<compile_context>
chip_gen: v7x
topology: tpu7x:2x2x1
jax: 0.10.0
libtpu: 0.0.40
codegen_flags: <defaults>
</compile_context>

<pallas_src>
import math

import numpy as np
import jax
import jax.numpy as jnp
from jax.experimental import pallas as pl
from jax.experimental.pallas import tpu as pltpu


def _round_up(x, m):
    return (x + m - 1) // m * m


_HEAD_ORDER = ("input_layer_w", "input_layer_b", "input_layer_s",
               "hidden_layer_w", "hidden_layer_b", "hidden_layer_s",
               "last_layer_w", "last_layer_b", "last_layer_s")


# -----------------------------------------------------------------------------
# Fused kernel factory (static dims baked in via closure).
# -----------------------------------------------------------------------------
def _make_fused_kernel(d_pad, out_pad, blk, sub_blk):
    n_sub = blk // sub_blk

    def kernel(meta_ref, xin_ref,
               w1h_ref, b1h_ref,
               wgw1_ref, bgw1_ref, wgw2_ref, bgw2_ref, wgw3_ref, bgw3_ref,
               wgbs_ref, bgbs_ref,
               e1_ref, r1_ref, e2_ref, r2_ref, e3_ref, r3_ref,
               o_ref):
        f32 = jnp.float32

        # Constant operands: single load site, hoisted out of the sub-block loop.
        w1h, b1h = w1h_ref[...], b1h_ref[...]
        wgw1, bgw1 = wgw1_ref[...], bgw1_ref[...]
        wgw2, bgw2 = wgw2_ref[...], bgw2_ref[...]
        wgw3, bgw3 = wgw3_ref[...], bgw3_ref[...]
        wgbs, bgbs = wgbs_ref[...], bgbs_ref[...]
        e1, r1 = e1_ref[...], r1_ref[...]
        e2, r2 = e2_ref[...], r2_ref[...]
        e3, r3 = e3_ref[...], r3_ref[...]

        # Statically-unrolled sub-block loop: every per-sample intermediate
        # (x_rep, h*_rep, generated weight sections) stays vreg-resident,
        # so there is no spill store/reload traffic on the vld/vst slots.
        for s in range(n_sub):
            r0 = s * sub_blk
            meta = meta_ref[r0:r0 + sub_blk, :]
            x = xin_ref[r0:r0 + sub_blk, :]

            # 9 hypernet heads, first layers fused into one matmul.
            hid = jnp.maximum(
                jnp.dot(meta, w1h, preferred_element_type=f32) + b1h, 0.0)

            # Six small bias/scale heads in one grouped dot; sections start on
            # 128-lane boundaries and "1.0 +" is pre-baked into the scale bias.
            bs = jnp.dot(hid, wgbs, preferred_element_type=f32) + bgbs
            b1, s1 = bs[:, 0:d_pad], bs[:, d_pad:2 * d_pad]
            b2, s2 = bs[:, 2 * d_pad:3 * d_pad], bs[:, 3 * d_pad:4 * d_pad]
            b3 = bs[:, 4 * d_pad:4 * d_pad + out_pad]
            s3 = bs[:, 4 * d_pad + out_pad:4 * d_pad + 2 * out_pad]

            # Layer 1: generated weight section produced and consumed in place.
            # w1t[b, i*D+d] = w1[b, d, i]  (pre-transposed at prep time)
            w1t = jnp.dot(hid, wgw1, preferred_element_type=f32) + bgw1
            x_rep = jnp.dot(x, e1, preferred_element_type=f32)
            h1 = jnp.dot(x_rep * w1t, r1, preferred_element_type=f32)
            h1 = jnp.maximum(h1 * s1 + b1, 0.0)

            # Layer 2: w2t[b, j*D+d] = w2[b, d, j]
            w2t = jnp.dot(hid, wgw2, preferred_element_type=f32) + bgw2
            h1_rep = jnp.dot(h1, e2, preferred_element_type=f32)
            h2 = jnp.dot(h1_rep * w2t, r2, preferred_element_type=f32)
            h2 = jnp.maximum(h2 * s2 + b2, 0.0)

            # Layer 3: w3t[b, o*D+d] = w3[b, o, d]  (native layout)
            w3t = jnp.dot(hid, wgw3, preferred_element_type=f32) + bgw3
            h2_rep = jnp.dot(h2, e3, preferred_element_type=f32)
            out = jnp.dot(h2_rep * w3t, r3, preferred_element_type=f32)
            # padded lanes (>= out_dim) are exactly zero -> lane-dense store
            o_ref[r0:r0 + sub_blk, :] = (out * s3 + b3).astype(o_ref.dtype)

    return kernel


# -----------------------------------------------------------------------------
# One-time parameter prep: stack head first layers, build per-section second
# layers (row-pre-permuted, no padding columns), grouped bias/scale slab with
# "1.0 +" baked in, and constant expand/reduce matrices.
# -----------------------------------------------------------------------------
def prepare_hyper_params(params, meta_dim, base_dim, out_dim, dyn_dim):
    in_dim = base_dim + meta_dim
    D, O = dyn_dim, out_dim
    H = np.asarray(params["input_layer_w"][0]).shape[0]   # hyper hidden dim
    d_pad = _round_up(D, 128)
    out_pad = _round_up(O, 128)
    f32 = np.float32

    # Stacked first layers: hidden block k lives in columns [k*H, (k+1)*H).
    w1h = np.concatenate([np.asarray(params[n][0]).T for n in _HEAD_ORDER],
                         axis=1).astype(f32)                       # (meta, 9H)
    b1h = np.concatenate([np.asarray(params[n][1]) for n in _HEAD_ORDER]
                         ).astype(f32)[None, :]                    # (1, 9H)

    def head2(name):
        return (np.asarray(params[name][2]).astype(f32),           # (odim, H)
                np.asarray(params[name][3]).astype(f32))            # (odim,)

    def place(w2, b2, k, width):
        wg = np.zeros((9 * H, width), f32)
        bg = np.zeros((1, width), f32)
        wg[k * H:(k + 1) * H, :w2.shape[0]] = w2.T
        bg[0, :b2.shape[0]] = b2
        return wg, bg

    # Weight heads: rows pre-permuted so generated weights arrive transposed.
    w2, b2 = head2("input_layer_w")                                 # flat d*in+i
    w2 = w2.reshape(D, in_dim, H).transpose(1, 0, 2).reshape(in_dim * D, H)
    b2 = b2.reshape(D, in_dim).T.reshape(-1)                        # -> i*D+d
    wg_w1, bg_w1 = place(w2, b2, 0, in_dim * D)

    w2, b2 = head2("hidden_layer_w")                                # flat d*D+j
    w2 = w2.reshape(D, D, H).transpose(1, 0, 2).reshape(D * D, H)
    b2 = b2.reshape(D, D).T.reshape(-1)                             # -> j*D+d
    wg_w2, bg_w2 = place(w2, b2, 3, D * D)

    w2, b2 = head2("last_layer_w")                                  # native o*D+d
    wg_w3, bg_w3 = place(w2, b2, 6, O * D)

    # Bias/scale heads: one grouped slab; each section on a 128-lane boundary;
    # "1.0 +" baked into the scale-head biases.
    bs_width = 4 * d_pad + 2 * out_pad
    wg_bs = np.zeros((9 * H, bs_width), f32)
    bg_bs = np.zeros((1, bs_width), f32)
    bs_layout = [("input_layer_b", 1, 0, D, 0.0),
                 ("input_layer_s", 2, d_pad, D, 1.0),
                 ("hidden_layer_b", 4, 2 * d_pad, D, 0.0),
                 ("hidden_layer_s", 5, 3 * d_pad, D, 1.0),
                 ("last_layer_b", 7, 4 * d_pad, O, 0.0),
                 ("last_layer_s", 8, 4 * d_pad + out_pad, O, 1.0)]
    for name, k, off, width, add in bs_layout:
        w2, b2 = head2(name)
        wg_bs[k * H:(k + 1) * H, off:off + width] = w2.T
        bg_bs[0, off:off + width] = b2 + add

    # Constant 0/1 expand (E*) / reduce (R*) matrices for the batched matvecs.
    e1 = np.kron(np.eye(in_dim, dtype=f32), np.ones((1, D), f32))   # (in, in*D)
    r1 = np.pad(np.kron(np.ones((in_dim, 1), f32), np.eye(D, dtype=f32)),
                ((0, 0), (0, d_pad - D)))                           # (in*D, d_pad)
    e2 = np.pad(np.kron(np.eye(D, dtype=f32), np.ones((1, D), f32)),
                ((0, d_pad - D), (0, 0)))                           # (d_pad, D*D)
    r2 = np.pad(np.kron(np.ones((D, 1), f32), np.eye(D, dtype=f32)),
                ((0, 0), (0, d_pad - D)))                           # (D*D, d_pad)
    e3 = np.pad(np.kron(np.ones((1, O), f32), np.eye(D, dtype=f32)),
                ((0, d_pad - D), (0, 0)))                           # (d_pad, O*D)
    r3 = np.pad(np.kron(np.eye(O, dtype=f32), np.ones((D, 1), f32)),
                ((0, 0), (0, out_pad - O)))                         # (O*D, out_pad)

    consts = [jnp.asarray(a) for a in
              (w1h, b1h, wg_w1, bg_w1, wg_w2, bg_w2, wg_w3, bg_w3, wg_bs, bg_bs,
               e1, r1, e2, r2, e3, r3)]
    return dict(consts=consts, meta_dim=meta_dim, base_dim=base_dim,
                in_dim=in_dim, dyn_dim=D, out_dim=O,
                d_pad=d_pad, out_pad=out_pad)


# -----------------------------------------------------------------------------
# Forward: single fused pallas_call, gridded over batch blocks.
# -----------------------------------------------------------------------------
def hypernetwork2layer_forward(prep, meta_v, base_v):
    B = meta_v.shape[0]
    meta_dim, in_dim = prep["meta_dim"], prep["in_dim"]
    out_dim, out_pad = prep["out_dim"], prep["out_pad"]

    sub_blk = 16                                   # register-friendly sub-block
    # Target >= 2 grid steps when possible (v7x megacore); cap rows/step at 256.
    blk = min(256, _round_up(max((B + 1) // 2, 1), sub_blk))
    b_pad = _round_up(B, blk)

    xin = jnp.concatenate([base_v, meta_v], axis=1)
    if b_pad != B:
        pad = ((0, b_pad - B), (0, 0))
        meta_v = jnp.pad(meta_v, pad)
        xin = jnp.pad(xin, pad)

    kernel = _make_fused_kernel(prep["d_pad"], out_pad, blk, sub_blk)
    consts = prep["consts"]

    def run(single_buffer_consts):
        if single_buffer_consts:
            const_specs = [pl.BlockSpec(c.shape, lambda b: (0, 0),
                                        pipeline_mode=pl.Buffered(1))
                           for c in consts]
        else:
            const_specs = [pl.BlockSpec(c.shape, lambda b: (0, 0))
                           for c in consts]
        out = pl.pallas_call(
            kernel,
            grid=(b_pad // blk,),
            in_specs=[pl.BlockSpec((blk, meta_dim), lambda b: (b, 0)),
                      pl.BlockSpec((blk, in_dim), lambda b: (b, 0))]
                     + const_specs,
            out_specs=pl.BlockSpec((blk, out_pad), lambda b: (b, 0)),
            out_shape=jax.ShapeDtypeStruct((b_pad, out_pad), jnp.float32),
            compiler_params=pltpu.CompilerParams(
                dimension_semantics=("parallel",),
                vmem_limit_bytes=32 * 1024 * 1024),
        )(meta_v, xin, *consts)
        return jax.block_until_ready(out)

    try:
        out = run(True)          # grid-invariant constants: single-buffered
    except Exception:            # fallback if Buffered(1) unsupported here
        out = run(False)
    return out[:B, :out_dim]


# -----------------------------------------------------------------------------
# Deterministic parameter init (mirrors init_layers: weights ~
# U(-1/sqrt(2*fan_in), 1/sqrt(2*fan_in)); biases nn.Linear default).
# -----------------------------------------------------------------------------
def init_head(key, in_dim, hidden_dim, out_dim):
    k1, k2, k3, k4 = jax.random.split(key, 4)
    bw1 = 1.0 / math.sqrt(2 * in_dim)
    w1 = jax.random.uniform(k1, (hidden_dim, in_dim), jnp.float32, -bw1, bw1)
    bb1 = 1.0 / math.sqrt(in_dim)
    b1 = jax.random.uniform(k2, (hidden_dim,), jnp.float32, -bb1, bb1)
    bw2 = 1.0 / math.sqrt(2 * hidden_dim)
    w2 = jax.random.uniform(k3, (out_dim, hidden_dim), jnp.float32, -bw2, bw2)
    bb2 = 1.0 / math.sqrt(hidden_dim)
    b2 = jax.random.uniform(k4, (out_dim,), jnp.float32, -bb2, bb2)
    return (w1, b1, w2, b2)


# Pure-JAX reference (mirrors the PyTorch forward exactly).
def reference_forward(params, meta_v, base_v, meta_dim, base_dim, out_dim, D):
    def head(p, x):
        w1, b1, w2, b2 = p
        return jax.nn.relu(x @ w1.T + b1) @ w2.T + b2

    B = meta_v.shape[0]
    in_dim = base_dim + meta_dim
    w1 = head(params["input_layer_w"], meta_v).reshape(B, D, in_dim)
    b1 = head(params["input_layer_b"], meta_v).reshape(B, D, 1)
    s1 = 1.0 + head(params["input_layer_s"], meta_v).reshape(B, D, 1)
    w2 = head(params["hidden_layer_w"], meta_v).reshape(B, D, D)
    b2 = head(params["hidden_layer_b"], meta_v).reshape(B, D, 1)
    s2 = 1.0 + head(params["hidden_layer_s"], meta_v).reshape(B, D, 1)
    w3 = head(params["last_layer_w"], meta_v).reshape(B, out_dim, D)
    b3 = head(params["last_layer_b"], meta_v).reshape(B, out_dim, 1)
    s3 = 1.0 + head(params["last_layer_s"], meta_v).reshape(B, out_dim, 1)
    x = jnp.concatenate([base_v, meta_v], axis=1)[:, :, None]
    h = jax.nn.relu(jnp.einsum("bij,bjk->bik", w1, x) * s1 + b1)
    h = jax.nn.relu(jnp.einsum("bij,bjk->bik", w2, h) * s2 + b2)
    out = jnp.einsum("bij,bjk->bik", w3, h) * s3 + b3
    return out[:, :, 0]


if __name__ == "__main__":
    META, BASE, OUT = 8, 16, 6
    HYPER_H, DYN_H = 32, 32

    key = jax.random.PRNGKey(0)
    keys = jax.random.split(key, 11)

    head_out_dims = {
        "input_layer_w": DYN_H * (BASE + META),
        "input_layer_b": DYN_H,
        "input_layer_s": DYN_H,
        "hidden_layer_w": DYN_H * DYN_H,
        "hidden_layer_b": DYN_H,
        "hidden_layer_s": DYN_H,
        "last_layer_w": DYN_H * OUT,
        "last_layer_b": OUT,
        "last_layer_s": OUT,
    }
    params = {}
    for k, (name, odim) in zip(keys[:9], head_out_dims.items()):
        params[name] = init_head(k, META, HYPER_H, odim)

    prep = prepare_hyper_params(params, META, BASE, OUT, DYN_H)

    # Two batch sizes: tiny (single grid step / single sub-block) and one that
    # exercises batch padding, 2 grid steps and multiple 16-row sub-blocks.
    for B in (4, 40):
        meta_v = jax.random.normal(keys[9], (B, META), jnp.float32)
        base_v = jax.random.normal(keys[10], (B, BASE), jnp.float32)

        out = hypernetwork2layer_forward(prep, meta_v, base_v)
        out = jax.block_until_ready(out)
        assert out.shape == (B, OUT), out.shape
        assert bool(jnp.all(jnp.isfinite(out)))

        ref = reference_forward(params, meta_v, base_v, META, BASE, OUT, DYN_H)
        max_err = float(jnp.max(jnp.abs(out - ref)))
        assert bool(jnp.allclose(out, ref, rtol=1e-4, atol=1e-4)), (B, max_err)

    print("KERNEL_OK")
</pallas_src>

<mosaic_0001>
module attributes {stable_mosaic.version = 11 : i64} {
  func.func @kernel(%arg0: i32, %arg1: memref<16x8xf32, #tpu.memory_space<vmem>>, %arg2: memref<16x24xf32, #tpu.memory_space<vmem>>, %arg3: memref<8x288xf32, #tpu.memory_space<vmem>>, %arg4: memref<1x288xf32, #tpu.memory_space<vmem>>, %arg5: memref<288x768xf32, #tpu.memory_space<vmem>>, %arg6: memref<1x768xf32, #tpu.memory_space<vmem>>, %arg7: memref<288x1024xf32, #tpu.memory_space<vmem>>, %arg8: memref<1x1024xf32, #tpu.memory_space<vmem>>, %arg9: memref<288x192xf32, #tpu.memory_space<vmem>>, %arg10: memref<1x192xf32, #tpu.memory_space<vmem>>, %arg11: memref<288x768xf32, #tpu.memory_space<vmem>>, %arg12: memref<1x768xf32, #tpu.memory_space<vmem>>, %arg13: memref<24x768xf32, #tpu.memory_space<vmem>>, %arg14: memref<768x128xf32, #tpu.memory_space<vmem>>, %arg15: memref<128x1024xf32, #tpu.memory_space<vmem>>, %arg16: memref<1024x128xf32, #tpu.memory_space<vmem>>, %arg17: memref<128x192xf32, #tpu.memory_space<vmem>>, %arg18: memref<192x128xf32, #tpu.memory_space<vmem>>, %arg19: memref<16x128xf32, #tpu.memory_space<vmem>>) attributes {dimension_semantics = [#tpu.dimension_semantics<parallel>], iteration_bounds = array<i64: 1>, scalar_prefetch = 0 : i64, scratch_operands = 0 : i64, tpu.core_type = #tpu.core_type<tc>, window_params = [{transform_indices = @transform_0, window_bounds = array<i64: 16, 8>}, {transform_indices = @transform_1, window_bounds = array<i64: 16, 24>}, {pipeline_mode = #tpu.pipeline_mode<synchronous>, transform_indices = @transform_2, window_bounds = array<i64: 8, 288>}, {pipeline_mode = #tpu.pipeline_mode<synchronous>, transform_indices = @transform_3, window_bounds = array<i64: 1, 288>}, {pipeline_mode = #tpu.pipeline_mode<synchronous>, transform_indices = @transform_4, window_bounds = array<i64: 288, 768>}, {pipeline_mode = #tpu.pipeline_mode<synchronous>, transform_indices = @transform_5, window_bounds = array<i64: 1, 768>}, {pipeline_mode = #tpu.pipeline_mode<synchronous>, transform_indices = @transform_6, window_bounds = array<i64: 288, 1024>}, {pipeline_mode = #tpu.pipeline_mode<synchronous>, transform_indices = @transform_7, window_bounds = array<i64: 1, 1024>}, {pipeline_mode = #tpu.pipeline_mode<synchronous>, transform_indices = @transform_8, window_bounds = array<i64: 288, 192>}, {pipeline_mode = #tpu.pipeline_mode<synchronous>, transform_indices = @transform_9, window_bounds = array<i64: 1, 192>}, {pipeline_mode = #tpu.pipeline_mode<synchronous>, transform_indices = @transform_10, window_bounds = array<i64: 288, 768>}, {pipeline_mode = #tpu.pipeline_mode<synchronous>, transform_indices = @transform_11, window_bounds = array<i64: 1, 768>}, {pipeline_mode = #tpu.pipeline_mode<synchronous>, transform_indices = @transform_12, window_bounds = array<i64: 24, 768>}, {pipeline_mode = #tpu.pipeline_mode<synchronous>, transform_indices = @transform_13, window_bounds = array<i64: 768, 128>}, {pipeline_mode = #tpu.pipeline_mode<synchronous>, transform_indices = @transform_14, window_bounds = array<i64: 128, 1024>}, {pipeline_mode = #tpu.pipeline_mode<synchronous>, transform_indices = @transform_15, window_bounds = array<i64: 1024, 128>}, {pipeline_mode = #tpu.pipeline_mode<synchronous>, transform_indices = @transform_16, window_bounds = array<i64: 128, 192>}, {pipeline_mode = #tpu.pipeline_mode<synchronous>, transform_indices = @transform_17, window_bounds = array<i64: 192, 128>}, {transform_indices = @transform_18, window_bounds = array<i64: 16, 128>}]} {
    %c0 = arith.constant 0 : index
    %c0_0 = arith.constant 0 : index
    %0 = vector.load %arg3[%c0, %c0_0] : memref<8x288xf32, #tpu.memory_space<vmem>>, vector<8x288xf32>
    %c0_1 = arith.constant 0 : index
    %c0_2 = arith.constant 0 : index
    %1 = vector.load %arg4[%c0_1, %c0_2] : memref<1x288xf32, #tpu.memory_space<vmem>>, vector<1x288xf32>
    %c0_3 = arith.constant 0 : index
    %c0_4 = arith.constant 0 : index
    %2 = vector.load %arg5[%c0_3, %c0_4] : memref<288x768xf32, #tpu.memory_space<vmem>>, vector<288x768xf32>
    %c0_5 = arith.constant 0 : index
    %c0_6 = arith.constant 0 : index
    %3 = vector.load %arg6[%c0_5, %c0_6] : memref<1x768xf32, #tpu.memory_space<vmem>>, vector<1x768xf32>
    %c0_7 = arith.constant 0 : index
    %c0_8 = arith.constant 0 : index
    %4 = vector.load %arg7[%c0_7, %c0_8] : memref<288x1024xf32, #tpu.memory_space<vmem>>, vector<288x1024xf32>
    %c0_9 = arith.constant 0 : index
    %c0_10 = arith.constant 0 : index
    %5 = vector.load %arg8[%c0_9, %c0_10] : memref<1x1024xf32, #tpu.memory_space<vmem>>, vector<1x1024xf32>
    %c0_11 = arith.constant 0 : index
    %c0_12 = arith.constant 0 : index
    %6 = vector.load %arg9[%c0_11, %c0_12] : memref<288x192xf32, #tpu.memory_space<vmem>>, vector<288x192xf32>
    %c0_13 = arith.constant 0 : index
    %c0_14 = arith.constant 0 : index
    %7 = vector.load %arg10[%c0_13, %c0_14] : memref<1x192xf32, #tpu.memory_space<vmem>>, vector<1x192xf32>
    %c0_15 = arith.constant 0 : index
    %c0_16 = arith.constant 0 : index
    %8 = vector.load %arg11[%c0_15, %c0_16] : memref<288x768xf32, #tpu.memory_space<vmem>>, vector<288x768xf32>
    %c0_17 = arith.constant 0 : index
    %c0_18 = arith.constant 0 : index
    %9 = vector.load %arg12[%c0_17, %c0_18] : memref<1x768xf32, #tpu.memory_space<vmem>>, vector<1x768xf32>
    %c0_19 = arith.constant 0 : index
    %c0_20 = arith.constant 0 : index
    %10 = vector.load %arg13[%c0_19, %c0_20] : memref<24x768xf32, #tpu.memory_space<vmem>>, vector<24x768xf32>
    %c0_21 = arith.constant 0 : index
    %c0_22 = arith.constant 0 : index
    %11 = vector.load %arg14[%c0_21, %c0_22] : memref<768x128xf32, #tpu.memory_space<vmem>>, vector<768x128xf32>
    %c0_23 = arith.constant 0 : index
    %c0_24 = arith.constant 0 : index
    %12 = vector.load %arg15[%c0_23, %c0_24] : memref<128x1024xf32, #tpu.memory_space<vmem>>, vector<128x1024xf32>
    %c0_25 = arith.constant 0 : index
    %c0_26 = arith.constant 0 : index
    %13 = vector.load %arg16[%c0_25, %c0_26] : memref<1024x128xf32, #tpu.memory_space<vmem>>, vector<1024x128xf32>
    %c0_27 = arith.constant 0 : index
    %c0_28 = arith.constant 0 : index
    %14 = vector.load %arg17[%c0_27, %c0_28] : memref<128x192xf32, #tpu.memory_space<vmem>>, vector<128x192xf32>
    %c0_29 = arith.constant 0 : index
    %c0_30 = arith.constant 0 : index
    %15 = vector.load %arg18[%c0_29, %c0_30] : memref<192x128xf32, #tpu.memory_space<vmem>>, vector<192x128xf32>
    %c0_31 = arith.constant 0 : index
    %c0_32 = arith.constant 0 : index
    %16 = vector.load %arg1[%c0_31, %c0_32] : memref<16x8xf32, #tpu.memory_space<vmem>>, vector<16x8xf32>
    %c0_33 = arith.constant 0 : index
    %c0_34 = arith.constant 0 : index
    %17 = vector.load %arg2[%c0_33, %c0_34] : memref<16x24xf32, #tpu.memory_space<vmem>>, vector<16x24xf32>
    %cst = arith.constant dense<0.000000e+00> : vector<16x288xf32>
    %18 = tpu.matmul %16, %0, %cst {dimension_numbers = #tpu.dot_dimension_numbers<[1], [0], [0], [1], [0, 0, 1, 1], [], []>} : vector<16x8xf32>, vector<8x288xf32>, vector<16x288xf32> -> vector<16x288xf32>
    %19 = vector.broadcast %1 : vector<1x288xf32> to vector<16x288xf32>
    %20 = arith.addf %18, %19 : vector<16x288xf32>
    %cst_35 = arith.constant 0.000000e+00 : f32
    %21 = vector.broadcast %cst_35 : f32 to vector<16x288xf32>
    %22 = arith.maximumf %20, %21 : vector<16x288xf32>
    %cst_36 = arith.constant dense<0.000000e+00> : vector<16x768xf32>
    %23 = tpu.matmul %22, %8, %cst_36 {dimension_numbers = #tpu.dot_dimension_numbers<[1], [0], [0], [1], [0, 0, 1, 1], [], []>} : vector<16x288xf32>, vector<288x768xf32>, vector<16x768xf32> -> vector<16x768xf32>
    %24 = vector.broadcast %9 : vector<1x768xf32> to vector<16x768xf32>
    %25 = arith.addf %23, %24 : vector<16x768xf32>
    %26 = vector.extract_strided_slice %25 {offsets = [0, 0], sizes = [16, 128], strides = [1, 1]} : vector<16x768xf32> to vector<16x128xf32>
    %27 = vector.extract_strided_slice %25 {offsets = [0, 128], sizes = [16, 128], strides = [1, 1]} : vector<16x768xf32> to vector<16x128xf32>
    %28 = vector.extract_strided_slice %25 {offsets = [0, 256], sizes = [16, 128], strides = [1, 1]} : vector<16x768xf32> to vector<16x128xf32>
    %29 = vector.extract_strided_slice %25 {offsets = [0, 384], sizes = [16, 128], strides = [1, 1]} : vector<16x768xf32> to vector<16x128xf32>
    %30 = vector.extract_strided_slice %25 {offsets = [0, 512], sizes = [16, 128], strides = [1, 1]} : vector<16x768xf32> to vector<16x128xf32>
    %31 = vector.extract_strided_slice %25 {offsets = [0, 640], sizes = [16, 128], strides = [1, 1]} : vector<16x768xf32> to vector<16x128xf32>
    %cst_37 = arith.constant dense<0.000000e+00> : vector<16x768xf32>
    %32 = tpu.matmul %22, %2, %cst_37 {dimension_numbers = #tpu.dot_dimension_numbers<[1], [0], [0], [1], [0, 0, 1, 1], [], []>} : vector<16x288xf32>, vector<288x768xf32>, vector<16x768xf32> -> vector<16x768xf32>
    %33 = vector.broadcast %3 : vector<1x768xf32> to vector<16x768xf32>
    %34 = arith.addf %32, %33 : vector<16x768xf32>
    %cst_38 = arith.constant dense<0.000000e+00> : vector<16x768xf32>
    %35 = tpu.matmul %17, %10, %cst_38 {dimension_numbers = #tpu.dot_dimension_numbers<[1], [0], [0], [1], [0, 0, 1, 1], [], []>} : vector<16x24xf32>, vector<24x768xf32>, vector<16x768xf32> -> vector<16x768xf32>
    %36 = arith.mulf %35, %34 : vector<16x768xf32>
    %cst_39 = arith.constant dense<0.000000e+00> : vector<16x128xf32>
    %37 = tpu.matmul %36, %11, %cst_39 {dimension_numbers = #tpu.dot_dimension_numbers<[1], [0], [0], [1], [0, 0, 1, 1], [], []>} : vector<16x768xf32>, vector<768x128xf32>, vector<16x128xf32> -> vector<16x128xf32>
    %38 = arith.mulf %37, %27 : vector<16x128xf32>
    %39 = arith.addf %38, %26 : vector<16x128xf32>
    %cst_40 = arith.constant 0.000000e+00 : f32
    %40 = vector.broadcast %cst_40 : f32 to vector<16x128xf32>
    %41 = arith.maximumf %39, %40 : vector<16x128xf32>
    %cst_41 = arith.constant dense<0.000000e+00> : vector<16x1024xf32>
    %42 = tpu.matmul %22, %4, %cst_41 {dimension_numbers = #tpu.dot_dimension_numbers<[1], [0], [0], [1], [0, 0, 1, 1], [], []>} : vector<16x288xf32>, vector<288x1024xf32>, vector<16x1024xf32> -> vector<16x1024xf32>
    %43 = vector.broadcast %5 : vector<1x1024xf32> to vector<16x1024xf32>
    %44 = arith.addf %42, %43 : vector<16x1024xf32>
    %cst_42 = arith.constant dense<0.000000e+00> : vector<16x1024xf32>
    %45 = tpu.matmul %41, %12, %cst_42 {dimension_numbers = #tpu.dot_dimension_numbers<[1], [0], [0], [1], [0, 0, 1, 1], [], []>} : vector<16x128xf32>, vector<128x1024xf32>, vector<16x1024xf32> -> vector<16x1024xf32>
    %46 = arith.mulf %45, %44 : vector<16x1024xf32>
    %cst_43 = arith.constant dense<0.000000e+00> : vector<16x128xf32>
    %47 = tpu.matmul %46, %13, %cst_43 {dimension_numbers = #tpu.dot_dimension_numbers<[1], [0], [0], [1], [0, 0, 1, 1], [], []>} : vector<16x1024xf32>, vector<1024x128xf32>, vector<16x128xf32> -> vector<16x128xf32>
    %48 = arith.mulf %47, %29 : vector<16x128xf32>
    %49 = arith.addf %48, %28 : vector<16x128xf32>
    %cst_44 = arith.constant 0.000000e+00 : f32
    %50 = vector.broadcast %cst_44 : f32 to vector<16x128xf32>
    %51 = arith.maximumf %49, %50 : vector<16x128xf32>
    %cst_45 = arith.constant dense<0.000000e+00> : vector<16x192xf32>
    %52 = tpu.matmul %22, %6, %cst_45 {dimension_numbers = #tpu.dot_dimension_numbers<[1], [0], [0], [1], [0, 0, 1, 1], [], []>} : vector<16x288xf32>, vector<288x192xf32>, vector<16x192xf32> -> vector<16x192xf32>
    %53 = vector.broadcast %7 : vector<1x192xf32> to vector<16x192xf32>
    %54 = arith.addf %52, %53 : vector<16x192xf32>
    %cst_46 = arith.constant dense<0.000000e+00> : vector<16x192xf32>
    %55 = tpu.matmul %51, %14, %cst_46 {dimension_numbers = #tpu.dot_dimension_numbers<[1], [0], [0], [1], [0, 0, 1, 1], [], []>} : vector<16x128xf32>, vector<128x192xf32>, vector<16x192xf32> -> vector<16x192xf32>
    %56 = arith.mulf %55, %54 : vector<16x192xf32>
    %cst_47 = arith.constant dense<0.000000e+00> : vector<16x128xf32>
    %57 = tpu.matmul %56, %15, %cst_47 {dimension_numbers = #tpu.dot_dimension_numbers<[1], [0], [0], [1], [0, 0, 1, 1], [], []>} : vector<16x192xf32>, vector<192x128xf32>, vector<16x128xf32> -> vector<16x128xf32>
    %58 = arith.mulf %57, %31 : vector<16x128xf32>
    %59 = arith.addf %58, %30 : vector<16x128xf32>
    %c0_48 = arith.constant 0 : index
    %c0_49 = arith.constant 0 : index
    %60 = vector.load %arg19[%c0_48, %c0_49] : memref<16x128xf32, #tpu.memory_space<vmem>>, vector<16x128xf32>
    tpu.vector_store %arg19[%c0_48, %c0_49], %59 {strides = array<i32>} : memref<16x128xf32, #tpu.memory_space<vmem>>, vector<16x128xf32>,
    return
  }
  func.func @transform_0(%arg0: i32) -> (i32, i32) {
    %c0_i32 = arith.constant 0 : i32
    %c0_i32_0 = arith.constant 0 : i32
    return %arg0, %c0_i32 : i32, i32
  }
  func.func @transform_1(%arg0: i32) -> (i32, i32) {
    %c0_i32 = arith.constant 0 : i32
    %c0_i32_0 = arith.constant 0 : i32
    return %arg0, %c0_i32 : i32, i32
  }
  func.func @transform_2(%arg0: i32) -> (i32, i32) {
    %c0_i32 = arith.constant 0 : i32
    %c0_i32_0 = arith.constant 0 : i32
    %c0_i32_1 = arith.constant 0 : i32
    return %c0_i32, %c0_i32_0 : i32, i32
  }
  func.func @transform_3(%arg0: i32) -> (i32, i32) {
    %c0_i32 = arith.constant 0 : i32
    %c0_i32_0 = arith.constant 0 : i32
    %c0_i32_1 = arith.constant 0 : i32
    return %c0_i32, %c0_i32_0 : i32, i32
  }
  func.func @transform_4(%arg0: i32) -> (i32, i32) {
    %c0_i32 = arith.constant 0 : i32
    %c0_i32_0 = arith.constant 0 : i32
    %c0_i32_1 = arith.constant 0 : i32
    return %c0_i32, %c0_i32_0 : i32, i32
  }
  func.func @transform_5(%arg0: i32) -> (i32, i32) {
    %c0_i32 = arith.constant 0 : i32
    %c0_i32_0 = arith.constant 0 : i32
    %c0_i32_1 = arith.constant 0 : i32
    return %c0_i32, %c0_i32_0 : i32, i32
  }
  func.func @transform_6(%arg0: i32) -> (i32, i32) {
    %c0_i32 = arith.constant 0 : i32
    %c0_i32_0 = arith.constant 0 : i32
    %c0_i32_1 = arith.constant 0 : i32
    return %c0_i32, %c0_i32_0 : i32, i32
  }
  func.func @transform_7(%arg0: i32) -> (i32, i32) {
    %c0_i32 = arith.constant 0 : i32
    %c0_i32_0 = arith.constant 0 : i32
    %c0_i32_1 = arith.constant 0 : i32
    return %c0_i32, %c0_i32_0 : i32, i32
  }
  func.func @transform_8(%arg0: i32) -> (i32, i32) {
    %c0_i32 = arith.constant 0 : i32
    %c0_i32_0 = arith.constant 0 : i32
    %c0_i32_1 = arith.constant 0 : i32
    return %c0_i32, %c0_i32_0 : i32, i32
  }
  func.func @transform_9(%arg0: i32) -> (i32, i32) {
    %c0_i32 = arith.constant 0 : i32
    %c0_i32_0 = arith.constant 0 : i32
    %c0_i32_1 = arith.constant 0 : i32
    return %c0_i32, %c0_i32_0 : i32, i32
  }
  func.func @transform_10(%arg0: i32) -> (i32, i32) {
    %c0_i32 = arith.constant 0 : i32
    %c0_i32_0 = arith.constant 0 : i32
    %c0_i32_1 = arith.constant 0 : i32
    return %c0_i32, %c0_i32_0 : i32, i32
  }
  func.func @transform_11(%arg0: i32) -> (i32, i32) {
    %c0_i32 = arith.constant 0 : i32
    %c0_i32_0 = arith.constant 0 : i32
    %c0_i32_1 = arith.constant 0 : i32
    return %c0_i32, %c0_i32_0 : i32, i32
  }
  func.func @transform_12(%arg0: i32) -> (i32, i32) {
    %c0_i32 = arith.constant 0 : i32
    %c0_i32_0 = arith.constant 0 : i32
    %c0_i32_1 = arith.constant 0 : i32
    return %c0_i32, %c0_i32_0 : i32, i32
  }
  func.func @transform_13(%arg0: i32) -> (i32, i32) {
    %c0_i32 = arith.constant 0 : i32
    %c0_i32_0 = arith.constant 0 : i32
    %c0_i32_1 = arith.constant 0 : i32
    return %c0_i32, %c0_i32_0 : i32, i32
  }
  func.func @transform_14(%arg0: i32) -> (i32, i32) {
    %c0_i32 = arith.constant 0 : i32
    %c0_i32_0 = arith.constant 0 : i32
    %c0_i32_1 = arith.constant 0 : i32
    return %c0_i32, %c0_i32_0 : i32, i32
  }
  func.func @transform_15(%arg0: i32) -> (i32, i32) {
    %c0_i32 = arith.constant 0 : i32
    %c0_i32_0 = arith.constant 0 : i32
    %c0_i32_1 = arith.constant 0 : i32
    return %c0_i32, %c0_i32_0 : i32, i32
  }
  func.func @transform_16(%arg0: i32) -> (i32, i32) {
    %c0_i32 = arith.constant 0 : i32
    %c0_i32_0 = arith.constant 0 : i32
    %c0_i32_1 = arith.constant 0 : i32
    return %c0_i32, %c0_i32_0 : i32, i32
  }
  func.func @transform_17(%arg0: i32) -> (i32, i32) {
    %c0_i32 = arith.constant 0 : i32
    %c0_i32_0 = arith.constant 0 : i32
    %c0_i32_1 = arith.constant 0 : i32
    return %c0_i32, %c0_i32_0 : i32, i32
  }
  func.func @transform_18(%arg0: i32) -> (i32, i32) {
    %c0_i32 = arith.constant 0 : i32
    %c0_i32_0 = arith.constant 0 : i32
    return %arg0, %c0_i32 : i32, i32
  }
}

module attributes {stable_mosaic.version = 11 : i64} {
  func.func @kernel(%arg0: i32, %arg1: memref<16x8xf32, #tpu.memory_space<vmem>>, %arg2: memref<16x24xf32, #tpu.memory_space<vmem>>, %arg3: memref<8x288xf32, #tpu.memory_space<vmem>>, %arg4: memref<1x288xf32, #tpu.memory_space<vmem>>, %arg5: memref<288x768xf32, #tpu.memory_space<vmem>>, %arg6: memref<1x768xf32, #tpu.memory_space<vmem>>, %arg7: memref<288x1024xf32, #tpu.memory_space<vmem>>, %arg8: memref<1x1024xf32, #tpu.memory_space<vmem>>, %arg9: memref<288x192xf32, #tpu.memory_space<vmem>>, %arg10: memref<1x192xf32, #tpu.memory_space<vmem>>, %arg11: memref<288x768xf32, #tpu.memory_space<vmem>>, %arg12: memref<1x768xf32, #tpu.memory_space<vmem>>, %arg13: memref<24x768xf32, #tpu.memory_space<vmem>>, %arg14: memref<768x128xf32, #tpu.memory_space<vmem>>, %arg15: memref<128x1024xf32, #tpu.memory_space<vmem>>, %arg16: memref<1024x128xf32, #tpu.memory_space<vmem>>, %arg17: memref<128x192xf32, #tpu.memory_space<vmem>>, %arg18: memref<192x128xf32, #tpu.memory_space<vmem>>, %arg19: memref<16x128xf32, #tpu.memory_space<vmem>>) attributes {dimension_semantics = [#tpu.dimension_semantics<parallel>], iteration_bounds = array<i64: 1>, scalar_prefetch = 0 : i64, scratch_operands = 0 : i64, tpu.core_type = #tpu.core_type<tc>, window_params = [{transform_indices = @transform_0, window_bounds = array<i64: 16, 8>}, {transform_indices = @transform_1, window_bounds = array<i64: 16, 24>}, {pipeline_mode = #tpu.pipeline_mode<synchronous>, transform_indices = @transform_2, window_bounds = array<i64: 8, 288>}, {pipeline_mode = #tpu.pipeline_mode<synchronous>, transform_indices = @transform_3, window_bounds = array<i64: 1, 288>}, {pipeline_mode = #tpu.pipeline_mode<synchronous>, transform_indices = @transform_4, window_bounds = array<i64: 288, 768>}, {pipeline_mode = #tpu.pipeline_mode<synchronous>, transform_indices = @transform_5, window_bounds = array<i64: 1, 768>}, {pipeline_mode = #tpu.pipeline_mode<synchronous>, transform_indices = @transform_6, window_bounds = array<i64: 288, 1024>}, {pipeline_mode = #tpu.pipeline_mode<synchronous>, transform_indices = @transform_7, window_bounds = array<i64: 1, 1024>}, {pipeline_mode = #tpu.pipeline_mode<synchronous>, transform_indices = @transform_8, window_bounds = array<i64: 288, 192>}, {pipeline_mode = #tpu.pipeline_mode<synchronous>, transform_indices = @transform_9, window_bounds = array<i64: 1, 192>}, {pipeline_mode = #tpu.pipeline_mode<synchronous>, transform_indices = @transform_10, window_bounds = array<i64: 288, 768>}, {pipeline_mode = #tpu.pipeline_mode<synchronous>, transform_indices = @transform_11, window_bounds = array<i64: 1, 768>}, {pipeline_mode = #tpu.pipeline_mode<synchronous>, transform_indices = @transform_12, window_bounds = array<i64: 24, 768>}, {pipeline_mode = #tpu.pipeline_mode<synchronous>, transform_indices = @transform_13, window_bounds = array<i64: 768, 128>}, {pipeline_mode = #tpu.pipeline_mode<synchronous>, transform_indices = @transform_14, window_bounds = array<i64: 128, 1024>}, {pipeline_mode = #tpu.pipeline_mode<synchronous>, transform_indices = @transform_15, window_bounds = array<i64: 1024, 128>}, {pipeline_mode = #tpu.pipeline_mode<synchronous>, transform_indices = @transform_16, window_bounds = array<i64: 128, 192>}, {pipeline_mode = #tpu.pipeline_mode<synchronous>, transform_indices = @transform_17, window_bounds = array<i64: 192, 128>}, {transform_indices = @transform_18, window_bounds = array<i64: 16, 128>}]} {
    %c0 = arith.constant 0 : index
    %c0_0 = arith.constant 0 : index
    %0 = vector.load %arg3[%c0, %c0_0] : memref<8x288xf32, #tpu.memory_space<vmem>>, vector<8x288xf32>
    %c0_1 = arith.constant 0 : index
    %c0_2 = arith.constant 0 : index
    %1 = vector.load %arg4[%c0_1, %c0_2] : memref<1x288xf32, #tpu.memory_space<vmem>>, vector<1x288xf32>
    %c0_3 = arith.constant 0 : index
    %c0_4 = arith.constant 0 : index
    %2 = vector.load %arg5[%c0_3, %c0_4] : memref<288x768xf32, #tpu.memory_space<vmem>>, vector<288x768xf32>
    %c0_5 = arith.constant 0 : index
    %c0_6 = arith.constant 0 : index
    %3 = vector.load %arg6[%c0_5, %c0_6] : memref<1x768xf32, #tpu.memory_space<vmem>>, vector<1x768xf32>
    %c0_7 = arith.constant 0 : index
    %c0_8 = arith.constant 0 : index
    %4 = vector.load %arg7[%c0_7, %c0_8] : memref<288x1024xf32, #tpu.memory_space<vmem>>, vector<288x1024xf32>
    %c0_9 = arith.constant 0 : index
    %c0_10 = arith.constant 0 : index
    %5 = vector.load %arg8[%c0_9, %c0_10] : memref<1x1024xf32, #tpu.memory_space<vmem>>, vector<1x1024xf32>
    %c0_11 = arith.constant 0 : index
    %c0_12 = arith.constant 0 : index
    %6 = vector.load %arg9[%c0_11, %c0_12] : memref<288x192xf32, #tpu.memory_space<vmem>>, vector<288x192xf32>
    %c0_13 = arith.constant 0 : index
    %c0_14 = arith.constant 0 : index
    %7 = vector.load %arg10[%c0_13, %c0_14] : memref<1x192xf32, #tpu.memory_space<vmem>>, vector<1x192xf32>
    %c0_15 = arith.constant 0 : index
    %c0_16 = arith.constant 0 : index
    %8 = vector.load %arg11[%c0_15, %c0_16] : memref<288x768xf32, #tpu.memory_space<vmem>>, vector<288x768xf32>
    %c0_17 = arith.constant 0 : index
    %c0_18 = arith.constant 0 : index
    %9 = vector.load %arg12[%c0_17, %c0_18] : memref<1x768xf32, #tpu.memory_space<vmem>>, vector<1x768xf32>
    %c0_19 = arith.constant 0 : index
    %c0_20 = arith.constant 0 : index
    %10 = vector.load %arg13[%c0_19, %c0_20] : memref<24x768xf32, #tpu.memory_space<vmem>>, vector<24x768xf32>
    %c0_21 = arith.constant 0 : index
    %c0_22 = arith.constant 0 : index
    %11 = vector.load %arg14[%c0_21, %c0_22] : memref<768x128xf32, #tpu.memory_space<vmem>>, vector<768x128xf32>
    %c0_23 = arith.constant 0 : index
    %c0_24 = arith.constant 0 : index
    %12 = vector.load %arg15[%c0_23, %c0_24] : memref<128x1024xf32, #tpu.memory_space<vmem>>, vector<128x1024xf32>
    %c0_25 = arith.constant 0 : index
    %c0_26 = arith.constant 0 : index
    %13 = vector.load %arg16[%c0_25, %c0_26] : memref<1024x128xf32, #tpu.memory_space<vmem>>, vector<1024x128xf32>
    %c0_27 = arith.constant 0 : index
    %c0_28 = arith.constant 0 : index
    %14 = vector.load %arg17[%c0_27, %c0_28] : memref<128x192xf32, #tpu.memory_space<vmem>>, vector<128x192xf32>
    %c0_29 = arith.constant 0 : index
    %c0_30 = arith.constant 0 : index
    %15 = vector.load %arg18[%c0_29, %c0_30] : memref<192x128xf32, #tpu.memory_space<vmem>>, vector<192x128xf32>
    %c0_31 = arith.constant 0 : index
    %c0_32 = arith.constant 0 : index
    %16 = vector.load %arg1[%c0_31, %c0_32] : memref<16x8xf32, #tpu.memory_space<vmem>>, vector<16x8xf32>
    %c0_33 = arith.constant 0 : index
    %c0_34 = arith.constant 0 : index
    %17 = vector.load %arg2[%c0_33, %c0_34] : memref<16x24xf32, #tpu.memory_space<vmem>>, vector<16x24xf32>
    %cst = arith.constant dense<0.000000e+00> : vector<16x288xf32>
    %18 = tpu.matmul %16, %0, %cst {dimension_numbers = #tpu.dot_dimension_numbers<[1], [0], [0], [1], [0, 0, 1, 1], [], []>} : vector<16x8xf32>, vector<8x288xf32>, vector<16x288xf32> -> vector<16x288xf32>
    %19 = vector.broadcast %1 : vector<1x288xf32> to vector<16x288xf32>
    %20 = arith.addf %18, %19 : vector<16x288xf32>
    %cst_35 = arith.constant 0.000000e+00 : f32
    %21 = vector.broadcast %cst_35 : f32 to vector<16x288xf32>
    %22 = arith.maximumf %20, %21 : vector<16x288xf32>
    %cst_36 = arith.constant dense<0.000000e+00> : vector<16x768xf32>
    %23 = tpu.matmul %22, %8, %cst_36 {dimension_numbers = #tpu.dot_dimension_numbers<[1], [0], [0], [1], [0, 0, 1, 1], [], []>} : vector<16x288xf32>, vector<288x768xf32>, vector<16x768xf32> -> vector<16x768xf32>
    %24 = vector.broadcast %9 : vector<1x768xf32> to vector<16x768xf32>
    %25 = arith.addf %23, %24 : vector<16x768xf32>
    %26 = vector.extract_strided_slice %25 {offsets = [0, 0], sizes = [16, 128], strides = [1, 1]} : vector<16x768xf32> to vector<16x128xf32>
    %27 = vector.extract_strided_slice %25 {offsets = [0, 128], sizes = [16, 128], strides = [1, 1]} : vector<16x768xf32> to vector<16x128xf32>
    %28 = vector.extract_strided_slice %25 {offsets = [0, 256], sizes = [16, 128], strides = [1, 1]} : vector<16x768xf32> to vector<16x128xf32>
    %29 = vector.extract_strided_slice %25 {offsets = [0, 384], sizes = [16, 128], strides = [1, 1]} : vector<16x768xf32> to vector<16x128xf32>
    %30 = vector.extract_strided_slice %25 {offsets = [0, 512], sizes = [16, 128], strides = [1, 1]} : vector<16x768xf32> to vector<16x128xf32>
    %31 = vector.extract_strided_slice %25 {offsets = [0, 640], sizes = [16, 128], strides = [1, 1]} : vector<16x768xf32> to vector<16x128xf32>
    %cst_37 = arith.constant dense<0.000000e+00> : vector<16x768xf32>
    %32 = tpu.matmul %22, %2, %cst_37 {dimension_numbers = #tpu.dot_dimension_numbers<[1], [0], [0], [1], [0, 0, 1, 1], [], []>} : vector<16x288xf32>, vector<288x768xf32>, vector<16x768xf32> -> vector<16x768xf32>
    %33 = vector.broadcast %3 : vector<1x768xf32> to vector<16x768xf32>
    %34 = arith.addf %32, %33 : vector<16x768xf32>
    %cst_38 = arith.constant dense<0.000000e+00> : vector<16x768xf32>
    %35 = tpu.matmul %17, %10, %cst_38 {dimension_numbers = #tpu.dot_dimension_numbers<[1], [0], [0], [1], [0, 0, 1, 1], [], []>} : vector<16x24xf32>, vector<24x768xf32>, vector<16x768xf32> -> vector<16x768xf32>
    %36 = arith.mulf %35, %34 : vector<16x768xf32>
    %cst_39 = arith.constant dense<0.000000e+00> : vector<16x128xf32>
    %37 = tpu.matmul %36, %11, %cst_39 {dimension_numbers = #tpu.dot_dimension_numbers<[1], [0], [0], [1], [0, 0, 1, 1], [], []>} : vector<16x768xf32>, vector<768x128xf32>, vector<16x128xf32> -> vector<16x128xf32>
    %38 = arith.mulf %37, %27 : vector<16x128xf32>
    %39 = arith.addf %38, %26 : vector<16x128xf32>
    %cst_40 = arith.constant 0.000000e+00 : f32
    %40 = vector.broadcast %cst_40 : f32 to vector<16x128xf32>
    %41 = arith.maximumf %39, %40 : vector<16x128xf32>
    %cst_41 = arith.constant dense<0.000000e+00> : vector<16x1024xf32>
    %42 = tpu.matmul %22, %4, %cst_41 {dimension_numbers = #tpu.dot_dimension_numbers<[1], [0], [0], [1], [0, 0, 1, 1], [], []>} : vector<16x288xf32>, vector<288x1024xf32>, vector<16x1024xf32> -> vector<16x1024xf32>
    %43 = vector.broadcast %5 : vector<1x1024xf32> to vector<16x1024xf32>
    %44 = arith.addf %42, %43 : vector<16x1024xf32>
    %cst_42 = arith.constant dense<0.000000e+00> : vector<16x1024xf32>
    %45 = tpu.matmul %41, %12, %cst_42 {dimension_numbers = #tpu.dot_dimension_numbers<[1], [0], [0], [1], [0, 0, 1, 1], [], []>} : vector<16x128xf32>, vector<128x1024xf32>, vector<16x1024xf32> -> vector<16x1024xf32>
    %46 = arith.mulf %45, %44 : vector<16x1024xf32>
    %cst_43 = arith.constant dense<0.000000e+00> : vector<16x128xf32>
    %47 = tpu.matmul %46, %13, %cst_43 {dimension_numbers = #tpu.dot_dimension_numbers<[1], [0], [0], [1], [0, 0, 1, 1], [], []>} : vector<16x1024xf32>, vector<1024x128xf32>, vector<16x128xf32> -> vector<16x128xf32>
    %48 = arith.mulf %47, %29 : vector<16x128xf32>
    %49 = arith.addf %48, %28 : vector<16x128xf32>
    %cst_44 = arith.constant 0.000000e+00 : f32
    %50 = vector.broadcast %cst_44 : f32 to vector<16x128xf32>
    %51 = arith.maximumf %49, %50 : vector<16x128xf32>
    %cst_45 = arith.constant dense<0.000000e+00> : vector<16x192xf32>
    %52 = tpu.matmul %22, %6, %cst_45 {dimension_numbers = #tpu.dot_dimension_numbers<[1], [0], [0], [1], [0, 0, 1, 1], [], []>} : vector<16x288xf32>, vector<288x192xf32>, vector<16x192xf32> -> vector<16x192xf32>
    %53 = vector.broadcast %7 : vector<1x192xf32> to vector<16x192xf32>
    %54 = arith.addf %52, %53 : vector<16x192xf32>
    %cst_46 = arith.constant dense<0.000000e+00> : vector<16x192xf32>
    %55 = tpu.matmul %51, %14, %cst_46 {dimension_numbers = #tpu.dot_dimension_numbers<[1], [0], [0], [1], [0, 0, 1, 1], [], []>} : vector<16x128xf32>, vector<128x192xf32>, vector<16x192xf32> -> vector<16x192xf32>
    %56 = arith.mulf %55, %54 : vector<16x192xf32>
    %cst_47 = arith.constant dense<0.000000e+00> : vector<16x128xf32>
    %57 = tpu.matmul %56, %15, %cst_47 {dimension_numbers = #tpu.dot_dimension_numbers<[1], [0], [0], [1], [0, 0, 1, 1], [], []>} : vector<16x192xf32>, vector<192x128xf32>, vector<16x128xf32> -> vector<16x128xf32>
    %58 = arith.mulf %57, %31 : vector<16x128xf32>
    %59 = arith.addf %58, %30 : vector<16x128xf32>
    %c0_48 = arith.constant 0 : index
    %c0_49 = arith.constant 0 : index
    %60 = vector.load %arg19[%c0_48, %c0_49] : memref<16x128xf32, #tpu.memory_space<vmem>>, vector<16x128xf32>
    tpu.vector_store %arg19[%c0_48, %c0_49], %59 {strides = array<i32>} : memref<16x128xf32, #tpu.memory_space<vmem>>, vector<16x128xf32>,
    return
  }
  func.func @transform_0(%arg0: i32) -> (i32, i32) {
    %c0_i32 = arith.constant 0 : i32
    %c0_i32_0 = arith.constant 0 : i32
    return %arg0, %c0_i32 : i32, i32
  }
  func.func @transform_1(%arg0: i32) -> (i32, i32) {
    %c0_i32 = arith.constant 0 : i32
    %c0_i32_0 = arith.constant 0 : i32
    return %arg0, %c0_i32 : i32, i32
  }
  func.func @transform_2(%arg0: i32) -> (i32, i32) {
    %c0_i32 = arith.constant 0 : i32
    %c0_i32_0 = arith.constant 0 : i32
    %c0_i32_1 = arith.constant 0 : i32
    return %c0_i32, %c0_i32_0 : i32, i32
  }
  func.func @transform_3(%arg0: i32) -> (i32, i32) {
    %c0_i32 = arith.constant 0 : i32
    %c0_i32_0 = arith.constant 0 : i32
    %c0_i32_1 = arith.constant 0 : i32
    return %c0_i32, %c0_i32_0 : i32, i32
  }
  func.func @transform_4(%arg0: i32) -> (i32, i32) {
    %c0_i32 = arith.constant 0 : i32
    %c0_i32_0 = arith.constant 0 : i32
    %c0_i32_1 = arith.constant 0 : i32
    return %c0_i32, %c0_i32_0 : i32, i32
  }
  func.func @transform_5(%arg0: i32) -> (i32, i32) {
    %c0_i32 = arith.constant 0 : i32
    %c0_i32_0 = arith.constant 0 : i32
    %c0_i32_1 = arith.constant 0 : i32
    return %c0_i32, %c0_i32_0 : i32, i32
  }
  func.func @transform_6(%arg0: i32) -> (i32, i32) {
    %c0_i32 = arith.constant 0 : i32
    %c0_i32_0 = arith.constant 0 : i32
    %c0_i32_1 = arith.constant 0 : i32
    return %c0_i32, %c0_i32_0 : i32, i32
  }
  func.func @transform_7(%arg0: i32) -> (i32, i32) {
    %c0_i32 = arith.constant 0 : i32
    %c0_i32_0 = arith.constant 0 : i32
    %c0_i32_1 = arith.constant 0 : i32
    return %c0_i32, %c0_i32_0 : i32, i32
  }
  func.func @transform_8(%arg0: i32) -> (i32, i32) {
    %c0_i32 = arith.constant 0 : i32
    %c0_i32_0 = arith.constant 0 : i32
    %c0_i32_1 = arith.constant 0 : i32
    return %c0_i32, %c0_i32_0 : i32, i32
  }
  func.func @transform_9(%arg0: i32) -> (i32, i32) {
    %c0_i32 = arith.constant 0 : i32
    %c0_i32_0 = arith.constant 0 : i32
    %c0_i32_1 = arith.constant 0 : i32
    return %c0_i32, %c0_i32_0 : i32, i32
  }
  func.func @transform_10(%arg0: i32) -> (i32, i32) {
    %c0_i32 = arith.constant 0 : i32
    %c0_i32_0 = arith.constant 0 : i32
    %c0_i32_1 = arith.constant 0 : i32
    return %c0_i32, %c0_i32_0 : i32, i32
  }
  func.func @transform_11(%arg0: i32) -> (i32, i32) {
    %c0_i32 = arith.constant 0 : i32
    %c0_i32_0 = arith.constant 0 : i32
    %c0_i32_1 = arith.constant 0 : i32
    return %c0_i32, %c0_i32_0 : i32, i32
  }
  func.func @transform_12(%arg0: i32) -> (i32, i32) {
    %c0_i32 = arith.constant 0 : i32
    %c0_i32_0 = arith.constant 0 : i32
    %c0_i32_1 = arith.constant 0 : i32
    return %c0_i32, %c0_i32_0 : i32, i32
  }
  func.func @transform_13(%arg0: i32) -> (i32, i32) {
    %c0_i32 = arith.constant 0 : i32
    %c0_i32_0 = arith.constant 0 : i32
    %c0_i32_1 = arith.constant 0 : i32
    return %c0_i32, %c0_i32_0 : i32, i32
  }
  func.func @transform_14(%arg0: i32) -> (i32, i32) {
    %c0_i32 = arith.constant 0 : i32
    %c0_i32_0 = arith.constant 0 : i32
    %c0_i32_1 = arith.constant 0 : i32
    return %c0_i32, %c0_i32_0 : i32, i32
  }
  func.func @transform_15(%arg0: i32) -> (i32, i32) {
    %c0_i32 = arith.constant 0 : i32
    %c0_i32_0 = arith.constant 0 : i32
    %c0_i32_1 = arith.constant 0 : i32
    return %c0_i32, %c0_i32_0 : i32, i32
  }
  func.func @transform_16(%arg0: i32) -> (i32, i32) {
    %c0_i32 = arith.constant 0 : i32
    %c0_i32_0 = arith.constant 0 : i32
    %c0_i32_1 = arith.constant 0 : i32
    return %c0_i32, %c0_i32_0 : i32, i32
  }
  func.func @transform_17(%arg0: i32) -> (i32, i32) {
    %c0_i32 = arith.constant 0 : i32
    %c0_i32_0 = arith.constant 0 : i32
    %c0_i32_1 = arith.constant 0 : i32
    return %c0_i32, %c0_i32_0 : i32, i32
  }
  func.func @transform_18(%arg0: i32) -> (i32, i32) {
    %c0_i32 = arith.constant 0 : i32
    %c0_i32_0 = arith.constant 0 : i32
    return %arg0, %c0_i32 : i32, i32
  }
}

</mosaic_0001>

<llo_original>
// kernel: tpu_custom_call.1
$region0: #{tpu_custom_call.1}
  #allocation0 [shape = 'u32[]', space=smem, size = 0x4, offset = 0x4, fixed_abs, tag = 'smem constant byte address 0x4 - core index']
  #allocation1 [shape = 'u32[144,128]{1,0:T(1,128)}', space=vmem, size = 0x12000, scoped, tag = 'internal scratch']
  %s0 = inlined_call_operand.vmem [shape: f32[16,8], index: 0, kind: input, shape index: {}]
  %s1 = inlined_call_operand.hbm [shape: f32[16,24], index: 1, kind: input, shape index: {}]
  %s2 = inlined_call_operand.hbm [shape: f32[8,288], index: 2, kind: input, shape index: {}]
  %s3 = inlined_call_operand.hbm [shape: f32[1,288], index: 3, kind: input, shape index: {}]
  %s4 = inlined_call_operand.hbm [shape: f32[288,768], index: 4, kind: input, shape index: {}]
  %s5 = inlined_call_operand.hbm [shape: f32[1,768], index: 5, kind: input, shape index: {}]
  %s6 = inlined_call_operand.hbm [shape: f32[288,1024], index: 6, kind: input, shape index: {}]
  %s7 = inlined_call_operand.hbm [shape: f32[1,1024], index: 7, kind: input, shape index: {}]
  %s8 = inlined_call_operand.hbm [shape: f32[288,192], index: 8, kind: input, shape index: {}]
  %s9 = inlined_call_operand.hbm [shape: f32[1,192], index: 9, kind: input, shape index: {}]
  %s10 = inlined_call_operand.hbm [shape: f32[288,768], index: 10, kind: input, shape index: {}]
  %s11 = inlined_call_operand.hbm [shape: f32[1,768], index: 11, kind: input, shape index: {}]
  %s12 = inlined_call_operand.hbm [shape: f32[24,768], index: 12, kind: input, shape index: {}]
  %s13 = inlined_call_operand.hbm [shape: f32[768,128], index: 13, kind: input, shape index: {}]
  %s14 = inlined_call_operand.hbm [shape: f32[128,1024], index: 14, kind: input, shape index: {}]
  %s15 = inlined_call_operand.hbm [shape: f32[1024,128], index: 15, kind: input, shape index: {}]
  %s16 = inlined_call_operand.vmem [shape: f32[128,192], index: 16, kind: input, shape index: {}]
  %s17 = inlined_call_operand.hbm [shape: f32[192,128], index: 17, kind: input, shape index: {}]
  %s18 = inlined_call_operand.hbm [shape: f32[16,128], index: 18, kind: output, shape index: {}]
  %s19 = sld [smem:[#allocation0]]
  $region146: #{tpu_custom_call.1} parent=0
    _
  %s21 = ssub.s32 1, %s19
  %s22 = scalar_select 0, %s21, %s19
  $region1: #{tpu_custom_call.1} parent=0
    #allocation2 [shape = 'u8[8192]{0}', space=vmem, size = 0x2000, scoped, tag = 'input window, operand 1, single buffered']
    #allocation3 [shape = 's32[1]{0}', space=sflag, size = 0x4, scoped, tag = 'scoped memory for tpu_custom_call.1']
    #allocation4 [shape = 's32[1]{0}', space=sflag, size = 0x4, scoped, tag = 'scoped memory for tpu_custom_call.1']
    #allocation5 [shape = 'u8[12288]{0}', space=vmem, size = 0x3000, scoped, tag = 'input window, operand 2, single buffered']
    #allocation6 [shape = 's32[1]{0}', space=sflag, size = 0x4, scoped, tag = 'scoped memory for tpu_custom_call.1']
    #allocation7 [shape = 'u8[1536]{0}', space=vmem, size = 0x800, scoped, tag = 'input window, operand 3, single buffered']
    #allocation8 [shape = 'u8[884736]{0}', space=vmem, size = 0xd8000, scoped, tag = 'input window, operand 4, single buffered']
    #allocation9 [shape = 's32[1]{0}', space=sflag, size = 0x4, scoped, tag = 'scoped memory for tpu_custom_call.1']
    #allocation10 [shape = 'u8[3072]{0}', space=vmem, size = 0xc00, scoped, tag = 'input window, operand 5, single buffered']
    #allocation11 [shape = 'u8[1179648]{0}', space=vmem, size = 0x120000, scoped, tag = 'input window, operand 6, single buffered']
    #allocation12 [shape = 's32[1]{0}', space=sflag, size = 0x4, scoped, tag = 'scoped memory for tpu_custom_call.1']
    #allocation13 [shape = 'u8[4096]{0}', space=vmem, size = 0x1000, scoped, tag = 'input window, operand 7, single buffered']
    #allocation14 [shape = 'u8[294912]{0}', space=vmem, size = 0x48000, scoped, tag = 'input window, operand 8, single buffered']
    #allocation15 [shape = 's32[1]{0}', space=sflag, size = 0x4, scoped, tag = 'scoped memory for tpu_custom_call.1']
    #allocation16 [shape = 'u8[1024]{0}', space=vmem, size = 0x400, scoped, tag = 'input window, operand 9, single buffered']
    #allocation17 [shape = 'u8[884736]{0}', space=vmem, size = 0xd8000, scoped, tag = 'input window, operand 10, single buffered']
    #allocation18 [shape = 's32[1]{0}', space=sflag, size = 0x4, scoped, tag = 'scoped memory for tpu_custom_call.1']
    #allocation19 [shape = 'u8[3072]{0}', space=vmem, size = 0xc00, scoped, tag = 'input window, operand 11, single buffered']
    #allocation20 [shape = 'u8[73728]{0}', space=vmem, size = 0x12000, scoped, tag = 'input window, operand 12, single buffered']
    #allocation21 [shape = 's32[1]{0}', space=sflag, size = 0x4, scoped, tag = 'scoped memory for tpu_custom_call.1']
    #allocation22 [shape = 'u8[393216]{0}', space=vmem, size = 0x60000, scoped, tag = 'input window, operand 13, single buffered']
    #allocation23 [shape = 'u8[524288]{0}', space=vmem, size = 0x80000, scoped, tag = 'input window, operand 14, single buffered']
    #allocation24 [shape = 's32[1]{0}', space=sflag, size = 0x4, scoped, tag = 'scoped memory for tpu_custom_call.1']
    #allocation25 [shape = 'u8[524288]{0}', space=vmem, size = 0x80000, scoped, tag = 'input window, operand 15, single buffered']
    #allocation26 [shape = 'u8[98304]{0}', space=vmem, size = 0x18000, scoped, tag = 'input window, operand 17, single buffered']
    #allocation27 [shape = 's32[1]{0}', space=sflag, size = 0x4, scoped, tag = 'scoped memory for tpu_custom_call.1']
    #allocation28 [shape = 'u8[8192]{0}', space=vmem, size = 0x2000, scoped, tag = 'output window, operand 0, single buffered']
    %23 = vsyncpa [#allocation3], 0
    %24 = vsyncpa [#allocation6], 0
    %25 = vsyncpa [#allocation9], 0
    %26 = vsyncpa [#allocation12], 0
    %27 = vsyncpa [#allocation15], 0
    %28 = vsyncpa [#allocation18], 0
    %29 = vsyncpa [#allocation21], 0
    %30 = vsyncpa [#allocation24], 0
    %31 = vsyncpa [#allocation27], 0
    %32 = vsyncpa [#allocation4], 0
    // Predicated region
    $region2: #{tpu_custom_call.1} parent=1 // pred_check
      _
    $region3: #{tpu_custom_call.1} parent=1 // pred_check_branch
      %34 = sbr.rel (0) target = $region5
    $region4: #{tpu_custom_call.1} parent=1 // pred_region
      _
    $region5: #{tpu_custom_call.1} parent=1 // pred_fallthru
      _
    // Predicated region
    $region6: #{tpu_custom_call.1} parent=1 // pred_check
      _
    $region7: #{tpu_custom_call.1} parent=1 // pred_check_branch
      %36 = sbr.rel (0) target = $region9
    $region8: #{tpu_custom_call.1} parent=1 // pred_region
      %s38 = ssub.s32 256, 256
      %39 = vsyncadd [#allocation3], %s38
      %s40 = sshll.u32 [#allocation2], 4
      %s41 = int_to_ptr.vmem [resolvable:$true] %s40
      %46 = dma.hbm_to_vmem [thread:$0]  %s1, 256, %s41, [#allocation3], 128, 128, 8
    $region9: #{tpu_custom_call.1} parent=1 // pred_fallthru
      _
    // Predicated region
    $region10: #{tpu_custom_call.1} parent=1 // pred_check
      _
    $region11: #{tpu_custom_call.1} parent=1 // pred_check_branch
      %48 = sbr.rel (0) target = $region13
    $region12: #{tpu_custom_call.1} parent=1 // pred_region
      %s50 = ssub.s32 384, 384
      %51 = vsyncadd [#allocation6], %s50
      %s53 = sshll.u32 [#allocation5], 4
      %s54 = int_to_ptr.vmem [resolvable:$true] %s53
      %56 = dma.hbm_to_vmem [thread:$0]  %s2, 384, %s54, [#allocation6]
    $region13: #{tpu_custom_call.1} parent=1 // pred_fallthru
      _
    // Predicated region
    $region14: #{tpu_custom_call.1} parent=1 // pred_check
      _
    $region15: #{tpu_custom_call.1} parent=1 // pred_check_branch
      %58 = sbr.rel (0) target = $region17
    $region16: #{tpu_custom_call.1} parent=1 // pred_region
      %s60 = ssub.s32 48, 48
      %61 = vsyncadd [#allocation6], %s60
      %s63 = sshll.u32 [#allocation7], 4
      %s64 = int_to_ptr.vmem [resolvable:$true] %s63
      %66 = dma.hbm_to_vmem [thread:$0]  %s3, 48, %s64, [#allocation6]
    $region17: #{tpu_custom_call.1} parent=1 // pred_fallthru
      _
    // Predicated region
    $region18: #{tpu_custom_call.1} parent=1 // pred_check
      _
    $region19: #{tpu_custom_call.1} parent=1 // pred_check_branch
      %68 = sbr.rel (0) target = $region21
    $region20: #{tpu_custom_call.1} parent=1 // pred_region
      %s70 = ssub.s32 27648, 27648
      %71 = vsyncadd [#allocation9], %s70
      %s72 = sshll.u32 [#allocation8], 4
      %s73 = int_to_ptr.vmem [resolvable:$true] %s72
      %78 = dma.hbm_to_vmem [thread:$0]  %s4, 27648, %s73, [#allocation9], 768, 768, 48
    $region21: #{tpu_custom_call.1} parent=1 // pred_fallthru
      _
    // Predicated region
    $region22: #{tpu_custom_call.1} parent=1 // pred_check
      _
    $region23: #{tpu_custom_call.1} parent=1 // pred_check_branch
      %80 = sbr.rel (0) target = $region25
    $region24: #{tpu_custom_call.1} parent=1 // pred_region
      %s82 = ssub.s32 96, 96
      %83 = vsyncadd [#allocation9], %s82
      %s85 = sshll.u32 [#allocation10], 4
      %s86 = int_to_ptr.vmem [resolvable:$true] %s85
      %88 = dma.hbm_to_vmem [thread:$0]  %s5, 96, %s86, [#allocation9]
    $region25: #{tpu_custom_call.1} parent=1 // pred_fallthru
      _
    // Predicated region
    $region26: #{tpu_custom_call.1} parent=1 // pred_check
      _
    $region27: #{tpu_custom_call.1} parent=1 // pred_check_branch
      %90 = sbr.rel (0) target = $region29
    $region28: #{tpu_custom_call.1} parent=1 // pred_region
      %s92 = ssub.s32 36864, 36864
      %93 = vsyncadd [#allocation12], %s92
      %s94 = sshll.u32 [#allocation11], 4
      %s95 = int_to_ptr.vmem [resolvable:$true] %s94
      %100 = dma.hbm_to_vmem [thread:$0]  %s6, 36864, %s95, [#allocation12], 1024, 1024, 64
    $region29: #{tpu_custom_call.1} parent=1 // pred_fallthru
      _
    // Predicated region
    $region30: #{tpu_custom_call.1} parent=1 // pred_check
      _
    $region31: #{tpu_custom_call.1} parent=1 // pred_check_branch
      %102 = sbr.rel (0) target = $region33
    $region32: #{tpu_custom_call.1} parent=1 // pred_region
      %s104 = ssub.s32 128, 128
      %105 = vsyncadd [#allocation12], %s104
      %s107 = sshll.u32 [#allocation13], 4
      %s108 = int_to_ptr.vmem [resolvable:$true] %s107
      %110 = dma.hbm_to_vmem [thread:$0]  %s7, 128, %s108, [#allocation12]
    $region33: #{tpu_custom_call.1} parent=1 // pred_fallthru
      _
    // Predicated region
    $region34: #{tpu_custom_call.1} parent=1 // pred_check
      _
    $region35: #{tpu_custom_call.1} parent=1 // pred_check_branch
      %112 = sbr.rel (0) target = $region37
    $region36: #{tpu_custom_call.1} parent=1 // pred_region
      %s114 = ssub.s32 9216, 9216
      %115 = vsyncadd [#allocation15], %s114
      %s116 = sshll.u32 [#allocation14], 4
      %s117 = int_to_ptr.vmem [resolvable:$true] %s116
      %122 = dma.hbm_to_vmem [thread:$0]  %s8, 9216, %s117, [#allocation15], 256, 256, 16
    $region37: #{tpu_custom_call.1} parent=1 // pred_fallthru
      _
    // Predicated region
    $region38: #{tpu_custom_call.1} parent=1 // pred_check
      _
    $region39: #{tpu_custom_call.1} parent=1 // pred_check_branch
      %124 = sbr.rel (0) target = $region41
    $region40: #{tpu_custom_call.1} parent=1 // pred_region
      %s126 = ssub.s32 32, 32
      %127 = vsyncadd [#allocation15], %s126
      %s129 = sshll.u32 [#allocation16], 4
      %s130 = int_to_ptr.vmem [resolvable:$true] %s129
      %132 = dma.hbm_to_vmem [thread:$0]  %s9, 32, %s130, [#allocation15]
    $region41: #{tpu_custom_call.1} parent=1 // pred_fallthru
      _
    // Predicated region
    $region42: #{tpu_custom_call.1} parent=1 // pred_check
      _
    $region43: #{tpu_custom_call.1} parent=1 // pred_check_branch
      %134 = sbr.rel (0) target = $region45
    $region44: #{tpu_custom_call.1} parent=1 // pred_region
      %s136 = ssub.s32 27648, 27648
      %137 = vsyncadd [#allocation18], %s136
      %s138 = sshll.u32 [#allocation17], 4
      %s139 = int_to_ptr.vmem [resolvable:$true] %s138
      %144 = dma.hbm_to_vmem [thread:$0]  %s10, 27648, %s139, [#allocation18], 768, 768, 48
    $region45: #{tpu_custom_call.1} parent=1 // pred_fallthru
      _
    // Predicated region
    $region46: #{tpu_custom_call.1} parent=1 // pred_check
      _
    $region47: #{tpu_custom_call.1} parent=1 // pred_check_branch
      %146 = sbr.rel (0) target = $region49
    $region48: #{tpu_custom_call.1} parent=1 // pred_region
      %s148 = ssub.s32 96, 96
      %149 = vsyncadd [#allocation18], %s148
      %s151 = sshll.u32 [#allocation19], 4
      %s152 = int_to_ptr.vmem [resolvable:$true] %s151
      %154 = dma.hbm_to_vmem [thread:$0]  %s11, 96, %s152, [#allocation18]
    $region49: #{tpu_custom_call.1} parent=1 // pred_fallthru
      _
    // Predicated region
    $region50: #{tpu_custom_call.1} parent=1 // pred_check
      _
    $region51: #{tpu_custom_call.1} parent=1 // pred_check_branch
      %156 = sbr.rel (0) target = $region53
    $region52: #{tpu_custom_call.1} parent=1 // pred_region
      %s158 = ssub.s32 2304, 2304
      %159 = vsyncadd [#allocation21], %s158
      %s160 = sshll.u32 [#allocation20], 4
      %s161 = int_to_ptr.vmem [resolvable:$true] %s160
      %166 = dma.hbm_to_vmem [thread:$0]  %s12, 2304, %s161, [#allocation21], 768, 768, 48
    $region53: #{tpu_custom_call.1} parent=1 // pred_fallthru
      _
    // Predicated region
    $region54: #{tpu_custom_call.1} parent=1 // pred_check
      _
    $region55: #{tpu_custom_call.1} parent=1 // pred_check_branch
      %168 = sbr.rel (0) target = $region57
    $region56: #{tpu_custom_call.1} parent=1 // pred_region
      %s170 = ssub.s32 12288, 12288
      %171 = vsyncadd [#allocation21], %s170
      %s172 = sshll.u32 [#allocation22], 4
      %s173 = int_to_ptr.vmem [resolvable:$true] %s172
      %178 = dma.hbm_to_vmem [thread:$0]  %s13, 12288, %s173, [#allocation21], 128, 128, 8
    $region57: #{tpu_custom_call.1} parent=1 // pred_fallthru
      _
    // Predicated region
    $region58: #{tpu_custom_call.1} parent=1 // pred_check
      _
    $region59: #{tpu_custom_call.1} parent=1 // pred_check_branch
      %180 = sbr.rel (0) target = $region61
    $region60: #{tpu_custom_call.1} parent=1 // pred_region
      %s182 = ssub.s32 16384, 16384
      %183 = vsyncadd [#allocation24], %s182
      %s184 = sshll.u32 [#allocation23], 4
      %s185 = int_to_ptr.vmem [resolvable:$true] %s184
      %190 = dma.hbm_to_vmem [thread:$0]  %s14, 16384, %s185, [#allocation24], 1024, 1024, 64
    $region61: #{tpu_custom_call.1} parent=1 // pred_fallthru
      _
    // Predicated region
    $region62: #{tpu_custom_call.1} parent=1 // pred_check
      _
    $region63: #{tpu_custom_call.1} parent=1 // pred_check_branch
      %192 = sbr.rel (0) target = $region65
    $region64: #{tpu_custom_call.1} parent=1 // pred_region
      %s194 = ssub.s32 16384, 16384
      %195 = vsyncadd [#allocation24], %s194
      %s196 = sshll.u32 [#allocation25], 4
      %s197 = int_to_ptr.vmem [resolvable:$true] %s196
      %202 = dma.hbm_to_vmem [thread:$0]  %s15, 16384, %s197, [#allocation24], 128, 128, 8
    $region65: #{tpu_custom_call.1} parent=1 // pred_fallthru
      _
    // Predicated region
    $region66: #{tpu_custom_call.1} parent=1 // pred_check
      _
    $region67: #{tpu_custom_call.1} parent=1 // pred_check_branch
      %204 = sbr.rel (0) target = $region69
    $region68: #{tpu_custom_call.1} parent=1 // pred_region
      _
    $region69: #{tpu_custom_call.1} parent=1 // pred_fallthru
      _
    // Predicated region
    $region70: #{tpu_custom_call.1} parent=1 // pred_check
      _
    $region71: #{tpu_custom_call.1} parent=1 // pred_check_branch
      %206 = sbr.rel (0) target = $region73
    $region72: #{tpu_custom_call.1} parent=1 // pred_region
      %s208 = ssub.s32 3072, 3072
      %209 = vsyncadd [#allocation27], %s208
      %s210 = sshll.u32 [#allocation26], 4
      %s211 = int_to_ptr.vmem [resolvable:$true] %s210
      %216 = dma.hbm_to_vmem [thread:$0]  %s17, 3072, %s211, [#allocation27], 128, 128, 8
    $region73: #{tpu_custom_call.1} parent=1 // pred_fallthru
      _
    // Predicated region
    $region74: #{tpu_custom_call.1} parent=1 // pred_check
      _
    $region75: #{tpu_custom_call.1} parent=1 // pred_check_branch
      %218 = sbr.rel (0) target = $region77
    $region76: #{tpu_custom_call.1} parent=1 // pred_region
      %219 = dma.done [#allocation3], 256
    $region77: #{tpu_custom_call.1} parent=1 // pred_fallthru
      _
    // Predicated region
    $region78: #{tpu_custom_call.1} parent=1 // pred_check
      _
    $region79: #{tpu_custom_call.1} parent=1 // pred_check_branch
      %221 = sbr.rel (0) target = $region81
    $region80: #{tpu_custom_call.1} parent=1 // pred_region
      %222 = dma.done [#allocation6], 384
    $region81: #{tpu_custom_call.1} parent=1 // pred_fallthru
      _
    // Predicated region
    $region82: #{tpu_custom_call.1} parent=1 // pred_check
      _
    $region83: #{tpu_custom_call.1} parent=1 // pred_check_branch
      %224 = sbr.rel (0) target = $region85
    $region84: #{tpu_custom_call.1} parent=1 // pred_region
      %225 = dma.done [#allocation6], 48
    $region85: #{tpu_custom_call.1} parent=1 // pred_fallthru
      _
    // Predicated region
    $region86: #{tpu_custom_call.1} parent=1 // pred_check
      _
    $region87: #{tpu_custom_call.1} parent=1 // pred_check_branch
      %227 = sbr.rel (0) target = $region89
    $region88: #{tpu_custom_call.1} parent=1 // pred_region
      %228 = dma.done [#allocation9], 27648
    $region89: #{tpu_custom_call.1} parent=1 // pred_fallthru
      _
    // Predicated region
    $region90: #{tpu_custom_call.1} parent=1 // pred_check
      _
    $region91: #{tpu_custom_call.1} parent=1 // pred_check_branch
      %230 = sbr.rel (0) target = $region93
    $region92: #{tpu_custom_call.1} parent=1 // pred_region
      %231 = dma.done [#allocation9], 96
    $region93: #{tpu_custom_call.1} parent=1 // pred_fallthru
      _
    // Predicated region
    $region94: #{tpu_custom_call.1} parent=1 // pred_check
      _
    $region95: #{tpu_custom_call.1} parent=1 // pred_check_branch
      %233 = sbr.rel (0) target = $region97
    $region96: #{tpu_custom_call.1} parent=1 // pred_region
      %234 = dma.done [#allocation12], 36864
    $region97: #{tpu_custom_call.1} parent=1 // pred_fallthru
      _
    // Predicated region
    $region98: #{tpu_custom_call.1} parent=1 // pred_check
      _
    $region99: #{tpu_custom_call.1} parent=1 // pred_check_branch
      %236 = sbr.rel (0) target = $region101
    $region100: #{tpu_custom_call.1} parent=1 // pred_region
      %237 = dma.done [#allocation12], 128
    $region101: #{tpu_custom_call.1} parent=1 // pred_fallthru
      _
    // Predicated region
    $region102: #{tpu_custom_call.1} parent=1 // pred_check
      _
    $region103: #{tpu_custom_call.1} parent=1 // pred_check_branch
      %239 = sbr.rel (0) target = $region105
    $region104: #{tpu_custom_call.1} parent=1 // pred_region
      %240 = dma.done [#allocation15], 9216
    $region105: #{tpu_custom_call.1} parent=1 // pred_fallthru
      _
    // Predicated region
    $region106: #{tpu_custom_call.1} parent=1 // pred_check
      _
    $region107: #{tpu_custom_call.1} parent=1 // pred_check_branch
      %242 = sbr.rel (0) target = $region109
    $region108: #{tpu_custom_call.1} parent=1 // pred_region
      %243 = dma.done [#allocation15], 32
    $region109: #{tpu_custom_call.1} parent=1 // pred_fallthru
      _
    // Predicated region
    $region110: #{tpu_custom_call.1} parent=1 // pred_check
      _
    $region111: #{tpu_custom_call.1} parent=1 // pred_check_branch
      %245 = sbr.rel (0) target = $region113
    $region112: #{tpu_custom_call.1} parent=1 // pred_region
      %246 = dma.done [#allocation18], 27648
    $region113: #{tpu_custom_call.1} parent=1 // pred_fallthru
      _
    // Predicated region
    $region114: #{tpu_custom_call.1} parent=1 // pred_check
      _
    $region115: #{tpu_custom_call.1} parent=1 // pred_check_branch
      %248 = sbr.rel (0) target = $region117
    $region116: #{tpu_custom_call.1} parent=1 // pred_region
      %249 = dma.done [#allocation18], 96
    $region117: #{tpu_custom_call.1} parent=1 // pred_fallthru
      _
    // Predicated region
    $region118: #{tpu_custom_call.1} parent=1 // pred_check
      _
    $region119: #{tpu_custom_call.1} parent=1 // pred_check_branch
      %251 = sbr.rel (0) target = $region121
    $region120: #{tpu_custom_call.1} parent=1 // pred_region
      %252 = dma.done [#allocation21], 2304
    $region121: #{tpu_custom_call.1} parent=1 // pred_fallthru
      _
    // Predicated region
    $region122: #{tpu_custom_call.1} parent=1 // pred_check
      _
    $region123: #{tpu_custom_call.1} parent=1 // pred_check_branch
      %254 = sbr.rel (0) target = $region125
    $region124: #{tpu_custom_call.1} parent=1 // pred_region
      %255 = dma.done [#allocation21], 12288
    $region125: #{tpu_custom_call.1} parent=1 // pred_fallthru
      _
    // Predicated region
    $region126: #{tpu_custom_call.1} parent=1 // pred_check
      _
    $region127: #{tpu_custom_call.1} parent=1 // pred_check_branch
      %257 = sbr.rel (0) target = $region129
    $region128: #{tpu_custom_call.1} parent=1 // pred_region
      %258 = dma.done [#allocation24], 16384
    $region129: #{tpu_custom_call.1} parent=1 // pred_fallthru
      _
    // Predicated region
    $region130: #{tpu_custom_call.1} parent=1 // pred_check
      _
    $region131: #{tpu_custom_call.1} parent=1 // pred_check_branch
      %260 = sbr.rel (0) target = $region133
    $region132: #{tpu_custom_call.1} parent=1 // pred_region
      %261 = dma.done [#allocation24], 16384
    $region133: #{tpu_custom_call.1} parent=1 // pred_fallthru
      _
    // Predicated region
    $region134: #{tpu_custom_call.1} parent=1 // pred_check
      _
    $region135: #{tpu_custom_call.1} parent=1 // pred_check_branch
      %263 = sbr.rel (0) target = $region137
    $region136: #{tpu_custom_call.1} parent=1 // pred_region
      %264 = dma.done [#allocation27], 3072
    $region137: #{tpu_custom_call.1} parent=1 // pred_fallthru
      _
    %v265 = vld [vmem:[#allocation5] sm:$0xff]
    %v266 = vld [vmem:[#allocation5 + $0x8] sm:$0xff]
    %v267 = vld [vmem:[#allocation5 + $0x10] sm:$0xff]
    %v268 = vld [vmem:[#allocation7] sm:$0x7]
    %v269 = vld [vmem:[#allocation8] sm:$0xff]
    %v270 = vld [vmem:[#allocation8 + $0x8] sm:$0xff]
    %v271 = vld [vmem:[#allocation8 + $0x10] sm:$0xff]
    %v272 = vld [vmem:[#allocation8 + $0x18] sm:$0xff]
    %v273 = vld [vmem:[#allocation8 + $0x20] sm:$0xff]
    %v274 = vld [vmem:[#allocation8 + $0x28] sm:$0xff]
    %v275 = vld [vmem:[#allocation8 + $0x30] sm:$0xff]
    %v276 = vld [vmem:[#allocation8 + $0x38] sm:$0xff]
    %v277 = vld [vmem:[#allocation8 + $0x40] sm:$0xff]
    %v278 = vld [vmem:[#allocation8 + $0x48] sm:$0xff]
    %v279 = vld [vmem:[#allocation8 + $0x50] sm:$0xff]
    %v280 = vld [vmem:[#allocation8 + $0x58] sm:$0xff]
    %v281 = vld [vmem:[#allocation8 + $0x60] sm:$0xff]
    %v282 = vld [vmem:[#allocation8 + $0x68] sm:$0xff]
    %v283 = vld [vmem:[#allocation8 + $0x70] sm:$0xff]
    %v284 = vld [vmem:[#allocation8 + $0x78] sm:$0xff]
    %v285 = vld [vmem:[#allocation8 + $0x80] sm:$0xff]
    %v286 = vld [vmem:[#allocation8 + $0x88] sm:$0xff]
    %v287 = vld [vmem:[#allocation8 + $0x90] sm:$0xff]
    %v288 = vld [vmem:[#allocation8 + $0x98] sm:$0xff]
    %v289 = vld [vmem:[#allocation8 + $0xa0] sm:$0xff]
    %v290 = vld [vmem:[#allocation8 + $0xa8] sm:$0xff]
    %v291 = vld [vmem:[#allocation8 + $0xb0] sm:$0xff]
    %v292 = vld [vmem:[#allocation8 + $0xb8] sm:$0xff]
    %v293 = vld [vmem:[#allocation8 + $0xc0] sm:$0xff]
    %v294 = vld [vmem:[#allocation8 + $0xc8] sm:$0xff]
    %v295 = vld [vmem:[#allocation8 + $0xd0] sm:$0xff]
    %v296 = vld [vmem:[#allocation8 + $0xd8] sm:$0xff]
    %v297 = vld [vmem:[#allocation8 + $0xe0] sm:$0xff]
    %v298 = vld [vmem:[#allocation8 + $0xe8] sm:$0xff]
    %v299 = vld [vmem:[#allocation8 + $0xf0] sm:$0xff]
    %v300 = vld [vmem:[#allocation8 + $0xf8] sm:$0xff]
    %v301 = vld [vmem:[#allocation8 + $0x100] sm:$0xff]
    %v302 = vld [vmem:[#allocation8 + $0x108] sm:$0xff]
    %v303 = vld [vmem:[#allocation8 + $0x110] sm:$0xff]
    %v304 = vld [vmem:[#allocation8 + $0x118] sm:$0xff]
    %v305 = vld [vmem:[#allocation8 + $0x120] sm:$0xff]
    %v306 = vld [vmem:[#allocation8 + $0x128] sm:$0xff]
    %v307 = vld [vmem:[#allocation8 + $0x130] sm:$0xff]
    %v308 = vld [vmem:[#allocation8 + $0x138] sm:$0xff]
    %v309 = vld [vmem:[#allocation8 + $0x140] sm:$0xff]
    %v310 = vld [vmem:[#allocation8 + $0x148] sm:$0xff]
    %v311 = vld [vmem:[#allocation8 + $0x150] sm:$0xff]
    %v312 = vld [vmem:[#allocation8 + $0x158] sm:$0xff]
    %v313 = vld [vmem:[#allocation8 + $0x160] sm:$0xff]
    %v314 = vld [vmem:[#allocation8 + $0x168] sm:$0xff]
    %v315 = vld [vmem:[#allocation8 + $0x170] sm:$0xff]
    %v316 = vld [vmem:[#allocation8 + $0x178] sm:$0xff]
    %v317 = vld [vmem:[#allocation8 + $0x180] sm:$0xff]
    %v318 = vld [vmem:[#allocation8 + $0x188] sm:$0xff]
    %v319 = vld [vmem:[#allocation8 + $0x190] sm:$0xff]
    %v320 = vld [vmem:[#allocation8 + $0x198] sm:$0xff]
    %v321 = vld [vmem:[#allocation8 + $0x1a0] sm:$0xff]
    %v322 = vld [vmem:[#allocation8 + $0x1a8] sm:$0xff]
    %v323 = vld [vmem:[#allocation8 + $0x1b0] sm:$0xff]
    %v324 = vld [vmem:[#allocation8 + $0x1b8] sm:$0xff]
    %v325 = vld [vmem:[#allocation8 + $0x1c0] sm:$0xff]
    %v326 = vld [vmem:[#allocation8 + $0x1c8] sm:$0xff]
    %v327 = vld [vmem:[#allocation8 + $0x1d0] sm:$0xff]
    %v328 = vld [vmem:[#allocation8 + $0x1d8] sm:$0xff]
    %v329 = vld [vmem:[#allocation8 + $0x1e0] sm:$0xff]
    %v330 = vld [vmem:[#allocation8 + $0x1e8] sm:$0xff]
    %v331 = vld [vmem:[#allocation8 + $0x1f0] sm:$0xff]
    %v332 = vld [vmem:[#allocation8 + $0x1f8] sm:$0xff]
    %v333 = vld [vmem:[#allocation8 + $0x200] sm:$0xff]
    %v334 = vld [vmem:[#allocation8 + $0x208] sm:$0xff]
    %v335 = vld [vmem:[#allocation8 + $0x210] sm:$0xff]
    %v336 = vld [vmem:[#allocation8 + $0x218] sm:$0xff]
    %v337 = vld [vmem:[#allocation8 + $0x220] sm:$0xff]
    %v338 = vld [vmem:[#allocation8 + $0x228] sm:$0xff]
    %v339 = vld [vmem:[#allocation8 + $0x230] sm:$0xff]
    %v340 = vld [vmem:[#allocation8 + $0x238] sm:$0xff]
    %v341 = vld [vmem:[#allocation8 + $0x240] sm:$0xff]
    %v342 = vld [vmem:[#allocation8 + $0x248] sm:$0xff]
    %v343 = vld [vmem:[#allocation8 + $0x250] sm:$0xff]
    %v344 = vld [vmem:[#allocation8 + $0x258] sm:$0xff]
    %v345 = vld [vmem:[#allocation8 + $0x260] sm:$0xff]
    %v346 = vld [vmem:[#allocation8 + $0x268] sm:$0xff]
    %v347 = vld [vmem:[#allocation8 + $0x270] sm:$0xff]
    %v348 = vld [vmem:[#allocation8 + $0x278] sm:$0xff]
    %v349 = vld [vmem:[#allocation8 + $0x280] sm:$0xff]
    %v350 = vld [vmem:[#allocation8 + $0x288] sm:$0xff]
    %v351 = vld [vmem:[#allocation8 + $0x290] sm:$0xff]
    %v352 = vld [vmem:[#allocation8 + $0x298] sm:$0xff]
    %v353 = vld [vmem:[#allocation8 + $0x2a0] sm:$0xff]
    %v354 = vld [vmem:[#allocation8 + $0x2a8] sm:$0xff]
    %v355 = vld [vmem:[#allocation8 + $0x2b0] sm:$0xff]
    %v356 = vld [vmem:[#allocation8 + $0x2b8] sm:$0xff]
    %v357 = vld [vmem:[#allocation8 + $0x2c0] sm:$0xff]
    %v358 = vld [vmem:[#allocation8 + $0x2c8] sm:$0xff]
    %v359 = vld [vmem:[#allocation8 + $0x2d0] sm:$0xff]
    %v360 = vld [vmem:[#allocation8 + $0x2d8] sm:$0xff]
    %v361 = vld [vmem:[#allocation8 + $0x2e0] sm:$0xff]
    %v362 = vld [vmem:[#allocation8 + $0x2e8] sm:$0xff]
    %v363 = vld [vmem:[#allocation8 + $0x2f0] sm:$0xff]
    %v364 = vld [vmem:[#allocation8 + $0x2f8] sm:$0xff]
    %v365 = vld [vmem:[#allocation8 + $0x300] sm:$0xff]
    %v366 = vld [vmem:[#allocation8 + $0x308] sm:$0xff]
    %v367 = vld [vmem:[#allocation8 + $0x310] sm:$0xff]
    %v368 = vld [vmem:[#allocation8 + $0x318] sm:$0xff]
    %v369 = vld [vmem:[#allocation8 + $0x320] sm:$0xff]
    %v370 = vld [vmem:[#allocation8 + $0x328] sm:$0xff]
    %v371 = vld [vmem:[#allocation8 + $0x330] sm:$0xff]
    %v372 = vld [vmem:[#allocation8 + $0x338] sm:$0xff]
    %v373 = vld [vmem:[#allocation8 + $0x340] sm:$0xff]
    %v374 = vld [vmem:[#allocation8 + $0x348] sm:$0xff]
    %v375 = vld [vmem:[#allocation8 + $0x350] sm:$0xff]
    %v376 = vld [vmem:[#allocation8 + $0x358] sm:$0xff]
    %v377 = vld [vmem:[#allocation8 + $0x360] sm:$0xff]
    %v378 = vld [vmem:[#allocation8 + $0x368] sm:$0xff]
    %v379 = vld [vmem:[#allocation8 + $0x370] sm:$0xff]
    %v380 = vld [vmem:[#allocation8 + $0x378] sm:$0xff]
    %v381 = vld [vmem:[#allocation8 + $0x380] sm:$0xff]
    %v382 = vld [vmem:[#allocation8 + $0x388] sm:$0xff]
    %v383 = vld [vmem:[#allocation8 + $0x390] sm:$0xff]
    %v384 = vld [vmem:[#allocation8 + $0x398] sm:$0xff]
    %v385 = vld [vmem:[#allocation8 + $0x3a0] sm:$0xff]
    %v386 = vld [vmem:[#allocation8 + $0x3a8] sm:$0xff]
    %v387 = vld [vmem:[#allocation8 + $0x3b0] sm:$0xff]
    %v388 = vld [vmem:[#allocation8 + $0x3b8] sm:$0xff]
    %v389 = vld [vmem:[#allocation8 + $0x3c0] sm:$0xff]
    %v390 = vld [vmem:[#allocation8 + $0x3c8] sm:$0xff]
    %v391 = vld [vmem:[#allocation8 + $0x3d0] sm:$0xff]
    %v392 = vld [vmem:[#allocation8 + $0x3d8] sm:$0xff]
    %v393 = vld [vmem:[#allocation8 + $0x3e0] sm:$0xff]
    %v394 = vld [vmem:[#allocation8 + $0x3e8] sm:$0xff]
    %v395 = vld [vmem:[#allocation8 + $0x3f0] sm:$0xff]
    %v396 = vld [vmem:[#allocation8 + $0x3f8] sm:$0xff]
    %v397 = vld [vmem:[#allocation8 + $0x400] sm:$0xff]
    %v398 = vld [vmem:[#allocation8 + $0x408] sm:$0xff]
    %v399 = vld [vmem:[#allocation8 + $0x410] sm:$0xff]
    %v400 = vld [vmem:[#allocation8 + $0x418] sm:$0xff]
    %v401 = vld [vmem:[#allocation8 + $0x420] sm:$0xff]
    %v402 = vld [vmem:[#allocation8 + $0x428] sm:$0xff]
    %v403 = vld [vmem:[#allocation8 + $0x430] sm:$0xff]
    %v404 = vld [vmem:[#allocation8 + $0x438] sm:$0xff]
    %v405 = vld [vmem:[#allocation8 + $0x440] sm:$0xff]
    %v406 = vld [vmem:[#allocation8 + $0x448] sm:$0xff]
    %v407 = vld [vmem:[#allocation8 + $0x450] sm:$0xff]
    %v408 = vld [vmem:[#allocation8 + $0x458] sm:$0xff]
    %v409 = vld [vmem:[#allocation8 + $0x460] sm:$0xff]
    %v410 = vld [vmem:[#allocation8 + $0x468] sm:$0xff]
    %v411 = vld [vmem:[#allocation8 + $0x470] sm:$0xff]
    %v412 = vld [vmem:[#allocation8 + $0x478] sm:$0xff]
    %v413 = vld [vmem:[#allocation8 + $0x480] sm:$0xff]
    %v414 = vld [vmem:[#allocation8 + $0x488] sm:$0xff]
    %v415 = vld [vmem:[#allocation8 + $0x490] sm:$0xff]
    %v416 = vld [vmem:[#allocation8 + $0x498] sm:$0xff]
    %v417 = vld [vmem:[#allocation8 + $0x4a0] sm:$0xff]
    %v418 = vld [vmem:[#allocation8 + $0x4a8] sm:$0xff]
    %v419 = vld [vmem:[#allocation8 + $0x4b0] sm:$0xff]
    %v420 = vld [vmem:[#allocation8 + $0x4b8] sm:$0xff]
    %v421 = vld [vmem:[#allocation8 + $0x4c0] sm:$0xff]
    %v422 = vld [vmem:[#allocation8 + $0x4c8] sm:$0xff]
    %v423 = vld [vmem:[#allocation8 + $0x4d0] sm:$0xff]
    %v424 = vld [vmem:[#allocation8 + $0x4d8] sm:$0xff]
    %v425 = vld [vmem:[#allocation8 + $0x4e0] sm:$0xff]
    %v426 = vld [vmem:[#allocation8 + $0x4e8] sm:$0xff]
    %v427 = vld [vmem:[#allocation8 + $0x4f0] sm:$0xff]
    %v428 = vld [vmem:[#allocation8 + $0x4f8] sm:$0xff]
    %v429 = vld [vmem:[#allocation8 + $0x500] sm:$0xff]
    %v430 = vld [vmem:[#allocation8 + $0x508] sm:$0xff]
    %v431 = vld [vmem:[#allocation8 + $0x510] sm:$0xff]
    %v432 = vld [vmem:[#allocation8 + $0x518] sm:$0xff]
    %v433 = vld [vmem:[#allocation8 + $0x520] sm:$0xff]
    %v434 = vld [vmem:[#allocation8 + $0x528] sm:$0xff]
    %v435 = vld [vmem:[#allocation8 + $0x530] sm:$0xff]
    %v436 = vld [vmem:[#allocation8 + $0x538] sm:$0xff]
    %v437 = vld [vmem:[#allocation8 + $0x540] sm:$0xff]
    %v438 = vld [vmem:[#allocation8 + $0x548] sm:$0xff]
    %v439 = vld [vmem:[#allocation8 + $0x550] sm:$0xff]
    %v440 = vld [vmem:[#allocation8 + $0x558] sm:$0xff]
    %v441 = vld [vmem:[#allocation8 + $0x560] sm:$0xff]
    %v442 = vld [vmem:[#allocation8 + $0x568] sm:$0xff]
    %v443 = vld [vmem:[#allocation8 + $0x570] sm:$0xff]
    %v444 = vld [vmem:[#allocation8 + $0x578] sm:$0xff]
    %v445 = vld [vmem:[#allocation8 + $0x580] sm:$0xff]
    %v446 = vld [vmem:[#allocation8 + $0x588] sm:$0xff]
    %v447 = vld [vmem:[#allocation8 + $0x590] sm:$0xff]
    %v448 = vld [vmem:[#allocation8 + $0x598] sm:$0xff]
    %v449 = vld [vmem:[#allocation8 + $0x5a0] sm:$0xff]
    %v450 = vld [vmem:[#allocation8 + $0x5a8] sm:$0xff]
    %v451 = vld [vmem:[#allocation8 + $0x5b0] sm:$0xff]
    %v452 = vld [vmem:[#allocation8 + $0x5b8] sm:$0xff]
    %v453 = vld [vmem:[#allocation8 + $0x5c0] sm:$0xff]
    %v454 = vld [vmem:[#allocation8 + $0x5c8] sm:$0xff]
    %v455 = vld [vmem:[#allocation8 + $0x5d0] sm:$0xff]
    %v456 = vld [vmem:[#allocation8 + $0x5d8] sm:$0xff]
    %v457 = vld [vmem:[#allocation8 + $0x5e0] sm:$0xff]
    %v458 = vld [vmem:[#allocation8 + $0x5e8] sm:$0xff]
    %v459 = vld [vmem:[#allocation8 + $0x5f0] sm:$0xff]
    %v460 = vld [vmem:[#allocation8 + $0x5f8] sm:$0xff]
    %v461 = vld [vmem:[#allocation8 + $0x600] sm:$0xff]
    %v462 = vld [vmem:[#allocation8 + $0x608] sm:$0xff]
    %v463 = vld [vmem:[#allocation8 + $0x610] sm:$0xff]
    %v464 = vld [vmem:[#allocation8 + $0x618] sm:$0xff]
    %v465 = vld [vmem:[#allocation8 + $0x620] sm:$0xff]
    %v466 = vld [vmem:[#allocation8 + $0x628] sm:$0xff]
    %v467 = vld [vmem:[#allocation8 + $0x630] sm:$0xff]
    %v468 = vld [vmem:[#allocation8 + $0x638] sm:$0xff]
    %v469 = vld [vmem:[#allocation8 + $0x640] sm:$0xff]
    %v470 = vld [vmem:[#allocation8 + $0x648] sm:$0xff]
    %v471 = vld [vmem:[#allocation8 + $0x650] sm:$0xff]
    %v472 = vld [vmem:[#allocation8 + $0x658] sm:$0xff]
    %v473 = vld [vmem:[#allocation8 + $0x660] sm:$0xff]
    %v474 = vld [vmem:[#allocation8 + $0x668] sm:$0xff]
    %v475 = vld [vmem:[#allocation8 + $0x670] sm:$0xff]
    %v476 = vld [vmem:[#allocation8 + $0x678] sm:$0xff]
    %v477 = vld [vmem:[#allocation8 + $0x680] sm:$0xff]
    %v478 = vld [vmem:[#allocation8 + $0x688] sm:$0xff]
    %v479 = vld [vmem:[#allocation8 + $0x690] sm:$0xff]
    %v480 = vld [vmem:[#allocation8 + $0x698] sm:$0xff]
    %v481 = vld [vmem:[#allocation8 + $0x6a0] sm:$0xff]
    %v482 = vld [vmem:[#allocation8 + $0x6a8] sm:$0xff]
    %v483 = vld [vmem:[#allocation8 + $0x6b0] sm:$0xff]
    %v484 = vld [vmem:[#allocation8 + $0x6b8] sm:$0xff]
    %v485 = vld [vmem:[#allocation10] sm:$0x3f]
    %v486 = vld [vmem:[#allocation11] sm:$0xff]
    %v487 = vld [vmem:[#allocation11 + $0x8] sm:$0xff]
    %v488 = vld [vmem:[#allocation11 + $0x10] sm:$0xff]
    %v489 = vld [vmem:[#allocation11 + $0x18] sm:$0xff]
    %v490 = vld [vmem:[#allocation11 + $0x20] sm:$0xff]
    %v491 = vld [vmem:[#allocation11 + $0x28] sm:$0xff]
    %v492 = vld [vmem:[#allocation11 + $0x30] sm:$0xff]
    %v493 = vld [vmem:[#allocation11 + $0x38] sm:$0xff]
    %v494 = vld [vmem:[#allocation11 + $0x40] sm:$0xff]
    %v495 = vld [vmem:[#allocation11 + $0x48] sm:$0xff]
    %v496 = vld [vmem:[#allocation11 + $0x50] sm:$0xff]
    %v497 = vld [vmem:[#allocation11 + $0x58] sm:$0xff]
    %v498 = vld [vmem:[#allocation11 + $0x60] sm:$0xff]
    %v499 = vld [vmem:[#allocation11 + $0x68] sm:$0xff]
    %v500 = vld [vmem:[#allocation11 + $0x70] sm:$0xff]
    %v501 = vld [vmem:[#allocation11 + $0x78] sm:$0xff]
    %v502 = vld [vmem:[#allocation11 + $0x80] sm:$0xff]
    %v503 = vld [vmem:[#allocation11 + $0x88] sm:$0xff]
    %v504 = vld [vmem:[#allocation11 + $0x90] sm:$0xff]
    %v505 = vld [vmem:[#allocation11 + $0x98] sm:$0xff]
    %v506 = vld [vmem:[#allocation11 + $0xa0] sm:$0xff]
    %v507 = vld [vmem:[#allocation11 + $0xa8] sm:$0xff]
    %v508 = vld [vmem:[#allocation11 + $0xb0] sm:$0xff]
    %v509 = vld [vmem:[#allocation11 + $0xb8] sm:$0xff]
    %v510 = vld [vmem:[#allocation11 + $0xc0] sm:$0xff]
    %v511 = vld [vmem:[#allocation11 + $0xc8] sm:$0xff]
    %v512 = vld [vmem:[#allocation11 + $0xd0] sm:$0xff]
    %v513 = vld [vmem:[#allocation11 + $0xd8] sm:$0xff]
    %v514 = vld [vmem:[#allocation11 + $0xe0] sm:$0xff]
    %v515 = vld [vmem:[#allocation11 + $0xe8] sm:$0xff]
    %v516 = vld [vmem:[#allocation11 + $0xf0] sm:$0xff]
    %v517 = vld [vmem:[#allocation11 + $0xf8] sm:$0xff]
    %v518 = vld [vmem:[#allocation11 + $0x100] sm:$0xff]
    %v519 = vld [vmem:[#allocation11 + $0x108] sm:$0xff]
    %v520 = vld [vmem:[#allocation11 + $0x110] sm:$0xff]
    %v521 = vld [vmem:[#allocation11 + $0x118] sm:$0xff]
    %v522 = vld [vmem:[#allocation11 + $0x120] sm:$0xff]
    %v523 = vld [vmem:[#allocation11 + $0x128] sm:$0xff]
    %v524 = vld [vmem:[#allocation11 + $0x130] sm:$0xff]
    %v525 = vld [vmem:[#allocation11 + $0x138] sm:$0xff]
    %v526 = vld [vmem:[#allocation11 + $0x140] sm:$0xff]
    %v527 = vld [vmem:[#allocation11 + $0x148] sm:$0xff]
    %v528 = vld [vmem:[#allocation11 + $0x150] sm:$0xff]
    %v529 = vld [vmem:[#allocation11 + $0x158] sm:$0xff]
    %v530 = vld [vmem:[#allocation11 + $0x160] sm:$0xff]
    %v531 = vld [vmem:[#allocation11 + $0x168] sm:$0xff]
    %v532 = vld [vmem:[#allocation11 + $0x170] sm:$0xff]
    %v533 = vld [vmem:[#allocation11 + $0x178] sm:$0xff]
    %v534 = vld [vmem:[#allocation11 + $0x180] sm:$0xff]
    %v535 = vld [vmem:[#allocation11 + $0x188] sm:$0xff]
    %v536 = vld [vmem:[#allocation11 + $0x190] sm:$0xff]
    %v537 = vld [vmem:[#allocation11 + $0x198] sm:$0xff]
    %v538 = vld [vmem:[#allocation11 + $0x1a0] sm:$0xff]
    %v539 = vld [vmem:[#allocation11 + $0x1a8] sm:$0xff]
    %v540 = vld [vmem:[#allocation11 + $0x1b0] sm:$0xff]
    %v541 = vld [vmem:[#allocation11 + $0x1b8] sm:$0xff]
    %v542 = vld [vmem:[#allocation11 + $0x1c0] sm:$0xff]
    %v543 = vld [vmem:[#allocation11 + $0x1c8] sm:$0xff]
    %v544 = vld [vmem:[#allocation11 + $0x1d0] sm:$0xff]
    %v545 = vld [vmem:[#allocation11 + $0x1d8] sm:$0xff]
    %v546 = vld [vmem:[#allocation11 + $0x1e0] sm:$0xff]
    %v547 = vld [vmem:[#allocation11 + $0x1e8] sm:$0xff]
    %v548 = vld [vmem:[#allocation11 + $0x1f0] sm:$0xff]
    %v549 = vld [vmem:[#allocation11 + $0x1f8] sm:$0xff]
    %v550 = vld [vmem:[#allocation11 + $0x200] sm:$0xff]
    %v551 = vld [vmem:[#allocation11 + $0x208] sm:$0xff]
    %v552 = vld [vmem:[#allocation11 + $0x210] sm:$0xff]
    %v553 = vld [vmem:[#allocation11 + $0x218] sm:$0xff]
    %v554 = vld [vmem:[#allocation11 + $0x220] sm:$0xff]
    %v555 = vld [vmem:[#allocation11 + $0x228] sm:$0xff]
    %v556 = vld [vmem:[#allocation11 + $0x230] sm:$0xff]
    %v557 = vld [vmem:[#allocation11 + $0x238] sm:$0xff]
    %v558 = vld [vmem:[#allocation11 + $0x240] sm:$0xff]
    %v559 = vld [vmem:[#allocation11 + $0x248] sm:$0xff]
    %v560 = vld [vmem:[#allocation11 + $0x250] sm:$0xff]
    %v561 = vld [vmem:[#allocation11 + $0x258] sm:$0xff]
    %v562 = vld [vmem:[#allocation11 + $0x260] sm:$0xff]
    %v563 = vld [vmem:[#allocation11 + $0x268] sm:$0xff]
    %v564 = vld [vmem:[#allocation11 + $0x270] sm:$0xff]
    %v565 = vld [vmem:[#allocation11 + $0x278] sm:$0xff]
    %v566 = vld [vmem:[#allocation11 + $0x280] sm:$0xff]
    %v567 = vld [vmem:[#allocation11 + $0x288] sm:$0xff]
    %v568 = vld [vmem:[#allocation11 + $0x290] sm:$0xff]
    %v569 = vld [vmem:[#allocation11 + $0x298] sm:$0xff]
    %v570 = vld [vmem:[#allocation11 + $0x2a0] sm:$0xff]
    %v571 = vld [vmem:[#allocation11 + $0x2a8] sm:$0xff]
    %v572 = vld [vmem:[#allocation11 + $0x2b0] sm:$0xff]
    %v573 = vld [vmem:[#allocation11 + $0x2b8] sm:$0xff]
    %v574 = vld [vmem:[#allocation11 + $0x2c0] sm:$0xff]
    %v575 = vld [vmem:[#allocation11 + $0x2c8] sm:$0xff]
    %v576 = vld [vmem:[#allocation11 + $0x2d0] sm:$0xff]
    %v577 = vld [vmem:[#allocation11 + $0x2d8] sm:$0xff]
    %v578 = vld [vmem:[#allocation11 + $0x2e0] sm:$0xff]
    %v579 = vld [vmem:[#allocation11 + $0x2e8] sm:$0xff]
    %v580 = vld [vmem:[#allocation11 + $0x2f0] sm:$0xff]
    %v581 = vld [vmem:[#allocation11 + $0x2f8] sm:$0xff]
    %v582 = vld [vmem:[#allocation11 + $0x300] sm:$0xff]
    %v583 = vld [vmem:[#allocation11 + $0x308] sm:$0xff]
    %v584 = vld [vmem:[#allocation11 + $0x310] sm:$0xff]
    %v585 = vld [vmem:[#allocation11 + $0x318] sm:$0xff]
    %v586 = vld [vmem:[#allocation11 + $0x320] sm:$0xff]
    %v587 = vld [vmem:[#allocation11 + $0x328] sm:$0xff]
    %v588 = vld [vmem:[#allocation11 + $0x330] sm:$0xff]
    %v589 = vld [vmem:[#allocation11 + $0x338] sm:$0xff]
    %v590 = vld [vmem:[#allocation11 + $0x340] sm:$0xff]
    %v591 = vld [vmem:[#allocation11 + $0x348] sm:$0xff]
    %v592 = vld [vmem:[#allocation11 + $0x350] sm:$0xff]
    %v593 = vld [vmem:[#allocation11 + $0x358] sm:$0xff]
    %v594 = vld [vmem:[#allocation11 + $0x360] sm:$0xff]
    %v595 = vld [vmem:[#allocation11 + $0x368] sm:$0xff]
    %v596 = vld [vmem:[#allocation11 + $0x370] sm:$0xff]
    %v597 = vld [vmem:[#allocation11 + $0x378] sm:$0xff]
    %v598 = vld [vmem:[#allocation11 + $0x380] sm:$0xff]
    %v599 = vld [vmem:[#allocation11 + $0x388] sm:$0xff]
    %v600 = vld [vmem:[#allocation11 + $0x390] sm:$0xff]
    %v601 = vld [vmem:[#allocation11 + $0x398] sm:$0xff]
    %v602 = vld [vmem:[#allocation11 + $0x3a0] sm:$0xff]
    %v603 = vld [vmem:[#allocation11 + $0x3a8] sm:$0xff]
    %v604 = vld [vmem:[#allocation11 + $0x3b0] sm:$0xff]
    %v605 = vld [vmem:[#allocation11 + $0x3b8] sm:$0xff]
    %v606 = vld [vmem:[#allocation11 + $0x3c0] sm:$0xff]
    %v607 = vld [vmem:[#allocation11 + $0x3c8] sm:$0xff]
    %v608 = vld [vmem:[#allocation11 + $0x3d0] sm:$0xff]
    %v609 = vld [vmem:[#allocation11 + $0x3d8] sm:$0xff]
    %v610 = vld [vmem:[#allocation11 + $0x3e0] sm:$0xff]
    %v611 = vld [vmem:[#allocation11 + $0x3e8] sm:$0xff]
    %v612 = vld [vmem:[#allocation11 + $0x3f0] sm:$0xff]
    %v613 = vld [vmem:[#allocation11 + $0x3f8] sm:$0xff]
    %v614 = vld [vmem:[#allocation11 + $0x400] sm:$0xff]
    %v615 = vld [vmem:[#allocation11 + $0x408] sm:$0xff]
    %v616 = vld [vmem:[#allocation11 + $0x410] sm:$0xff]
    %v617 = vld [vmem:[#allocation11 + $0x418] sm:$0xff]
    %v618 = vld [vmem:[#allocation11 + $0x420] sm:$0xff]
    %v619 = vld [vmem:[#allocation11 + $0x428] sm:$0xff]
    %v620 = vld [vmem:[#allocation11 + $0x430] sm:$0xff]
    %v621 = vld [vmem:[#allocation11 + $0x438] sm:$0xff]
    %v622 = vld [vmem:[#allocation11 + $0x440] sm:$0xff]
    %v623 = vld [vmem:[#allocation11 + $0x448] sm:$0xff]
    %v624 = vld [vmem:[#allocation11 + $0x450] sm:$0xff]
    %v625 = vld [vmem:[#allocation11 + $0x458] sm:$0xff]
    %v626 = vld [vmem:[#allocation11 + $0x460] sm:$0xff]
    %v627 = vld [vmem:[#allocation11 + $0x468] sm:$0xff]
    %v628 = vld [vmem:[#allocation11 + $0x470] sm:$0xff]
    %v629 = vld [vmem:[#allocation11 + $0x478] sm:$0xff]
    %v630 = vld [vmem:[#allocation11 + $0x480] sm:$0xff]
    %v631 = vld [vmem:[#allocation11 + $0x488] sm:$0xff]
    %v632 = vld [vmem:[#allocation11 + $0x490] sm:$0xff]
    %v633 = vld [vmem:[#allocation11 + $0x498] sm:$0xff]
    %v634 = vld [vmem:[#allocation11 + $0x4a0] sm:$0xff]
    %v635 = vld [vmem:[#allocation11 + $0x4a8] sm:$0xff]
    %v636 = vld [vmem:[#allocation11 + $0x4b0] sm:$0xff]
    %v637 = vld [vmem:[#allocation11 + $0x4b8] sm:$0xff]
    %v638 = vld [vmem:[#allocation11 + $0x4c0] sm:$0xff]
    %v639 = vld [vmem:[#allocation11 + $0x4c8] sm:$0xff]
    %v640 = vld [vmem:[#allocation11 + $0x4d0] sm:$0xff]
    %v641 = vld [vmem:[#allocation11 + $0x4d8] sm:$0xff]
    %v642 = vld [vmem:[#allocation11 + $0x4e0] sm:$0xff]
    %v643 = vld [vmem:[#allocation11 + $0x4e8] sm:$0xff]
    %v644 = vld [vmem:[#allocation11 + $0x4f0] sm:$0xff]
    %v645 = vld [vmem:[#allocation11 + $0x4f8] sm:$0xff]
    %v646 = vld [vmem:[#allocation11 + $0x500] sm:$0xff]
    %v647 = vld [vmem:[#allocation11 + $0x508] sm:$0xff]
    %v648 = vld [vmem:[#allocation11 + $0x510] sm:$0xff]
    %v649 = vld [vmem:[#allocation11 + $0x518] sm:$0xff]
    %v650 = vld [vmem:[#allocation11 + $0x520] sm:$0xff]
    %v651 = vld [vmem:[#allocation11 + $0x528] sm:$0xff]
    %v652 = vld [vmem:[#allocation11 + $0x530] sm:$0xff]
    %v653 = vld [vmem:[#allocation11 + $0x538] sm:$0xff]
    %v654 = vld [vmem:[#allocation11 + $0x540] sm:$0xff]
    %v655 = vld [vmem:[#allocation11 + $0x548] sm:$0xff]
    %v656 = vld [vmem:[#allocation11 + $0x550] sm:$0xff]
    %v657 = vld [vmem:[#allocation11 + $0x558] sm:$0xff]
    %v658 = vld [vmem:[#allocation11 + $0x560] sm:$0xff]
    %v659 = vld [vmem:[#allocation11 + $0x568] sm:$0xff]
    %v660 = vld [vmem:[#allocation11 + $0x570] sm:$0xff]
    %v661 = vld [vmem:[#allocation11 + $0x578] sm:$0xff]
    %v662 = vld [vmem:[#allocation11 + $0x580] sm:$0xff]
    %v663 = vld [vmem:[#allocation11 + $0x588] sm:$0xff]
    %v664 = vld [vmem:[#allocation11 + $0x590] sm:$0xff]
    %v665 = vld [vmem:[#allocation11 + $0x598] sm:$0xff]
    %v666 = vld [vmem:[#allocation11 + $0x5a0] sm:$0xff]
    %v667 = vld [vmem:[#allocation11 + $0x5a8] sm:$0xff]
    %v668 = vld [vmem:[#allocation11 + $0x5b0] sm:$0xff]
    %v669 = vld [vmem:[#allocation11 + $0x5b8] sm:$0xff]
    %v670 = vld [vmem:[#allocation11 + $0x5c0] sm:$0xff]
    %v671 = vld [vmem:[#allocation11 + $0x5c8] sm:$0xff]
    %v672 = vld [vmem:[#allocation11 + $0x5d0] sm:$0xff]
    %v673 = vld [vmem:[#allocation11 + $0x5d8] sm:$0xff]
    %v674 = vld [vmem:[#allocation11 + $0x5e0] sm:$0xff]
    %v675 = vld [vmem:[#allocation11 + $0x5e8] sm:$0xff]
    %v676 = vld [vmem:[#allocation11 + $0x5f0] sm:$0xff]
    %v677 = vld [vmem:[#allocation11 + $0x5f8] sm:$0xff]
    %v678 = vld [vmem:[#allocation11 + $0x600] sm:$0xff]
    %v679 = vld [vmem:[#allocation11 + $0x608] sm:$0xff]
    %v680 = vld [vmem:[#allocation11 + $0x610] sm:$0xff]
    %v681 = vld [vmem:[#allocation11 + $0x618] sm:$0xff]
    %v682 = vld [vmem:[#allocation11 + $0x620] sm:$0xff]
    %v683 = vld [vmem:[#allocation11 + $0x628] sm:$0xff]
    %v684 = vld [vmem:[#allocation11 + $0x630] sm:$0xff]
    %v685 = vld [vmem:[#allocation11 + $0x638] sm:$0xff]
    %v686 = vld [vmem:[#allocation11 + $0x640] sm:$0xff]
    %v687 = vld [vmem:[#allocation11 + $0x648] sm:$0xff]
    %v688 = vld [vmem:[#allocation11 + $0x650] sm:$0xff]
    %v689 = vld [vmem:[#allocation11 + $0x658] sm:$0xff]
    %v690 = vld [vmem:[#allocation11 + $0x660] sm:$0xff]
    %v691 = vld [vmem:[#allocation11 + $0x668] sm:$0xff]
    %v692 = vld [vmem:[#allocation11 + $0x670] sm:$0xff]
    %v693 = vld [vmem:[#allocation11 + $0x678] sm:$0xff]
    %v694 = vld [vmem:[#allocation11 + $0x680] sm:$0xff]
    %v695 = vld [vmem:[#allocation11 + $0x688] sm:$0xff]
    %v696 = vld [vmem:[#allocation11 + $0x690] sm:$0xff]
    %v697 = vld [vmem:[#allocation11 + $0x698] sm:$0xff]
    %v698 = vld [vmem:[#allocation11 + $0x6a0] sm:$0xff]
    %v699 = vld [vmem:[#allocation11 + $0x6a8] sm:$0xff]
    %v700 = vld [vmem:[#allocation11 + $0x6b0] sm:$0xff]
    %v701 = vld [vmem:[#allocation11 + $0x6b8] sm:$0xff]
    %v702 = vld [vmem:[#allocation11 + $0x6c0] sm:$0xff]
    %v703 = vld [vmem:[#allocation11 + $0x6c8] sm:$0xff]
    %v704 = vld [vmem:[#allocation11 + $0x6d0] sm:$0xff]
    %v705 = vld [vmem:[#allocation11 + $0x6d8] sm:$0xff]
    %v706 = vld [vmem:[#allocation11 + $0x6e0] sm:$0xff]
    %v707 = vld [vmem:[#allocation11 + $0x6e8] sm:$0xff]
    %v708 = vld [vmem:[#allocation11 + $0x6f0] sm:$0xff]
    %v709 = vld [vmem:[#allocation11 + $0x6f8] sm:$0xff]
    %v710 = vld [vmem:[#allocation11 + $0x700] sm:$0xff]
    %v711 = vld [vmem:[#allocation11 + $0x708] sm:$0xff]
    %v712 = vld [vmem:[#allocation11 + $0x710] sm:$0xff]
    %v713 = vld [vmem:[#allocation11 + $0x718] sm:$0xff]
    %v714 = vld [vmem:[#allocation11 + $0x720] sm:$0xff]
    %v715 = vld [vmem:[#allocation11 + $0x728] sm:$0xff]
    %v716 = vld [vmem:[#allocation11 + $0x730] sm:$0xff]
    %v717 = vld [vmem:[#allocation11 + $0x738] sm:$0xff]
    %v718 = vld [vmem:[#allocation11 + $0x740] sm:$0xff]
    %v719 = vld [vmem:[#allocation11 + $0x748] sm:$0xff]
    %v720 = vld [vmem:[#allocation11 + $0x750] sm:$0xff]
    %v721 = vld [vmem:[#allocation11 + $0x758] sm:$0xff]
    %v722 = vld [vmem:[#allocation11 + $0x760] sm:$0xff]
    %v723 = vld [vmem:[#allocation11 + $0x768] sm:$0xff]
    %v724 = vld [vmem:[#allocation11 + $0x770] sm:$0xff]
    %v725 = vld [vmem:[#allocation11 + $0x778] sm:$0xff]
    %v726 = vld [vmem:[#allocation11 + $0x780] sm:$0xff]
    %v727 = vld [vmem:[#allocation11 + $0x788] sm:$0xff]
    %v728 = vld [vmem:[#allocation11 + $0x790] sm:$0xff]
    %v729 = vld [vmem:[#allocation11 + $0x798] sm:$0xff]
    %v730 = vld [vmem:[#allocation11 + $0x7a0] sm:$0xff]
    %v731 = vld [vmem:[#allocation11 + $0x7a8] sm:$0xff]
    %v732 = vld [vmem:[#allocation11 + $0x7b0] sm:$0xff]
    %v733 = vld [vmem:[#allocation11 + $0x7b8] sm:$0xff]
    %v734 = vld [vmem:[#allocation11 + $0x7c0] sm:$0xff]
    %v735 = vld [vmem:[#allocation11 + $0x7c8] sm:$0xff]
    %v736 = vld [vmem:[#allocation11 + $0x7d0] sm:$0xff]
    %v737 = vld [vmem:[#allocation11 + $0x7d8] sm:$0xff]
    %v738 = vld [vmem:[#allocation11 + $0x7e0] sm:$0xff]
    %v739 = vld [vmem:[#allocation11 + $0x7e8] sm:$0xff]
    %v740 = vld [vmem:[#allocation11 + $0x7f0] sm:$0xff]
    %v741 = vld [vmem:[#allocation11 + $0x7f8] sm:$0xff]
    %v742 = vld [vmem:[#allocation11 + $0x800] sm:$0xff]
    %v743 = vld [vmem:[#allocation11 + $0x808] sm:$0xff]
    %v744 = vld [vmem:[#allocation11 + $0x810] sm:$0xff]
    %v745 = vld [vmem:[#allocation11 + $0x818] sm:$0xff]
    %v746 = vld [vmem:[#allocation11 + $0x820] sm:$0xff]
    %v747 = vld [vmem:[#allocation11 + $0x828] sm:$0xff]
    %v748 = vld [vmem:[#allocation11 + $0x830] sm:$0xff]
    %v749 = vld [vmem:[#allocation11 + $0x838] sm:$0xff]
    %v750 = vld [vmem:[#allocation11 + $0x840] sm:$0xff]
    %v751 = vld [vmem:[#allocation11 + $0x848] sm:$0xff]
    %v752 = vld [vmem:[#allocation11 + $0x850] sm:$0xff]
    %v753 = vld [vmem:[#allocation11 + $0x858] sm:$0xff]
    %v754 = vld [vmem:[#allocation11 + $0x860] sm:$0xff]
    %v755 = vld [vmem:[#allocation11 + $0x868] sm:$0xff]
    %v756 = vld [vmem:[#allocation11 + $0x870] sm:$0xff]
    %v757 = vld [vmem:[#allocation11 + $0x878] sm:$0xff]
    %v758 = vld [vmem:[#allocation11 + $0x880] sm:$0xff]
    %v759 = vld [vmem:[#allocation11 + $0x888] sm:$0xff]
    %v760 = vld [vmem:[#allocation11 + $0x890] sm:$0xff]
    %v761 = vld [vmem:[#allocation11 + $0x898] sm:$0xff]
    %v762 = vld [vmem:[#allocation11 + $0x8a0] sm:$0xff]
    %v763 = vld [vmem:[#allocation11 + $0x8a8] sm:$0xff]
    %v764 = vld [vmem:[#allocation11 + $0x8b0] sm:$0xff]
    %v765 = vld [vmem:[#allocation11 + $0x8b8] sm:$0xff]
    %v766 = vld [vmem:[#allocation11 + $0x8c0] sm:$0xff]
    %v767 = vld [vmem:[#allocation11 + $0x8c8] sm:$0xff]
    %v768 = vld [vmem:[#allocation11 + $0x8d0] sm:$0xff]
    %v769 = vld [vmem:[#allocation11 + $0x8d8] sm:$0xff]
    %v770 = vld [vmem:[#allocation11 + $0x8e0] sm:$0xff]
    %v771 = vld [vmem:[#allocation11 + $0x8e8] sm:$0xff]
    %v772 = vld [vmem:[#allocation11 + $0x8f0] sm:$0xff]
    %v773 = vld [vmem:[#allocation11 + $0x8f8] sm:$0xff]
    %v774 = vld [vmem:[#allocation13] sm:$0xff]
    %v775 = vld [vmem:[#allocation14] sm:$0xff]
    %v776 = vld [vmem:[#allocation14 + $0x8] sm:$0xff]
    %v777 = vld [vmem:[#allocation14 + $0x10] sm:$0xff]
    %v778 = vld [vmem:[#allocation14 + $0x18] sm:$0xff]
    %v779 = vld [vmem:[#allocation14 + $0x20] sm:$0xff]
    %v780 = vld [vmem:[#allocation14 + $0x28] sm:$0xff]
    %v781 = vld [vmem:[#allocation14 + $0x30] sm:$0xff]
    %v782 = vld [vmem:[#allocation14 + $0x38] sm:$0xff]
    %v783 = vld [vmem:[#allocation14 + $0x40] sm:$0xff]
    %v784 = vld [vmem:[#allocation14 + $0x48] sm:$0xff]
    %v785 = vld [vmem:[#allocation14 + $0x50] sm:$0xff]
    %v786 = vld [vmem:[#allocation14 + $0x58] sm:$0xff]
    %v787 = vld [vmem:[#allocation14 + $0x60] sm:$0xff]
    %v788 = vld [vmem:[#allocation14 + $0x68] sm:$0xff]
    %v789 = vld [vmem:[#allocation14 + $0x70] sm:$0xff]
    %v790 = vld [vmem:[#allocation14 + $0x78] sm:$0xff]
    %v791 = vld [vmem:[#allocation14 + $0x80] sm:$0xff]
    %v792 = vld [vmem:[#allocation14 + $0x88] sm:$0xff]
    %v793 = vld [vmem:[#allocation14 + $0x90] sm:$0xff]
    %v794 = vld [vmem:[#allocation14 + $0x98] sm:$0xff]
    %v795 = vld [vmem:[#allocation14 + $0xa0] sm:$0xff]
    %v796 = vld [vmem:[#allocation14 + $0xa8] sm:$0xff]
    %v797 = vld [vmem:[#allocation14 + $0xb0] sm:$0xff]
    %v798 = vld [vmem:[#allocation14 + $0xb8] sm:$0xff]
    %v799 = vld [vmem:[#allocation14 + $0xc0] sm:$0xff]
    %v800 = vld [vmem:[#allocation14 + $0xc8] sm:$0xff]
    %v801 = vld [vmem:[#allocation14 + $0xd0] sm:$0xff]
    %v802 = vld [vmem:[#allocation14 + $0xd8] sm:$0xff]
    %v803 = vld [vmem:[#allocation14 + $0xe0] sm:$0xff]
    %v804 = vld [vmem:[#allocation14 + $0xe8] sm:$0xff]
    %v805 = vld [vmem:[#allocation14 + $0xf0] sm:$0xff]
    %v806 = vld [vmem:[#allocation14 + $0xf8] sm:$0xff]
    %v807 = vld [vmem:[#allocation14 + $0x100] sm:$0xff]
    %v808 = vld [vmem:[#allocation14 + $0x108] sm:$0xff]
    %v809 = vld [vmem:[#allocation14 + $0x110] sm:$0xff]
    %v810 = vld [vmem:[#allocation14 + $0x118] sm:$0xff]
    %v811 = vld [vmem:[#allocation14 + $0x120] sm:$0xff]
    %v812 = vld [vmem:[#allocation14 + $0x128] sm:$0xff]
    %v813 = vld [vmem:[#allocation14 + $0x130] sm:$0xff]
    %v814 = vld [vmem:[#allocation14 + $0x138] sm:$0xff]
    %v815 = vld [vmem:[#allocation14 + $0x140] sm:$0xff]
    %v816 = vld [vmem:[#allocation14 + $0x148] sm:$0xff]
    %v817 = vld [vmem:[#allocation14 + $0x150] sm:$0xff]
    %v818 = vld [vmem:[#allocation14 + $0x158] sm:$0xff]
    %v819 = vld [vmem:[#allocation14 + $0x160] sm:$0xff]
    %v820 = vld [vmem:[#allocation14 + $0x168] sm:$0xff]
    %v821 = vld [vmem:[#allocation14 + $0x170] sm:$0xff]
    %v822 = vld [vmem:[#allocation14 + $0x178] sm:$0xff]
    %v823 = vld [vmem:[#allocation14 + $0x180] sm:$0xff]
    %v824 = vld [vmem:[#allocation14 + $0x188] sm:$0xff]
    %v825 = vld [vmem:[#allocation14 + $0x190] sm:$0xff]
    %v826 = vld [vmem:[#allocation14 + $0x198] sm:$0xff]
    %v827 = vld [vmem:[#allocation14 + $0x1a0] sm:$0xff]
    %v828 = vld [vmem:[#allocation14 + $0x1a8] sm:$0xff]
    %v829 = vld [vmem:[#allocation14 + $0x1b0] sm:$0xff]
    %v830 = vld [vmem:[#allocation14 + $0x1b8] sm:$0xff]
    %v831 = vld [vmem:[#allocation14 + $0x1c0] sm:$0xff]
    %v832 = vld [vmem:[#allocation14 + $0x1c8] sm:$0xff]
    %v833 = vld [vmem:[#allocation14 + $0x1d0] sm:$0xff]
    %v834 = vld [vmem:[#allocation14 + $0x1d8] sm:$0xff]
    %v835 = vld [vmem:[#allocation14 + $0x1e0] sm:$0xff]
    %v836 = vld [vmem:[#allocation14 + $0x1e8] sm:$0xff]
    %v837 = vld [vmem:[#allocation14 + $0x1f0] sm:$0xff]
    %v838 = vld [vmem:[#allocation14 + $0x1f8] sm:$0xff]
    %v839 = vld [vmem:[#allocation14 + $0x200] sm:$0xff]
    %v840 = vld [vmem:[#allocation14 + $0x208] sm:$0xff]
    %v841 = vld [vmem:[#allocation14 + $0x210] sm:$0xff]
    %v842 = vld [vmem:[#allocation14 + $0x218] sm:$0xff]
    %v843 = vld [vmem:[#allocation14 + $0x220] sm:$0xff]
    %v844 = vld [vmem:[#allocation14 + $0x228] sm:$0xff]
    %v845 = vld [vmem:[#allocation14 + $0x230] sm:$0xff]
    %v846 = vld [vmem:[#allocation14 + $0x238] sm:$0xff]
    %v847 = vld [vmem:[#allocation16] sm:$0x3]
    %v848 = vld [vmem:[#allocation17] sm:$0xff]
    %v849 = vld [vmem:[#allocation17 + $0x8] sm:$0xff]
    %v850 = vld [vmem:[#allocation17 + $0x10] sm:$0xff]
    %v851 = vld [vmem:[#allocation17 + $0x18] sm:$0xff]
    %v852 = vld [vmem:[#allocation17 + $0x20] sm:$0xff]
    %v853 = vld [vmem:[#allocation17 + $0x28] sm:$0xff]
    %v854 = vld [vmem:[#allocation17 + $0x30] sm:$0xff]
    %v855 = vld [vmem:[#allocation17 + $0x38] sm:$0xff]
    %v856 = vld [vmem:[#allocation17 + $0x40] sm:$0xff]
    %v857 = vld [vmem:[#allocation17 + $0x48] sm:$0xff]
    %v858 = vld [vmem:[#allocation17 + $0x50] sm:$0xff]
    %v859 = vld [vmem:[#allocation17 + $0x58] sm:$0xff]
    %v860 = vld [vmem:[#allocation17 + $0x60] sm:$0xff]
    %v861 = vld [vmem:[#allocation17 + $0x68] sm:$0xff]
    %v862 = vld [vmem:[#allocation17 + $0x70] sm:$0xff]
    %v863 = vld [vmem:[#allocation17 + $0x78] sm:$0xff]
    %v864 = vld [vmem:[#allocation17 + $0x80] sm:$0xff]
    %v865 = vld [vmem:[#allocation17 + $0x88] sm:$0xff]
    %v866 = vld [vmem:[#allocation17 + $0x90] sm:$0xff]
    %v867 = vld [vmem:[#allocation17 + $0x98] sm:$0xff]
    %v868 = vld [vmem:[#allocation17 + $0xa0] sm:$0xff]
    %v869 = vld [vmem:[#allocation17 + $0xa8] sm:$0xff]
    %v870 = vld [vmem:[#allocation17 + $0xb0] sm:$0xff]
    %v871 = vld [vmem:[#allocation17 + $0xb8] sm:$0xff]
    %v872 = vld [vmem:[#allocation17 + $0xc0] sm:$0xff]
    %v873 = vld [vmem:[#allocation17 + $0xc8] sm:$0xff]
    %v874 = vld [vmem:[#allocation17 + $0xd0] sm:$0xff]
    %v875 = vld [vmem:[#allocation17 + $0xd8] sm:$0xff]
    %v876 = vld [vmem:[#allocation17 + $0xe0] sm:$0xff]
    %v877 = vld [vmem:[#allocation17 + $0xe8] sm:$0xff]
    %v878 = vld [vmem:[#allocation17 + $0xf0] sm:$0xff]
    %v879 = vld [vmem:[#allocation17 + $0xf8] sm:$0xff]
    %v880 = vld [vmem:[#allocation17 + $0x100] sm:$0xff]
    %v881 = vld [vmem:[#allocation17 + $0x108] sm:$0xff]
    %v882 = vld [vmem:[#allocation17 + $0x110] sm:$0xff]
    %v883 = vld [vmem:[#allocation17 + $0x118] sm:$0xff]
    %v884 = vld [vmem:[#allocation17 + $0x120] sm:$0xff]
    %v885 = vld [vmem:[#allocation17 + $0x128] sm:$0xff]
    %v886 = vld [vmem:[#allocation17 + $0x130] sm:$0xff]
    %v887 = vld [vmem:[#allocation17 + $0x138] sm:$0xff]
    %v888 = vld [vmem:[#allocation17 + $0x140] sm:$0xff]
    %v889 = vld [vmem:[#allocation17 + $0x148] sm:$0xff]
    %v890 = vld [vmem:[#allocation17 + $0x150] sm:$0xff]
    %v891 = vld [vmem:[#allocation17 + $0x158] sm:$0xff]
    %v892 = vld [vmem:[#allocation17 + $0x160] sm:$0xff]
    %v893 = vld [vmem:[#allocation17 + $0x168] sm:$0xff]
    %v894 = vld [vmem:[#allocation17 + $0x170] sm:$0xff]
    %v895 = vld [vmem:[#allocation17 + $0x178] sm:$0xff]
    %v896 = vld [vmem:[#allocation17 + $0x180] sm:$0xff]
    %v897 = vld [vmem:[#allocation17 + $0x188] sm:$0xff]
    %v898 = vld [vmem:[#allocation17 + $0x190] sm:$0xff]
    %v899 = vld [vmem:[#allocation17 + $0x198] sm:$0xff]
    %v900 = vld [vmem:[#allocation17 + $0x1a0] sm:$0xff]
    %v901 = vld [vmem:[#allocation17 + $0x1a8] sm:$0xff]
    %v902 = vld [vmem:[#allocation17 + $0x1b0] sm:$0xff]
    %v903 = vld [vmem:[#allocation17 + $0x1b8] sm:$0xff]
    %v904 = vld [vmem:[#allocation17 + $0x1c0] sm:$0xff]
    %v905 = vld [vmem:[#allocation17 + $0x1c8] sm:$0xff]
    %v906 = vld [vmem:[#allocation17 + $0x1d0] sm:$0xff]
    %v907 = vld [vmem:[#allocation17 + $0x1d8] sm:$0xff]
    %v908 = vld [vmem:[#allocation17 + $0x1e0] sm:$0xff]
    %v909 = vld [vmem:[#allocation17 + $0x1e8] sm:$0xff]
    %v910 = vld [vmem:[#allocation17 + $0x1f0] sm:$0xff]
    %v911 = vld [vmem:[#allocation17 + $0x1f8] sm:$0xff]
    %v912 = vld [vmem:[#allocation17 + $0x200] sm:$0xff]
    %v913 = vld [vmem:[#allocation17 + $0x208] sm:$0xff]
    %v914 = vld [vmem:[#allocation17 + $0x210] sm:$0xff]
    %v915 = vld [vmem:[#allocation17 + $0x218] sm:$0xff]
    %v916 = vld [vmem:[#allocation17 + $0x220] sm:$0xff]
    %v917 = vld [vmem:[#allocation17 + $0x228] sm:$0xff]
    %v918 = vld [vmem:[#allocation17 + $0x230] sm:$0xff]
    %v919 = vld [vmem:[#allocation17 + $0x238] sm:$0xff]
    %v920 = vld [vmem:[#allocation17 + $0x240] sm:$0xff]
    %v921 = vld [vmem:[#allocation17 + $0x248] sm:$0xff]
    %v922 = vld [vmem:[#allocation17 + $0x250] sm:$0xff]
    %v923 = vld [vmem:[#allocation17 + $0x258] sm:$0xff]
    %v924 = vld [vmem:[#allocation17 + $0x260] sm:$0xff]
    %v925 = vld [vmem:[#allocation17 + $0x268] sm:$0xff]
    %v926 = vld [vmem:[#allocation17 + $0x270] sm:$0xff]
    %v927 = vld [vmem:[#allocation17 + $0x278] sm:$0xff]
    %v928 = vld [vmem:[#allocation17 + $0x280] sm:$0xff]
    %v929 = vld [vmem:[#allocation17 + $0x288] sm:$0xff]
    %v930 = vld [vmem:[#allocation17 + $0x290] sm:$0xff]
    %v931 = vld [vmem:[#allocation17 + $0x298] sm:$0xff]
    %v932 = vld [vmem:[#allocation17 + $0x2a0] sm:$0xff]
    %v933 = vld [vmem:[#allocation17 + $0x2a8] sm:$0xff]
    %v934 = vld [vmem:[#allocation17 + $0x2b0] sm:$0xff]
    %v935 = vld [vmem:[#allocation17 + $0x2b8] sm:$0xff]
    %v936 = vld [vmem:[#allocation17 + $0x2c0] sm:$0xff]
    %v937 = vld [vmem:[#allocation17 + $0x2c8] sm:$0xff]
    %v938 = vld [vmem:[#allocation17 + $0x2d0] sm:$0xff]
    %v939 = vld [vmem:[#allocation17 + $0x2d8] sm:$0xff]
    %v940 = vld [vmem:[#allocation17 + $0x2e0] sm:$0xff]
    %v941 = vld [vmem:[#allocation17 + $0x2e8] sm:$0xff]
    %v942 = vld [vmem:[#allocation17 + $0x2f0] sm:$0xff]
    %v943 = vld [vmem:[#allocation17 + $0x2f8] sm:$0xff]
    %v944 = vld [vmem:[#allocation17 + $0x300] sm:$0xff]
    %v945 = vld [vmem:[#allocation17 + $0x308] sm:$0xff]
    %v946 = vld [vmem:[#allocation17 + $0x310] sm:$0xff]
    %v947 = vld [vmem:[#allocation17 + $0x318] sm:$0xff]
    %v948 = vld [vmem:[#allocation17 + $0x320] sm:$0xff]
    %v949 = vld [vmem:[#allocation17 + $0x328] sm:$0xff]
    %v950 = vld [vmem:[#allocation17 + $0x330] sm:$0xff]
    %v951 = vld [vmem:[#allocation17 + $0x338] sm:$0xff]
    %v952 = vld [vmem:[#allocation17 + $0x340] sm:$0xff]
    %v953 = vld [vmem:[#allocation17 + $0x348] sm:$0xff]
    %v954 = vld [vmem:[#allocation17 + $0x350] sm:$0xff]
    %v955 = vld [vmem:[#allocation17 + $0x358] sm:$0xff]
    %v956 = vld [vmem:[#allocation17 + $0x360] sm:$0xff]
    %v957 = vld [vmem:[#allocation17 + $0x368] sm:$0xff]
    %v958 = vld [vmem:[#allocation17 + $0x370] sm:$0xff]
    %v959 = vld [vmem:[#allocation17 + $0x378] sm:$0xff]
    %v960 = vld [vmem:[#allocation17 + $0x380] sm:$0xff]
    %v961 = vld [vmem:[#allocation17 + $0x388] sm:$0xff]
    %v962 = vld [vmem:[#allocation17 + $0x390] sm:$0xff]
    %v963 = vld [vmem:[#allocation17 + $0x398] sm:$0xff]
    %v964 = vld [vmem:[#allocation17 + $0x3a0] sm:$0xff]
    %v965 = vld [vmem:[#allocation17 + $0x3a8] sm:$0xff]
    %v966 = vld [vmem:[#allocation17 + $0x3b0] sm:$0xff]
    %v967 = vld [vmem:[#allocation17 + $0x3b8] sm:$0xff]
    %v968 = vld [vmem:[#allocation17 + $0x3c0] sm:$0xff]
    %v969 = vld [vmem:[#allocation17 + $0x3c8] sm:$0xff]
    %v970 = vld [vmem:[#allocation17 + $0x3d0] sm:$0xff]
    %v971 = vld [vmem:[#allocation17 + $0x3d8] sm:$0xff]
    %v972 = vld [vmem:[#allocation17 + $0x3e0] sm:$0xff]
    %v973 = vld [vmem:[#allocation17 + $0x3e8] sm:$0xff]
    %v974 = vld [vmem:[#allocation17 + $0x3f0] sm:$0xff]
    %v975 = vld [vmem:[#allocation17 + $0x3f8] sm:$0xff]
    %v976 = vld [vmem:[#allocation17 + $0x400] sm:$0xff]
    %v977 = vld [vmem:[#allocation17 + $0x408] sm:$0xff]
    %v978 = vld [vmem:[#allocation17 + $0x410] sm:$0xff]
    %v979 = vld [vmem:[#allocation17 + $0x418] sm:$0xff]
    %v980 = vld [vmem:[#allocation17 + $0x420] sm:$0xff]
    %v981 = vld [vmem:[#allocation17 + $0x428] sm:$0xff]
    %v982 = vld [vmem:[#allocation17 + $0x430] sm:$0xff]
    %v983 = vld [vmem:[#allocation17 + $0x438] sm:$0xff]
    %v984 = vld [vmem:[#allocation17 + $0x440] sm:$0xff]
    %v985 = vld [vmem:[#allocation17 + $0x448] sm:$0xff]
    %v986 = vld [vmem:[#allocation17 + $0x450] sm:$0xff]
    %v987 = vld [vmem:[#allocation17 + $0x458] sm:$0xff]
    %v988 = vld [vmem:[#allocation17 + $0x460] sm:$0xff]
    %v989 = vld [vmem:[#allocation17 + $0x468] sm:$0xff]
    %v990 = vld [vmem:[#allocation17 + $0x470] sm:$0xff]
    %v991 = vld [vmem:[#allocation17 + $0x478] sm:$0xff]
    %v992 = vld [vmem:[#allocation17 + $0x480] sm:$0xff]
    %v993 = vld [vmem:[#allocation17 + $0x488] sm:$0xff]
    %v994 = vld [vmem:[#allocation17 + $0x490] sm:$0xff]
    %v995 = vld [vmem:[#allocation17 + $0x498] sm:$0xff]
    %v996 = vld [vmem:[#allocation17 + $0x4a0] sm:$0xff]
    %v997 = vld [vmem:[#allocation17 + $0x4a8] sm:$0xff]
    %v998 = vld [vmem:[#allocation17 + $0x4b0] sm:$0xff]
    %v999 = vld [vmem:[#allocation17 + $0x4b8] sm:$0xff]
    %v1000 = vld [vmem:[#allocation17 + $0x4c0] sm:$0xff]
    %v1001 = vld [vmem:[#allocation17 + $0x4c8] sm:$0xff]
    %v1002 = vld [vmem:[#allocation17 + $0x4d0] sm:$0xff]
    %v1003 = vld [vmem:[#allocation17 + $0x4d8] sm:$0xff]
    %v1004 = vld [vmem:[#allocation17 + $0x4e0] sm:$0xff]
    %v1005 = vld [vmem:[#allocation17 + $0x4e8] sm:$0xff]
    %v1006 = vld [vmem:[#allocation17 + $0x4f0] sm:$0xff]
    %v1007 = vld [vmem:[#allocation17 + $0x4f8] sm:$0xff]
    %v1008 = vld [vmem:[#allocation17 + $0x500] sm:$0xff]
    %v1009 = vld [vmem:[#allocation17 + $0x508] sm:$0xff]
    %v1010 = vld [vmem:[#allocation17 + $0x510] sm:$0xff]
    %v1011 = vld [vmem:[#allocation17 + $0x518] sm:$0xff]
    %v1012 = vld [vmem:[#allocation17 + $0x520] sm:$0xff]
    %v1013 = vld [vmem:[#allocation17 + $0x528] sm:$0xff]
    %v1014 = vld [vmem:[#allocation17 + $0x530] sm:$0xff]
    %v1015 = vld [vmem:[#allocation17 + $0x538] sm:$0xff]
    %v1016 = vld [vmem:[#allocation17 + $0x540] sm:$0xff]
    %v1017 = vld [vmem:[#allocation17 + $0x548] sm:$0xff]
    %v1018 = vld [vmem:[#allocation17 + $0x550] sm:$0xff]
    %v1019 = vld [vmem:[#allocation17 + $0x558] sm:$0xff]
    %v1020 = vld [vmem:[#allocation17 + $0x560] sm:$0xff]
    %v1021 = vld [vmem:[#allocation17 + $0x568] sm:$0xff]
    %v1022 = vld [vmem:[#allocation17 + $0x570] sm:$0xff]
    %v1023 = vld [vmem:[#allocation17 + $0x578] sm:$0xff]
    %v1024 = vld [vmem:[#allocation17 + $0x580] sm:$0xff]
    %v1025 = vld [vmem:[#allocation17 + $0x588] sm:$0xff]
    %v1026 = vld [vmem:[#allocation17 + $0x590] sm:$0xff]
    %v1027 = vld [vmem:[#allocation17 + $0x598] sm:$0xff]
    %v1028 = vld [vmem:[#allocation17 + $0x5a0] sm:$0xff]
    %v1029 = vld [vmem:[#allocation17 + $0x5a8] sm:$0xff]
    %v1030 = vld [vmem:[#allocation17 + $0x5b0] sm:$0xff]
    %v1031 = vld [vmem:[#allocation17 + $0x5b8] sm:$0xff]
    %v1032 = vld [vmem:[#allocation17 + $0x5c0] sm:$0xff]
    %v1033 = vld [vmem:[#allocation17 + $0x5c8] sm:$0xff]
    %v1034 = vld [vmem:[#allocation17 + $0x5d0] sm:$0xff]
    %v1035 = vld [vmem:[#allocation17 + $0x5d8] sm:$0xff]
    %v1036 = vld [vmem:[#allocation17 + $0x5e0] sm:$0xff]
    %v1037 = vld [vmem:[#allocation17 + $0x5e8] sm:$0xff]
    %v1038 = vld [vmem:[#allocation17 + $0x5f0] sm:$0xff]
    %v1039 = vld [vmem:[#allocation17 + $0x5f8] sm:$0xff]
    %v1040 = vld [vmem:[#allocation17 + $0x600] sm:$0xff]
    %v1041 = vld [vmem:[#allocation17 + $0x608] sm:$0xff]
    %v1042 = vld [vmem:[#allocation17 + $0x610] sm:$0xff]
    %v1043 = vld [vmem:[#allocation17 + $0x618] sm:$0xff]
    %v1044 = vld [vmem:[#allocation17 + $0x620] sm:$0xff]
    %v1045 = vld [vmem:[#allocation17 + $0x628] sm:$0xff]
    %v1046 = vld [vmem:[#allocation17 + $0x630] sm:$0xff]
    %v1047 = vld [vmem:[#allocation17 + $0x638] sm:$0xff]
    %v1048 = vld [vmem:[#allocation17 + $0x640] sm:$0xff]
    %v1049 = vld [vmem:[#allocation17 + $0x648] sm:$0xff]
    %v1050 = vld [vmem:[#allocation17 + $0x650] sm:$0xff]
    %v1051 = vld [vmem:[#allocation17 + $0x658] sm:$0xff]
    %v1052 = vld [vmem:[#allocation17 + $0x660] sm:$0xff]
    %v1053 = vld [vmem:[#allocation17 + $0x668] sm:$0xff]
    %v1054 = vld [vmem:[#allocation17 + $0x670] sm:$0xff]
    %v1055 = vld [vmem:[#allocation17 + $0x678] sm:$0xff]
    %v1056 = vld [vmem:[#allocation17 + $0x680] sm:$0xff]
    %v1057 = vld [vmem:[#allocation17 + $0x688] sm:$0xff]
    %v1058 = vld [vmem:[#allocation17 + $0x690] sm:$0xff]
    %v1059 = vld [vmem:[#allocation17 + $0x698] sm:$0xff]
    %v1060 = vld [vmem:[#allocation17 + $0x6a0] sm:$0xff]
    %v1061 = vld [vmem:[#allocation17 + $0x6a8] sm:$0xff]
    %v1062 = vld [vmem:[#allocation17 + $0x6b0] sm:$0xff]
    %v1063 = vld [vmem:[#allocation17 + $0x6b8] sm:$0xff]
    %v1064 = vld [vmem:[#allocation19] sm:$0x3f]
    %v1065 = vld [vmem:[#allocation20] sm:$0xff]
    %v1066 = vld [vmem:[#allocation20 + $0x8] sm:$0xff]
    %v1067 = vld [vmem:[#allocation20 + $0x10] sm:$0xff]
    %v1068 = vld [vmem:[#allocation20 + $0x18] sm:$0xff]
    %v1069 = vld [vmem:[#allocation20 + $0x20] sm:$0xff]
    %v1070 = vld [vmem:[#allocation20 + $0x28] sm:$0xff]
    %v1071 = vld [vmem:[#allocation20 + $0x30] sm:$0xff]
    %v1072 = vld [vmem:[#allocation20 + $0x38] sm:$0xff]
    %v1073 = vld [vmem:[#allocation20 + $0x40] sm:$0xff]
    %v1074 = vld [vmem:[#allocation20 + $0x48] sm:$0xff]
    %v1075 = vld [vmem:[#allocation20 + $0x50] sm:$0xff]
    %v1076 = vld [vmem:[#allocation20 + $0x58] sm:$0xff]
    %v1077 = vld [vmem:[#allocation20 + $0x60] sm:$0xff]
    %v1078 = vld [vmem:[#allocation20 + $0x68] sm:$0xff]
    %v1079 = vld [vmem:[#allocation20 + $0x70] sm:$0xff]
    %v1080 = vld [vmem:[#allocation20 + $0x78] sm:$0xff]
    %v1081 = vld [vmem:[#allocation20 + $0x80] sm:$0xff]
    %v1082 = vld [vmem:[#allocation20 + $0x88] sm:$0xff]
    %v1083 = vld [vmem:[#allocation22] sm:$0xff]
    %v1084 = vld [vmem:[#allocation22 + $0x8] sm:$0xff]
    %v1085 = vld [vmem:[#allocation22 + $0x10] sm:$0xff]
    %v1086 = vld [vmem:[#allocation22 + $0x18] sm:$0xff]
    %v1087 = vld [vmem:[#allocation22 + $0x20] sm:$0xff]
    %v1088 = vld [vmem:[#allocation22 + $0x28] sm:$0xff]
    %v1089 = vld [vmem:[#allocation22 + $0x30] sm:$0xff]
    %v1090 = vld [vmem:[#allocation22 + $0x38] sm:$0xff]
    %v1091 = vld [vmem:[#allocation22 + $0x40] sm:$0xff]
    %v1092 = vld [vmem:[#allocation22 + $0x48] sm:$0xff]
    %v1093 = vld [vmem:[#allocation22 + $0x50] sm:$0xff]
    %v1094 = vld [vmem:[#allocation22 + $0x58] sm:$0xff]
    %v1095 = vld [vmem:[#allocation22 + $0x60] sm:$0xff]
    %v1096 = vld [vmem:[#allocation22 + $0x68] sm:$0xff]
    %v1097 = vld [vmem:[#allocation22 + $0x70] sm:$0xff]
    %v1098 = vld [vmem:[#allocation22 + $0x78] sm:$0xff]
    %v1099 = vld [vmem:[#allocation22 + $0x80] sm:$0xff]
    %v1100 = vld [vmem:[#allocation22 + $0x88] sm:$0xff]
    %v1101 = vld [vmem:[#allocation22 + $0x90] sm:$0xff]
    %v1102 = vld [vmem:[#allocation22 + $0x98] sm:$0xff]
    %v1103 = vld [vmem:[#allocation22 + $0xa0] sm:$0xff]
    %v1104 = vld [vmem:[#allocation22 + $0xa8] sm:$0xff]
    %v1105 = vld [vmem:[#allocation22 + $0xb0] sm:$0xff]
    %v1106 = vld [vmem:[#allocation22 + $0xb8] sm:$0xff]
    %v1107 = vld [vmem:[#allocation22 + $0xc0] sm:$0xff]
    %v1108 = vld [vmem:[#allocation22 + $0xc8] sm:$0xff]
    %v1109 = vld [vmem:[#allocation22 + $0xd0] sm:$0xff]
    %v1110 = vld [vmem:[#allocation22 + $0xd8] sm:$0xff]
    %v1111 = vld [vmem:[#allocation22 + $0xe0] sm:$0xff]
    %v1112 = vld [vmem:[#allocation22 + $0xe8] sm:$0xff]
    %v1113 = vld [vmem:[#allocation22 + $0xf0] sm:$0xff]
    %v1114 = vld [vmem:[#allocation22 + $0xf8] sm:$0xff]
    %v1115 = vld [vmem:[#allocation22 + $0x100] sm:$0xff]
    %v1116 = vld [vmem:[#allocation22 + $0x108] sm:$0xff]
    %v1117 = vld [vmem:[#allocation22 + $0x110] sm:$0xff]
    %v1118 = vld [vmem:[#allocation22 + $0x118] sm:$0xff]
    %v1119 = vld [vmem:[#allocation22 + $0x120] sm:$0xff]
    %v1120 = vld [vmem:[#allocation22 + $0x128] sm:$0xff]
    %v1121 = vld [vmem:[#allocation22 + $0x130] sm:$0xff]
    %v1122 = vld [vmem:[#allocation22 + $0x138] sm:$0xff]
    %v1123 = vld [vmem:[#allocation22 + $0x140] sm:$0xff]
    %v1124 = vld [vmem:[#allocation22 + $0x148] sm:$0xff]
    %v1125 = vld [vmem:[#allocation22 + $0x150] sm:$0xff]
    %v1126 = vld [vmem:[#allocation22 + $0x158] sm:$0xff]
    %v1127 = vld [vmem:[#allocation22 + $0x160] sm:$0xff]
    %v1128 = vld [vmem:[#allocation22 + $0x168] sm:$0xff]
    %v1129 = vld [vmem:[#allocation22 + $0x170] sm:$0xff]
    %v1130 = vld [vmem:[#allocation22 + $0x178] sm:$0xff]
    %v1131 = vld [vmem:[#allocation22 + $0x180] sm:$0xff]
    %v1132 = vld [vmem:[#allocation22 + $0x188] sm:$0xff]
    %v1133 = vld [vmem:[#allocation22 + $0x190] sm:$0xff]
    %v1134 = vld [vmem:[#allocation22 + $0x198] sm:$0xff]
    %v1135 = vld [vmem:[#allocation22 + $0x1a0] sm:$0xff]
    %v1136 = vld [vmem:[#allocation22 + $0x1a8] sm:$0xff]
    %v1137 = vld [vmem:[#allocation22 + $0x1b0] sm:$0xff]
    %v1138 = vld [vmem:[#allocation22 + $0x1b8] sm:$0xff]
    %v1139 = vld [vmem:[#allocation22 + $0x1c0] sm:$0xff]
    %v1140 = vld [vmem:[#allocation22 + $0x1c8] sm:$0xff]
    %v1141 = vld [vmem:[#allocation22 + $0x1d0] sm:$0xff]
    %v1142 = vld [vmem:[#allocation22 + $0x1d8] sm:$0xff]
    %v1143 = vld [vmem:[#allocation22 + $0x1e0] sm:$0xff]
    %v1144 = vld [vmem:[#allocation22 + $0x1e8] sm:$0xff]
    %v1145 = vld [vmem:[#allocation22 + $0x1f0] sm:$0xff]
    %v1146 = vld [vmem:[#allocation22 + $0x1f8] sm:$0xff]
    %v1147 = vld [vmem:[#allocation22 + $0x200] sm:$0xff]
    %v1148 = vld [vmem:[#allocation22 + $0x208] sm:$0xff]
    %v1149 = vld [vmem:[#allocation22 + $0x210] sm:$0xff]
    %v1150 = vld [vmem:[#allocation22 + $0x218] sm:$0xff]
    %v1151 = vld [vmem:[#allocation22 + $0x220] sm:$0xff]
    %v1152 = vld [vmem:[#allocation22 + $0x228] sm:$0xff]
    %v1153 = vld [vmem:[#allocation22 + $0x230] sm:$0xff]
    %v1154 = vld [vmem:[#allocation22 + $0x238] sm:$0xff]
    %v1155 = vld [vmem:[#allocation22 + $0x240] sm:$0xff]
    %v1156 = vld [vmem:[#allocation22 + $0x248] sm:$0xff]
    %v1157 = vld [vmem:[#allocation22 + $0x250] sm:$0xff]
    %v1158 = vld [vmem:[#allocation22 + $0x258] sm:$0xff]
    %v1159 = vld [vmem:[#allocation22 + $0x260] sm:$0xff]
    %v1160 = vld [vmem:[#allocation22 + $0x268] sm:$0xff]
    %v1161 = vld [vmem:[#allocation22 + $0x270] sm:$0xff]
    %v1162 = vld [vmem:[#allocation22 + $0x278] sm:$0xff]
    %v1163 = vld [vmem:[#allocation22 + $0x280] sm:$0xff]
    %v1164 = vld [vmem:[#allocation22 + $0x288] sm:$0xff]
    %v1165 = vld [vmem:[#allocation22 + $0x290] sm:$0xff]
    %v1166 = vld [vmem:[#allocation22 + $0x298] sm:$0xff]
    %v1167 = vld [vmem:[#allocation22 + $0x2a0] sm:$0xff]
    %v1168 = vld [vmem:[#allocation22 + $0x2a8] sm:$0xff]
    %v1169 = vld [vmem:[#allocation22 + $0x2b0] sm:$0xff]
    %v1170 = vld [vmem:[#allocation22 + $0x2b8] sm:$0xff]
    %v1171 = vld [vmem:[#allocation22 + $0x2c0] sm:$0xff]
    %v1172 = vld [vmem:[#allocation22 + $0x2c8] sm:$0xff]
    %v1173 = vld [vmem:[#allocation22 + $0x2d0] sm:$0xff]
    %v1174 = vld [vmem:[#allocation22 + $0x2d8] sm:$0xff]
    %v1175 = vld [vmem:[#allocation22 + $0x2e0] sm:$0xff]
    %v1176 = vld [vmem:[#allocation22 + $0x2e8] sm:$0xff]
    %v1177 = vld [vmem:[#allocation22 + $0x2f0] sm:$0xff]
    %v1178 = vld [vmem:[#allocation22 + $0x2f8] sm:$0xff]
    %v1179 = vld [vmem:[#allocation23] sm:$0xff]
    %v1180 = vld [vmem:[#allocation23 + $0x8] sm:$0xff]
    %v1181 = vld [vmem:[#allocation23 + $0x10] sm:$0xff]
    %v1182 = vld [vmem:[#allocation23 + $0x18] sm:$0xff]
    %v1183 = vld [vmem:[#allocation23 + $0x20] sm:$0xff]
    %v1184 = vld [vmem:[#allocation23 + $0x28] sm:$0xff]
    %v1185 = vld [vmem:[#allocation23 + $0x30] sm:$0xff]
    %v1186 = vld [vmem:[#allocation23 + $0x38] sm:$0xff]
    %v1187 = vld [vmem:[#allocation23 + $0x40] sm:$0xff]
    %v1188 = vld [vmem:[#allocation23 + $0x48] sm:$0xff]
    %v1189 = vld [vmem:[#allocation23 + $0x50] sm:$0xff]
    %v1190 = vld [vmem:[#allocation23 + $0x58] sm:$0xff]
    %v1191 = vld [vmem:[#allocation23 + $0x60] sm:$0xff]
    %v1192 = vld [vmem:[#allocation23 + $0x68] sm:$0xff]
    %v1193 = vld [vmem:[#allocation23 + $0x70] sm:$0xff]
    %v1194 = vld [vmem:[#allocation23 + $0x78] sm:$0xff]
    %v1195 = vld [vmem:[#allocation23 + $0x80] sm:$0xff]
    %v1196 = vld [vmem:[#allocation23 + $0x88] sm:$0xff]
    %v1197 = vld [vmem:[#allocation23 + $0x90] sm:$0xff]
    %v1198 = vld [vmem:[#allocation23 + $0x98] sm:$0xff]
    %v1199 = vld [vmem:[#allocation23 + $0xa0] sm:$0xff]
    %v1200 = vld [vmem:[#allocation23 + $0xa8] sm:$0xff]
    %v1201 = vld [vmem:[#allocation23 + $0xb0] sm:$0xff]
    %v1202 = vld [vmem:[#allocation23 + $0xb8] sm:$0xff]
    %v1203 = vld [vmem:[#allocation23 + $0xc0] sm:$0xff]
    %v1204 = vld [vmem:[#allocation23 + $0xc8] sm:$0xff]
    %v1205 = vld [vmem:[#allocation23 + $0xd0] sm:$0xff]
    %v1206 = vld [vmem:[#allocation23 + $0xd8] sm:$0xff]
    %v1207 = vld [vmem:[#allocation23 + $0xe0] sm:$0xff]
    %v1208 = vld [vmem:[#allocation23 + $0xe8] sm:$0xff]
    %v1209 = vld [vmem:[#allocation23 + $0xf0] sm:$0xff]
    %v1210 = vld [vmem:[#allocation23 + $0xf8] sm:$0xff]
    %v1211 = vld [vmem:[#allocation23 + $0x100] sm:$0xff]
    %v1212 = vld [vmem:[#allocation23 + $0x108] sm:$0xff]
    %v1213 = vld [vmem:[#allocation23 + $0x110] sm:$0xff]
    %v1214 = vld [vmem:[#allocation23 + $0x118] sm:$0xff]
    %v1215 = vld [vmem:[#allocation23 + $0x120] sm:$0xff]
    %v1216 = vld [vmem:[#allocation23 + $0x128] sm:$0xff]
    %v1217 = vld [vmem:[#allocation23 + $0x130] sm:$0xff]
    %v1218 = vld [vmem:[#allocation23 + $0x138] sm:$0xff]
    %v1219 = vld [vmem:[#allocation23 + $0x140] sm:$0xff]
    %v1220 = vld [vmem:[#allocation23 + $0x148] sm:$0xff]
    %v1221 = vld [vmem:[#allocation23 + $0x150] sm:$0xff]
    %v1222 = vld [vmem:[#allocation23 + $0x158] sm:$0xff]
    %v1223 = vld [vmem:[#allocation23 + $0x160] sm:$0xff]
    %v1224 = vld [vmem:[#allocation23 + $0x168] sm:$0xff]
    %v1225 = vld [vmem:[#allocation23 + $0x170] sm:$0xff]
    %v1226 = vld [vmem:[#allocation23 + $0x178] sm:$0xff]
    %v1227 = vld [vmem:[#allocation23 + $0x180] sm:$0xff]
    %v1228 = vld [vmem:[#allocation23 + $0x188] sm:$0xff]
    %v1229 = vld [vmem:[#allocation23 + $0x190] sm:$0xff]
    %v1230 = vld [vmem:[#allocation23 + $0x198] sm:$0xff]
    %v1231 = vld [vmem:[#allocation23 + $0x1a0] sm:$0xff]
    %v1232 = vld [vmem:[#allocation23 + $0x1a8] sm:$0xff]
    %v1233 = vld [vmem:[#allocation23 + $0x1b0] sm:$0xff]
    %v1234 = vld [vmem:[#allocation23 + $0x1b8] sm:$0xff]
    %v1235 = vld [vmem:[#allocation23 + $0x1c0] sm:$0xff]
    %v1236 = vld [vmem:[#allocation23 + $0x1c8] sm:$0xff]
    %v1237 = vld [vmem:[#allocation23 + $0x1d0] sm:$0xff]
    %v1238 = vld [vmem:[#allocation23 + $0x1d8] sm:$0xff]
    %v1239 = vld [vmem:[#allocation23 + $0x1e0] sm:$0xff]
    %v1240 = vld [vmem:[#allocation23 + $0x1e8] sm:$0xff]
    %v1241 = vld [vmem:[#allocation23 + $0x1f0] sm:$0xff]
    %v1242 = vld [vmem:[#allocation23 + $0x1f8] sm:$0xff]
    %v1243 = vld [vmem:[#allocation23 + $0x200] sm:$0xff]
    %v1244 = vld [vmem:[#allocation23 + $0x208] sm:$0xff]
    %v1245 = vld [vmem:[#allocation23 + $0x210] sm:$0xff]
    %v1246 = vld [vmem:[#allocation23 + $0x218] sm:$0xff]
    %v1247 = vld [vmem:[#allocation23 + $0x220] sm:$0xff]
    %v1248 = vld [vmem:[#allocation23 + $0x228] sm:$0xff]
    %v1249 = vld [vmem:[#allocation23 + $0x230] sm:$0xff]
    %v1250 = vld [vmem:[#allocation23 + $0x238] sm:$0xff]
    %v1251 = vld [vmem:[#allocation23 + $0x240] sm:$0xff]
    %v1252 = vld [vmem:[#allocation23 + $0x248] sm:$0xff]
    %v1253 = vld [vmem:[#allocation23 + $0x250] sm:$0xff]
    %v1254 = vld [vmem:[#allocation23 + $0x258] sm:$0xff]
    %v1255 = vld [vmem:[#allocation23 + $0x260] sm:$0xff]
    %v1256 = vld [vmem:[#allocation23 + $0x268] sm:$0xff]
    %v1257 = vld [vmem:[#allocation23 + $0x270] sm:$0xff]
    %v1258 = vld [vmem:[#allocation23 + $0x278] sm:$0xff]
    %v1259 = vld [vmem:[#allocation23 + $0x280] sm:$0xff]
    %v1260 = vld [vmem:[#allocation23 + $0x288] sm:$0xff]
    %v1261 = vld [vmem:[#allocation23 + $0x290] sm:$0xff]
    %v1262 = vld [vmem:[#allocation23 + $0x298] sm:$0xff]
    %v1263 = vld [vmem:[#allocation23 + $0x2a0] sm:$0xff]
    %v1264 = vld [vmem:[#allocation23 + $0x2a8] sm:$0xff]
    %v1265 = vld [vmem:[#allocation23 + $0x2b0] sm:$0xff]
    %v1266 = vld [vmem:[#allocation23 + $0x2b8] sm:$0xff]
    %v1267 = vld [vmem:[#allocation23 + $0x2c0] sm:$0xff]
    %v1268 = vld [vmem:[#allocation23 + $0x2c8] sm:$0xff]
    %v1269 = vld [vmem:[#allocation23 + $0x2d0] sm:$0xff]
    %v1270 = vld [vmem:[#allocation23 + $0x2d8] sm:$0xff]
    %v1271 = vld [vmem:[#allocation23 + $0x2e0] sm:$0xff]
    %v1272 = vld [vmem:[#allocation23 + $0x2e8] sm:$0xff]
    %v1273 = vld [vmem:[#allocation23 + $0x2f0] sm:$0xff]
    %v1274 = vld [vmem:[#allocation23 + $0x2f8] sm:$0xff]
    %v1275 = vld [vmem:[#allocation23 + $0x300] sm:$0xff]
    %v1276 = vld [vmem:[#allocation23 + $0x308] sm:$0xff]
    %v1277 = vld [vmem:[#allocation23 + $0x310] sm:$0xff]
    %v1278 = vld [vmem:[#allocation23 + $0x318] sm:$0xff]
    %v1279 = vld [vmem:[#allocation23 + $0x320] sm:$0xff]
    %v1280 = vld [vmem:[#allocation23 + $0x328] sm:$0xff]
    %v1281 = vld [vmem:[#allocation23 + $0x330] sm:$0xff]
    %v1282 = vld [vmem:[#allocation23 + $0x338] sm:$0xff]
    %v1283 = vld [vmem:[#allocation23 + $0x340] sm:$0xff]
    %v1284 = vld [vmem:[#allocation23 + $0x348] sm:$0xff]
    %v1285 = vld [vmem:[#allocation23 + $0x350] sm:$0xff]
    %v1286 = vld [vmem:[#allocation23 + $0x358] sm:$0xff]
    %v1287 = vld [vmem:[#allocation23 + $0x360] sm:$0xff]
    %v1288 = vld [vmem:[#allocation23 + $0x368] sm:$0xff]
    %v1289 = vld [vmem:[#allocation23 + $0x370] sm:$0xff]
    %v1290 = vld [vmem:[#allocation23 + $0x378] sm:$0xff]
    %v1291 = vld [vmem:[#allocation23 + $0x380] sm:$0xff]
    %v1292 = vld [vmem:[#allocation23 + $0x388] sm:$0xff]
    %v1293 = vld [vmem:[#allocation23 + $0x390] sm:$0xff]
    %v1294 = vld [vmem:[#allocation23 + $0x398] sm:$0xff]
    %v1295 = vld [vmem:[#allocation23 + $0x3a0] sm:$0xff]
    %v1296 = vld [vmem:[#allocation23 + $0x3a8] sm:$0xff]
    %v1297 = vld [vmem:[#allocation23 + $0x3b0] sm:$0xff]
    %v1298 = vld [vmem:[#allocation23 + $0x3b8] sm:$0xff]
    %v1299 = vld [vmem:[#allocation23 + $0x3c0] sm:$0xff]
    %v1300 = vld [vmem:[#allocation23 + $0x3c8] sm:$0xff]
    %v1301 = vld [vmem:[#allocation23 + $0x3d0] sm:$0xff]
    %v1302 = vld [vmem:[#allocation23 + $0x3d8] sm:$0xff]
    %v1303 = vld [vmem:[#allocation23 + $0x3e0] sm:$0xff]
    %v1304 = vld [vmem:[#allocation23 + $0x3e8] sm:$0xff]
    %v1305 = vld [vmem:[#allocation23 + $0x3f0] sm:$0xff]
    %v1306 = vld [vmem:[#allocation23 + $0x3f8] sm:$0xff]
    %v1307 = vld [vmem:[#allocation25] sm:$0xff]
    %v1308 = vld [vmem:[#allocation25 + $0x8] sm:$0xff]
    %v1309 = vld [vmem:[#allocation25 + $0x10] sm:$0xff]
    %v1310 = vld [vmem:[#allocation25 + $0x18] sm:$0xff]
    %v1311 = vld [vmem:[#allocation25 + $0x20] sm:$0xff]
    %v1312 = vld [vmem:[#allocation25 + $0x28] sm:$0xff]
    %v1313 = vld [vmem:[#allocation25 + $0x30] sm:$0xff]
    %v1314 = vld [vmem:[#allocation25 + $0x38] sm:$0xff]
    %v1315 = vld [vmem:[#allocation25 + $0x40] sm:$0xff]
    %v1316 = vld [vmem:[#allocation25 + $0x48] sm:$0xff]
    %v1317 = vld [vmem:[#allocation25 + $0x50] sm:$0xff]
    %v1318 = vld [vmem:[#allocation25 + $0x58] sm:$0xff]
    %v1319 = vld [vmem:[#allocation25 + $0x60] sm:$0xff]
    %v1320 = vld [vmem:[#allocation25 + $0x68] sm:$0xff]
    %v1321 = vld [vmem:[#allocation25 + $0x70] sm:$0xff]
    %v1322 = vld [vmem:[#allocation25 + $0x78] sm:$0xff]
    %v1323 = vld [vmem:[#allocation25 + $0x80] sm:$0xff]
    %v1324 = vld [vmem:[#allocation25 + $0x88] sm:$0xff]
    %v1325 = vld [vmem:[#allocation25 + $0x90] sm:$0xff]
    %v1326 = vld [vmem:[#allocation25 + $0x98] sm:$0xff]
    %v1327 = vld [vmem:[#allocation25 + $0xa0] sm:$0xff]
    %v1328 = vld [vmem:[#allocation25 + $0xa8] sm:$0xff]
    %v1329 = vld [vmem:[#allocation25 + $0xb0] sm:$0xff]
    %v1330 = vld [vmem:[#allocation25 + $0xb8] sm:$0xff]
    %v1331 = vld [vmem:[#allocation25 + $0xc0] sm:$0xff]
    %v1332 = vld [vmem:[#allocation25 + $0xc8] sm:$0xff]
    %v1333 = vld [vmem:[#allocation25 + $0xd0] sm:$0xff]
    %v1334 = vld [vmem:[#allocation25 + $0xd8] sm:$0xff]
    %v1335 = vld [vmem:[#allocation25 + $0xe0] sm:$0xff]
    %v1336 = vld [vmem:[#allocation25 + $0xe8] sm:$0xff]
    %v1337 = vld [vmem:[#allocation25 + $0xf0] sm:$0xff]
    %v1338 = vld [vmem:[#allocation25 + $0xf8] sm:$0xff]
    %v1339 = vld [vmem:[#allocation25 + $0x100] sm:$0xff]
    %v1340 = vld [vmem:[#allocation25 + $0x108] sm:$0xff]
    %v1341 = vld [vmem:[#allocation25 + $0x110] sm:$0xff]
    %v1342 = vld [vmem:[#allocation25 + $0x118] sm:$0xff]
    %v1343 = vld [vmem:[#allocation25 + $0x120] sm:$0xff]
    %v1344 = vld [vmem:[#allocation25 + $0x128] sm:$0xff]
    %v1345 = vld [vmem:[#allocation25 + $0x130] sm:$0xff]
    %v1346 = vld [vmem:[#allocation25 + $0x138] sm:$0xff]
    %v1347 = vld [vmem:[#allocation25 + $0x140] sm:$0xff]
    %v1348 = vld [vmem:[#allocation25 + $0x148] sm:$0xff]
    %v1349 = vld [vmem:[#allocation25 + $0x150] sm:$0xff]
    %v1350 = vld [vmem:[#allocation25 + $0x158] sm:$0xff]
    %v1351 = vld [vmem:[#allocation25 + $0x160] sm:$0xff]
    %v1352 = vld [vmem:[#allocation25 + $0x168] sm:$0xff]
    %v1353 = vld [vmem:[#allocation25 + $0x170] sm:$0xff]
    %v1354 = vld [vmem:[#allocation25 + $0x178] sm:$0xff]
    %v1355 = vld [vmem:[#allocation25 + $0x180] sm:$0xff]
    %v1356 = vld [vmem:[#allocation25 + $0x188] sm:$0xff]
    %v1357 = vld [vmem:[#allocation25 + $0x190] sm:$0xff]
    %v1358 = vld [vmem:[#allocation25 + $0x198] sm:$0xff]
    %v1359 = vld [vmem:[#allocation25 + $0x1a0] sm:$0xff]
    %v1360 = vld [vmem:[#allocation25 + $0x1a8] sm:$0xff]
    %v1361 = vld [vmem:[#allocation25 + $0x1b0] sm:$0xff]
    %v1362 = vld [vmem:[#allocation25 + $0x1b8] sm:$0xff]
    %v1363 = vld [vmem:[#allocation25 + $0x1c0] sm:$0xff]
    %v1364 = vld [vmem:[#allocation25 + $0x1c8] sm:$0xff]
    %v1365 = vld [vmem:[#allocation25 + $0x1d0] sm:$0xff]
    %v1366 = vld [vmem:[#allocation25 + $0x1d8] sm:$0xff]
    %v1367 = vld [vmem:[#allocation25 + $0x1e0] sm:$0xff]
    %v1368 = vld [vmem:[#allocation25 + $0x1e8] sm:$0xff]
    %v1369 = vld [vmem:[#allocation25 + $0x1f0] sm:$0xff]
    %v1370 = vld [vmem:[#allocation25 + $0x1f8] sm:$0xff]
    %v1371 = vld [vmem:[#allocation25 + $0x200] sm:$0xff]
    %v1372 = vld [vmem:[#allocation25 + $0x208] sm:$0xff]
    %v1373 = vld [vmem:[#allocation25 + $0x210] sm:$0xff]
    %v1374 = vld [vmem:[#allocation25 + $0x218] sm:$0xff]
    %v1375 = vld [vmem:[#allocation25 + $0x220] sm:$0xff]
    %v1376 = vld [vmem:[#allocation25 + $0x228] sm:$0xff]
    %v1377 = vld [vmem:[#allocation25 + $0x230] sm:$0xff]
    %v1378 = vld [vmem:[#allocation25 + $0x238] sm:$0xff]
    %v1379 = vld [vmem:[#allocation25 + $0x240] sm:$0xff]
    %v1380 = vld [vmem:[#allocation25 + $0x248] sm:$0xff]
    %v1381 = vld [vmem:[#allocation25 + $0x250] sm:$0xff]
    %v1382 = vld [vmem:[#allocation25 + $0x258] sm:$0xff]
    %v1383 = vld [vmem:[#allocation25 + $0x260] sm:$0xff]
    %v1384 = vld [vmem:[#allocation25 + $0x268] sm:$0xff]
    %v1385 = vld [vmem:[#allocation25 + $0x270] sm:$0xff]
    %v1386 = vld [vmem:[#allocation25 + $0x278] sm:$0xff]
    %v1387 = vld [vmem:[#allocation25 + $0x280] sm:$0xff]
    %v1388 = vld [vmem:[#allocation25 + $0x288] sm:$0xff]
    %v1389 = vld [vmem:[#allocation25 + $0x290] sm:$0xff]
    %v1390 = vld [vmem:[#allocation25 + $0x298] sm:$0xff]
    %v1391 = vld [vmem:[#allocation25 + $0x2a0] sm:$0xff]
    %v1392 = vld [vmem:[#allocation25 + $0x2a8] sm:$0xff]
    %v1393 = vld [vmem:[#allocation25 + $0x2b0] sm:$0xff]
    %v1394 = vld [vmem:[#allocation25 + $0x2b8] sm:$0xff]
    %v1395 = vld [vmem:[#allocation25 + $0x2c0] sm:$0xff]
    %v1396 = vld [vmem:[#allocation25 + $0x2c8] sm:$0xff]
    %v1397 = vld [vmem:[#allocation25 + $0x2d0] sm:$0xff]
    %v1398 = vld [vmem:[#allocation25 + $0x2d8] sm:$0xff]
    %v1399 = vld [vmem:[#allocation25 + $0x2e0] sm:$0xff]
    %v1400 = vld [vmem:[#allocation25 + $0x2e8] sm:$0xff]
    %v1401 = vld [vmem:[#allocation25 + $0x2f0] sm:$0xff]
    %v1402 = vld [vmem:[#allocation25 + $0x2f8] sm:$0xff]
    %v1403 = vld [vmem:[#allocation25 + $0x300] sm:$0xff]
    %v1404 = vld [vmem:[#allocation25 + $0x308] sm:$0xff]
    %v1405 = vld [vmem:[#allocation25 + $0x310] sm:$0xff]
    %v1406 = vld [vmem:[#allocation25 + $0x318] sm:$0xff]
    %v1407 = vld [vmem:[#allocation25 + $0x320] sm:$0xff]
    %v1408 = vld [vmem:[#allocation25 + $0x328] sm:$0xff]
    %v1409 = vld [vmem:[#allocation25 + $0x330] sm:$0xff]
    %v1410 = vld [vmem:[#allocation25 + $0x338] sm:$0xff]
    %v1411 = vld [vmem:[#allocation25 + $0x340] sm:$0xff]
    %v1412 = vld [vmem:[#allocation25 + $0x348] sm:$0xff]
    %v1413 = vld [vmem:[#allocation25 + $0x350] sm:$0xff]
    %v1414 = vld [vmem:[#allocation25 + $0x358] sm:$0xff]
    %v1415 = vld [vmem:[#allocation25 + $0x360] sm:$0xff]
    %v1416 = vld [vmem:[#allocation25 + $0x368] sm:$0xff]
    %v1417 = vld [vmem:[#allocation25 + $0x370] sm:$0xff]
    %v1418 = vld [vmem:[#allocation25 + $0x378] sm:$0xff]
    %v1419 = vld [vmem:[#allocation25 + $0x380] sm:$0xff]
    %v1420 = vld [vmem:[#allocation25 + $0x388] sm:$0xff]
    %v1421 = vld [vmem:[#allocation25 + $0x390] sm:$0xff]
    %v1422 = vld [vmem:[#allocation25 + $0x398] sm:$0xff]
    %v1423 = vld [vmem:[#allocation25 + $0x3a0] sm:$0xff]
    %v1424 = vld [vmem:[#allocation25 + $0x3a8] sm:$0xff]
    %v1425 = vld [vmem:[#allocation25 + $0x3b0] sm:$0xff]
    %v1426 = vld [vmem:[#allocation25 + $0x3b8] sm:$0xff]
    %v1427 = vld [vmem:[#allocation25 + $0x3c0] sm:$0xff]
    %v1428 = vld [vmem:[#allocation25 + $0x3c8] sm:$0xff]
    %v1429 = vld [vmem:[#allocation25 + $0x3d0] sm:$0xff]
    %v1430 = vld [vmem:[#allocation25 + $0x3d8] sm:$0xff]
    %v1431 = vld [vmem:[#allocation25 + $0x3e0] sm:$0xff]
    %v1432 = vld [vmem:[#allocation25 + $0x3e8] sm:$0xff]
    %v1433 = vld [vmem:[#allocation25 + $0x3f0] sm:$0xff]
    %v1434 = vld [vmem:[#allocation25 + $0x3f8] sm:$0xff]
    %v1435 = vld [vmem:[%s16] sm:$0xff]
    %v1436 = vld [vmem:[%s16 + $0x8] sm:$0xff]
    %v1437 = vld [vmem:[%s16 + $0x10] sm:$0xff]
    %v1438 = vld [vmem:[%s16 + $0x18] sm:$0xff]
    %v1439 = vld [vmem:[%s16 + $0x20] sm:$0xff]
    %v1440 = vld [vmem:[%s16 + $0x28] sm:$0xff]
    %v1441 = vld [vmem:[%s16 + $0x30] sm:$0xff]
    %v1442 = vld [vmem:[%s16 + $0x38] sm:$0xff]
    %v1443 = vld [vmem:[%s16 + $0x40] sm:$0xff]
    %v1444 = vld [vmem:[%s16 + $0x48] sm:$0xff]
    %v1445 = vld [vmem:[%s16 + $0x50] sm:$0xff]
    %v1446 = vld [vmem:[%s16 + $0x58] sm:$0xff]
    %v1447 = vld [vmem:[%s16 + $0x60] sm:$0xff]
    %v1448 = vld [vmem:[%s16 + $0x68] sm:$0xff]
    %v1449 = vld [vmem:[%s16 + $0x70] sm:$0xff]
    %v1450 = vld [vmem:[%s16 + $0x78] sm:$0xff]
    %v1451 = vld [vmem:[%s16 + $0x80] sm:$0xff]
    %v1452 = vld [vmem:[%s16 + $0x88] sm:$0xff]
    %v1453 = vld [vmem:[%s16 + $0x90] sm:$0xff]
    %v1454 = vld [vmem:[%s16 + $0x98] sm:$0xff]
    %v1455 = vld [vmem:[%s16 + $0xa0] sm:$0xff]
    %v1456 = vld [vmem:[%s16 + $0xa8] sm:$0xff]
    %v1457 = vld [vmem:[%s16 + $0xb0] sm:$0xff]
    %v1458 = vld [vmem:[%s16 + $0xb8] sm:$0xff]
    %v1459 = vld [vmem:[%s16 + $0xc0] sm:$0xff]
    %v1460 = vld [vmem:[%s16 + $0xc8] sm:$0xff]
    %v1461 = vld [vmem:[%s16 + $0xd0] sm:$0xff]
    %v1462 = vld [vmem:[%s16 + $0xd8] sm:$0xff]
    %v1463 = vld [vmem:[%s16 + $0xe0] sm:$0xff]
    %v1464 = vld [vmem:[%s16 + $0xe8] sm:$0xff]
    %v1465 = vld [vmem:[%s16 + $0xf0] sm:$0xff]
    %v1466 = vld [vmem:[%s16 + $0xf8] sm:$0xff]
    %v1467 = vld [vmem:[#allocation26] sm:$0xff]
    %v1468 = vld [vmem:[#allocation26 + $0x8] sm:$0xff]
    %v1469 = vld [vmem:[#allocation26 + $0x10] sm:$0xff]
    %v1470 = vld [vmem:[#allocation26 + $0x18] sm:$0xff]
    %v1471 = vld [vmem:[#allocation26 + $0x20] sm:$0xff]
    %v1472 = vld [vmem:[#allocation26 + $0x28] sm:$0xff]
    %v1473 = vld [vmem:[#allocation26 + $0x30] sm:$0xff]
    %v1474 = vld [vmem:[#allocation26 + $0x38] sm:$0xff]
    %v1475 = vld [vmem:[#allocation26 + $0x40] sm:$0xff]
    %v1476 = vld [vmem:[#allocation26 + $0x48] sm:$0xff]
    %v1477 = vld [vmem:[#allocation26 + $0x50] sm:$0xff]
    %v1478 = vld [vmem:[#allocation26 + $0x58] sm:$0xff]
    %v1479 = vld [vmem:[#allocation26 + $0x60] sm:$0xff]
    %v1480 = vld [vmem:[#allocation26 + $0x68] sm:$0xff]
    %v1481 = vld [vmem:[#allocation26 + $0x70] sm:$0xff]
    %v1482 = vld [vmem:[#allocation26 + $0x78] sm:$0xff]
    %v1483 = vld [vmem:[#allocation26 + $0x80] sm:$0xff]
    %v1484 = vld [vmem:[#allocation26 + $0x88] sm:$0xff]
    %v1485 = vld [vmem:[#allocation26 + $0x90] sm:$0xff]
    %v1486 = vld [vmem:[#allocation26 + $0x98] sm:$0xff]
    %v1487 = vld [vmem:[#allocation26 + $0xa0] sm:$0xff]
    %v1488 = vld [vmem:[#allocation26 + $0xa8] sm:$0xff]
    %v1489 = vld [vmem:[#allocation26 + $0xb0] sm:$0xff]
    %v1490 = vld [vmem:[#allocation26 + $0xb8] sm:$0xff]
    %v1491 = vld [vmem:[%s0] sm:$0xff]
    %v1492 = vld [vmem:[%s0 + $0x8] sm:$0xff]
    %v1493 = vld [vmem:[#allocation2] sm:$0xff]
    %v1494 = vld [vmem:[#allocation2 + $0x8] sm:$0xff]
    %v1496 = vlaneseq
    %v1497 = vshrl.u32 %v1496, 7
    %v1498 = vsub.s32 0, %v1497
    %v1499 = vrot.slane %v268, %v1498
    %v1500 = vlaneseq
    %v1501 = vshrl.u32 %v1500, 7
    %v1502 = vsub.s32 1, %v1501
    %v1503 = vrot.slane %v268, %v1502
    %v1504 = vlaneseq
    %v1505 = vshrl.u32 %v1504, 7
    %v1506 = vsub.s32 2, %v1505
    %v1507 = vrot.slane %v268, %v1506
    %vm1511 = vcmask 64512
    %v1513 = vsel %vm1511, %v1491, 0
    %v1516 = vsel %vm1511, %v1492, 0
    %1518 = vmatprep.subr.mxu0 %v266
    %1519 = vmatpush1.msra.mxu0 %v265
    %1520 = vmatprep.subr.mxu0 0.0
    %1521 = vmatpush1.msra.mxu0 0.0
    %1522 = vmatprep.subr.mxu0 0.0
    %1523 = vmatpush1.msra.mxu0 0.0
    %1524 = vmatprep.subr.mxu0 0.0
    %1525 = vmatpush1.msra.mxu0 0.0
    %1526 = vmatprep.subr.mxu0 0.0
    %1527 = vmatpush1.msra.mxu0 0.0
    %1528 = vmatprep.subr.mxu0 0.0
    %1529 = vmatpush1.msra.mxu0 0.0
    %1530 = vmatprep.subr.mxu0 0.0
    %1531 = vmatpush1.msra.mxu0 0.0
    %1532 = vmatprep.subr.mxu0 0.0
    %1533 = vmatpush1.msra.mxu0 0.0
    %1534 = vmatprep.subr.mxu0 0.0
    %1535 = vmatpush1.msra.mxu0 0.0
    %1536 = vmatprep.subr.mxu0 0.0
    %1537 = vmatpush1.msra.mxu0 0.0
    %1538 = vmatprep.subr.mxu0 0.0
    %1539 = vmatpush1.msra.mxu0 0.0
    %1540 = vmatprep.subr.mxu0 0.0
    %1541 = vmatpush1.msra.mxu0 0.0
    %1542 = vmatprep.subr.mxu0 0.0
    %1543 = vmatpush1.msra.mxu0 0.0
    %1544 = vmatprep.subr.mxu0 0.0
    %1545 = vmatpush1.msra.mxu0 0.0
    %1546 = vmatprep.subr.mxu0 0.0
    %1547 = vmatpush1.msra.mxu0 0.0
    %1548 = vmatprep.subr.mxu0 0.0
    %1549 = vmatpush1.msra.mxu0 0.0
    %1550 = vmatprep.subr.mxu0 0.0
    %1551 = vmatpush1.msra.mxu0 0.0
    %1552 = vmatprep.subr.mxu0 0.0
    %1553 = vmatpush1.msra.mxu0 0.0
    %1554 = vmatprep.subr.mxu0 0.0
    %1555 = vmatpush1.msra.mxu0 0.0
    %1556 = vmatprep.subr.mxu0 0.0
    %1557 = vmatpush1.msra.mxu0 0.0
    %1558 = vmatprep.subr.mxu0 0.0
    %1559 = vmatpush1.msra.mxu0 0.0
    %1560 = vmatprep.subr.mxu0 0.0
    %1561 = vmatpush1.msra.mxu0 0.0
    %1562 = vmatprep.subr.mxu0 0.0
    %1563 = vmatpush1.msra.mxu0 0.0
    %1564 = vmatprep.subr.mxu0 0.0
    %1565 = vmatpush1.msra.mxu0 0.0
    %1566 = vmatprep.subr.mxu0 0.0
    %1567 = vmatpush1.msra.mxu0 0.0
    %1568 = vmatprep.subr.mxu0 0.0
    %1569 = vmatpush1.msra.mxu0 0.0
    %1570 = vmatprep.subr.mxu0 0.0
    %1571 = vmatpush1.msra.mxu0 0.0
    %1572 = vmatprep.subr.mxu0 0.0
    %1573 = vmatpush1.msra.mxu0 0.0
    %1574 = vmatprep.subr.mxu0 0.0
    %1575 = vmatpush1.msra.mxu0 0.0
    %1576 = vmatprep.subr.mxu0 0.0
    %1577 = vmatpush1.msra.mxu0 0.0
    %1578 = vmatprep.subr.mxu0 0.0
    %1579 = vmatpush1.msra.mxu0 0.0
    %1580 = vmatprep.subr.mxu0 0.0
    %1581 = vmatpush1.msra.mxu0 0.0
    %1582 = vmatprep.mubr.f32.mxu0 0.0
    %1583 = vmatmul.mubr.f32.gmra.mrb[0].mxu0 %v1513
    %v1584 = vpop.f32.mrb[0].mxu0
    %v1585 = vadd.f32 %v1499, %v1584
    %v1586 = vpop.f32.mrb[0].mxu0
    %v1587 = vadd.f32 %v1503, %v1586
    %1588 = vmatprep.mubr.f32.mxu0 0.0
    %1589 = vmatmul.mubr.f32.gmra.mrb[0].mxu0 %v1516
    %v1590 = vpop.f32.mrb[0].mxu0
    %v1591 = vadd.f32 %v1499, %v1590
    %v1592 = vpop.f32.mrb[0].mxu0
    %v1593 = vadd.f32 %v1503, %v1592
    %1594 = vdwg.mxu0
    %1595 = vmatprep.subr.mxu0 0.0
    %1596 = vmatpush1.msra.mxu0 %v267
    %1597 = vmatprep.subr.mxu0 0.0
    %1598 = vmatpush1.msra.mxu0 0.0
    %1599 = vmatprep.subr.mxu0 0.0
    %1600 = vmatpush1.msra.mxu0 0.0
    %1601 = vmatprep.subr.mxu0 0.0
    %1602 = vmatpush1.msra.mxu0 0.0
    %1603 = vmatprep.subr.mxu0 0.0
    %1604 = vmatpush1.msra.mxu0 0.0
    %1605 = vmatprep.subr.mxu0 0.0
    %1606 = vmatpush1.msra.mxu0 0.0
    %1607 = vmatprep.subr.mxu0 0.0
    %1608 = vmatpush1.msra.mxu0 0.0
    %1609 = vmatprep.subr.mxu0 0.0
    %1610 = vmatpush1.msra.mxu0 0.0
    %1611 = vmatprep.subr.mxu0 0.0
    %1612 = vmatpush1.msra.mxu0 0.0
    %1613 = vmatprep.subr.mxu0 0.0
    %1614 = vmatpush1.msra.mxu0 0.0
    %1615 = vmatprep.subr.mxu0 0.0
    %1616 = vmatpush1.msra.mxu0 0.0
    %1617 = vmatprep.subr.mxu0 0.0
    %1618 = vmatpush1.msra.mxu0 0.0
    %1619 = vmatprep.subr.mxu0 0.0
    %1620 = vmatpush1.msra.mxu0 0.0
    %1621 = vmatprep.subr.mxu0 0.0
    %1622 = vmatpush1.msra.mxu0 0.0
    %1623 = vmatprep.subr.mxu0 0.0
    %1624 = vmatpush1.msra.mxu0 0.0
    %1625 = vmatprep.subr.mxu0 0.0
    %1626 = vmatpush1.msra.mxu0 0.0
    %1627 = vmatprep.subr.mxu0 0.0
    %1628 = vmatpush1.msra.mxu0 0.0
    %1629 = vmatprep.subr.mxu0 0.0
    %1630 = vmatpush1.msra.mxu0 0.0
    %1631 = vmatprep.subr.mxu0 0.0
    %1632 = vmatpush1.msra.mxu0 0.0
    %1633 = vmatprep.subr.mxu0 0.0
    %1634 = vmatpush1.msra.mxu0 0.0
    %1635 = vmatprep.subr.mxu0 0.0
    %1636 = vmatpush1.msra.mxu0 0.0
    %1637 = vmatprep.subr.mxu0 0.0
    %1638 = vmatpush1.msra.mxu0 0.0
    %1639 = vmatprep.subr.mxu0 0.0
    %1640 = vmatpush1.msra.mxu0 0.0
    %1641 = vmatprep.subr.mxu0 0.0
    %1642 = vmatpush1.msra.mxu0 0.0
    %1643 = vmatprep.subr.mxu0 0.0
    %1644 = vmatpush1.msra.mxu0 0.0
    %1645 = vmatprep.subr.mxu0 0.0
    %1646 = vmatpush1.msra.mxu0 0.0
    %1647 = vmatprep.subr.mxu0 0.0
    %1648 = vmatpush1.msra.mxu0 0.0
    %1649 = vmatprep.subr.mxu0 0.0
    %1650 = vmatpush1.msra.mxu0 0.0
    %1651 = vmatprep.subr.mxu0 0.0
    %1652 = vmatpush1.msra.mxu0 0.0
    %1653 = vmatprep.subr.mxu0 0.0
    %1654 = vmatpush1.msra.mxu0 0.0
    %1655 = vmatprep.subr.mxu0 0.0
    %1656 = vmatpush1.msra.mxu0 0.0
    %1657 = vmatprep.subr.mxu0 0.0
    %1658 = vmatpush1.msra.mxu0 0.0
    %1659 = vmatprep.mubr.f32.mxu0 0.0
    %1660 = vmatmul.mubr.f32.gmra.mrb[0].mxu0 %v1513
    %v1661 = vpop.f32.mrb[0].mxu0
    %v1662 = vadd.f32 %v1507, %v1661
    %v1663 = vpop.f32.mrb[0].mxu0
    %1664 = vmatprep.mubr.f32.mxu0 0.0
    %1665 = vmatmul.mubr.f32.gmra.mrb[0].mxu0 %v1516
    %v1666 = vpop.f32.mrb[0].mxu0
    %v1667 = vadd.f32 %v1507, %v1666
    %v1668 = vpop.f32.mrb[0].mxu0
    %1669 = vdwg.mxu0
    %v1670 = vmax.f32 %v1585, 0.0
    %v1671 = vmax.f32 %v1587, 0.0
    %v1672 = vmax.f32 %v1662, 0.0
    %v1673 = vmax.f32 %v1591, 0.0
    %v1674 = vmax.f32 %v1593, 0.0
    %v1675 = vmax.f32 %v1667, 0.0
    %v1677 = vlaneseq
    %v1678 = vshrl.u32 %v1677, 7
    %v1679 = vsub.s32 0, %v1678
    %v1680 = vrot.slane %v1064, %v1679
    %v1681 = vlaneseq
    %v1682 = vshrl.u32 %v1681, 7
    %v1683 = vsub.s32 1, %v1682
    %v1684 = vrot.slane %v1064, %v1683
    %v1685 = vlaneseq
    %v1686 = vshrl.u32 %v1685, 7
    %v1687 = vsub.s32 2, %v1686
    %v1688 = vrot.slane %v1064, %v1687
    %v1689 = vlaneseq
    %v1690 = vshrl.u32 %v1689, 7
    %v1691 = vsub.s32 3, %v1690
    %v1692 = vrot.slane %v1064, %v1691
    %v1693 = vlaneseq
    %v1694 = vshrl.u32 %v1693, 7
    %v1695 = vsub.s32 4, %v1694
    %v1696 = vrot.slane %v1064, %v1695
    %v1697 = vlaneseq
    %v1698 = vshrl.u32 %v1697, 7
    %v1699 = vsub.s32 5, %v1698
    %v1700 = vrot.slane %v1064, %v1699
    %vm1707 = vcmask 261120
    %v1709 = vsel %vm1707, %v1672, 0
    %v1712 = vsel %vm1707, %v1675, 0
    %1714 = vmatprep.subr.mxu0 %v849
    %1715 = vmatpush1.msra.mxu0 %v848
    %1716 = vmatprep.subr.mxu0 %v855
    %1717 = vmatpush1.msra.mxu0 %v854
    %1718 = vmatprep.subr.mxu0 %v861
    %1719 = vmatpush1.msra.mxu0 %v860
    %1720 = vmatprep.subr.mxu0 %v867
    %1721 = vmatpush1.msra.mxu0 %v866
    %1722 = vmatprep.subr.mxu0 %v873
    %1723 = vmatpush1.msra.mxu0 %v872
    %1724 = vmatprep.subr.mxu0 %v879
    %1725 = vmatpush1.msra.mxu0 %v878
    %1726 = vmatprep.subr.mxu0 %v885
    %1727 = vmatpush1.msra.mxu0 %v884
    %1728 = vmatprep.subr.mxu0 %v891
    %1729 = vmatpush1.msra.mxu0 %v890
    %1730 = vmatprep.subr.mxu0 %v897
    %1731 = vmatpush1.msra.mxu0 %v896
    %1732 = vmatprep.subr.mxu0 %v903
    %1733 = vmatpush1.msra.mxu0 %v902
    %1734 = vmatprep.subr.mxu0 %v909
    %1735 = vmatpush1.msra.mxu0 %v908
    %1736 = vmatprep.subr.mxu0 %v915
    %1737 = vmatpush1.msra.mxu0 %v914
    %1738 = vmatprep.subr.mxu0 %v921
    %1739 = vmatpush1.msra.mxu0 %v920
    %1740 = vmatprep.subr.mxu0 %v927
    %1741 = vmatpush1.msra.mxu0 %v926
    %1742 = vmatprep.subr.mxu0 %v933
    %1743 = vmatpush1.msra.mxu0 %v932
    %1744 = vmatprep.subr.mxu0 %v939
    %1745 = vmatpush1.msra.mxu0 %v938
    %1746 = vmatprep.subr.mxu0 %v945
    %1747 = vmatpush1.msra.mxu0 %v944
    %1748 = vmatprep.subr.mxu0 %v951
    %1749 = vmatpush1.msra.mxu0 %v950
    %1750 = vmatprep.subr.mxu0 %v957
    %1751 = vmatpush1.msra.mxu0 %v956
    %1752 = vmatprep.subr.mxu0 %v963
    %1753 = vmatpush1.msra.mxu0 %v962
    %1754 = vmatprep.subr.mxu0 %v969
    %1755 = vmatpush1.msra.mxu0 %v968
    %1756 = vmatprep.subr.mxu0 %v975
    %1757 = vmatpush1.msra.mxu0 %v974
    %1758 = vmatprep.subr.mxu0 %v981
    %1759 = vmatpush1.msra.mxu0 %v980
    %1760 = vmatprep.subr.mxu0 %v987
    %1761 = vmatpush1.msra.mxu0 %v986
    %1762 = vmatprep.subr.mxu0 %v993
    %1763 = vmatpush1.msra.mxu0 %v992
    %1764 = vmatprep.subr.mxu0 %v999
    %1765 = vmatpush1.msra.mxu0 %v998
    %1766 = vmatprep.subr.mxu0 %v1005
    %1767 = vmatpush1.msra.mxu0 %v1004
    %1768 = vmatprep.subr.mxu0 %v1011
    %1769 = vmatpush1.msra.mxu0 %v1010
    %1770 = vmatprep.subr.mxu0 %v1017
    %1771 = vmatpush1.msra.mxu0 %v1016
    %1772 = vmatprep.subr.mxu0 %v1023
    %1773 = vmatpush1.msra.mxu0 %v1022
    %1774 = vmatprep.subr.mxu0 %v1029
    %1775 = vmatpush1.msra.mxu0 %v1028
    %1776 = vmatprep.subr.mxu0 %v1035
    %1777 = vmatpush1.msra.mxu0 %v1034
    %1778 = vmatprep.mubr.f32.mxu0 %v1671
    %1779 = vmatmul.mubr.f32.gmra.mrb[0].mxu0 %v1670
    %v1780 = vpop.f32.mrb[0].mxu0
    %v1781 = vadd.f32 %v1680, %v1780
    %v1782 = vpop.f32.mrb[0].mxu0
    %v1783 = vadd.f32 %v1684, %v1782
    %1784 = vmatprep.mubr.f32.mxu0 %v1674
    %1785 = vmatmul.mubr.f32.gmra.mrb[0].mxu0 %v1673
    %v1786 = vpop.f32.mrb[0].mxu0
    %v1787 = vadd.f32 %v1680, %v1786
    %v1788 = vpop.f32.mrb[0].mxu0
    %v1789 = vadd.f32 %v1684, %v1788
    %1790 = vdwg.mxu0
    %1791 = vmatprep.subr.mxu0 %v1041
    %1792 = vmatpush1.msra.mxu0 %v1040
    %1793 = vmatprep.subr.mxu0 %v1047
    %1794 = vmatpush1.msra.mxu0 %v1046
    %1795 = vmatprep.subr.mxu0 %v1053
    %1796 = vmatpush1.msra.mxu0 %v1052
    %1797 = vmatprep.subr.mxu0 %v1059
    %1798 = vmatpush1.msra.mxu0 %v1058
    %1799 = vmatprep.subr.mxu0 0.0
    %1800 = vmatpush1.msra.mxu0 0.0
    %1801 = vmatprep.subr.mxu0 0.0
    %1802 = vmatpush1.msra.mxu0 0.0
    %1803 = vmatprep.subr.mxu0 0.0
    %1804 = vmatpush1.msra.mxu0 0.0
    %1805 = vmatprep.subr.mxu0 0.0
    %1806 = vmatpush1.msra.mxu0 0.0
    %1807 = vmatprep.subr.mxu0 0.0
    %1808 = vmatpush1.msra.mxu0 0.0
    %1809 = vmatprep.subr.mxu0 0.0
    %1810 = vmatpush1.msra.mxu0 0.0
    %1811 = vmatprep.subr.mxu0 0.0
    %1812 = vmatpush1.msra.mxu0 0.0
    %1813 = vmatprep.subr.mxu0 0.0
    %1814 = vmatpush1.msra.mxu0 0.0
    %1815 = vmatprep.subr.mxu0 0.0
    %1816 = vmatpush1.msra.mxu0 0.0
    %1817 = vmatprep.subr.mxu0 0.0
    %1818 = vmatpush1.msra.mxu0 0.0
    %1819 = vmatprep.subr.mxu0 0.0
    %1820 = vmatpush1.msra.mxu0 0.0
    %1821 = vmatprep.subr.mxu0 0.0
    %1822 = vmatpush1.msra.mxu0 0.0
    %1823 = vmatprep.subr.mxu0 0.0
    %1824 = vmatpush1.msra.mxu0 0.0
    %1825 = vmatprep.subr.mxu0 0.0
    %1826 = vmatpush1.msra.mxu0 0.0
    %1827 = vmatprep.subr.mxu0 0.0
    %1828 = vmatpush1.msra.mxu0 0.0
    %1829 = vmatprep.subr.mxu0 0.0
    %1830 = vmatpush1.msra.mxu0 0.0
    %1831 = vmatprep.subr.mxu0 0.0
    %1832 = vmatpush1.msra.mxu0 0.0
    %1833 = vmatprep.subr.mxu0 0.0
    %1834 = vmatpush1.msra.mxu0 0.0
    %1835 = vmatprep.subr.mxu0 0.0
    %1836 = vmatpush1.msra.mxu0 0.0
    %1837 = vmatprep.subr.mxu0 0.0
    %1838 = vmatpush1.msra.mxu0 0.0
    %1839 = vmatprep.subr.mxu0 0.0
    %1840 = vmatpush1.msra.mxu0 0.0
    %1841 = vmatprep.subr.mxu0 0.0
    %1842 = vmatpush1.msra.mxu0 0.0
    %1843 = vmatprep.subr.mxu0 0.0
    %1844 = vmatpush1.msra.mxu0 0.0
    %1845 = vmatprep.subr.mxu0 0.0
    %1846 = vmatpush1.msra.mxu0 0.0
    %1847 = vmatprep.subr.mxu0 0.0
    %1848 = vmatpush1.msra.mxu0 0.0
    %1849 = vmatprep.subr.mxu0 0.0
    %1850 = vmatpush1.msra.mxu0 0.0
    %1851 = vmatprep.subr.mxu0 0.0
    %1852 = vmatpush1.msra.mxu0 0.0
    %1853 = vmatprep.subr.mxu0 0.0
    %1854 = vmatpush1.msra.mxu0 0.0
    %1855 = vmatprep.mubr.f32.mxu0 0.0
    %1856 = vmatmul.mubr.f32.gmra.mrb[0].mxu0 %v1709
    %v1857 = vpop.f32.mrb[0].mxu0
    %v1858 = vadd.f32 %v1781, %v1857
    %v1859 = vpop.f32.mrb[0].mxu0
    %v1860 = vadd.f32 %v1783, %v1859
    %1861 = vmatprep.mubr.f32.mxu0 0.0
    %1862 = vmatmul.mubr.f32.gmra.mrb[0].mxu0 %v1712
    %v1863 = vpop.f32.mrb[0].mxu0
    %v1864 = vadd.f32 %v1787, %v1863
    %v1865 = vpop.f32.mrb[0].mxu0
    %v1866 = vadd.f32 %v1789, %v1865
    %1867 = vdwg.mxu0
    %1868 = vmatprep.subr.mxu0 %v851
    %1869 = vmatpush1.msra.mxu0 %v850
    %1870 = vmatprep.subr.mxu0 %v857
    %1871 = vmatpush1.msra.mxu0 %v856
    %1872 = vmatprep.subr.mxu0 %v863
    %1873 = vmatpush1.msra.mxu0 %v862
    %1874 = vmatprep.subr.mxu0 %v869
    %1875 = vmatpush1.msra.mxu0 %v868
    %1876 = vmatprep.subr.mxu0 %v875
    %1877 = vmatpush1.msra.mxu0 %v874
    %1878 = vmatprep.subr.mxu0 %v881
    %1879 = vmatpush1.msra.mxu0 %v880
    %1880 = vmatprep.subr.mxu0 %v887
    %1881 = vmatpush1.msra.mxu0 %v886
    %1882 = vmatprep.subr.mxu0 %v893
    %1883 = vmatpush1.msra.mxu0 %v892
    %1884 = vmatprep.subr.mxu0 %v899
    %1885 = vmatpush1.msra.mxu0 %v898
    %1886 = vmatprep.subr.mxu0 %v905
    %1887 = vmatpush1.msra.mxu0 %v904
    %1888 = vmatprep.subr.mxu0 %v911
    %1889 = vmatpush1.msra.mxu0 %v910
    %1890 = vmatprep.subr.mxu0 %v917
    %1891 = vmatpush1.msra.mxu0 %v916
    %1892 = vmatprep.subr.mxu0 %v923
    %1893 = vmatpush1.msra.mxu0 %v922
    %1894 = vmatprep.subr.mxu0 %v929
    %1895 = vmatpush1.msra.mxu0 %v928
    %1896 = vmatprep.subr.mxu0 %v935
    %1897 = vmatpush1.msra.mxu0 %v934
    %1898 = vmatprep.subr.mxu0 %v941
    %1899 = vmatpush1.msra.mxu0 %v940
    %1900 = vmatprep.subr.mxu0 %v947
    %1901 = vmatpush1.msra.mxu0 %v946
    %1902 = vmatprep.subr.mxu0 %v953
    %1903 = vmatpush1.msra.mxu0 %v952
    %1904 = vmatprep.subr.mxu0 %v959
    %1905 = vmatpush1.msra.mxu0 %v958
    %1906 = vmatprep.subr.mxu0 %v965
    %1907 = vmatpush1.msra.mxu0 %v964
    %1908 = vmatprep.subr.mxu0 %v971
    %1909 = vmatpush1.msra.mxu0 %v970
    %1910 = vmatprep.subr.mxu0 %v977
    %1911 = vmatpush1.msra.mxu0 %v976
    %1912 = vmatprep.subr.mxu0 %v983
    %1913 = vmatpush1.msra.mxu0 %v982
    %1914 = vmatprep.subr.mxu0 %v989
    %1915 = vmatpush1.msra.mxu0 %v988
    %1916 = vmatprep.subr.mxu0 %v995
    %1917 = vmatpush1.msra.mxu0 %v994
    %1918 = vmatprep.subr.mxu0 %v1001
    %1919 = vmatpush1.msra.mxu0 %v1000
    %1920 = vmatprep.subr.mxu0 %v1007
    %1921 = vmatpush1.msra.mxu0 %v1006
    %1922 = vmatprep.subr.mxu0 %v1013
    %1923 = vmatpush1.msra.mxu0 %v1012
    %1924 = vmatprep.subr.mxu0 %v1019
    %1925 = vmatpush1.msra.mxu0 %v1018
    %1926 = vmatprep.subr.mxu0 %v1025
    %1927 = vmatpush1.msra.mxu0 %v1024
    %1928 = vmatprep.subr.mxu0 %v1031
    %1929 = vmatpush1.msra.mxu0 %v1030
    %1930 = vmatprep.subr.mxu0 %v1037
    %1931 = vmatpush1.msra.mxu0 %v1036
    %1932 = vmatprep.mubr.f32.mxu0 %v1671
    %1933 = vmatmul.mubr.f32.gmra.mrb[0].mxu0 %v1670
    %v1934 = vpop.f32.mrb[0].mxu0
    %v1935 = vadd.f32 %v1688, %v1934
    %v1936 = vpop.f32.mrb[0].mxu0
    %v1937 = vadd.f32 %v1692, %v1936
    %1938 = vmatprep.mubr.f32.mxu0 %v1674
    %1939 = vmatmul.mubr.f32.gmra.mrb[0].mxu0 %v1673
    %v1940 = vpop.f32.mrb[0].mxu0
    %v1941 = vadd.f32 %v1688, %v1940
    %v1942 = vpop.f32.mrb[0].mxu0
    %v1943 = vadd.f32 %v1692, %v1942
    %1944 = vdwg.mxu0
    %1945 = vmatprep.subr.mxu0 %v1043
    %1946 = vmatpush1.msra.mxu0 %v1042
    %1947 = vmatprep.subr.mxu0 %v1049
    %1948 = vmatpush1.msra.mxu0 %v1048
    %1949 = vmatprep.subr.mxu0 %v1055
    %1950 = vmatpush1.msra.mxu0 %v1054
    %1951 = vmatprep.subr.mxu0 %v1061
    %1952 = vmatpush1.msra.mxu0 %v1060
    %1953 = vmatprep.subr.mxu0 0.0
    %1954 = vmatpush1.msra.mxu0 0.0
    %1955 = vmatprep.subr.mxu0 0.0
    %1956 = vmatpush1.msra.mxu0 0.0
    %1957 = vmatprep.subr.mxu0 0.0
    %1958 = vmatpush1.msra.mxu0 0.0
    %1959 = vmatprep.subr.mxu0 0.0
    %1960 = vmatpush1.msra.mxu0 0.0
    %1961 = vmatprep.subr.mxu0 0.0
    %1962 = vmatpush1.msra.mxu0 0.0
    %1963 = vmatprep.subr.mxu0 0.0
    %1964 = vmatpush1.msra.mxu0 0.0
    %1965 = vmatprep.subr.mxu0 0.0
    %1966 = vmatpush1.msra.mxu0 0.0
    %1967 = vmatprep.subr.mxu0 0.0
    %1968 = vmatpush1.msra.mxu0 0.0
    %1969 = vmatprep.subr.mxu0 0.0
    %1970 = vmatpush1.msra.mxu0 0.0
    %1971 = vmatprep.subr.mxu0 0.0
    %1972 = vmatpush1.msra.mxu0 0.0
    %1973 = vmatprep.subr.mxu0 0.0
    %1974 = vmatpush1.msra.mxu0 0.0
    %1975 = vmatprep.subr.mxu0 0.0
    %1976 = vmatpush1.msra.mxu0 0.0
    %1977 = vmatprep.subr.mxu0 0.0
    %1978 = vmatpush1.msra.mxu0 0.0
    %1979 = vmatprep.subr.mxu0 0.0
    %1980 = vmatpush1.msra.mxu0 0.0
    %1981 = vmatprep.subr.mxu0 0.0
    %1982 = vmatpush1.msra.mxu0 0.0
    %1983 = vmatprep.subr.mxu0 0.0
    %1984 = vmatpush1.msra.mxu0 0.0
    %1985 = vmatprep.subr.mxu0 0.0
    %1986 = vmatpush1.msra.mxu0 0.0
    %1987 = vmatprep.subr.mxu0 0.0
    %1988 = vmatpush1.msra.mxu0 0.0
    %1989 = vmatprep.subr.mxu0 0.0
    %1990 = vmatpush1.msra.mxu0 0.0
    %1991 = vmatprep.subr.mxu0 0.0
    %1992 = vmatpush1.msra.mxu0 0.0
    %1993 = vmatprep.subr.mxu0 0.0
    %1994 = vmatpush1.msra.mxu0 0.0
    %1995 = vmatprep.subr.mxu0 0.0
    %1996 = vmatpush1.msra.mxu0 0.0
    %1997 = vmatprep.subr.mxu0 0.0
    %1998 = vmatpush1.msra.mxu0 0.0
    %1999 = vmatprep.subr.mxu0 0.0
    %2000 = vmatpush1.msra.mxu0 0.0
    %2001 = vmatprep.subr.mxu0 0.0
    %2002 = vmatpush1.msra.mxu0 0.0
    %2003 = vmatprep.subr.mxu0 0.0
    %2004 = vmatpush1.msra.mxu0 0.0
    %2005 = vmatprep.subr.mxu0 0.0
    %2006 = vmatpush1.msra.mxu0 0.0
    %2007 = vmatprep.subr.mxu0 0.0
    %2008 = vmatpush1.msra.mxu0 0.0
    %2009 = vmatprep.mubr.f32.mxu0 0.0
    %2010 = vmatmul.mubr.f32.gmra.mrb[0].mxu0 %v1709
    %v2011 = vpop.f32.mrb[0].mxu0
    %v2012 = vadd.f32 %v1935, %v2011
    %v2013 = vpop.f32.mrb[0].mxu0
    %v2014 = vadd.f32 %v1937, %v2013
    %2015 = vmatprep.mubr.f32.mxu0 0.0
    %2016 = vmatmul.mubr.f32.gmra.mrb[0].mxu0 %v1712
    %v2017 = vpop.f32.mrb[0].mxu0
    %v2018 = vadd.f32 %v1941, %v2017
    %v2019 = vpop.f32.mrb[0].mxu0
    %v2020 = vadd.f32 %v1943, %v2019
    %2021 = vdwg.mxu0
    %2022 = vmatprep.subr.mxu0 %v853
    %2023 = vmatpush1.msra.mxu0 %v852
    %2024 = vmatprep.subr.mxu0 %v859
    %2025 = vmatpush1.msra.mxu0 %v858
    %2026 = vmatprep.subr.mxu0 %v865
    %2027 = vmatpush1.msra.mxu0 %v864
    %2028 = vmatprep.subr.mxu0 %v871
    %2029 = vmatpush1.msra.mxu0 %v870
    %2030 = vmatprep.subr.mxu0 %v877
    %2031 = vmatpush1.msra.mxu0 %v876
    %2032 = vmatprep.subr.mxu0 %v883
    %2033 = vmatpush1.msra.mxu0 %v882
    %2034 = vmatprep.subr.mxu0 %v889
    %2035 = vmatpush1.msra.mxu0 %v888
    %2036 = vmatprep.subr.mxu0 %v895
    %2037 = vmatpush1.msra.mxu0 %v894
    %2038 = vmatprep.subr.mxu0 %v901
    %2039 = vmatpush1.msra.mxu0 %v900
    %2040 = vmatprep.subr.mxu0 %v907
    %2041 = vmatpush1.msra.mxu0 %v906
    %2042 = vmatprep.subr.mxu0 %v913
    %2043 = vmatpush1.msra.mxu0 %v912
    %2044 = vmatprep.subr.mxu0 %v919
    %2045 = vmatpush1.msra.mxu0 %v918
    %2046 = vmatprep.subr.mxu0 %v925
    %2047 = vmatpush1.msra.mxu0 %v924
    %2048 = vmatprep.subr.mxu0 %v931
    %2049 = vmatpush1.msra.mxu0 %v930
    %2050 = vmatprep.subr.mxu0 %v937
    %2051 = vmatpush1.msra.mxu0 %v936
    %2052 = vmatprep.subr.mxu0 %v943
    %2053 = vmatpush1.msra.mxu0 %v942
    %2054 = vmatprep.subr.mxu0 %v949
    %2055 = vmatpush1.msra.mxu0 %v948
    %2056 = vmatprep.subr.mxu0 %v955
    %2057 = vmatpush1.msra.mxu0 %v954
    %2058 = vmatprep.subr.mxu0 %v961
    %2059 = vmatpush1.msra.mxu0 %v960
    %2060 = vmatprep.subr.mxu0 %v967
    %2061 = vmatpush1.msra.mxu0 %v966
    %2062 = vmatprep.subr.mxu0 %v973
    %2063 = vmatpush1.msra.mxu0 %v972
    %2064 = vmatprep.subr.mxu0 %v979
    %2065 = vmatpush1.msra.mxu0 %v978
    %2066 = vmatprep.subr.mxu0 %v985
    %2067 = vmatpush1.msra.mxu0 %v984
    %2068 = vmatprep.subr.mxu0 %v991
    %2069 = vmatpush1.msra.mxu0 %v990
    %2070 = vmatprep.subr.mxu0 %v997
    %2071 = vmatpush1.msra.mxu0 %v996
    %2072 = vmatprep.subr.mxu0 %v1003
    %2073 = vmatpush1.msra.mxu0 %v1002
    %2074 = vmatprep.subr.mxu0 %v1009
    %2075 = vmatpush1.msra.mxu0 %v1008
    %2076 = vmatprep.subr.mxu0 %v1015
    %2077 = vmatpush1.msra.mxu0 %v1014
    %2078 = vmatprep.subr.mxu0 %v1021
    %2079 = vmatpush1.msra.mxu0 %v1020
    %2080 = vmatprep.subr.mxu0 %v1027
    %2081 = vmatpush1.msra.mxu0 %v1026
    %2082 = vmatprep.subr.mxu0 %v1033
    %2083 = vmatpush1.msra.mxu0 %v1032
    %2084 = vmatprep.subr.mxu0 %v1039
    %2085 = vmatpush1.msra.mxu0 %v1038
    %2086 = vmatprep.mubr.f32.mxu0 %v1671
    %2087 = vmatmul.mubr.f32.gmra.mrb[0].mxu0 %v1670
    %v2088 = vpop.f32.mrb[0].mxu0
    %v2089 = vadd.f32 %v1696, %v2088
    %v2090 = vpop.f32.mrb[0].mxu0
    %v2091 = vadd.f32 %v1700, %v2090
    %2092 = vmatprep.mubr.f32.mxu0 %v1674
    %2093 = vmatmul.mubr.f32.gmra.mrb[0].mxu0 %v1673
    %v2094 = vpop.f32.mrb[0].mxu0
    %v2095 = vadd.f32 %v1696, %v2094
    %v2096 = vpop.f32.mrb[0].mxu0
    %v2097 = vadd.f32 %v1700, %v2096
    %2098 = vdwg.mxu0
    %2099 = vmatprep.subr.mxu0 %v1045
    %2100 = vmatpush1.msra.mxu0 %v1044
    %2101 = vmatprep.subr.mxu0 %v1051
    %2102 = vmatpush1.msra.mxu0 %v1050
    %2103 = vmatprep.subr.mxu0 %v1057
    %2104 = vmatpush1.msra.mxu0 %v1056
    %2105 = vmatprep.subr.mxu0 %v1063
    %2106 = vmatpush1.msra.mxu0 %v1062
    %2107 = vmatprep.subr.mxu0 0.0
    %2108 = vmatpush1.msra.mxu0 0.0
    %2109 = vmatprep.subr.mxu0 0.0
    %2110 = vmatpush1.msra.mxu0 0.0
    %2111 = vmatprep.subr.mxu0 0.0
    %2112 = vmatpush1.msra.mxu0 0.0
    %2113 = vmatprep.subr.mxu0 0.0
    %2114 = vmatpush1.msra.mxu0 0.0
    %2115 = vmatprep.subr.mxu0 0.0
    %2116 = vmatpush1.msra.mxu0 0.0
    %2117 = vmatprep.subr.mxu0 0.0
    %2118 = vmatpush1.msra.mxu0 0.0
    %2119 = vmatprep.subr.mxu0 0.0
    %2120 = vmatpush1.msra.mxu0 0.0
    %2121 = vmatprep.subr.mxu0 0.0
    %2122 = vmatpush1.msra.mxu0 0.0
    %2123 = vmatprep.subr.mxu0 0.0
    %2124 = vmatpush1.msra.mxu0 0.0
    %2125 = vmatprep.subr.mxu0 0.0
    %2126 = vmatpush1.msra.mxu0 0.0
    %2127 = vmatprep.subr.mxu0 0.0
    %2128 = vmatpush1.msra.mxu0 0.0
    %2129 = vmatprep.subr.mxu0 0.0
    %2130 = vmatpush1.msra.mxu0 0.0
    %2131 = vmatprep.subr.mxu0 0.0
    %2132 = vmatpush1.msra.mxu0 0.0
    %2133 = vmatprep.subr.mxu0 0.0
    %2134 = vmatpush1.msra.mxu0 0.0
    %2135 = vmatprep.subr.mxu0 0.0
    %2136 = vmatpush1.msra.mxu0 0.0
    %2137 = vmatprep.subr.mxu0 0.0
    %2138 = vmatpush1.msra.mxu0 0.0
    %2139 = vmatprep.subr.mxu0 0.0
    %2140 = vmatpush1.msra.mxu0 0.0
    %2141 = vmatprep.subr.mxu0 0.0
    %2142 = vmatpush1.msra.mxu0 0.0
    %2143 = vmatprep.subr.mxu0 0.0
    %2144 = vmatpush1.msra.mxu0 0.0
    %2145 = vmatprep.subr.mxu0 0.0
    %2146 = vmatpush1.msra.mxu0 0.0
    %2147 = vmatprep.subr.mxu0 0.0
    %2148 = vmatpush1.msra.mxu0 0.0
    %2149 = vmatprep.subr.mxu0 0.0
    %2150 = vmatpush1.msra.mxu0 0.0
    %2151 = vmatprep.subr.mxu0 0.0
    %2152 = vmatpush1.msra.mxu0 0.0
    %2153 = vmatprep.subr.mxu0 0.0
    %2154 = vmatpush1.msra.mxu0 0.0
    %2155 = vmatprep.subr.mxu0 0.0
    %2156 = vmatpush1.msra.mxu0 0.0
    %2157 = vmatprep.subr.mxu0 0.0
    %2158 = vmatpush1.msra.mxu0 0.0
    %2159 = vmatprep.subr.mxu0 0.0
    %2160 = vmatpush1.msra.mxu0 0.0
    %2161 = vmatprep.subr.mxu0 0.0
    %2162 = vmatpush1.msra.mxu0 0.0
    %2163 = vmatprep.mubr.f32.mxu0 0.0
    %2164 = vmatmul.mubr.f32.gmra.mrb[0].mxu0 %v1709
    %v2165 = vpop.f32.mrb[0].mxu0
    %v2166 = vadd.f32 %v2089, %v2165
    %v2167 = vpop.f32.mrb[0].mxu0
    %v2168 = vadd.f32 %v2091, %v2167
    %2169 = vmatprep.mubr.f32.mxu0 0.0
    %2170 = vmatmul.mubr.f32.gmra.mrb[0].mxu0 %v1712
    %v2171 = vpop.f32.mrb[0].mxu0
    %v2172 = vadd.f32 %v2095, %v2171
    %v2173 = vpop.f32.mrb[0].mxu0
    %v2174 = vadd.f32 %v2097, %v2173
    %2175 = vdwg.mxu0
    %v2177 = vlaneseq
    %v2178 = vshrl.u32 %v2177, 7
    %v2179 = vsub.s32 0, %v2178
    %v2180 = vrot.slane %v485, %v2179
    %v2181 = vlaneseq
    %v2182 = vshrl.u32 %v2181, 7
    %v2183 = vsub.s32 1, %v2182
    %v2184 = vrot.slane %v485, %v2183
    %v2185 = vlaneseq
    %v2186 = vshrl.u32 %v2185, 7
    %v2187 = vsub.s32 2, %v2186
    %v2188 = vrot.slane %v485, %v2187
    %v2189 = vlaneseq
    %v2190 = vshrl.u32 %v2189, 7
    %v2191 = vsub.s32 3, %v2190
    %v2192 = vrot.slane %v485, %v2191
    %v2193 = vlaneseq
    %v2194 = vshrl.u32 %v2193, 7
    %v2195 = vsub.s32 4, %v2194
    %v2196 = vrot.slane %v485, %v2195
    %v2197 = vlaneseq
    %v2198 = vshrl.u32 %v2197, 7
    %v2199 = vsub.s32 5, %v2198
    %v2200 = vrot.slane %v485, %v2199
    %2207 = vmatprep.subr.mxu0 %v270
    %2208 = vmatpush1.msra.mxu0 %v269
    %2209 = vmatprep.subr.mxu0 %v276
    %2210 = vmatpush1.msra.mxu0 %v275
    %2211 = vmatprep.subr.mxu0 %v282
    %2212 = vmatpush1.msra.mxu0 %v281
    %2213 = vmatprep.subr.mxu0 %v288
    %2214 = vmatpush1.msra.mxu0 %v287
    %2215 = vmatprep.subr.mxu0 %v294
    %2216 = vmatpush1.msra.mxu0 %v293
    %2217 = vmatprep.subr.mxu0 %v300
    %2218 = vmatpush1.msra.mxu0 %v299
    %2219 = vmatprep.subr.mxu0 %v306
    %2220 = vmatpush1.msra.mxu0 %v305
    %2221 = vmatprep.subr.mxu0 %v312
    %2222 = vmatpush1.msra.mxu0 %v311
    %2223 = vmatprep.subr.mxu0 %v318
    %2224 = vmatpush1.msra.mxu0 %v317
    %2225 = vmatprep.subr.mxu0 %v324
    %2226 = vmatpush1.msra.mxu0 %v323
    %2227 = vmatprep.subr.mxu0 %v330
    %2228 = vmatpush1.msra.mxu0 %v329
    %2229 = vmatprep.subr.mxu0 %v336
    %2230 = vmatpush1.msra.mxu0 %v335
    %2231 = vmatprep.subr.mxu0 %v342
    %2232 = vmatpush1.msra.mxu0 %v341
    %2233 = vmatprep.subr.mxu0 %v348
    %2234 = vmatpush1.msra.mxu0 %v347
    %2235 = vmatprep.subr.mxu0 %v354
    %2236 = vmatpush1.msra.mxu0 %v353
    %2237 = vmatprep.subr.mxu0 %v360
    %2238 = vmatpush1.msra.mxu0 %v359
    %2239 = vmatprep.subr.mxu0 %v366
    %2240 = vmatpush1.msra.mxu0 %v365
    %2241 = vmatprep.subr.mxu0 %v372
    %2242 = vmatpush1.msra.mxu0 %v371
    %2243 = vmatprep.subr.mxu0 %v378
    %2244 = vmatpush1.msra.mxu0 %v377
    %2245 = vmatprep.subr.mxu0 %v384
    %2246 = vmatpush1.msra.mxu0 %v383
    %2247 = vmatprep.subr.mxu0 %v390
    %2248 = vmatpush1.msra.mxu0 %v389
    %2249 = vmatprep.subr.mxu0 %v396
    %2250 = vmatpush1.msra.mxu0 %v395
    %2251 = vmatprep.subr.mxu0 %v402
    %2252 = vmatpush1.msra.mxu0 %v401
    %2253 = vmatprep.subr.mxu0 %v408
    %2254 = vmatpush1.msra.mxu0 %v407
    %2255 = vmatprep.subr.mxu0 %v414
    %2256 = vmatpush1.msra.mxu0 %v413
    %2257 = vmatprep.subr.mxu0 %v420
    %2258 = vmatpush1.msra.mxu0 %v419
    %2259 = vmatprep.subr.mxu0 %v426
    %2260 = vmatpush1.msra.mxu0 %v425
    %2261 = vmatprep.subr.mxu0 %v432
    %2262 = vmatpush1.msra.mxu0 %v431
    %2263 = vmatprep.subr.mxu0 %v438
    %2264 = vmatpush1.msra.mxu0 %v437
    %2265 = vmatprep.subr.mxu0 %v444
    %2266 = vmatpush1.msra.mxu0 %v443
    %2267 = vmatprep.subr.mxu0 %v450
    %2268 = vmatpush1.msra.mxu0 %v449
    %2269 = vmatprep.subr.mxu0 %v456
    %2270 = vmatpush1.msra.mxu0 %v455
    %2271 = vmatprep.mubr.f32.mxu0 %v1671
    %2272 = vmatmul.mubr.f32.gmra.mrb[0].mxu0 %v1670
    %v2273 = vpop.f32.mrb[0].mxu0
    %v2274 = vadd.f32 %v2180, %v2273
    %v2275 = vpop.f32.mrb[0].mxu0
    %v2276 = vadd.f32 %v2184, %v2275
    %2277 = vmatprep.mubr.f32.mxu0 %v1674
    %2278 = vmatmul.mubr.f32.gmra.mrb[0].mxu0 %v1673
    %v2279 = vpop.f32.mrb[0].mxu0
    %v2280 = vadd.f32 %v2180, %v2279
    %v2281 = vpop.f32.mrb[0].mxu0
    %v2282 = vadd.f32 %v2184, %v2281
    %2283 = vdwg.mxu0
    %2284 = vmatprep.subr.mxu0 %v462
    %2285 = vmatpush1.msra.mxu0 %v461
    %2286 = vmatprep.subr.mxu0 %v468
    %2287 = vmatpush1.msra.mxu0 %v467
    %2288 = vmatprep.subr.mxu0 %v474
    %2289 = vmatpush1.msra.mxu0 %v473
    %2290 = vmatprep.subr.mxu0 %v480
    %2291 = vmatpush1.msra.mxu0 %v479
    %2292 = vmatprep.subr.mxu0 0.0
    %2293 = vmatpush1.msra.mxu0 0.0
    %2294 = vmatprep.subr.mxu0 0.0
    %2295 = vmatpush1.msra.mxu0 0.0
    %2296 = vmatprep.subr.mxu0 0.0
    %2297 = vmatpush1.msra.mxu0 0.0
    %2298 = vmatprep.subr.mxu0 0.0
    %2299 = vmatpush1.msra.mxu0 0.0
    %2300 = vmatprep.subr.mxu0 0.0
    %2301 = vmatpush1.msra.mxu0 0.0
    %2302 = vmatprep.subr.mxu0 0.0
    %2303 = vmatpush1.msra.mxu0 0.0
    %2304 = vmatprep.subr.mxu0 0.0
    %2305 = vmatpush1.msra.mxu0 0.0
    %2306 = vmatprep.subr.mxu0 0.0
    %2307 = vmatpush1.msra.mxu0 0.0
    %2308 = vmatprep.subr.mxu0 0.0
    %2309 = vmatpush1.msra.mxu0 0.0
    %2310 = vmatprep.subr.mxu0 0.0
    %2311 = vmatpush1.msra.mxu0 0.0
    %2312 = vmatprep.subr.mxu0 0.0
    %2313 = vmatpush1.msra.mxu0 0.0
    %2314 = vmatprep.subr.mxu0 0.0
    %2315 = vmatpush1.msra.mxu0 0.0
    %2316 = vmatprep.subr.mxu0 0.0
    %2317 = vmatpush1.msra.mxu0 0.0
    %2318 = vmatprep.subr.mxu0 0.0
    %2319 = vmatpush1.msra.mxu0 0.0
    %2320 = vmatprep.subr.mxu0 0.0
    %2321 = vmatpush1.msra.mxu0 0.0
    %2322 = vmatprep.subr.mxu0 0.0
    %2323 = vmatpush1.msra.mxu0 0.0
    %2324 = vmatprep.subr.mxu0 0.0
    %2325 = vmatpush1.msra.mxu0 0.0
    %2326 = vmatprep.subr.mxu0 0.0
    %2327 = vmatpush1.msra.mxu0 0.0
    %2328 = vmatprep.subr.mxu0 0.0
    %2329 = vmatpush1.msra.mxu0 0.0
    %2330 = vmatprep.subr.mxu0 0.0
    %2331 = vmatpush1.msra.mxu0 0.0
    %2332 = vmatprep.subr.mxu0 0.0
    %2333 = vmatpush1.msra.mxu0 0.0
    %2334 = vmatprep.subr.mxu0 0.0
    %2335 = vmatpush1.msra.mxu0 0.0
    %2336 = vmatprep.subr.mxu0 0.0
    %2337 = vmatpush1.msra.mxu0 0.0
    %2338 = vmatprep.subr.mxu0 0.0
    %2339 = vmatpush1.msra.mxu0 0.0
    %2340 = vmatprep.subr.mxu0 0.0
    %2341 = vmatpush1.msra.mxu0 0.0
    %2342 = vmatprep.subr.mxu0 0.0
    %2343 = vmatpush1.msra.mxu0 0.0
    %2344 = vmatprep.subr.mxu0 0.0
    %2345 = vmatpush1.msra.mxu0 0.0
    %2346 = vmatprep.subr.mxu0 0.0
    %2347 = vmatpush1.msra.mxu0 0.0
    %2348 = vmatprep.mubr.f32.mxu0 0.0
    %2349 = vmatmul.mubr.f32.gmra.mrb[0].mxu0 %v1709
    %v2350 = vpop.f32.mrb[0].mxu0
    %v2351 = vadd.f32 %v2274, %v2350
    %v2352 = vpop.f32.mrb[0].mxu0
    %v2353 = vadd.f32 %v2276, %v2352
    %2354 = vmatprep.mubr.f32.mxu0 0.0
    %2355 = vmatmul.mubr.f32.gmra.mrb[0].mxu0 %v1712
    %v2356 = vpop.f32.mrb[0].mxu0
    %v2357 = vadd.f32 %v2280, %v2356
    %v2358 = vpop.f32.mrb[0].mxu0
    %v2359 = vadd.f32 %v2282, %v2358
    %2360 = vdwg.mxu0
    %2361 = vmatprep.subr.mxu0 %v272
    %2362 = vmatpush1.msra.mxu0 %v271
    %2363 = vmatprep.subr.mxu0 %v278
    %2364 = vmatpush1.msra.mxu0 %v277
    %2365 = vmatprep.subr.mxu0 %v284
    %2366 = vmatpush1.msra.mxu0 %v283
    %2367 = vmatprep.subr.mxu0 %v290
    %2368 = vmatpush1.msra.mxu0 %v289
    %2369 = vmatprep.subr.mxu0 %v296
    %2370 = vmatpush1.msra.mxu0 %v295
    %2371 = vmatprep.subr.mxu0 %v302
    %2372 = vmatpush1.msra.mxu0 %v301
    %2373 = vmatprep.subr.mxu0 %v308
    %2374 = vmatpush1.msra.mxu0 %v307
    %2375 = vmatprep.subr.mxu0 %v314
    %2376 = vmatpush1.msra.mxu0 %v313
    %2377 = vmatprep.subr.mxu0 %v320
    %2378 = vmatpush1.msra.mxu0 %v319
    %2379 = vmatprep.subr.mxu0 %v326
    %2380 = vmatpush1.msra.mxu0 %v325
    %2381 = vmatprep.subr.mxu0 %v332
    %2382 = vmatpush1.msra.mxu0 %v331
    %2383 = vmatprep.subr.mxu0 %v338
    %2384 = vmatpush1.msra.mxu0 %v337
    %2385 = vmatprep.subr.mxu0 %v344
    %2386 = vmatpush1.msra.mxu0 %v343
    %2387 = vmatprep.subr.mxu0 %v350
    %2388 = vmatpush1.msra.mxu0 %v349
    %2389 = vmatprep.subr.mxu0 %v356
    %2390 = vmatpush1.msra.mxu0 %v355
    %2391 = vmatprep.subr.mxu0 %v362
    %2392 = vmatpush1.msra.mxu0 %v361
    %2393 = vmatprep.subr.mxu0 %v368
    %2394 = vmatpush1.msra.mxu0 %v367
    %2395 = vmatprep.subr.mxu0 %v374
    %2396 = vmatpush1.msra.mxu0 %v373
    %2397 = vmatprep.subr.mxu0 %v380
    %2398 = vmatpush1.msra.mxu0 %v379
    %2399 = vmatprep.subr.mxu0 %v386
    %2400 = vmatpush1.msra.mxu0 %v385
    %2401 = vmatprep.subr.mxu0 %v392
    %2402 = vmatpush1.msra.mxu0 %v391
    %2403 = vmatprep.subr.mxu0 %v398
    %2404 = vmatpush1.msra.mxu0 %v397
    %2405 = vmatprep.subr.mxu0 %v404
    %2406 = vmatpush1.msra.mxu0 %v403
    %2407 = vmatprep.subr.mxu0 %v410
    %2408 = vmatpush1.msra.mxu0 %v409
    %2409 = vmatprep.subr.mxu0 %v416
    %2410 = vmatpush1.msra.mxu0 %v415
    %2411 = vmatprep.subr.mxu0 %v422
    %2412 = vmatpush1.msra.mxu0 %v421
    %2413 = vmatprep.subr.mxu0 %v428
    %2414 = vmatpush1.msra.mxu0 %v427
    %2415 = vmatprep.subr.mxu0 %v434
    %2416 = vmatpush1.msra.mxu0 %v433
    %2417 = vmatprep.subr.mxu0 %v440
    %2418 = vmatpush1.msra.mxu0 %v439
    %2419 = vmatprep.subr.mxu0 %v446
    %2420 = vmatpush1.msra.mxu0 %v445
    %2421 = vmatprep.subr.mxu0 %v452
    %2422 = vmatpush1.msra.mxu0 %v451
    %2423 = vmatprep.subr.mxu0 %v458
    %2424 = vmatpush1.msra.mxu0 %v457
    %2425 = vmatprep.mubr.f32.mxu0 %v1671
    %2426 = vmatmul.mubr.f32.gmra.mrb[0].mxu0 %v1670
    %v2427 = vpop.f32.mrb[0].mxu0
    %v2428 = vadd.f32 %v2188, %v2427
    %v2429 = vpop.f32.mrb[0].mxu0
    %v2430 = vadd.f32 %v2192, %v2429
    %2431 = vmatprep.mubr.f32.mxu0 %v1674
    %2432 = vmatmul.mubr.f32.gmra.mrb[0].mxu0 %v1673
    %v2433 = vpop.f32.mrb[0].mxu0
    %v2434 = vadd.f32 %v2188, %v2433
    %v2435 = vpop.f32.mrb[0].mxu0
    %v2436 = vadd.f32 %v2192, %v2435
    %2437 = vdwg.mxu0
    %2438 = vmatprep.subr.mxu0 %v464
    %2439 = vmatpush1.msra.mxu0 %v463
    %2440 = vmatprep.subr.mxu0 %v470
    %2441 = vmatpush1.msra.mxu0 %v469
    %2442 = vmatprep.subr.mxu0 %v476
    %2443 = vmatpush1.msra.mxu0 %v475
    %2444 = vmatprep.subr.mxu0 %v482
    %2445 = vmatpush1.msra.mxu0 %v481
    %2446 = vmatprep.subr.mxu0 0.0
    %2447 = vmatpush1.msra.mxu0 0.0
    %2448 = vmatprep.subr.mxu0 0.0
    %2449 = vmatpush1.msra.mxu0 0.0
    %2450 = vmatprep.subr.mxu0 0.0
    %2451 = vmatpush1.msra.mxu0 0.0
    %2452 = vmatprep.subr.mxu0 0.0
    %2453 = vmatpush1.msra.mxu0 0.0
    %2454 = vmatprep.subr.mxu0 0.0
    %2455 = vmatpush1.msra.mxu0 0.0
    %2456 = vmatprep.subr.mxu0 0.0
    %2457 = vmatpush1.msra.mxu0 0.0
    %2458 = vmatprep.subr.mxu0 0.0
    %2459 = vmatpush1.msra.mxu0 0.0
    %2460 = vmatprep.subr.mxu0 0.0
    %2461 = vmatpush1.msra.mxu0 0.0
    %2462 = vmatprep.subr.mxu0 0.0
    %2463 = vmatpush1.msra.mxu0 0.0
    %2464 = vmatprep.subr.mxu0 0.0
    %2465 = vmatpush1.msra.mxu0 0.0
    %2466 = vmatprep.subr.mxu0 0.0
    %2467 = vmatpush1.msra.mxu0 0.0
    %2468 = vmatprep.subr.mxu0 0.0
    %2469 = vmatpush1.msra.mxu0 0.0
    %2470 = vmatprep.subr.mxu0 0.0
    %2471 = vmatpush1.msra.mxu0 0.0
    %2472 = vmatprep.subr.mxu0 0.0
    %2473 = vmatpush1.msra.mxu0 0.0
    %2474 = vmatprep.subr.mxu0 0.0
    %2475 = vmatpush1.msra.mxu0 0.0
    %2476 = vmatprep.subr.mxu0 0.0
    %2477 = vmatpush1.msra.mxu0 0.0
    %2478 = vmatprep.subr.mxu0 0.0
    %2479 = vmatpush1.msra.mxu0 0.0
    %2480 = vmatprep.subr.mxu0 0.0
    %2481 = vmatpush1.msra.mxu0 0.0
    %2482 = vmatprep.subr.mxu0 0.0
    %2483 = vmatpush1.msra.mxu0 0.0
    %2484 = vmatprep.subr.mxu0 0.0
    %2485 = vmatpush1.msra.mxu0 0.0
    %2486 = vmatprep.subr.mxu0 0.0
    %2487 = vmatpush1.msra.mxu0 0.0
    %2488 = vmatprep.subr.mxu0 0.0
    %2489 = vmatpush1.msra.mxu0 0.0
    %2490 = vmatprep.subr.mxu0 0.0
    %2491 = vmatpush1.msra.mxu0 0.0
    %2492 = vmatprep.subr.mxu0 0.0
    %2493 = vmatpush1.msra.mxu0 0.0
    %2494 = vmatprep.subr.mxu0 0.0
    %2495 = vmatpush1.msra.mxu0 0.0
    %2496 = vmatprep.subr.mxu0 0.0
    %2497 = vmatpush1.msra.mxu0 0.0
    %2498 = vmatprep.subr.mxu0 0.0
    %2499 = vmatpush1.msra.mxu0 0.0
    %2500 = vmatprep.subr.mxu0 0.0
    %2501 = vmatpush1.msra.mxu0 0.0
    %2502 = vmatprep.mubr.f32.mxu0 0.0
    %2503 = vmatmul.mubr.f32.gmra.mrb[0].mxu0 %v1709
    %v2504 = vpop.f32.mrb[0].mxu0
    %v2505 = vadd.f32 %v2428, %v2504
    %v2506 = vpop.f32.mrb[0].mxu0
    %v2507 = vadd.f32 %v2430, %v2506
    %2508 = vmatprep.mubr.f32.mxu0 0.0
    %2509 = vmatmul.mubr.f32.gmra.mrb[0].mxu0 %v1712
    %v2510 = vpop.f32.mrb[0].mxu0
    %v2511 = vadd.f32 %v2434, %v2510
    %v2512 = vpop.f32.mrb[0].mxu0
    %v2513 = vadd.f32 %v2436, %v2512
    %2514 = vdwg.mxu0
    %2515 = vmatprep.subr.mxu0 %v274
    %2516 = vmatpush1.msra.mxu0 %v273
    %2517 = vmatprep.subr.mxu0 %v280
    %2518 = vmatpush1.msra.mxu0 %v279
    %2519 = vmatprep.subr.mxu0 %v286
    %2520 = vmatpush1.msra.mxu0 %v285
    %2521 = vmatprep.subr.mxu0 %v292
    %2522 = vmatpush1.msra.mxu0 %v291
    %2523 = vmatprep.subr.mxu0 %v298
    %2524 = vmatpush1.msra.mxu0 %v297
    %2525 = vmatprep.subr.mxu0 %v304
    %2526 = vmatpush1.msra.mxu0 %v303
    %2527 = vmatprep.subr.mxu0 %v310
    %2528 = vmatpush1.msra.mxu0 %v309
    %2529 = vmatprep.subr.mxu0 %v316
    %2530 = vmatpush1.msra.mxu0 %v315
    %2531 = vmatprep.subr.mxu0 %v322
    %2532 = vmatpush1.msra.mxu0 %v321
    %2533 = vmatprep.subr.mxu0 %v328
    %2534 = vmatpush1.msra.mxu0 %v327
    %2535 = vmatprep.subr.mxu0 %v334
    %2536 = vmatpush1.msra.mxu0 %v333
    %2537 = vmatprep.subr.mxu0 %v340
    %2538 = vmatpush1.msra.mxu0 %v339
    %2539 = vmatprep.subr.mxu0 %v346
    %2540 = vmatpush1.msra.mxu0 %v345
    %2541 = vmatprep.subr.mxu0 %v352
    %2542 = vmatpush1.msra.mxu0 %v351
    %2543 = vmatprep.subr.mxu0 %v358
    %2544 = vmatpush1.msra.mxu0 %v357
    %2545 = vmatprep.subr.mxu0 %v364
    %2546 = vmatpush1.msra.mxu0 %v363
    %2547 = vmatprep.subr.mxu0 %v370
    %2548 = vmatpush1.msra.mxu0 %v369
    %2549 = vmatprep.subr.mxu0 %v376
    %2550 = vmatpush1.msra.mxu0 %v375
    %2551 = vmatprep.subr.mxu0 %v382
    %2552 = vmatpush1.msra.mxu0 %v381
    %2553 = vmatprep.subr.mxu0 %v388
    %2554 = vmatpush1.msra.mxu0 %v387
    %2555 = vmatprep.subr.mxu0 %v394
    %2556 = vmatpush1.msra.mxu0 %v393
    %2557 = vmatprep.subr.mxu0 %v400
    %2558 = vmatpush1.msra.mxu0 %v399
    %2559 = vmatprep.subr.mxu0 %v406
    %2560 = vmatpush1.msra.mxu0 %v405
    %2561 = vmatprep.subr.mxu0 %v412
    %2562 = vmatpush1.msra.mxu0 %v411
    %2563 = vmatprep.subr.mxu0 %v418
    %2564 = vmatpush1.msra.mxu0 %v417
    %2565 = vmatprep.subr.mxu0 %v424
    %2566 = vmatpush1.msra.mxu0 %v423
    %2567 = vmatprep.subr.mxu0 %v430
    %2568 = vmatpush1.msra.mxu0 %v429
    %2569 = vmatprep.subr.mxu0 %v436
    %2570 = vmatpush1.msra.mxu0 %v435
    %2571 = vmatprep.subr.mxu0 %v442
    %2572 = vmatpush1.msra.mxu0 %v441
    %2573 = vmatprep.subr.mxu0 %v448
    %2574 = vmatpush1.msra.mxu0 %v447
    %2575 = vmatprep.subr.mxu0 %v454
    %2576 = vmatpush1.msra.mxu0 %v453
    %2577 = vmatprep.subr.mxu0 %v460
    %2578 = vmatpush1.msra.mxu0 %v459
    %2579 = vmatprep.mubr.f32.mxu0 %v1671
    %2580 = vmatmul.mubr.f32.gmra.mrb[0].mxu0 %v1670
    %v2581 = vpop.f32.mrb[0].mxu0
    %v2582 = vadd.f32 %v2196, %v2581
    %v2583 = vpop.f32.mrb[0].mxu0
    %v2584 = vadd.f32 %v2200, %v2583
    %2585 = vmatprep.mubr.f32.mxu0 %v1674
    %2586 = vmatmul.mubr.f32.gmra.mrb[0].mxu0 %v1673
    %v2587 = vpop.f32.mrb[0].mxu0
    %v2588 = vadd.f32 %v2196, %v2587
    %v2589 = vpop.f32.mrb[0].mxu0
    %v2590 = vadd.f32 %v2200, %v2589
    %2591 = vdwg.mxu0
    %2592 = vmatprep.subr.mxu0 %v466
    %2593 = vmatpush1.msra.mxu0 %v465
    %2594 = vmatprep.subr.mxu0 %v472
    %2595 = vmatpush1.msra.mxu0 %v471
    %2596 = vmatprep.subr.mxu0 %v478
    %2597 = vmatpush1.msra.mxu0 %v477
    %2598 = vmatprep.subr.mxu0 %v484
    %2599 = vmatpush1.msra.mxu0 %v483
    %2600 = vmatprep.subr.mxu0 0.0
    %2601 = vmatpush1.msra.mxu0 0.0
    %2602 = vmatprep.subr.mxu0 0.0
    %2603 = vmatpush1.msra.mxu0 0.0
    %2604 = vmatprep.subr.mxu0 0.0
    %2605 = vmatpush1.msra.mxu0 0.0
    %2606 = vmatprep.subr.mxu0 0.0
    %2607 = vmatpush1.msra.mxu0 0.0
    %2608 = vmatprep.subr.mxu0 0.0
    %2609 = vmatpush1.msra.mxu0 0.0
    %2610 = vmatprep.subr.mxu0 0.0
    %2611 = vmatpush1.msra.mxu0 0.0
    %2612 = vmatprep.subr.mxu0 0.0
    %2613 = vmatpush1.msra.mxu0 0.0
    %2614 = vmatprep.subr.mxu0 0.0
    %2615 = vmatpush1.msra.mxu0 0.0
    %2616 = vmatprep.subr.mxu0 0.0
    %2617 = vmatpush1.msra.mxu0 0.0
    %2618 = vmatprep.subr.mxu0 0.0
    %2619 = vmatpush1.msra.mxu0 0.0
    %2620 = vmatprep.subr.mxu0 0.0
    %2621 = vmatpush1.msra.mxu0 0.0
    %2622 = vmatprep.subr.mxu0 0.0
    %2623 = vmatpush1.msra.mxu0 0.0
    %2624 = vmatprep.subr.mxu0 0.0
    %2625 = vmatpush1.msra.mxu0 0.0
    %2626 = vmatprep.subr.mxu0 0.0
    %2627 = vmatpush1.msra.mxu0 0.0
    %2628 = vmatprep.subr.mxu0 0.0
    %2629 = vmatpush1.msra.mxu0 0.0
    %2630 = vmatprep.subr.mxu0 0.0
    %2631 = vmatpush1.msra.mxu0 0.0
    %2632 = vmatprep.subr.mxu0 0.0
    %2633 = vmatpush1.msra.mxu0 0.0
    %2634 = vmatprep.subr.mxu0 0.0
    %2635 = vmatpush1.msra.mxu0 0.0
    %2636 = vmatprep.subr.mxu0 0.0
    %2637 = vmatpush1.msra.mxu0 0.0
    %2638 = vmatprep.subr.mxu0 0.0
    %2639 = vmatpush1.msra.mxu0 0.0
    %2640 = vmatprep.subr.mxu0 0.0
    %2641 = vmatpush1.msra.mxu0 0.0
    %2642 = vmatprep.subr.mxu0 0.0
    %2643 = vmatpush1.msra.mxu0 0.0
    %2644 = vmatprep.subr.mxu0 0.0
    %2645 = vmatpush1.msra.mxu0 0.0
    %2646 = vmatprep.subr.mxu0 0.0
    %2647 = vmatpush1.msra.mxu0 0.0
    %2648 = vmatprep.subr.mxu0 0.0
    %2649 = vmatpush1.msra.mxu0 0.0
    %2650 = vmatprep.subr.mxu0 0.0
    %2651 = vmatpush1.msra.mxu0 0.0
    %2652 = vmatprep.subr.mxu0 0.0
    %2653 = vmatpush1.msra.mxu0 0.0
    %2654 = vmatprep.subr.mxu0 0.0
    %2655 = vmatpush1.msra.mxu0 0.0
    %2656 = vmatprep.mubr.f32.mxu0 0.0
    %2657 = vmatmul.mubr.f32.gmra.mrb[0].mxu0 %v1709
    %v2658 = vpop.f32.mrb[0].mxu0
    %v2659 = vadd.f32 %v2582, %v2658
    %v2660 = vpop.f32.mrb[0].mxu0
    %v2661 = vadd.f32 %v2584, %v2660
    %2662 = vmatprep.mubr.f32.mxu0 0.0
    %2663 = vmatmul.mubr.f32.gmra.mrb[0].mxu0 %v1712
    %v2664 = vpop.f32.mrb[0].mxu0
    %v2665 = vadd.f32 %v2588, %v2664
    %v2666 = vpop.f32.mrb[0].mxu0
    %v2667 = vadd.f32 %v2590, %v2666
    %2668 = vdwg.mxu0
    %vm2669 = vcmask 195584
    %v2671 = vsel %vm2669, %v1493, 0
    %v2674 = vsel %vm2669, %v1494, 0
    %2676 = vmatprep.subr.mxu0 %v1066
    %2677 = vmatpush1.msra.mxu0 %v1065
    %2678 = vmatprep.subr.mxu0 %v1072
    %2679 = vmatpush1.msra.mxu0 %v1071
    %2680 = vmatprep.subr.mxu0 %v1078
    %2681 = vmatpush1.msra.mxu0 %v1077
    %2682 = vmatprep.subr.mxu0 0.0
    %2683 = vmatpush1.msra.mxu0 0.0
    %2684 = vmatprep.subr.mxu0 0.0
    %2685 = vmatpush1.msra.mxu0 0.0
    %2686 = vmatprep.subr.mxu0 0.0
    %2687 = vmatpush1.msra.mxu0 0.0
    %2688 = vmatprep.subr.mxu0 0.0
    %2689 = vmatpush1.msra.mxu0 0.0
    %2690 = vmatprep.subr.mxu0 0.0
    %2691 = vmatpush1.msra.mxu0 0.0
    %2692 = vmatprep.subr.mxu0 0.0
    %2693 = vmatpush1.msra.mxu0 0.0
    %2694 = vmatprep.subr.mxu0 0.0
    %2695 = vmatpush1.msra.mxu0 0.0
    %2696 = vmatprep.subr.mxu0 0.0
    %2697 = vmatpush1.msra.mxu0 0.0
    %2698 = vmatprep.subr.mxu0 0.0
    %2699 = vmatpush1.msra.mxu0 0.0
    %2700 = vmatprep.subr.mxu0 0.0
    %2701 = vmatpush1.msra.mxu0 0.0
    %2702 = vmatprep.subr.mxu0 0.0
    %2703 = vmatpush1.msra.mxu0 0.0
    %2704 = vmatprep.subr.mxu0 0.0
    %2705 = vmatpush1.msra.mxu0 0.0
    %2706 = vmatprep.subr.mxu0 0.0
    %2707 = vmatpush1.msra.mxu0 0.0
    %2708 = vmatprep.subr.mxu0 0.0
    %2709 = vmatpush1.msra.mxu0 0.0
    %2710 = vmatprep.subr.mxu0 0.0
    %2711 = vmatpush1.msra.mxu0 0.0
    %2712 = vmatprep.subr.mxu0 0.0
    %2713 = vmatpush1.msra.mxu0 0.0
    %2714 = vmatprep.subr.mxu0 0.0
    %2715 = vmatpush1.msra.mxu0 0.0
    %2716 = vmatprep.subr.mxu0 0.0
    %2717 = vmatpush1.msra.mxu0 0.0
    %2718 = vmatprep.subr.mxu0 0.0
    %2719 = vmatpush1.msra.mxu0 0.0
    %2720 = vmatprep.subr.mxu0 0.0
    %2721 = vmatpush1.msra.mxu0 0.0
    %2722 = vmatprep.subr.mxu0 0.0
    %2723 = vmatpush1.msra.mxu0 0.0
    %2724 = vmatprep.subr.mxu0 0.0
    %2725 = vmatpush1.msra.mxu0 0.0
    %2726 = vmatprep.subr.mxu0 0.0
    %2727 = vmatpush1.msra.mxu0 0.0
    %2728 = vmatprep.subr.mxu0 0.0
    %2729 = vmatpush1.msra.mxu0 0.0
    %2730 = vmatprep.subr.mxu0 0.0
    %2731 = vmatpush1.msra.mxu0 0.0
    %2732 = vmatprep.subr.mxu0 0.0
    %2733 = vmatpush1.msra.mxu0 0.0
    %2734 = vmatprep.subr.mxu0 0.0
    %2735 = vmatpush1.msra.mxu0 0.0
    %2736 = vmatprep.subr.mxu0 0.0
    %2737 = vmatpush1.msra.mxu0 0.0
    %2738 = vmatprep.subr.mxu0 0.0
    %2739 = vmatpush1.msra.mxu0 0.0
    %2740 = vmatprep.mubr.f32.mxu0 0.0
    %2741 = vmatmul.mubr.f32.gmra.mrb[0].mxu0 %v2671
    %v2742 = vpop.f32.mrb[0].mxu0
    %v2743 = vadd.f32 0.0, %v2742
    %v2744 = vpop.f32.mrb[0].mxu0
    %v2745 = vadd.f32 0.0, %v2744
    %2746 = vmatprep.mubr.f32.mxu0 0.0
    %2747 = vmatmul.mubr.f32.gmra.mrb[0].mxu0 %v2674
    %v2748 = vpop.f32.mrb[0].mxu0
    %v2749 = vadd.f32 0.0, %v2748
    %v2750 = vpop.f32.mrb[0].mxu0
    %v2751 = vadd.f32 0.0, %v2750
    %2752 = vdwg.mxu0
    %2753 = vmatprep.subr.mxu0 %v1068
    %2754 = vmatpush1.msra.mxu0 %v1067
    %2755 = vmatprep.subr.mxu0 %v1074
    %2756 = vmatpush1.msra.mxu0 %v1073
    %2757 = vmatprep.subr.mxu0 %v1080
    %2758 = vmatpush1.msra.mxu0 %v1079
    %2759 = vmatprep.subr.mxu0 0.0
    %2760 = vmatpush1.msra.mxu0 0.0
    %2761 = vmatprep.subr.mxu0 0.0
    %2762 = vmatpush1.msra.mxu0 0.0
    %2763 = vmatprep.subr.mxu0 0.0
    %2764 = vmatpush1.msra.mxu0 0.0
    %2765 = vmatprep.subr.mxu0 0.0
    %2766 = vmatpush1.msra.mxu0 0.0
    %2767 = vmatprep.subr.mxu0 0.0
    %2768 = vmatpush1.msra.mxu0 0.0
    %2769 = vmatprep.subr.mxu0 0.0
    %2770 = vmatpush1.msra.mxu0 0.0
    %2771 = vmatprep.subr.mxu0 0.0
    %2772 = vmatpush1.msra.mxu0 0.0
    %2773 = vmatprep.subr.mxu0 0.0
    %2774 = vmatpush1.msra.mxu0 0.0
    %2775 = vmatprep.subr.mxu0 0.0
    %2776 = vmatpush1.msra.mxu0 0.0
    %2777 = vmatprep.subr.mxu0 0.0
    %2778 = vmatpush1.msra.mxu0 0.0
    %2779 = vmatprep.subr.mxu0 0.0
    %2780 = vmatpush1.msra.mxu0 0.0
    %2781 = vmatprep.subr.mxu0 0.0
    %2782 = vmatpush1.msra.mxu0 0.0
    %2783 = vmatprep.subr.mxu0 0.0
    %2784 = vmatpush1.msra.mxu0 0.0
    %2785 = vmatprep.subr.mxu0 0.0
    %2786 = vmatpush1.msra.mxu0 0.0
    %2787 = vmatprep.subr.mxu0 0.0
    %2788 = vmatpush1.msra.mxu0 0.0
    %2789 = vmatprep.subr.mxu0 0.0
    %2790 = vmatpush1.msra.mxu0 0.0
    %2791 = vmatprep.subr.mxu0 0.0
    %2792 = vmatpush1.msra.mxu0 0.0
    %2793 = vmatprep.subr.mxu0 0.0
    %2794 = vmatpush1.msra.mxu0 0.0
    %2795 = vmatprep.subr.mxu0 0.0
    %2796 = vmatpush1.msra.mxu0 0.0
    %2797 = vmatprep.subr.mxu0 0.0
    %2798 = vmatpush1.msra.mxu0 0.0
    %2799 = vmatprep.subr.mxu0 0.0
    %2800 = vmatpush1.msra.mxu0 0.0
    %2801 = vmatprep.subr.mxu0 0.0
    %2802 = vmatpush1.msra.mxu0 0.0
    %2803 = vmatprep.subr.mxu0 0.0
    %2804 = vmatpush1.msra.mxu0 0.0
    %2805 = vmatprep.subr.mxu0 0.0
    %2806 = vmatpush1.msra.mxu0 0.0
    %2807 = vmatprep.subr.mxu0 0.0
    %2808 = vmatpush1.msra.mxu0 0.0
    %2809 = vmatprep.subr.mxu0 0.0
    %2810 = vmatpush1.msra.mxu0 0.0
    %2811 = vmatprep.subr.mxu0 0.0
    %2812 = vmatpush1.msra.mxu0 0.0
    %2813 = vmatprep.subr.mxu0 0.0
    %2814 = vmatpush1.msra.mxu0 0.0
    %2815 = vmatprep.subr.mxu0 0.0
    %2816 = vmatpush1.msra.mxu0 0.0
    %2817 = vmatprep.mubr.f32.mxu0 0.0
    %2818 = vmatmul.mubr.f32.gmra.mrb[0].mxu0 %v2671
    %v2819 = vpop.f32.mrb[0].mxu0
    %v2820 = vadd.f32 0.0, %v2819
    %v2821 = vpop.f32.mrb[0].mxu0
    %v2822 = vadd.f32 0.0, %v2821
    %2823 = vmatprep.mubr.f32.mxu0 0.0
    %2824 = vmatmul.mubr.f32.gmra.mrb[0].mxu0 %v2674
    %v2825 = vpop.f32.mrb[0].mxu0
    %v2826 = vadd.f32 0.0, %v2825
    %v2827 = vpop.f32.mrb[0].mxu0
    %v2828 = vadd.f32 0.0, %v2827
    %2829 = vdwg.mxu0
    %2830 = vmatprep.subr.mxu0 %v1070
    %2831 = vmatpush1.msra.mxu0 %v1069
    %2832 = vmatprep.subr.mxu0 %v1076
    %2833 = vmatpush1.msra.mxu0 %v1075
    %2834 = vmatprep.subr.mxu0 %v1082
    %2835 = vmatpush1.msra.mxu0 %v1081
    %2836 = vmatprep.subr.mxu0 0.0
    %2837 = vmatpush1.msra.mxu0 0.0
    %2838 = vmatprep.subr.mxu0 0.0
    %2839 = vmatpush1.msra.mxu0 0.0
    %2840 = vmatprep.subr.mxu0 0.0
    %2841 = vmatpush1.msra.mxu0 0.0
    %2842 = vmatprep.subr.mxu0 0.0
    %2843 = vmatpush1.msra.mxu0 0.0
    %2844 = vmatprep.subr.mxu0 0.0
    %2845 = vmatpush1.msra.mxu0 0.0
    %2846 = vmatprep.subr.mxu0 0.0
    %2847 = vmatpush1.msra.mxu0 0.0
    %2848 = vmatprep.subr.mxu0 0.0
    %2849 = vmatpush1.msra.mxu0 0.0
    %2850 = vmatprep.subr.mxu0 0.0
    %2851 = vmatpush1.msra.mxu0 0.0
    %2852 = vmatprep.subr.mxu0 0.0
    %2853 = vmatpush1.msra.mxu0 0.0
    %2854 = vmatprep.subr.mxu0 0.0
    %2855 = vmatpush1.msra.mxu0 0.0
    %2856 = vmatprep.subr.mxu0 0.0
    %2857 = vmatpush1.msra.mxu0 0.0
    %2858 = vmatprep.subr.mxu0 0.0
    %2859 = vmatpush1.msra.mxu0 0.0
    %2860 = vmatprep.subr.mxu0 0.0
    %2861 = vmatpush1.msra.mxu0 0.0
    %2862 = vmatprep.subr.mxu0 0.0
    %2863 = vmatpush1.msra.mxu0 0.0
    %2864 = vmatprep.subr.mxu0 0.0
    %2865 = vmatpush1.msra.mxu0 0.0
    %2866 = vmatprep.subr.mxu0 0.0
    %2867 = vmatpush1.msra.mxu0 0.0
    %2868 = vmatprep.subr.mxu0 0.0
    %2869 = vmatpush1.msra.mxu0 0.0
    %2870 = vmatprep.subr.mxu0 0.0
    %2871 = vmatpush1.msra.mxu0 0.0
    %2872 = vmatprep.subr.mxu0 0.0
    %2873 = vmatpush1.msra.mxu0 0.0
    %2874 = vmatprep.subr.mxu0 0.0
    %2875 = vmatpush1.msra.mxu0 0.0
    %2876 = vmatprep.subr.mxu0 0.0
    %2877 = vmatpush1.msra.mxu0 0.0
    %2878 = vmatprep.subr.mxu0 0.0
    %2879 = vmatpush1.msra.mxu0 0.0
    %2880 = vmatprep.subr.mxu0 0.0
    %2881 = vmatpush1.msra.mxu0 0.0
    %2882 = vmatprep.subr.mxu0 0.0
    %2883 = vmatpush1.msra.mxu0 0.0
    %2884 = vmatprep.subr.mxu0 0.0
    %2885 = vmatpush1.msra.mxu0 0.0
    %2886 = vmatprep.subr.mxu0 0.0
    %2887 = vmatpush1.msra.mxu0 0.0
    %2888 = vmatprep.subr.mxu0 0.0
    %2889 = vmatpush1.msra.mxu0 0.0
    %2890 = vmatprep.subr.mxu0 0.0
    %2891 = vmatpush1.msra.mxu0 0.0
    %2892 = vmatprep.subr.mxu0 0.0
    %2893 = vmatpush1.msra.mxu0 0.0
    %2894 = vmatprep.mubr.f32.mxu0 0.0
    %2895 = vmatmul.mubr.f32.gmra.mrb[0].mxu0 %v2671
    %v2896 = vpop.f32.mrb[0].mxu0
    %v2897 = vadd.f32 0.0, %v2896
    %v2898 = vpop.f32.mrb[0].mxu0
    %v2899 = vadd.f32 0.0, %v2898
    %2900 = vmatprep.mubr.f32.mxu0 0.0
    %2901 = vmatmul.mubr.f32.gmra.mrb[0].mxu0 %v2674
    %v2902 = vpop.f32.mrb[0].mxu0
    %v2903 = vadd.f32 0.0, %v2902
    %v2904 = vpop.f32.mrb[0].mxu0
    %v2905 = vadd.f32 0.0, %v2904
    %2906 = vdwg.mxu0
    %v2907 = vmul.f32 %v2743, %v2351
    %v2908 = vmul.f32 %v2745, %v2353
    %v2909 = vmul.f32 %v2820, %v2505
    %v2910 = vmul.f32 %v2822, %v2507
    %v2911 = vmul.f32 %v2897, %v2659
    %v2912 = vmul.f32 %v2899, %v2661
    %v2913 = vmul.f32 %v2749, %v2357
    %v2914 = vmul.f32 %v2751, %v2359
    %v2915 = vmul.f32 %v2826, %v2511
    %v2916 = vmul.f32 %v2828, %v2513
    %v2917 = vmul.f32 %v2903, %v2665
    %v2918 = vmul.f32 %v2905, %v2667
    %2919 = vmatprep.subr.mxu0 0.0
    %2920 = vmatpush1.msra.mxu0 %v1083
    %2921 = vmatprep.subr.mxu0 0.0
    %2922 = vmatpush1.msra.mxu0 %v1084
    %2923 = vmatprep.subr.mxu0 0.0
    %2924 = vmatpush1.msra.mxu0 %v1085
    %2925 = vmatprep.subr.mxu0 0.0
    %2926 = vmatpush1.msra.mxu0 %v1086
    %2927 = vmatprep.subr.mxu0 0.0
    %2928 = vmatpush1.msra.mxu0 %v1087
    %2929 = vmatprep.subr.mxu0 0.0
    %2930 = vmatpush1.msra.mxu0 %v1088
    %2931 = vmatprep.subr.mxu0 0.0
    %2932 = vmatpush1.msra.mxu0 %v1089
    %2933 = vmatprep.subr.mxu0 0.0
    %2934 = vmatpush1.msra.mxu0 %v1090
    %2935 = vmatprep.subr.mxu0 0.0
    %2936 = vmatpush1.msra.mxu0 %v1091
    %2937 = vmatprep.subr.mxu0 0.0
    %2938 = vmatpush1.msra.mxu0 %v1092
    %2939 = vmatprep.subr.mxu0 0.0
    %2940 = vmatpush1.msra.mxu0 %v1093
    %2941 = vmatprep.subr.mxu0 0.0
    %2942 = vmatpush1.msra.mxu0 %v1094
    %2943 = vmatprep.subr.mxu0 0.0
    %2944 = vmatpush1.msra.mxu0 %v1095
    %2945 = vmatprep.subr.mxu0 0.0
    %2946 = vmatpush1.msra.mxu0 %v1096
    %2947 = vmatprep.subr.mxu0 0.0
    %2948 = vmatpush1.msra.mxu0 %v1097
    %2949 = vmatprep.subr.mxu0 0.0
    %2950 = vmatpush1.msra.mxu0 %v1098
    %2951 = vmatprep.subr.mxu0 0.0
    %2952 = vmatpush1.msra.mxu0 %v1099
    %2953 = vmatprep.subr.mxu0 0.0
    %2954 = vmatpush1.msra.mxu0 %v1100
    %2955 = vmatprep.subr.mxu0 0.0
    %2956 = vmatpush1.msra.mxu0 %v1101
    %2957 = vmatprep.subr.mxu0 0.0
    %2958 = vmatpush1.msra.mxu0 %v1102
    %2959 = vmatprep.subr.mxu0 0.0
    %2960 = vmatpush1.msra.mxu0 %v1103
    %2961 = vmatprep.subr.mxu0 0.0
    %2962 = vmatpush1.msra.mxu0 %v1104
    %2963 = vmatprep.subr.mxu0 0.0
    %2964 = vmatpush1.msra.mxu0 %v1105
    %2965 = vmatprep.subr.mxu0 0.0
    %2966 = vmatpush1.msra.mxu0 %v1106
    %2967 = vmatprep.subr.mxu0 0.0
    %2968 = vmatpush1.msra.mxu0 %v1107
    %2969 = vmatprep.subr.mxu0 0.0
    %2970 = vmatpush1.msra.mxu0 %v1108
    %2971 = vmatprep.subr.mxu0 0.0
    %2972 = vmatpush1.msra.mxu0 %v1109
    %2973 = vmatprep.subr.mxu0 0.0
    %2974 = vmatpush1.msra.mxu0 %v1110
    %2975 = vmatprep.subr.mxu0 0.0
    %2976 = vmatpush1.msra.mxu0 %v1111
    %2977 = vmatprep.subr.mxu0 0.0
    %2978 = vmatpush1.msra.mxu0 %v1112
    %2979 = vmatprep.subr.mxu0 0.0
    %2980 = vmatpush1.msra.mxu0 %v1113
    %2981 = vmatprep.subr.mxu0 0.0
    %2982 = vmatpush1.msra.mxu0 %v1114
    %2983 = vmatprep.mubr.f32.mxu0 %v2908
    %2984 = vmatmul.mubr.f32.gmra.mrb[0].mxu0 %v2907
    %v2985 = vpop.f32.mrb[0].mxu0
    %v2986 = vadd.f32 0.0, %v2985
    %v2987 = vpop.f32.mrb[0].mxu0
    %2988 = vmatprep.mubr.f32.mxu0 %v2914
    %2989 = vmatmul.mubr.f32.gmra.mrb[0].mxu0 %v2913
    %v2990 = vpop.f32.mrb[0].mxu0
    %v2991 = vadd.f32 0.0, %v2990
    %v2992 = vpop.f32.mrb[0].mxu0
    %2993 = vdwg.mxu0
    %2994 = vmatprep.subr.mxu0 0.0
    %2995 = vmatpush1.msra.mxu0 %v1115
    %2996 = vmatprep.subr.mxu0 0.0
    %2997 = vmatpush1.msra.mxu0 %v1116
    %2998 = vmatprep.subr.mxu0 0.0
    %2999 = vmatpush1.msra.mxu0 %v1117
    %3000 = vmatprep.subr.mxu0 0.0
    %3001 = vmatpush1.msra.mxu0 %v1118
    %3002 = vmatprep.subr.mxu0 0.0
    %3003 = vmatpush1.msra.mxu0 %v1119
    %3004 = vmatprep.subr.mxu0 0.0
    %3005 = vmatpush1.msra.mxu0 %v1120
    %3006 = vmatprep.subr.mxu0 0.0
    %3007 = vmatpush1.msra.mxu0 %v1121
    %3008 = vmatprep.subr.mxu0 0.0
    %3009 = vmatpush1.msra.mxu0 %v1122
    %3010 = vmatprep.subr.mxu0 0.0
    %3011 = vmatpush1.msra.mxu0 %v1123
    %3012 = vmatprep.subr.mxu0 0.0
    %3013 = vmatpush1.msra.mxu0 %v1124
    %3014 = vmatprep.subr.mxu0 0.0
    %3015 = vmatpush1.msra.mxu0 %v1125
    %3016 = vmatprep.subr.mxu0 0.0
    %3017 = vmatpush1.msra.mxu0 %v1126
    %3018 = vmatprep.subr.mxu0 0.0
    %3019 = vmatpush1.msra.mxu0 %v1127
    %3020 = vmatprep.subr.mxu0 0.0
    %3021 = vmatpush1.msra.mxu0 %v1128
    %3022 = vmatprep.subr.mxu0 0.0
    %3023 = vmatpush1.msra.mxu0 %v1129
    %3024 = vmatprep.subr.mxu0 0.0
    %3025 = vmatpush1.msra.mxu0 %v1130
    %3026 = vmatprep.subr.mxu0 0.0
    %3027 = vmatpush1.msra.mxu0 %v1131
    %3028 = vmatprep.subr.mxu0 0.0
    %3029 = vmatpush1.msra.mxu0 %v1132
    %3030 = vmatprep.subr.mxu0 0.0
    %3031 = vmatpush1.msra.mxu0 %v1133
    %3032 = vmatprep.subr.mxu0 0.0
    %3033 = vmatpush1.msra.mxu0 %v1134
    %3034 = vmatprep.subr.mxu0 0.0
    %3035 = vmatpush1.msra.mxu0 %v1135
    %3036 = vmatprep.subr.mxu0 0.0
    %3037 = vmatpush1.msra.mxu0 %v1136
    %3038 = vmatprep.subr.mxu0 0.0
    %3039 = vmatpush1.msra.mxu0 %v1137
    %3040 = vmatprep.subr.mxu0 0.0
    %3041 = vmatpush1.msra.mxu0 %v1138
    %3042 = vmatprep.subr.mxu0 0.0
    %3043 = vmatpush1.msra.mxu0 %v1139
    %3044 = vmatprep.subr.mxu0 0.0
    %3045 = vmatpush1.msra.mxu0 %v1140
    %3046 = vmatprep.subr.mxu0 0.0
    %3047 = vmatpush1.msra.mxu0 %v1141
    %3048 = vmatprep.subr.mxu0 0.0
    %3049 = vmatpush1.msra.mxu0 %v1142
    %3050 = vmatprep.subr.mxu0 0.0
    %3051 = vmatpush1.msra.mxu0 %v1143
    %3052 = vmatprep.subr.mxu0 0.0
    %3053 = vmatpush1.msra.mxu0 %v1144
    %3054 = vmatprep.subr.mxu0 0.0
    %3055 = vmatpush1.msra.mxu0 %v1145
    %3056 = vmatprep.subr.mxu0 0.0
    %3057 = vmatpush1.msra.mxu0 %v1146
    %3058 = vmatprep.mubr.f32.mxu0 %v2910
    %3059 = vmatmul.mubr.f32.gmra.mrb[0].mxu0 %v2909
    %v3060 = vpop.f32.mrb[0].mxu0
    %v3061 = vadd.f32 %v2986, %v3060
    %v3062 = vpop.f32.mrb[0].mxu0
    %3063 = vmatprep.mubr.f32.mxu0 %v2916
    %3064 = vmatmul.mubr.f32.gmra.mrb[0].mxu0 %v2915
    %v3065 = vpop.f32.mrb[0].mxu0
    %v3066 = vadd.f32 %v2991, %v3065
    %v3067 = vpop.f32.mrb[0].mxu0
    %3068 = vdwg.mxu0
    %3069 = vmatprep.subr.mxu0 0.0
    %3070 = vmatpush1.msra.mxu0 %v1147
    %3071 = vmatprep.subr.mxu0 0.0
    %3072 = vmatpush1.msra.mxu0 %v1148
    %3073 = vmatprep.subr.mxu0 0.0
    %3074 = vmatpush1.msra.mxu0 %v1149
    %3075 = vmatprep.subr.mxu0 0.0
    %3076 = vmatpush1.msra.mxu0 %v1150
    %3077 = vmatprep.subr.mxu0 0.0
    %3078 = vmatpush1.msra.mxu0 %v1151
    %3079 = vmatprep.subr.mxu0 0.0
    %3080 = vmatpush1.msra.mxu0 %v1152
    %3081 = vmatprep.subr.mxu0 0.0
    %3082 = vmatpush1.msra.mxu0 %v1153
    %3083 = vmatprep.subr.mxu0 0.0
    %3084 = vmatpush1.msra.mxu0 %v1154
    %3085 = vmatprep.subr.mxu0 0.0
    %3086 = vmatpush1.msra.mxu0 %v1155
    %3087 = vmatprep.subr.mxu0 0.0
    %3088 = vmatpush1.msra.mxu0 %v1156
    %3089 = vmatprep.subr.mxu0 0.0
    %3090 = vmatpush1.msra.mxu0 %v1157
    %3091 = vmatprep.subr.mxu0 0.0
    %3092 = vmatpush1.msra.mxu0 %v1158
    %3093 = vmatprep.subr.mxu0 0.0
    %3094 = vmatpush1.msra.mxu0 %v1159
    %3095 = vmatprep.subr.mxu0 0.0
    %3096 = vmatpush1.msra.mxu0 %v1160
    %3097 = vmatprep.subr.mxu0 0.0
    %3098 = vmatpush1.msra.mxu0 %v1161
    %3099 = vmatprep.subr.mxu0 0.0
    %3100 = vmatpush1.msra.mxu0 %v1162
    %3101 = vmatprep.subr.mxu0 0.0
    %3102 = vmatpush1.msra.mxu0 %v1163
    %3103 = vmatprep.subr.mxu0 0.0
    %3104 = vmatpush1.msra.mxu0 %v1164
    %3105 = vmatprep.subr.mxu0 0.0
    %3106 = vmatpush1.msra.mxu0 %v1165
    %3107 = vmatprep.subr.mxu0 0.0
    %3108 = vmatpush1.msra.mxu0 %v1166
    %3109 = vmatprep.subr.mxu0 0.0
    %3110 = vmatpush1.msra.mxu0 %v1167
    %3111 = vmatprep.subr.mxu0 0.0
    %3112 = vmatpush1.msra.mxu0 %v1168
    %3113 = vmatprep.subr.mxu0 0.0
    %3114 = vmatpush1.msra.mxu0 %v1169
    %3115 = vmatprep.subr.mxu0 0.0
    %3116 = vmatpush1.msra.mxu0 %v1170
    %3117 = vmatprep.subr.mxu0 0.0
    %3118 = vmatpush1.msra.mxu0 %v1171
    %3119 = vmatprep.subr.mxu0 0.0
    %3120 = vmatpush1.msra.mxu0 %v1172
    %3121 = vmatprep.subr.mxu0 0.0
    %3122 = vmatpush1.msra.mxu0 %v1173
    %3123 = vmatprep.subr.mxu0 0.0
    %3124 = vmatpush1.msra.mxu0 %v1174
    %3125 = vmatprep.subr.mxu0 0.0
    %3126 = vmatpush1.msra.mxu0 %v1175
    %3127 = vmatprep.subr.mxu0 0.0
    %3128 = vmatpush1.msra.mxu0 %v1176
    %3129 = vmatprep.subr.mxu0 0.0
    %3130 = vmatpush1.msra.mxu0 %v1177
    %3131 = vmatprep.subr.mxu0 0.0
    %3132 = vmatpush1.msra.mxu0 %v1178
    %3133 = vmatprep.mubr.f32.mxu0 %v2912
    %3134 = vmatmul.mubr.f32.gmra.mrb[0].mxu0 %v2911
    %v3135 = vpop.f32.mrb[0].mxu0
    %v3136 = vadd.f32 %v3061, %v3135
    %v3137 = vpop.f32.mrb[0].mxu0
    %3138 = vmatprep.mubr.f32.mxu0 %v2918
    %3139 = vmatmul.mubr.f32.gmra.mrb[0].mxu0 %v2917
    %v3140 = vpop.f32.mrb[0].mxu0
    %v3141 = vadd.f32 %v3066, %v3140
    %v3142 = vpop.f32.mrb[0].mxu0
    %3143 = vdwg.mxu0
    %v3144 = vmul.f32 %v3136, %v1860
    %v3145 = vmul.f32 %v3141, %v1866
    %v3146 = vadd.f32 %v3144, %v1858
    %v3147 = vadd.f32 %v3145, %v1864
    %v3148 = vmax.f32 %v3146, 0.0
    %v3149 = vmax.f32 %v3147, 0.0
    %v3151 = vlaneseq
    %v3152 = vshrl.u32 %v3151, 7
    %v3153 = vsub.s32 0, %v3152
    %v3154 = vrot.slane %v774, %v3153
    %v3155 = vlaneseq
    %v3156 = vshrl.u32 %v3155, 7
    %v3157 = vsub.s32 1, %v3156
    %v3158 = vrot.slane %v774, %v3157
    %v3159 = vlaneseq
    %v3160 = vshrl.u32 %v3159, 7
    %v3161 = vsub.s32 2, %v3160
    %v3162 = vrot.slane %v774, %v3161
    %v3163 = vlaneseq
    %v3164 = vshrl.u32 %v3163, 7
    %v3165 = vsub.s32 3, %v3164
    %v3166 = vrot.slane %v774, %v3165
    %v3167 = vlaneseq
    %v3168 = vshrl.u32 %v3167, 7
    %v3169 = vsub.s32 4, %v3168
    %v3170 = vrot.slane %v774, %v3169
    %v3171 = vlaneseq
    %v3172 = vshrl.u32 %v3171, 7
    %v3173 = vsub.s32 5, %v3172
    %v3174 = vrot.slane %v774, %v3173
    %v3175 = vlaneseq
    %v3176 = vshrl.u32 %v3175, 7
    %v3177 = vsub.s32 6, %v3176
    %v3178 = vrot.slane %v774, %v3177
    %v3179 = vlaneseq
    %v3180 = vshrl.u32 %v3179, 7
    %v3181 = vsub.s32 7, %v3180
    %v3182 = vrot.slane %v774, %v3181
    %3191 = vmatprep.subr.mxu0 %v487
    %3192 = vmatpush1.msra.mxu0 %v486
    %3193 = vmatprep.subr.mxu0 %v495
    %3194 = vmatpush1.msra.mxu0 %v494
    %3195 = vmatprep.subr.mxu0 %v503
    %3196 = vmatpush1.msra.mxu0 %v502
    %3197 = vmatprep.subr.mxu0 %v511
    %3198 = vmatpush1.msra.mxu0 %v510
    %3199 = vmatprep.subr.mxu0 %v519
    %3200 = vmatpush1.msra.mxu0 %v518
    %3201 = vmatprep.subr.mxu0 %v527
    %3202 = vmatpush1.msra.mxu0 %v526
    %3203 = vmatprep.subr.mxu0 %v535
    %3204 = vmatpush1.msra.mxu0 %v534
    %3205 = vmatprep.subr.mxu0 %v543
    %3206 = vmatpush1.msra.mxu0 %v542
    %3207 = vmatprep.subr.mxu0 %v551
    %3208 = vmatpush1.msra.mxu0 %v550
    %3209 = vmatprep.subr.mxu0 %v559
    %3210 = vmatpush1.msra.mxu0 %v558
    %3211 = vmatprep.subr.mxu0 %v567
    %3212 = vmatpush1.msra.mxu0 %v566
    %3213 = vmatprep.subr.mxu0 %v575
    %3214 = vmatpush1.msra.mxu0 %v574
    %3215 = vmatprep.subr.mxu0 %v583
    %3216 = vmatpush1.msra.mxu0 %v582
    %3217 = vmatprep.subr.mxu0 %v591
    %3218 = vmatpush1.msra.mxu0 %v590
    %3219 = vmatprep.subr.mxu0 %v599
    %3220 = vmatpush1.msra.mxu0 %v598
    %3221 = vmatprep.subr.mxu0 %v607
    %3222 = vmatpush1.msra.mxu0 %v606
    %3223 = vmatprep.subr.mxu0 %v615
    %3224 = vmatpush1.msra.mxu0 %v614
    %3225 = vmatprep.subr.mxu0 %v623
    %3226 = vmatpush1.msra.mxu0 %v622
    %3227 = vmatprep.subr.mxu0 %v631
    %3228 = vmatpush1.msra.mxu0 %v630
    %3229 = vmatprep.subr.mxu0 %v639
    %3230 = vmatpush1.msra.mxu0 %v638
    %3231 = vmatprep.subr.mxu0 %v647
    %3232 = vmatpush1.msra.mxu0 %v646
    %3233 = vmatprep.subr.mxu0 %v655
    %3234 = vmatpush1.msra.mxu0 %v654
    %3235 = vmatprep.subr.mxu0 %v663
    %3236 = vmatpush1.msra.mxu0 %v662
    %3237 = vmatprep.subr.mxu0 %v671
    %3238 = vmatpush1.msra.mxu0 %v670
    %3239 = vmatprep.subr.mxu0 %v679
    %3240 = vmatpush1.msra.mxu0 %v678
    %3241 = vmatprep.subr.mxu0 %v687
    %3242 = vmatpush1.msra.mxu0 %v686
    %3243 = vmatprep.subr.mxu0 %v695
    %3244 = vmatpush1.msra.mxu0 %v694
    %3245 = vmatprep.subr.mxu0 %v703
    %3246 = vmatpush1.msra.mxu0 %v702
    %3247 = vmatprep.subr.mxu0 %v711
    %3248 = vmatpush1.msra.mxu0 %v710
    %3249 = vmatprep.subr.mxu0 %v719
    %3250 = vmatpush1.msra.mxu0 %v718
    %3251 = vmatprep.subr.mxu0 %v727
    %3252 = vmatpush1.msra.mxu0 %v726
    %3253 = vmatprep.subr.mxu0 %v735
    %3254 = vmatpush1.msra.mxu0 %v734
    %3255 = vmatprep.mubr.f32.mxu0 %v1671
    %3256 = vmatmul.mubr.f32.gmra.mrb[0].mxu0 %v1670
    %v3257 = vpop.f32.mrb[0].mxu0
    %v3258 = vadd.f32 %v3154, %v3257
    %v3259 = vpop.f32.mrb[0].mxu0
    %v3260 = vadd.f32 %v3158, %v3259
    %3261 = vmatprep.mubr.f32.mxu0 %v1674
    %3262 = vmatmul.mubr.f32.gmra.mrb[0].mxu0 %v1673
    %v3263 = vpop.f32.mrb[0].mxu0
    %v3264 = vadd.f32 %v3154, %v3263
    %v3265 = vpop.f32.mrb[0].mxu0
    %v3266 = vadd.f32 %v3158, %v3265
    %3267 = vdwg.mxu0
    %3268 = vmatprep.subr.mxu0 %v743
    %3269 = vmatpush1.msra.mxu0 %v742
    %3270 = vmatprep.subr.mxu0 %v751
    %3271 = vmatpush1.msra.mxu0 %v750
    %3272 = vmatprep.subr.mxu0 %v759
    %3273 = vmatpush1.msra.mxu0 %v758
    %3274 = vmatprep.subr.mxu0 %v767
    %3275 = vmatpush1.msra.mxu0 %v766
    %3276 = vmatprep.subr.mxu0 0.0
    %3277 = vmatpush1.msra.mxu0 0.0
    %3278 = vmatprep.subr.mxu0 0.0
    %3279 = vmatpush1.msra.mxu0 0.0
    %3280 = vmatprep.subr.mxu0 0.0
    %3281 = vmatpush1.msra.mxu0 0.0
    %3282 = vmatprep.subr.mxu0 0.0
    %3283 = vmatpush1.msra.mxu0 0.0
    %3284 = vmatprep.subr.mxu0 0.0
    %3285 = vmatpush1.msra.mxu0 0.0
    %3286 = vmatprep.subr.mxu0 0.0
    %3287 = vmatpush1.msra.mxu0 0.0
    %3288 = vmatprep.subr.mxu0 0.0
    %3289 = vmatpush1.msra.mxu0 0.0
    %3290 = vmatprep.subr.mxu0 0.0
    %3291 = vmatpush1.msra.mxu0 0.0
    %3292 = vmatprep.subr.mxu0 0.0
    %3293 = vmatpush1.msra.mxu0 0.0
    %3294 = vmatprep.subr.mxu0 0.0
    %3295 = vmatpush1.msra.mxu0 0.0
    %3296 = vmatprep.subr.mxu0 0.0
    %3297 = vmatpush1.msra.mxu0 0.0
    %3298 = vmatprep.subr.mxu0 0.0
    %3299 = vmatpush1.msra.mxu0 0.0
    %3300 = vmatprep.subr.mxu0 0.0
    %3301 = vmatpush1.msra.mxu0 0.0
    %3302 = vmatprep.subr.mxu0 0.0
    %3303 = vmatpush1.msra.mxu0 0.0
    %3304 = vmatprep.subr.mxu0 0.0
    %3305 = vmatpush1.msra.mxu0 0.0
    %3306 = vmatprep.subr.mxu0 0.0
    %3307 = vmatpush1.msra.mxu0 0.0
    %3308 = vmatprep.subr.mxu0 0.0
    %3309 = vmatpush1.msra.mxu0 0.0
    %3310 = vmatprep.subr.mxu0 0.0
    %3311 = vmatpush1.msra.mxu0 0.0
    %3312 = vmatprep.subr.mxu0 0.0
    %3313 = vmatpush1.msra.mxu0 0.0
    %3314 = vmatprep.subr.mxu0 0.0
    %3315 = vmatpush1.msra.mxu0 0.0
    %3316 = vmatprep.subr.mxu0 0.0
    %3317 = vmatpush1.msra.mxu0 0.0
    %3318 = vmatprep.subr.mxu0 0.0
    %3319 = vmatpush1.msra.mxu0 0.0
    %3320 = vmatprep.subr.mxu0 0.0
    %3321 = vmatpush1.msra.mxu0 0.0
    %3322 = vmatprep.subr.mxu0 0.0
    %3323 = vmatpush1.msra.mxu0 0.0
    %3324 = vmatprep.subr.mxu0 0.0
    %3325 = vmatpush1.msra.mxu0 0.0
    %3326 = vmatprep.subr.mxu0 0.0
    %3327 = vmatpush1.msra.mxu0 0.0
    %3328 = vmatprep.subr.mxu0 0.0
    %3329 = vmatpush1.msra.mxu0 0.0
    %3330 = vmatprep.subr.mxu0 0.0
    %3331 = vmatpush1.msra.mxu0 0.0
    %3332 = vmatprep.mubr.f32.mxu0 0.0
    %3333 = vmatmul.mubr.f32.gmra.mrb[0].mxu0 %v1709
    %v3334 = vpop.f32.mrb[0].mxu0
    %v3335 = vadd.f32 %v3258, %v3334
    %v3336 = vpop.f32.mrb[0].mxu0
    %v3337 = vadd.f32 %v3260, %v3336
    %3338 = vmatprep.mubr.f32.mxu0 0.0
    %3339 = vmatmul.mubr.f32.gmra.mrb[0].mxu0 %v1712
    %v3340 = vpop.f32.mrb[0].mxu0
    %v3341 = vadd.f32 %v3264, %v3340
    %v3342 = vpop.f32.mrb[0].mxu0
    %v3343 = vadd.f32 %v3266, %v3342
    %3344 = vdwg.mxu0
    %3345 = vmatprep.subr.mxu0 %v489
    %3346 = vmatpush1.msra.mxu0 %v488
    %3347 = vmatprep.subr.mxu0 %v497
    %3348 = vmatpush1.msra.mxu0 %v496
    %3349 = vmatprep.subr.mxu0 %v505
    %3350 = vmatpush1.msra.mxu0 %v504
    %3351 = vmatprep.subr.mxu0 %v513
    %3352 = vmatpush1.msra.mxu0 %v512
    %3353 = vmatprep.subr.mxu0 %v521
    %3354 = vmatpush1.msra.mxu0 %v520
    %3355 = vmatprep.subr.mxu0 %v529
    %3356 = vmatpush1.msra.mxu0 %v528
    %3357 = vmatprep.subr.mxu0 %v537
    %3358 = vmatpush1.msra.mxu0 %v536
    %3359 = vmatprep.subr.mxu0 %v545
    %3360 = vmatpush1.msra.mxu0 %v544
    %3361 = vmatprep.subr.mxu0 %v553
    %3362 = vmatpush1.msra.mxu0 %v552
    %3363 = vmatprep.subr.mxu0 %v561
    %3364 = vmatpush1.msra.mxu0 %v560
    %3365 = vmatprep.subr.mxu0 %v569
    %3366 = vmatpush1.msra.mxu0 %v568
    %3367 = vmatprep.subr.mxu0 %v577
    %3368 = vmatpush1.msra.mxu0 %v576
    %3369 = vmatprep.subr.mxu0 %v585
    %3370 = vmatpush1.msra.mxu0 %v584
    %3371 = vmatprep.subr.mxu0 %v593
    %3372 = vmatpush1.msra.mxu0 %v592
    %3373 = vmatprep.subr.mxu0 %v601
    %3374 = vmatpush1.msra.mxu0 %v600
    %3375 = vmatprep.subr.mxu0 %v609
    %3376 = vmatpush1.msra.mxu0 %v608
    %3377 = vmatprep.subr.mxu0 %v617
    %3378 = vmatpush1.msra.mxu0 %v616
    %3379 = vmatprep.subr.mxu0 %v625
    %3380 = vmatpush1.msra.mxu0 %v624
    %3381 = vmatprep.subr.mxu0 %v633
    %3382 = vmatpush1.msra.mxu0 %v632
    %3383 = vmatprep.subr.mxu0 %v641
    %3384 = vmatpush1.msra.mxu0 %v640
    %3385 = vmatprep.subr.mxu0 %v649
    %3386 = vmatpush1.msra.mxu0 %v648
    %3387 = vmatprep.subr.mxu0 %v657
    %3388 = vmatpush1.msra.mxu0 %v656
    %3389 = vmatprep.subr.mxu0 %v665
    %3390 = vmatpush1.msra.mxu0 %v664
    %3391 = vmatprep.subr.mxu0 %v673
    %3392 = vmatpush1.msra.mxu0 %v672
    %3393 = vmatprep.subr.mxu0 %v681
    %3394 = vmatpush1.msra.mxu0 %v680
    %3395 = vmatprep.subr.mxu0 %v689
    %3396 = vmatpush1.msra.mxu0 %v688
    %3397 = vmatprep.subr.mxu0 %v697
    %3398 = vmatpush1.msra.mxu0 %v696
    %3399 = vmatprep.subr.mxu0 %v705
    %3400 = vmatpush1.msra.mxu0 %v704
    %3401 = vmatprep.subr.mxu0 %v713
    %3402 = vmatpush1.msra.mxu0 %v712
    %3403 = vmatprep.subr.mxu0 %v721
    %3404 = vmatpush1.msra.mxu0 %v720
    %3405 = vmatprep.subr.mxu0 %v729
    %3406 = vmatpush1.msra.mxu0 %v728
    %3407 = vmatprep.subr.mxu0 %v737
    %3408 = vmatpush1.msra.mxu0 %v736
    %3409 = vmatprep.mubr.f32.mxu0 %v1671
    %3410 = vmatmul.mubr.f32.gmra.mrb[0].mxu0 %v1670
    %v3411 = vpop.f32.mrb[0].mxu0
    %v3412 = vadd.f32 %v3162, %v3411
    %v3413 = vpop.f32.mrb[0].mxu0
    %v3414 = vadd.f32 %v3166, %v3413
    %3415 = vmatprep.mubr.f32.mxu0 %v1674
    %3416 = vmatmul.mubr.f32.gmra.mrb[0].mxu0 %v1673
    %v3417 = vpop.f32.mrb[0].mxu0
    %v3418 = vadd.f32 %v3162, %v3417
    %v3419 = vpop.f32.mrb[0].mxu0
    %v3420 = vadd.f32 %v3166, %v3419
    %3421 = vdwg.mxu0
    %3422 = vmatprep.subr.mxu0 %v745
    %3423 = vmatpush1.msra.mxu0 %v744
    %3424 = vmatprep.subr.mxu0 %v753
    %3425 = vmatpush1.msra.mxu0 %v752
    %3426 = vmatprep.subr.mxu0 %v761
    %3427 = vmatpush1.msra.mxu0 %v760
    %3428 = vmatprep.subr.mxu0 %v769
    %3429 = vmatpush1.msra.mxu0 %v768
    %3430 = vmatprep.subr.mxu0 0.0
    %3431 = vmatpush1.msra.mxu0 0.0
    %3432 = vmatprep.subr.mxu0 0.0
    %3433 = vmatpush1.msra.mxu0 0.0
    %3434 = vmatprep.subr.mxu0 0.0
    %3435 = vmatpush1.msra.mxu0 0.0
    %3436 = vmatprep.subr.mxu0 0.0
    %3437 = vmatpush1.msra.mxu0 0.0
    %3438 = vmatprep.subr.mxu0 0.0
    %3439 = vmatpush1.msra.mxu0 0.0
    %3440 = vmatprep.subr.mxu0 0.0
    %3441 = vmatpush1.msra.mxu0 0.0
    %3442 = vmatprep.subr.mxu0 0.0
    %3443 = vmatpush1.msra.mxu0 0.0
    %3444 = vmatprep.subr.mxu0 0.0
    %3445 = vmatpush1.msra.mxu0 0.0
    %3446 = vmatprep.subr.mxu0 0.0
    %3447 = vmatpush1.msra.mxu0 0.0
    %3448 = vmatprep.subr.mxu0 0.0
    %3449 = vmatpush1.msra.mxu0 0.0
    %3450 = vmatprep.subr.mxu0 0.0
    %3451 = vmatpush1.msra.mxu0 0.0
    %3452 = vmatprep.subr.mxu0 0.0
    %3453 = vmatpush1.msra.mxu0 0.0
    %3454 = vmatprep.subr.mxu0 0.0
    %3455 = vmatpush1.msra.mxu0 0.0
    %3456 = vmatprep.subr.mxu0 0.0
    %3457 = vmatpush1.msra.mxu0 0.0
    %3458 = vmatprep.subr.mxu0 0.0
    %3459 = vmatpush1.msra.mxu0 0.0
    %3460 = vmatprep.subr.mxu0 0.0
    %3461 = vmatpush1.msra.mxu0 0.0
    %3462 = vmatprep.subr.mxu0 0.0
    %3463 = vmatpush1.msra.mxu0 0.0
    %3464 = vmatprep.subr.mxu0 0.0
    %3465 = vmatpush1.msra.mxu0 0.0
    %3466 = vmatprep.subr.mxu0 0.0
    %3467 = vmatpush1.msra.mxu0 0.0
    %3468 = vmatprep.subr.mxu0 0.0
    %3469 = vmatpush1.msra.mxu0 0.0
    %3470 = vmatprep.subr.mxu0 0.0
    %3471 = vmatpush1.msra.mxu0 0.0
    %3472 = vmatprep.subr.mxu0 0.0
    %3473 = vmatpush1.msra.mxu0 0.0
    %3474 = vmatprep.subr.mxu0 0.0
    %3475 = vmatpush1.msra.mxu0 0.0
    %3476 = vmatprep.subr.mxu0 0.0
    %3477 = vmatpush1.msra.mxu0 0.0
    %3478 = vmatprep.subr.mxu0 0.0
    %3479 = vmatpush1.msra.mxu0 0.0
    %3480 = vmatprep.subr.mxu0 0.0
    %3481 = vmatpush1.msra.mxu0 0.0
    %3482 = vmatprep.subr.mxu0 0.0
    %3483 = vmatpush1.msra.mxu0 0.0
    %3484 = vmatprep.subr.mxu0 0.0
    %3485 = vmatpush1.msra.mxu0 0.0
    %3486 = vmatprep.mubr.f32.mxu0 0.0
    %3487 = vmatmul.mubr.f32.gmra.mrb[0].mxu0 %v1709
    %v3488 = vpop.f32.mrb[0].mxu0
    %v3489 = vadd.f32 %v3412, %v3488
    %v3490 = vpop.f32.mrb[0].mxu0
    %v3491 = vadd.f32 %v3414, %v3490
    %3492 = vmatprep.mubr.f32.mxu0 0.0
    %3493 = vmatmul.mubr.f32.gmra.mrb[0].mxu0 %v1712
    %v3494 = vpop.f32.mrb[0].mxu0
    %v3495 = vadd.f32 %v3418, %v3494
    %v3496 = vpop.f32.mrb[0].mxu0
    %v3497 = vadd.f32 %v3420, %v3496
    %3498 = vdwg.mxu0
    %3499 = vmatprep.subr.mxu0 %v491
    %3500 = vmatpush1.msra.mxu0 %v490
    %3501 = vmatprep.subr.mxu0 %v499
    %3502 = vmatpush1.msra.mxu0 %v498
    %3503 = vmatprep.subr.mxu0 %v507
    %3504 = vmatpush1.msra.mxu0 %v506
    %3505 = vmatprep.subr.mxu0 %v515
    %3506 = vmatpush1.msra.mxu0 %v514
    %3507 = vmatprep.subr.mxu0 %v523
    %3508 = vmatpush1.msra.mxu0 %v522
    %3509 = vmatprep.subr.mxu0 %v531
    %3510 = vmatpush1.msra.mxu0 %v530
    %3511 = vmatprep.subr.mxu0 %v539
    %3512 = vmatpush1.msra.mxu0 %v538
    %3513 = vmatprep.subr.mxu0 %v547
    %3514 = vmatpush1.msra.mxu0 %v546
    %3515 = vmatprep.subr.mxu0 %v555
    %3516 = vmatpush1.msra.mxu0 %v554
    %3517 = vmatprep.subr.mxu0 %v563
    %3518 = vmatpush1.msra.mxu0 %v562
    %3519 = vmatprep.subr.mxu0 %v571
    %3520 = vmatpush1.msra.mxu0 %v570
    %3521 = vmatprep.subr.mxu0 %v579
    %3522 = vmatpush1.msra.mxu0 %v578
    %3523 = vmatprep.subr.mxu0 %v587
    %3524 = vmatpush1.msra.mxu0 %v586
    %3525 = vmatprep.subr.mxu0 %v595
    %3526 = vmatpush1.msra.mxu0 %v594
    %3527 = vmatprep.subr.mxu0 %v603
    %3528 = vmatpush1.msra.mxu0 %v602
    %3529 = vmatprep.subr.mxu0 %v611
    %3530 = vmatpush1.msra.mxu0 %v610
    %3531 = vmatprep.subr.mxu0 %v619
    %3532 = vmatpush1.msra.mxu0 %v618
    %3533 = vmatprep.subr.mxu0 %v627
    %3534 = vmatpush1.msra.mxu0 %v626
    %3535 = vmatprep.subr.mxu0 %v635
    %3536 = vmatpush1.msra.mxu0 %v634
    %3537 = vmatprep.subr.mxu0 %v643
    %3538 = vmatpush1.msra.mxu0 %v642
    %3539 = vmatprep.subr.mxu0 %v651
    %3540 = vmatpush1.msra.mxu0 %v650
    %3541 = vmatprep.subr.mxu0 %v659
    %3542 = vmatpush1.msra.mxu0 %v658
    %3543 = vmatprep.subr.mxu0 %v667
    %3544 = vmatpush1.msra.mxu0 %v666
    %3545 = vmatprep.subr.mxu0 %v675
    %3546 = vmatpush1.msra.mxu0 %v674
    %3547 = vmatprep.subr.mxu0 %v683
    %3548 = vmatpush1.msra.mxu0 %v682
    %3549 = vmatprep.subr.mxu0 %v691
    %3550 = vmatpush1.msra.mxu0 %v690
    %3551 = vmatprep.subr.mxu0 %v699
    %3552 = vmatpush1.msra.mxu0 %v698
    %3553 = vmatprep.subr.mxu0 %v707
    %3554 = vmatpush1.msra.mxu0 %v706
    %3555 = vmatprep.subr.mxu0 %v715
    %3556 = vmatpush1.msra.mxu0 %v714
    %3557 = vmatprep.subr.mxu0 %v723
    %3558 = vmatpush1.msra.mxu0 %v722
    %3559 = vmatprep.subr.mxu0 %v731
    %3560 = vmatpush1.msra.mxu0 %v730
    %3561 = vmatprep.subr.mxu0 %v739
    %3562 = vmatpush1.msra.mxu0 %v738
    %3563 = vmatprep.mubr.f32.mxu0 %v1671
    %3564 = vmatmul.mubr.f32.gmra.mrb[0].mxu0 %v1670
    %v3565 = vpop.f32.mrb[0].mxu0
    %v3566 = vadd.f32 %v3170, %v3565
    %v3567 = vpop.f32.mrb[0].mxu0
    %v3568 = vadd.f32 %v3174, %v3567
    %3569 = vmatprep.mubr.f32.mxu0 %v1674
    %3570 = vmatmul.mubr.f32.gmra.mrb[0].mxu0 %v1673
    %v3571 = vpop.f32.mrb[0].mxu0
    %v3572 = vadd.f32 %v3170, %v3571
    %v3573 = vpop.f32.mrb[0].mxu0
    %v3574 = vadd.f32 %v3174, %v3573
    %3575 = vdwg.mxu0
    %3576 = vmatprep.subr.mxu0 %v747
    %3577 = vmatpush1.msra.mxu0 %v746
    %3578 = vmatprep.subr.mxu0 %v755
    %3579 = vmatpush1.msra.mxu0 %v754
    %3580 = vmatprep.subr.mxu0 %v763
    %3581 = vmatpush1.msra.mxu0 %v762
    %3582 = vmatprep.subr.mxu0 %v771
    %3583 = vmatpush1.msra.mxu0 %v770
    %3584 = vmatprep.subr.mxu0 0.0
    %3585 = vmatpush1.msra.mxu0 0.0
    %3586 = vmatprep.subr.mxu0 0.0
    %3587 = vmatpush1.msra.mxu0 0.0
    %3588 = vmatprep.subr.mxu0 0.0
    %3589 = vmatpush1.msra.mxu0 0.0
    %3590 = vmatprep.subr.mxu0 0.0
    %3591 = vmatpush1.msra.mxu0 0.0
    %3592 = vmatprep.subr.mxu0 0.0
    %3593 = vmatpush1.msra.mxu0 0.0
    %3594 = vmatprep.subr.mxu0 0.0
    %3595 = vmatpush1.msra.mxu0 0.0
    %3596 = vmatprep.subr.mxu0 0.0
    %3597 = vmatpush1.msra.mxu0 0.0
    %3598 = vmatprep.subr.mxu0 0.0
    %3599 = vmatpush1.msra.mxu0 0.0
    %3600 = vmatprep.subr.mxu0 0.0
    %3601 = vmatpush1.msra.mxu0 0.0
    %3602 = vmatprep.subr.mxu0 0.0
    %3603 = vmatpush1.msra.mxu0 0.0
    %3604 = vmatprep.subr.mxu0 0.0
    %3605 = vmatpush1.msra.mxu0 0.0
    %3606 = vmatprep.subr.mxu0 0.0
    %3607 = vmatpush1.msra.mxu0 0.0
    %3608 = vmatprep.subr.mxu0 0.0
    %3609 = vmatpush1.msra.mxu0 0.0
    %3610 = vmatprep.subr.mxu0 0.0
    %3611 = vmatpush1.msra.mxu0 0.0
    %3612 = vmatprep.subr.mxu0 0.0
    %3613 = vmatpush1.msra.mxu0 0.0
    %3614 = vmatprep.subr.mxu0 0.0
    %3615 = vmatpush1.msra.mxu0 0.0
    %3616 = vmatprep.subr.mxu0 0.0
    %3617 = vmatpush1.msra.mxu0 0.0
    %3618 = vmatprep.subr.mxu0 0.0
    %3619 = vmatpush1.msra.mxu0 0.0
    %3620 = vmatprep.subr.mxu0 0.0
    %3621 = vmatpush1.msra.mxu0 0.0
    %3622 = vmatprep.subr.mxu0 0.0
    %3623 = vmatpush1.msra.mxu0 0.0
    %3624 = vmatprep.subr.mxu0 0.0
    %3625 = vmatpush1.msra.mxu0 0.0
    %3626 = vmatprep.subr.mxu0 0.0
    %3627 = vmatpush1.msra.mxu0 0.0
    %3628 = vmatprep.subr.mxu0 0.0
    %3629 = vmatpush1.msra.mxu0 0.0
    %3630 = vmatprep.subr.mxu0 0.0
    %3631 = vmatpush1.msra.mxu0 0.0
    %3632 = vmatprep.subr.mxu0 0.0
    %3633 = vmatpush1.msra.mxu0 0.0
    %3634 = vmatprep.subr.mxu0 0.0
    %3635 = vmatpush1.msra.mxu0 0.0
    %3636 = vmatprep.subr.mxu0 0.0
    %3637 = vmatpush1.msra.mxu0 0.0
    %3638 = vmatprep.subr.mxu0 0.0
    %3639 = vmatpush1.msra.mxu0 0.0
    %3640 = vmatprep.mubr.f32.mxu0 0.0
    %3641 = vmatmul.mubr.f32.gmra.mrb[0].mxu0 %v1709
    %v3642 = vpop.f32.mrb[0].mxu0
    %v3643 = vadd.f32 %v3566, %v3642
    %v3644 = vpop.f32.mrb[0].mxu0
    %v3645 = vadd.f32 %v3568, %v3644
    %3646 = vmatprep.mubr.f32.mxu0 0.0
    %3647 = vmatmul.mubr.f32.gmra.mrb[0].mxu0 %v1712
    %v3648 = vpop.f32.mrb[0].mxu0
    %v3649 = vadd.f32 %v3572, %v3648
    %v3650 = vpop.f32.mrb[0].mxu0
    %v3651 = vadd.f32 %v3574, %v3650
    %3652 = vdwg.mxu0
    %3653 = vmatprep.subr.mxu0 %v493
    %3654 = vmatpush1.msra.mxu0 %v492
    %3655 = vmatprep.subr.mxu0 %v501
    %3656 = vmatpush1.msra.mxu0 %v500
    %3657 = vmatprep.subr.mxu0 %v509
    %3658 = vmatpush1.msra.mxu0 %v508
    %3659 = vmatprep.subr.mxu0 %v517
    %3660 = vmatpush1.msra.mxu0 %v516
    %3661 = vmatprep.subr.mxu0 %v525
    %3662 = vmatpush1.msra.mxu0 %v524
    %3663 = vmatprep.subr.mxu0 %v533
    %3664 = vmatpush1.msra.mxu0 %v532
    %3665 = vmatprep.subr.mxu0 %v541
    %3666 = vmatpush1.msra.mxu0 %v540
    %3667 = vmatprep.subr.mxu0 %v549
    %3668 = vmatpush1.msra.mxu0 %v548
    %3669 = vmatprep.subr.mxu0 %v557
    %3670 = vmatpush1.msra.mxu0 %v556
    %3671 = vmatprep.subr.mxu0 %v565
    %3672 = vmatpush1.msra.mxu0 %v564
    %3673 = vmatprep.subr.mxu0 %v573
    %3674 = vmatpush1.msra.mxu0 %v572
    %3675 = vmatprep.subr.mxu0 %v581
    %3676 = vmatpush1.msra.mxu0 %v580
    %3677 = vmatprep.subr.mxu0 %v589
    %3678 = vmatpush1.msra.mxu0 %v588
    %3679 = vmatprep.subr.mxu0 %v597
    %3680 = vmatpush1.msra.mxu0 %v596
    %3681 = vmatprep.subr.mxu0 %v605
    %3682 = vmatpush1.msra.mxu0 %v604
    %3683 = vmatprep.subr.mxu0 %v613
    %3684 = vmatpush1.msra.mxu0 %v612
    %3685 = vmatprep.subr.mxu0 %v621
    %3686 = vmatpush1.msra.mxu0 %v620
    %3687 = vmatprep.subr.mxu0 %v629
    %3688 = vmatpush1.msra.mxu0 %v628
    %3689 = vmatprep.subr.mxu0 %v637
    %3690 = vmatpush1.msra.mxu0 %v636
    %3691 = vmatprep.subr.mxu0 %v645
    %3692 = vmatpush1.msra.mxu0 %v644
    %3693 = vmatprep.subr.mxu0 %v653
    %3694 = vmatpush1.msra.mxu0 %v652
    %3695 = vmatprep.subr.mxu0 %v661
    %3696 = vmatpush1.msra.mxu0 %v660
    %3697 = vmatprep.subr.mxu0 %v669
    %3698 = vmatpush1.msra.mxu0 %v668
    %3699 = vmatprep.subr.mxu0 %v677
    %3700 = vmatpush1.msra.mxu0 %v676
    %3701 = vmatprep.subr.mxu0 %v685
    %3702 = vmatpush1.msra.mxu0 %v684
    %3703 = vmatprep.subr.mxu0 %v693
    %3704 = vmatpush1.msra.mxu0 %v692
    %3705 = vmatprep.subr.mxu0 %v701
    %3706 = vmatpush1.msra.mxu0 %v700
    %3707 = vmatprep.subr.mxu0 %v709
    %3708 = vmatpush1.msra.mxu0 %v708
    %3709 = vmatprep.subr.mxu0 %v717
    %3710 = vmatpush1.msra.mxu0 %v716
    %3711 = vmatprep.subr.mxu0 %v725
    %3712 = vmatpush1.msra.mxu0 %v724
    %3713 = vmatprep.subr.mxu0 %v733
    %3714 = vmatpush1.msra.mxu0 %v732
    %3715 = vmatprep.subr.mxu0 %v741
    %3716 = vmatpush1.msra.mxu0 %v740
    %3717 = vmatprep.mubr.f32.mxu0 %v1671
    %3718 = vmatmul.mubr.f32.gmra.mrb[0].mxu0 %v1670
    %v3719 = vpop.f32.mrb[0].mxu0
    %v3720 = vadd.f32 %v3178, %v3719
    %v3721 = vpop.f32.mrb[0].mxu0
    %v3722 = vadd.f32 %v3182, %v3721
    %3723 = vmatprep.mubr.f32.mxu0 %v1674
    %3724 = vmatmul.mubr.f32.gmra.mrb[0].mxu0 %v1673
    %v3725 = vpop.f32.mrb[0].mxu0
    %v3726 = vadd.f32 %v3178, %v3725
    %v3727 = vpop.f32.mrb[0].mxu0
    %v3728 = vadd.f32 %v3182, %v3727
    %3729 = vdwg.mxu0
    %3730 = vmatprep.subr.mxu0 %v749
    %3731 = vmatpush1.msra.mxu0 %v748
    %3732 = vmatprep.subr.mxu0 %v757
    %3733 = vmatpush1.msra.mxu0 %v756
    %3734 = vmatprep.subr.mxu0 %v765
    %3735 = vmatpush1.msra.mxu0 %v764
    %3736 = vmatprep.subr.mxu0 %v773
    %3737 = vmatpush1.msra.mxu0 %v772
    %3738 = vmatprep.subr.mxu0 0.0
    %3739 = vmatpush1.msra.mxu0 0.0
    %3740 = vmatprep.subr.mxu0 0.0
    %3741 = vmatpush1.msra.mxu0 0.0
    %3742 = vmatprep.subr.mxu0 0.0
    %3743 = vmatpush1.msra.mxu0 0.0
    %3744 = vmatprep.subr.mxu0 0.0
    %3745 = vmatpush1.msra.mxu0 0.0
    %3746 = vmatprep.subr.mxu0 0.0
    %3747 = vmatpush1.msra.mxu0 0.0
    %3748 = vmatprep.subr.mxu0 0.0
    %3749 = vmatpush1.msra.mxu0 0.0
    %3750 = vmatprep.subr.mxu0 0.0
    %3751 = vmatpush1.msra.mxu0 0.0
    %3752 = vmatprep.subr.mxu0 0.0
    %3753 = vmatpush1.msra.mxu0 0.0
    %3754 = vmatprep.subr.mxu0 0.0
    %3755 = vmatpush1.msra.mxu0 0.0
    %3756 = vmatprep.subr.mxu0 0.0
    %3757 = vmatpush1.msra.mxu0 0.0
    %3758 = vmatprep.subr.mxu0 0.0
    %3759 = vmatpush1.msra.mxu0 0.0
    %3760 = vmatprep.subr.mxu0 0.0
    %3761 = vmatpush1.msra.mxu0 0.0
    %3762 = vmatprep.subr.mxu0 0.0
    %3763 = vmatpush1.msra.mxu0 0.0
    %3764 = vmatprep.subr.mxu0 0.0
    %3765 = vmatpush1.msra.mxu0 0.0
    %3766 = vmatprep.subr.mxu0 0.0
    %3767 = vmatpush1.msra.mxu0 0.0
    %3768 = vmatprep.subr.mxu0 0.0
    %3769 = vmatpush1.msra.mxu0 0.0
    %3770 = vmatprep.subr.mxu0 0.0
    %3771 = vmatpush1.msra.mxu0 0.0
    %3772 = vmatprep.subr.mxu0 0.0
    %3773 = vmatpush1.msra.mxu0 0.0
    %3774 = vmatprep.subr.mxu0 0.0
    %3775 = vmatpush1.msra.mxu0 0.0
    %3776 = vmatprep.subr.mxu0 0.0
    %3777 = vmatpush1.msra.mxu0 0.0
    %3778 = vmatprep.subr.mxu0 0.0
    %3779 = vmatpush1.msra.mxu0 0.0
    %3780 = vmatprep.subr.mxu0 0.0
    %3781 = vmatpush1.msra.mxu0 0.0
    %3782 = vmatprep.subr.mxu0 0.0
    %3783 = vmatpush1.msra.mxu0 0.0
    %3784 = vmatprep.subr.mxu0 0.0
    %3785 = vmatpush1.msra.mxu0 0.0
    %3786 = vmatprep.subr.mxu0 0.0
    %3787 = vmatpush1.msra.mxu0 0.0
    %3788 = vmatprep.subr.mxu0 0.0
    %3789 = vmatpush1.msra.mxu0 0.0
    %3790 = vmatprep.subr.mxu0 0.0
    %3791 = vmatpush1.msra.mxu0 0.0
    %3792 = vmatprep.subr.mxu0 0.0
    %3793 = vmatpush1.msra.mxu0 0.0
    %3794 = vmatprep.mubr.f32.mxu0 0.0
    %3795 = vmatmul.mubr.f32.gmra.mrb[0].mxu0 %v1709
    %v3796 = vpop.f32.mrb[0].mxu0
    %v3797 = vadd.f32 %v3720, %v3796
    %v3798 = vpop.f32.mrb[0].mxu0
    %v3799 = vadd.f32 %v3722, %v3798
    %3800 = vmatprep.mubr.f32.mxu0 0.0
    %3801 = vmatmul.mubr.f32.gmra.mrb[0].mxu0 %v1712
    %v3802 = vpop.f32.mrb[0].mxu0
    %v3803 = vadd.f32 %v3726, %v3802
    %v3804 = vpop.f32.mrb[0].mxu0
    %v3805 = vadd.f32 %v3728, %v3804
    %3806 = vdwg.mxu0
    %3807 = vmatprep.subr.mxu0 %v1180
    %3808 = vmatpush1.msra.mxu0 %v1179
    %3809 = vmatprep.subr.mxu0 %v1188
    %3810 = vmatpush1.msra.mxu0 %v1187
    %3811 = vmatprep.subr.mxu0 %v1196
    %3812 = vmatpush1.msra.mxu0 %v1195
    %3813 = vmatprep.subr.mxu0 %v1204
    %3814 = vmatpush1.msra.mxu0 %v1203
    %3815 = vmatprep.subr.mxu0 %v1212
    %3816 = vmatpush1.msra.mxu0 %v1211
    %3817 = vmatprep.subr.mxu0 %v1220
    %3818 = vmatpush1.msra.mxu0 %v1219
    %3819 = vmatprep.subr.mxu0 %v1228
    %3820 = vmatpush1.msra.mxu0 %v1227
    %3821 = vmatprep.subr.mxu0 %v1236
    %3822 = vmatpush1.msra.mxu0 %v1235
    %3823 = vmatprep.subr.mxu0 %v1244
    %3824 = vmatpush1.msra.mxu0 %v1243
    %3825 = vmatprep.subr.mxu0 %v1252
    %3826 = vmatpush1.msra.mxu0 %v1251
    %3827 = vmatprep.subr.mxu0 %v1260
    %3828 = vmatpush1.msra.mxu0 %v1259
    %3829 = vmatprep.subr.mxu0 %v1268
    %3830 = vmatpush1.msra.mxu0 %v1267
    %3831 = vmatprep.subr.mxu0 %v1276
    %3832 = vmatpush1.msra.mxu0 %v1275
    %3833 = vmatprep.subr.mxu0 %v1284
    %3834 = vmatpush1.msra.mxu0 %v1283
    %3835 = vmatprep.subr.mxu0 %v1292
    %3836 = vmatpush1.msra.mxu0 %v1291
    %3837 = vmatprep.subr.mxu0 %v1300
    %3838 = vmatpush1.msra.mxu0 %v1299
    %3839 = vmatprep.subr.mxu0 0.0
    %3840 = vmatpush1.msra.mxu0 0.0
    %3841 = vmatprep.subr.mxu0 0.0
    %3842 = vmatpush1.msra.mxu0 0.0
    %3843 = vmatprep.subr.mxu0 0.0
    %3844 = vmatpush1.msra.mxu0 0.0
    %3845 = vmatprep.subr.mxu0 0.0
    %3846 = vmatpush1.msra.mxu0 0.0
    %3847 = vmatprep.subr.mxu0 0.0
    %3848 = vmatpush1.msra.mxu0 0.0
    %3849 = vmatprep.subr.mxu0 0.0
    %3850 = vmatpush1.msra.mxu0 0.0
    %3851 = vmatprep.subr.mxu0 0.0
    %3852 = vmatpush1.msra.mxu0 0.0
    %3853 = vmatprep.subr.mxu0 0.0
    %3854 = vmatpush1.msra.mxu0 0.0
    %3855 = vmatprep.subr.mxu0 0.0
    %3856 = vmatpush1.msra.mxu0 0.0
    %3857 = vmatprep.subr.mxu0 0.0
    %3858 = vmatpush1.msra.mxu0 0.0
    %3859 = vmatprep.subr.mxu0 0.0
    %3860 = vmatpush1.msra.mxu0 0.0
    %3861 = vmatprep.subr.mxu0 0.0
    %3862 = vmatpush1.msra.mxu0 0.0
    %3863 = vmatprep.subr.mxu0 0.0
    %3864 = vmatpush1.msra.mxu0 0.0
    %3865 = vmatprep.subr.mxu0 0.0
    %3866 = vmatpush1.msra.mxu0 0.0
    %3867 = vmatprep.subr.mxu0 0.0
    %3868 = vmatpush1.msra.mxu0 0.0
    %3869 = vmatprep.subr.mxu0 0.0
    %3870 = vmatpush1.msra.mxu0 0.0
    %3871 = vmatprep.mubr.f32.mxu0 0.0
    %3872 = vmatmul.mubr.f32.gmra.mrb[0].mxu0 %v3148
    %v3873 = vpop.f32.mrb[0].mxu0
    %v3874 = vadd.f32 0.0, %v3873
    %v3875 = vpop.f32.mrb[0].mxu0
    %v3876 = vadd.f32 0.0, %v3875
    %3877 = vmatprep.mubr.f32.mxu0 0.0
    %3878 = vmatmul.mubr.f32.gmra.mrb[0].mxu0 %v3149
    %v3879 = vpop.f32.mrb[0].mxu0
    %v3880 = vadd.f32 0.0, %v3879
    %v3881 = vpop.f32.mrb[0].mxu0
    %v3882 = vadd.f32 0.0, %v3881
    %3883 = vdwg.mxu0
    %3884 = vmatprep.subr.mxu0 %v1182
    %3885 = vmatpush1.msra.mxu0 %v1181
    %3886 = vmatprep.subr.mxu0 %v1190
    %3887 = vmatpush1.msra.mxu0 %v1189
    %3888 = vmatprep.subr.mxu0 %v1198
    %3889 = vmatpush1.msra.mxu0 %v1197
    %3890 = vmatprep.subr.mxu0 %v1206
    %3891 = vmatpush1.msra.mxu0 %v1205
    %3892 = vmatprep.subr.mxu0 %v1214
    %3893 = vmatpush1.msra.mxu0 %v1213
    %3894 = vmatprep.subr.mxu0 %v1222
    %3895 = vmatpush1.msra.mxu0 %v1221
    %3896 = vmatprep.subr.mxu0 %v1230
    %3897 = vmatpush1.msra.mxu0 %v1229
    %3898 = vmatprep.subr.mxu0 %v1238
    %3899 = vmatpush1.msra.mxu0 %v1237
    %3900 = vmatprep.subr.mxu0 %v1246
    %3901 = vmatpush1.msra.mxu0 %v1245
    %3902 = vmatprep.subr.mxu0 %v1254
    %3903 = vmatpush1.msra.mxu0 %v1253
    %3904 = vmatprep.subr.mxu0 %v1262
    %3905 = vmatpush1.msra.mxu0 %v1261
    %3906 = vmatprep.subr.mxu0 %v1270
    %3907 = vmatpush1.msra.mxu0 %v1269
    %3908 = vmatprep.subr.mxu0 %v1278
    %3909 = vmatpush1.msra.mxu0 %v1277
    %3910 = vmatprep.subr.mxu0 %v1286
    %3911 = vmatpush1.msra.mxu0 %v1285
    %3912 = vmatprep.subr.mxu0 %v1294
    %3913 = vmatpush1.msra.mxu0 %v1293
    %3914 = vmatprep.subr.mxu0 %v1302
    %3915 = vmatpush1.msra.mxu0 %v1301
    %3916 = vmatprep.subr.mxu0 0.0
    %3917 = vmatpush1.msra.mxu0 0.0
    %3918 = vmatprep.subr.mxu0 0.0
    %3919 = vmatpush1.msra.mxu0 0.0
    %3920 = vmatprep.subr.mxu0 0.0
    %3921 = vmatpush1.msra.mxu0 0.0
    %3922 = vmatprep.subr.mxu0 0.0
    %3923 = vmatpush1.msra.mxu0 0.0
    %3924 = vmatprep.subr.mxu0 0.0
    %3925 = vmatpush1.msra.mxu0 0.0
    %3926 = vmatprep.subr.mxu0 0.0
    %3927 = vmatpush1.msra.mxu0 0.0
    %3928 = vmatprep.subr.mxu0 0.0
    %3929 = vmatpush1.msra.mxu0 0.0
    %3930 = vmatprep.subr.mxu0 0.0
    %3931 = vmatpush1.msra.mxu0 0.0
    %3932 = vmatprep.subr.mxu0 0.0
    %3933 = vmatpush1.msra.mxu0 0.0
    %3934 = vmatprep.subr.mxu0 0.0
    %3935 = vmatpush1.msra.mxu0 0.0
    %3936 = vmatprep.subr.mxu0 0.0
    %3937 = vmatpush1.msra.mxu0 0.0
    %3938 = vmatprep.subr.mxu0 0.0
    %3939 = vmatpush1.msra.mxu0 0.0
    %3940 = vmatprep.subr.mxu0 0.0
    %3941 = vmatpush1.msra.mxu0 0.0
    %3942 = vmatprep.subr.mxu0 0.0
    %3943 = vmatpush1.msra.mxu0 0.0
    %3944 = vmatprep.subr.mxu0 0.0
    %3945 = vmatpush1.msra.mxu0 0.0
    %3946 = vmatprep.subr.mxu0 0.0
    %3947 = vmatpush1.msra.mxu0 0.0
    %3948 = vmatprep.mubr.f32.mxu0 0.0
    %3949 = vmatmul.mubr.f32.gmra.mrb[0].mxu0 %v3148
    %v3950 = vpop.f32.mrb[0].mxu0
    %v3951 = vadd.f32 0.0, %v3950
    %v3952 = vpop.f32.mrb[0].mxu0
    %v3953 = vadd.f32 0.0, %v3952
    %3954 = vmatprep.mubr.f32.mxu0 0.0
    %3955 = vmatmul.mubr.f32.gmra.mrb[0].mxu0 %v3149
    %v3956 = vpop.f32.mrb[0].mxu0
    %v3957 = vadd.f32 0.0, %v3956
    %v3958 = vpop.f32.mrb[0].mxu0
    %v3959 = vadd.f32 0.0, %v3958
    %3960 = vdwg.mxu0
    %3961 = vmatprep.subr.mxu0 %v1184
    %3962 = vmatpush1.msra.mxu0 %v1183
    %3963 = vmatprep.subr.mxu0 %v1192
    %3964 = vmatpush1.msra.mxu0 %v1191
    %3965 = vmatprep.subr.mxu0 %v1200
    %3966 = vmatpush1.msra.mxu0 %v1199
    %3967 = vmatprep.subr.mxu0 %v1208
    %3968 = vmatpush1.msra.mxu0 %v1207
    %3969 = vmatprep.subr.mxu0 %v1216
    %3970 = vmatpush1.msra.mxu0 %v1215
    %3971 = vmatprep.subr.mxu0 %v1224
    %3972 = vmatpush1.msra.mxu0 %v1223
    %3973 = vmatprep.subr.mxu0 %v1232
    %3974 = vmatpush1.msra.mxu0 %v1231
    %3975 = vmatprep.subr.mxu0 %v1240
    %3976 = vmatpush1.msra.mxu0 %v1239
    %3977 = vmatprep.subr.mxu0 %v1248
    %3978 = vmatpush1.msra.mxu0 %v1247
    %3979 = vmatprep.subr.mxu0 %v1256
    %3980 = vmatpush1.msra.mxu0 %v1255
    %3981 = vmatprep.subr.mxu0 %v1264
    %3982 = vmatpush1.msra.mxu0 %v1263
    %3983 = vmatprep.subr.mxu0 %v1272
    %3984 = vmatpush1.msra.mxu0 %v1271
    %3985 = vmatprep.subr.mxu0 %v1280
    %3986 = vmatpush1.msra.mxu0 %v1279
    %3987 = vmatprep.subr.mxu0 %v1288
    %3988 = vmatpush1.msra.mxu0 %v1287
    %3989 = vmatprep.subr.mxu0 %v1296
    %3990 = vmatpush1.msra.mxu0 %v1295
    %3991 = vmatprep.subr.mxu0 %v1304
    %3992 = vmatpush1.msra.mxu0 %v1303
    %3993 = vmatprep.subr.mxu0 0.0
    %3994 = vmatpush1.msra.mxu0 0.0
    %3995 = vmatprep.subr.mxu0 0.0
    %3996 = vmatpush1.msra.mxu0 0.0
    %3997 = vmatprep.subr.mxu0 0.0
    %3998 = vmatpush1.msra.mxu0 0.0
    %3999 = vmatprep.subr.mxu0 0.0
    %4000 = vmatpush1.msra.mxu0 0.0
    %4001 = vmatprep.subr.mxu0 0.0
    %4002 = vmatpush1.msra.mxu0 0.0
    %4003 = vmatprep.subr.mxu0 0.0
    %4004 = vmatpush1.msra.mxu0 0.0
    %4005 = vmatprep.subr.mxu0 0.0
    %4006 = vmatpush1.msra.mxu0 0.0
    %4007 = vmatprep.subr.mxu0 0.0
    %4008 = vmatpush1.msra.mxu0 0.0
    %4009 = vmatprep.subr.mxu0 0.0
    %4010 = vmatpush1.msra.mxu0 0.0
    %4011 = vmatprep.subr.mxu0 0.0
    %4012 = vmatpush1.msra.mxu0 0.0
    %4013 = vmatprep.subr.mxu0 0.0
    %4014 = vmatpush1.msra.mxu0 0.0
    %4015 = vmatprep.subr.mxu0 0.0
    %4016 = vmatpush1.msra.mxu0 0.0
    %4017 = vmatprep.subr.mxu0 0.0
    %4018 = vmatpush1.msra.mxu0 0.0
    %4019 = vmatprep.subr.mxu0 0.0
    %4020 = vmatpush1.msra.mxu0 0.0
    %4021 = vmatprep.subr.mxu0 0.0
    %4022 = vmatpush1.msra.mxu0 0.0
    %4023 = vmatprep.subr.mxu0 0.0
    %4024 = vmatpush1.msra.mxu0 0.0
    %4025 = vmatprep.mubr.f32.mxu0 0.0
    %4026 = vmatmul.mubr.f32.gmra.mrb[0].mxu0 %v3148
    %v4027 = vpop.f32.mrb[0].mxu0
    %v4028 = vadd.f32 0.0, %v4027
    %v4029 = vpop.f32.mrb[0].mxu0
    %v4030 = vadd.f32 0.0, %v4029
    %4031 = vmatprep.mubr.f32.mxu0 0.0
    %4032 = vmatmul.mubr.f32.gmra.mrb[0].mxu0 %v3149
    %v4033 = vpop.f32.mrb[0].mxu0
    %v4034 = vadd.f32 0.0, %v4033
    %v4035 = vpop.f32.mrb[0].mxu0
    %v4036 = vadd.f32 0.0, %v4035
    %4037 = vdwg.mxu0
    %4038 = vmatprep.subr.mxu0 %v1186
    %4039 = vmatpush1.msra.mxu0 %v1185
    %4040 = vmatprep.subr.mxu0 %v1194
    %4041 = vmatpush1.msra.mxu0 %v1193
    %4042 = vmatprep.subr.mxu0 %v1202
    %4043 = vmatpush1.msra.mxu0 %v1201
    %4044 = vmatprep.subr.mxu0 %v1210
    %4045 = vmatpush1.msra.mxu0 %v1209
    %4046 = vmatprep.subr.mxu0 %v1218
    %4047 = vmatpush1.msra.mxu0 %v1217
    %4048 = vmatprep.subr.mxu0 %v1226
    %4049 = vmatpush1.msra.mxu0 %v1225
    %4050 = vmatprep.subr.mxu0 %v1234
    %4051 = vmatpush1.msra.mxu0 %v1233
    %4052 = vmatprep.subr.mxu0 %v1242
    %4053 = vmatpush1.msra.mxu0 %v1241
    %4054 = vmatprep.subr.mxu0 %v1250
    %4055 = vmatpush1.msra.mxu0 %v1249
    %4056 = vmatprep.subr.mxu0 %v1258
    %4057 = vmatpush1.msra.mxu0 %v1257
    %4058 = vmatprep.subr.mxu0 %v1266
    %4059 = vmatpush1.msra.mxu0 %v1265
    %4060 = vmatprep.subr.mxu0 %v1274
    %4061 = vmatpush1.msra.mxu0 %v1273
    %4062 = vmatprep.subr.mxu0 %v1282
    %4063 = vmatpush1.msra.mxu0 %v1281
    %4064 = vmatprep.subr.mxu0 %v1290
    %4065 = vmatpush1.msra.mxu0 %v1289
    %4066 = vmatprep.subr.mxu0 %v1298
    %4067 = vmatpush1.msra.mxu0 %v1297
    %4068 = vmatprep.subr.mxu0 %v1306
    %4069 = vmatpush1.msra.mxu0 %v1305
    %4070 = vmatprep.subr.mxu0 0.0
    %4071 = vmatpush1.msra.mxu0 0.0
    %4072 = vmatprep.subr.mxu0 0.0
    %4073 = vmatpush1.msra.mxu0 0.0
    %4074 = vmatprep.subr.mxu0 0.0
    %4075 = vmatpush1.msra.mxu0 0.0
    %4076 = vmatprep.subr.mxu0 0.0
    %4077 = vmatpush1.msra.mxu0 0.0
    %4078 = vmatprep.subr.mxu0 0.0
    %4079 = vmatpush1.msra.mxu0 0.0
    %4080 = vmatprep.subr.mxu0 0.0
    %4081 = vmatpush1.msra.mxu0 0.0
    %4082 = vmatprep.subr.mxu0 0.0
    %4083 = vmatpush1.msra.mxu0 0.0
    %4084 = vmatprep.subr.mxu0 0.0
    %4085 = vmatpush1.msra.mxu0 0.0
    %4086 = vmatprep.subr.mxu0 0.0
    %4087 = vmatpush1.msra.mxu0 0.0
    %4088 = vmatprep.subr.mxu0 0.0
    %4089 = vmatpush1.msra.mxu0 0.0
    %4090 = vmatprep.subr.mxu0 0.0
    %4091 = vmatpush1.msra.mxu0 0.0
    %4092 = vmatprep.subr.mxu0 0.0
    %4093 = vmatpush1.msra.mxu0 0.0
    %4094 = vmatprep.subr.mxu0 0.0
    %4095 = vmatpush1.msra.mxu0 0.0
    %4096 = vmatprep.subr.mxu0 0.0
    %4097 = vmatpush1.msra.mxu0 0.0
    %4098 = vmatprep.subr.mxu0 0.0
    %4099 = vmatpush1.msra.mxu0 0.0
    %4100 = vmatprep.subr.mxu0 0.0
    %4101 = vmatpush1.msra.mxu0 0.0
    %4102 = vmatprep.mubr.f32.mxu0 0.0
    %4103 = vmatmul.mubr.f32.gmra.mrb[0].mxu0 %v3148
    %v4104 = vpop.f32.mrb[0].mxu0
    %v4105 = vadd.f32 0.0, %v4104
    %v4106 = vpop.f32.mrb[0].mxu0
    %v4107 = vadd.f32 0.0, %v4106
    %4108 = vmatprep.mubr.f32.mxu0 0.0
    %4109 = vmatmul.mubr.f32.gmra.mrb[0].mxu0 %v3149
    %v4110 = vpop.f32.mrb[0].mxu0
    %v4111 = vadd.f32 0.0, %v4110
    %v4112 = vpop.f32.mrb[0].mxu0
    %v4113 = vadd.f32 0.0, %v4112
    %4114 = vdwg.mxu0
    %v4115 = vmul.f32 %v3874, %v3335
    %v4116 = vmul.f32 %v3876, %v3337
    %v4117 = vmul.f32 %v3951, %v3489
    %v4118 = vmul.f32 %v3953, %v3491
    %v4119 = vmul.f32 %v4028, %v3643
    %v4120 = vmul.f32 %v4030, %v3645
    %v4121 = vmul.f32 %v4105, %v3797
    %v4122 = vmul.f32 %v4107, %v3799
    %v4123 = vmul.f32 %v3880, %v3341
    %v4124 = vmul.f32 %v3882, %v3343
    %v4125 = vmul.f32 %v3957, %v3495
    %v4126 = vmul.f32 %v3959, %v3497
    %v4127 = vmul.f32 %v4034, %v3649
    %v4128 = vmul.f32 %v4036, %v3651
    %v4129 = vmul.f32 %v4111, %v3803
    %v4130 = vmul.f32 %v4113, %v3805
    %4131 = vmatprep.subr.mxu0 0.0
    %4132 = vmatpush1.msra.mxu0 %v1307
    %4133 = vmatprep.subr.mxu0 0.0
    %4134 = vmatpush1.msra.mxu0 %v1308
    %4135 = vmatprep.subr.mxu0 0.0
    %4136 = vmatpush1.msra.mxu0 %v1309
    %4137 = vmatprep.subr.mxu0 0.0
    %4138 = vmatpush1.msra.mxu0 %v1310
    %4139 = vmatprep.subr.mxu0 0.0
    %4140 = vmatpush1.msra.mxu0 %v1311
    %4141 = vmatprep.subr.mxu0 0.0
    %4142 = vmatpush1.msra.mxu0 %v1312
    %4143 = vmatprep.subr.mxu0 0.0
    %4144 = vmatpush1.msra.mxu0 %v1313
    %4145 = vmatprep.subr.mxu0 0.0
    %4146 = vmatpush1.msra.mxu0 %v1314
    %4147 = vmatprep.subr.mxu0 0.0
    %4148 = vmatpush1.msra.mxu0 %v1315
    %4149 = vmatprep.subr.mxu0 0.0
    %4150 = vmatpush1.msra.mxu0 %v1316
    %4151 = vmatprep.subr.mxu0 0.0
    %4152 = vmatpush1.msra.mxu0 %v1317
    %4153 = vmatprep.subr.mxu0 0.0
    %4154 = vmatpush1.msra.mxu0 %v1318
    %4155 = vmatprep.subr.mxu0 0.0
    %4156 = vmatpush1.msra.mxu0 %v1319
    %4157 = vmatprep.subr.mxu0 0.0
    %4158 = vmatpush1.msra.mxu0 %v1320
    %4159 = vmatprep.subr.mxu0 0.0
    %4160 = vmatpush1.msra.mxu0 %v1321
    %4161 = vmatprep.subr.mxu0 0.0
    %4162 = vmatpush1.msra.mxu0 %v1322
    %4163 = vmatprep.subr.mxu0 0.0
    %4164 = vmatpush1.msra.mxu0 %v1323
    %4165 = vmatprep.subr.mxu0 0.0
    %4166 = vmatpush1.msra.mxu0 %v1324
    %4167 = vmatprep.subr.mxu0 0.0
    %4168 = vmatpush1.msra.mxu0 %v1325
    %4169 = vmatprep.subr.mxu0 0.0
    %4170 = vmatpush1.msra.mxu0 %v1326
    %4171 = vmatprep.subr.mxu0 0.0
    %4172 = vmatpush1.msra.mxu0 %v1327
    %4173 = vmatprep.subr.mxu0 0.0
    %4174 = vmatpush1.msra.mxu0 %v1328
    %4175 = vmatprep.subr.mxu0 0.0
    %4176 = vmatpush1.msra.mxu0 %v1329
    %4177 = vmatprep.subr.mxu0 0.0
    %4178 = vmatpush1.msra.mxu0 %v1330
    %4179 = vmatprep.subr.mxu0 0.0
    %4180 = vmatpush1.msra.mxu0 %v1331
    %4181 = vmatprep.subr.mxu0 0.0
    %4182 = vmatpush1.msra.mxu0 %v1332
    %4183 = vmatprep.subr.mxu0 0.0
    %4184 = vmatpush1.msra.mxu0 %v1333
    %4185 = vmatprep.subr.mxu0 0.0
    %4186 = vmatpush1.msra.mxu0 %v1334
    %4187 = vmatprep.subr.mxu0 0.0
    %4188 = vmatpush1.msra.mxu0 %v1335
    %4189 = vmatprep.subr.mxu0 0.0
    %4190 = vmatpush1.msra.mxu0 %v1336
    %4191 = vmatprep.subr.mxu0 0.0
    %4192 = vmatpush1.msra.mxu0 %v1337
    %4193 = vmatprep.subr.mxu0 0.0
    %4194 = vmatpush1.msra.mxu0 %v1338
    %4195 = vmatprep.mubr.f32.mxu0 %v4116
    %4196 = vmatmul.mubr.f32.gmra.mrb[0].mxu0 %v4115
    %v4197 = vpop.f32.mrb[0].mxu0
    %v4198 = vadd.f32 0.0, %v4197
    %v4199 = vpop.f32.mrb[0].mxu0
    %4200 = vmatprep.mubr.f32.mxu0 %v4124
    %4201 = vmatmul.mubr.f32.gmra.mrb[0].mxu0 %v4123
    %v4202 = vpop.f32.mrb[0].mxu0
    %v4203 = vadd.f32 0.0, %v4202
    %v4204 = vpop.f32.mrb[0].mxu0
    %4205 = vdwg.mxu0
    %4206 = vmatprep.subr.mxu0 0.0
    %4207 = vmatpush1.msra.mxu0 %v1339
    %4208 = vmatprep.subr.mxu0 0.0
    %4209 = vmatpush1.msra.mxu0 %v1340
    %4210 = vmatprep.subr.mxu0 0.0
    %4211 = vmatpush1.msra.mxu0 %v1341
    %4212 = vmatprep.subr.mxu0 0.0
    %4213 = vmatpush1.msra.mxu0 %v1342
    %4214 = vmatprep.subr.mxu0 0.0
    %4215 = vmatpush1.msra.mxu0 %v1343
    %4216 = vmatprep.subr.mxu0 0.0
    %4217 = vmatpush1.msra.mxu0 %v1344
    %4218 = vmatprep.subr.mxu0 0.0
    %4219 = vmatpush1.msra.mxu0 %v1345
    %4220 = vmatprep.subr.mxu0 0.0
    %4221 = vmatpush1.msra.mxu0 %v1346
    %4222 = vmatprep.subr.mxu0 0.0
    %4223 = vmatpush1.msra.mxu0 %v1347
    %4224 = vmatprep.subr.mxu0 0.0
    %4225 = vmatpush1.msra.mxu0 %v1348
    %4226 = vmatprep.subr.mxu0 0.0
    %4227 = vmatpush1.msra.mxu0 %v1349
    %4228 = vmatprep.subr.mxu0 0.0
    %4229 = vmatpush1.msra.mxu0 %v1350
    %4230 = vmatprep.subr.mxu0 0.0
    %4231 = vmatpush1.msra.mxu0 %v1351
    %4232 = vmatprep.subr.mxu0 0.0
    %4233 = vmatpush1.msra.mxu0 %v1352
    %4234 = vmatprep.subr.mxu0 0.0
    %4235 = vmatpush1.msra.mxu0 %v1353
    %4236 = vmatprep.subr.mxu0 0.0
    %4237 = vmatpush1.msra.mxu0 %v1354
    %4238 = vmatprep.subr.mxu0 0.0
    %4239 = vmatpush1.msra.mxu0 %v1355
    %4240 = vmatprep.subr.mxu0 0.0
    %4241 = vmatpush1.msra.mxu0 %v1356
    %4242 = vmatprep.subr.mxu0 0.0
    %4243 = vmatpush1.msra.mxu0 %v1357
    %4244 = vmatprep.subr.mxu0 0.0
    %4245 = vmatpush1.msra.mxu0 %v1358
    %4246 = vmatprep.subr.mxu0 0.0
    %4247 = vmatpush1.msra.mxu0 %v1359
    %4248 = vmatprep.subr.mxu0 0.0
    %4249 = vmatpush1.msra.mxu0 %v1360
    %4250 = vmatprep.subr.mxu0 0.0
    %4251 = vmatpush1.msra.mxu0 %v1361
    %4252 = vmatprep.subr.mxu0 0.0
    %4253 = vmatpush1.msra.mxu0 %v1362
    %4254 = vmatprep.subr.mxu0 0.0
    %4255 = vmatpush1.msra.mxu0 %v1363
    %4256 = vmatprep.subr.mxu0 0.0
    %4257 = vmatpush1.msra.mxu0 %v1364
    %4258 = vmatprep.subr.mxu0 0.0
    %4259 = vmatpush1.msra.mxu0 %v1365
    %4260 = vmatprep.subr.mxu0 0.0
    %4261 = vmatpush1.msra.mxu0 %v1366
    %4262 = vmatprep.subr.mxu0 0.0
    %4263 = vmatpush1.msra.mxu0 %v1367
    %4264 = vmatprep.subr.mxu0 0.0
    %4265 = vmatpush1.msra.mxu0 %v1368
    %4266 = vmatprep.subr.mxu0 0.0
    %4267 = vmatpush1.msra.mxu0 %v1369
    %4268 = vmatprep.subr.mxu0 0.0
    %4269 = vmatpush1.msra.mxu0 %v1370
    %4270 = vmatprep.mubr.f32.mxu0 %v4118
    %4271 = vmatmul.mubr.f32.gmra.mrb[0].mxu0 %v4117
    %v4272 = vpop.f32.mrb[0].mxu0
    %v4273 = vadd.f32 %v4198, %v4272
    %v4274 = vpop.f32.mrb[0].mxu0
    %4275 = vmatprep.mubr.f32.mxu0 %v4126
    %4276 = vmatmul.mubr.f32.gmra.mrb[0].mxu0 %v4125
    %v4277 = vpop.f32.mrb[0].mxu0
    %v4278 = vadd.f32 %v4203, %v4277
    %v4279 = vpop.f32.mrb[0].mxu0
    %4280 = vdwg.mxu0
    %4281 = vmatprep.subr.mxu0 0.0
    %4282 = vmatpush1.msra.mxu0 %v1371
    %4283 = vmatprep.subr.mxu0 0.0
    %4284 = vmatpush1.msra.mxu0 %v1372
    %4285 = vmatprep.subr.mxu0 0.0
    %4286 = vmatpush1.msra.mxu0 %v1373
    %4287 = vmatprep.subr.mxu0 0.0
    %4288 = vmatpush1.msra.mxu0 %v1374
    %4289 = vmatprep.subr.mxu0 0.0
    %4290 = vmatpush1.msra.mxu0 %v1375
    %4291 = vmatprep.subr.mxu0 0.0
    %4292 = vmatpush1.msra.mxu0 %v1376
    %4293 = vmatprep.subr.mxu0 0.0
    %4294 = vmatpush1.msra.mxu0 %v1377
    %4295 = vmatprep.subr.mxu0 0.0
    %4296 = vmatpush1.msra.mxu0 %v1378
    %4297 = vmatprep.subr.mxu0 0.0
    %4298 = vmatpush1.msra.mxu0 %v1379
    %4299 = vmatprep.subr.mxu0 0.0
    %4300 = vmatpush1.msra.mxu0 %v1380
    %4301 = vmatprep.subr.mxu0 0.0
    %4302 = vmatpush1.msra.mxu0 %v1381
    %4303 = vmatprep.subr.mxu0 0.0
    %4304 = vmatpush1.msra.mxu0 %v1382
    %4305 = vmatprep.subr.mxu0 0.0
    %4306 = vmatpush1.msra.mxu0 %v1383
    %4307 = vmatprep.subr.mxu0 0.0
    %4308 = vmatpush1.msra.mxu0 %v1384
    %4309 = vmatprep.subr.mxu0 0.0
    %4310 = vmatpush1.msra.mxu0 %v1385
    %4311 = vmatprep.subr.mxu0 0.0
    %4312 = vmatpush1.msra.mxu0 %v1386
    %4313 = vmatprep.subr.mxu0 0.0
    %4314 = vmatpush1.msra.mxu0 %v1387
    %4315 = vmatprep.subr.mxu0 0.0
    %4316 = vmatpush1.msra.mxu0 %v1388
    %4317 = vmatprep.subr.mxu0 0.0
    %4318 = vmatpush1.msra.mxu0 %v1389
    %4319 = vmatprep.subr.mxu0 0.0
    %4320 = vmatpush1.msra.mxu0 %v1390
    %4321 = vmatprep.subr.mxu0 0.0
    %4322 = vmatpush1.msra.mxu0 %v1391
    %4323 = vmatprep.subr.mxu0 0.0
    %4324 = vmatpush1.msra.mxu0 %v1392
    %4325 = vmatprep.subr.mxu0 0.0
    %4326 = vmatpush1.msra.mxu0 %v1393
    %4327 = vmatprep.subr.mxu0 0.0
    %4328 = vmatpush1.msra.mxu0 %v1394
    %4329 = vmatprep.subr.mxu0 0.0
    %4330 = vmatpush1.msra.mxu0 %v1395
    %4331 = vmatprep.subr.mxu0 0.0
    %4332 = vmatpush1.msra.mxu0 %v1396
    %4333 = vmatprep.subr.mxu0 0.0
    %4334 = vmatpush1.msra.mxu0 %v1397
    %4335 = vmatprep.subr.mxu0 0.0
    %4336 = vmatpush1.msra.mxu0 %v1398
    %4337 = vmatprep.subr.mxu0 0.0
    %4338 = vmatpush1.msra.mxu0 %v1399
    %4339 = vmatprep.subr.mxu0 0.0
    %4340 = vmatpush1.msra.mxu0 %v1400
    %4341 = vmatprep.subr.mxu0 0.0
    %4342 = vmatpush1.msra.mxu0 %v1401
    %4343 = vmatprep.subr.mxu0 0.0
    %4344 = vmatpush1.msra.mxu0 %v1402
    %4345 = vmatprep.mubr.f32.mxu0 %v4120
    %4346 = vmatmul.mubr.f32.gmra.mrb[0].mxu0 %v4119
    %v4347 = vpop.f32.mrb[0].mxu0
    %v4348 = vadd.f32 %v4273, %v4347
    %v4349 = vpop.f32.mrb[0].mxu0
    %4350 = vmatprep.mubr.f32.mxu0 %v4128
    %4351 = vmatmul.mubr.f32.gmra.mrb[0].mxu0 %v4127
    %v4352 = vpop.f32.mrb[0].mxu0
    %v4353 = vadd.f32 %v4278, %v4352
    %v4354 = vpop.f32.mrb[0].mxu0
    %4355 = vdwg.mxu0
    %4356 = vmatprep.subr.mxu0 0.0
    %4357 = vmatpush1.msra.mxu0 %v1403
    %4358 = vmatprep.subr.mxu0 0.0
    %4359 = vmatpush1.msra.mxu0 %v1404
    %4360 = vmatprep.subr.mxu0 0.0
    %4361 = vmatpush1.msra.mxu0 %v1405
    %4362 = vmatprep.subr.mxu0 0.0
    %4363 = vmatpush1.msra.mxu0 %v1406
    %4364 = vmatprep.subr.mxu0 0.0
    %4365 = vmatpush1.msra.mxu0 %v1407
    %4366 = vmatprep.subr.mxu0 0.0
    %4367 = vmatpush1.msra.mxu0 %v1408
    %4368 = vmatprep.subr.mxu0 0.0
    %4369 = vmatpush1.msra.mxu0 %v1409
    %4370 = vmatprep.subr.mxu0 0.0
    %4371 = vmatpush1.msra.mxu0 %v1410
    %4372 = vmatprep.subr.mxu0 0.0
    %4373 = vmatpush1.msra.mxu0 %v1411
    %4374 = vmatprep.subr.mxu0 0.0
    %4375 = vmatpush1.msra.mxu0 %v1412
    %4376 = vmatprep.subr.mxu0 0.0
    %4377 = vmatpush1.msra.mxu0 %v1413
    %4378 = vmatprep.subr.mxu0 0.0
    %4379 = vmatpush1.msra.mxu0 %v1414
    %4380 = vmatprep.subr.mxu0 0.0
    %4381 = vmatpush1.msra.mxu0 %v1415
    %4382 = vmatprep.subr.mxu0 0.0
    %4383 = vmatpush1.msra.mxu0 %v1416
    %4384 = vmatprep.subr.mxu0 0.0
    %4385 = vmatpush1.msra.mxu0 %v1417
    %4386 = vmatprep.subr.mxu0 0.0
    %4387 = vmatpush1.msra.mxu0 %v1418
    %4388 = vmatprep.subr.mxu0 0.0
    %4389 = vmatpush1.msra.mxu0 %v1419
    %4390 = vmatprep.subr.mxu0 0.0
    %4391 = vmatpush1.msra.mxu0 %v1420
    %4392 = vmatprep.subr.mxu0 0.0
    %4393 = vmatpush1.msra.mxu0 %v1421
    %4394 = vmatprep.subr.mxu0 0.0
    %4395 = vmatpush1.msra.mxu0 %v1422
    %4396 = vmatprep.subr.mxu0 0.0
    %4397 = vmatpush1.msra.mxu0 %v1423
    %4398 = vmatprep.subr.mxu0 0.0
    %4399 = vmatpush1.msra.mxu0 %v1424
    %4400 = vmatprep.subr.mxu0 0.0
    %4401 = vmatpush1.msra.mxu0 %v1425
    %4402 = vmatprep.subr.mxu0 0.0
    %4403 = vmatpush1.msra.mxu0 %v1426
    %4404 = vmatprep.subr.mxu0 0.0
    %4405 = vmatpush1.msra.mxu0 %v1427
    %4406 = vmatprep.subr.mxu0 0.0
    %4407 = vmatpush1.msra.mxu0 %v1428
    %4408 = vmatprep.subr.mxu0 0.0
    %4409 = vmatpush1.msra.mxu0 %v1429
    %4410 = vmatprep.subr.mxu0 0.0
    %4411 = vmatpush1.msra.mxu0 %v1430
    %4412 = vmatprep.subr.mxu0 0.0
    %4413 = vmatpush1.msra.mxu0 %v1431
    %4414 = vmatprep.subr.mxu0 0.0
    %4415 = vmatpush1.msra.mxu0 %v1432
    %4416 = vmatprep.subr.mxu0 0.0
    %4417 = vmatpush1.msra.mxu0 %v1433
    %4418 = vmatprep.subr.mxu0 0.0
    %4419 = vmatpush1.msra.mxu0 %v1434
    %4420 = vmatprep.mubr.f32.mxu0 %v4122
    %4421 = vmatmul.mubr.f32.gmra.mrb[0].mxu0 %v4121
    %v4422 = vpop.f32.mrb[0].mxu0
    %v4423 = vadd.f32 %v4348, %v4422
    %v4424 = vpop.f32.mrb[0].mxu0
    %4425 = vmatprep.mubr.f32.mxu0 %v4130
    %4426 = vmatmul.mubr.f32.gmra.mrb[0].mxu0 %v4129
    %v4427 = vpop.f32.mrb[0].mxu0
    %v4428 = vadd.f32 %v4353, %v4427
    %v4429 = vpop.f32.mrb[0].mxu0
    %4430 = vdwg.mxu0
    %v4431 = vmul.f32 %v4423, %v2014
    %v4432 = vmul.f32 %v4428, %v2020
    %v4433 = vadd.f32 %v4431, %v2012
    %v4434 = vadd.f32 %v4432, %v2018
    %v4435 = vmax.f32 %v4433, 0.0
    %v4436 = vmax.f32 %v4434, 0.0
    %v4438 = vlaneseq
    %v4439 = vshrl.u32 %v4438, 7
    %v4440 = vsub.s32 0, %v4439
    %v4441 = vrot.slane %v847, %v4440
    %v4442 = vlaneseq
    %v4443 = vshrl.u32 %v4442, 7
    %v4444 = vsub.s32 1, %v4443
    %v4445 = vrot.slane %v847, %v4444
    %4448 = vmatprep.subr.mxu0 %v776
    %4449 = vmatpush1.msra.mxu0 %v775
    %4450 = vmatprep.subr.mxu0 %v778
    %4451 = vmatpush1.msra.mxu0 %v777
    %4452 = vmatprep.subr.mxu0 %v780
    %4453 = vmatpush1.msra.mxu0 %v779
    %4454 = vmatprep.subr.mxu0 %v782
    %4455 = vmatpush1.msra.mxu0 %v781
    %4456 = vmatprep.subr.mxu0 %v784
    %4457 = vmatpush1.msra.mxu0 %v783
    %4458 = vmatprep.subr.mxu0 %v786
    %4459 = vmatpush1.msra.mxu0 %v785
    %4460 = vmatprep.subr.mxu0 %v788
    %4461 = vmatpush1.msra.mxu0 %v787
    %4462 = vmatprep.subr.mxu0 %v790
    %4463 = vmatpush1.msra.mxu0 %v789
    %4464 = vmatprep.subr.mxu0 %v792
    %4465 = vmatpush1.msra.mxu0 %v791
    %4466 = vmatprep.subr.mxu0 %v794
    %4467 = vmatpush1.msra.mxu0 %v793
    %4468 = vmatprep.subr.mxu0 %v796
    %4469 = vmatpush1.msra.mxu0 %v795
    %4470 = vmatprep.subr.mxu0 %v798
    %4471 = vmatpush1.msra.mxu0 %v797
    %4472 = vmatprep.subr.mxu0 %v800
    %4473 = vmatpush1.msra.mxu0 %v799
    %4474 = vmatprep.subr.mxu0 %v802
    %4475 = vmatpush1.msra.mxu0 %v801
    %4476 = vmatprep.subr.mxu0 %v804
    %4477 = vmatpush1.msra.mxu0 %v803
    %4478 = vmatprep.subr.mxu0 %v806
    %4479 = vmatpush1.msra.mxu0 %v805
    %4480 = vmatprep.subr.mxu0 %v808
    %4481 = vmatpush1.msra.mxu0 %v807
    %4482 = vmatprep.subr.mxu0 %v810
    %4483 = vmatpush1.msra.mxu0 %v809
    %4484 = vmatprep.subr.mxu0 %v812
    %4485 = vmatpush1.msra.mxu0 %v811
    %4486 = vmatprep.subr.mxu0 %v814
    %4487 = vmatpush1.msra.mxu0 %v813
    %4488 = vmatprep.subr.mxu0 %v816
    %4489 = vmatpush1.msra.mxu0 %v815
    %4490 = vmatprep.subr.mxu0 %v818
    %4491 = vmatpush1.msra.mxu0 %v817
    %4492 = vmatprep.subr.mxu0 %v820
    %4493 = vmatpush1.msra.mxu0 %v819
    %4494 = vmatprep.subr.mxu0 %v822
    %4495 = vmatpush1.msra.mxu0 %v821
    %4496 = vmatprep.subr.mxu0 %v824
    %4497 = vmatpush1.msra.mxu0 %v823
    %4498 = vmatprep.subr.mxu0 %v826
    %4499 = vmatpush1.msra.mxu0 %v825
    %4500 = vmatprep.subr.mxu0 %v828
    %4501 = vmatpush1.msra.mxu0 %v827
    %4502 = vmatprep.subr.mxu0 %v830
    %4503 = vmatpush1.msra.mxu0 %v829
    %4504 = vmatprep.subr.mxu0 %v832
    %4505 = vmatpush1.msra.mxu0 %v831
    %4506 = vmatprep.subr.mxu0 %v834
    %4507 = vmatpush1.msra.mxu0 %v833
    %4508 = vmatprep.subr.mxu0 %v836
    %4509 = vmatpush1.msra.mxu0 %v835
    %4510 = vmatprep.subr.mxu0 %v838
    %4511 = vmatpush1.msra.mxu0 %v837
    %4512 = vmatprep.mubr.f32.mxu0 %v1671
    %4513 = vmatmul.mubr.f32.gmra.mrb[0].mxu0 %v1670
    %v4514 = vpop.f32.mrb[0].mxu0
    %v4515 = vadd.f32 %v4441, %v4514
    %v4516 = vpop.f32.mrb[0].mxu0
    %v4517 = vadd.f32 %v4445, %v4516
    %4518 = vmatprep.mubr.f32.mxu0 %v1674
    %4519 = vmatmul.mubr.f32.gmra.mrb[0].mxu0 %v1673
    %v4520 = vpop.f32.mrb[0].mxu0
    %v4521 = vadd.f32 %v4441, %v4520
    %v4522 = vpop.f32.mrb[0].mxu0
    %v4523 = vadd.f32 %v4445, %v4522
    %4524 = vdwg.mxu0
    %4525 = vmatprep.subr.mxu0 %v840
    %4526 = vmatpush1.msra.mxu0 %v839
    %4527 = vmatprep.subr.mxu0 %v842
    %4528 = vmatpush1.msra.mxu0 %v841
    %4529 = vmatprep.subr.mxu0 %v844
    %4530 = vmatpush1.msra.mxu0 %v843
    %4531 = vmatprep.subr.mxu0 %v846
    %4532 = vmatpush1.msra.mxu0 %v845
    %4533 = vmatprep.subr.mxu0 0.0
    %4534 = vmatpush1.msra.mxu0 0.0
    %4535 = vmatprep.subr.mxu0 0.0
    %4536 = vmatpush1.msra.mxu0 0.0
    %4537 = vmatprep.subr.mxu0 0.0
    %4538 = vmatpush1.msra.mxu0 0.0
    %4539 = vmatprep.subr.mxu0 0.0
    %4540 = vmatpush1.msra.mxu0 0.0
    %4541 = vmatprep.subr.mxu0 0.0
    %4542 = vmatpush1.msra.mxu0 0.0
    %4543 = vmatprep.subr.mxu0 0.0
    %4544 = vmatpush1.msra.mxu0 0.0
    %4545 = vmatprep.subr.mxu0 0.0
    %4546 = vmatpush1.msra.mxu0 0.0
    %4547 = vmatprep.subr.mxu0 0.0
    %4548 = vmatpush1.msra.mxu0 0.0
    %4549 = vmatprep.subr.mxu0 0.0
    %4550 = vmatpush1.msra.mxu0 0.0
    %4551 = vmatprep.subr.mxu0 0.0
    %4552 = vmatpush1.msra.mxu0 0.0
    %4553 = vmatprep.subr.mxu0 0.0
    %4554 = vmatpush1.msra.mxu0 0.0
    %4555 = vmatprep.subr.mxu0 0.0
    %4556 = vmatpush1.msra.mxu0 0.0
    %4557 = vmatprep.subr.mxu0 0.0
    %4558 = vmatpush1.msra.mxu0 0.0
    %4559 = vmatprep.subr.mxu0 0.0
    %4560 = vmatpush1.msra.mxu0 0.0
    %4561 = vmatprep.subr.mxu0 0.0
    %4562 = vmatpush1.msra.mxu0 0.0
    %4563 = vmatprep.subr.mxu0 0.0
    %4564 = vmatpush1.msra.mxu0 0.0
    %4565 = vmatprep.subr.mxu0 0.0
    %4566 = vmatpush1.msra.mxu0 0.0
    %4567 = vmatprep.subr.mxu0 0.0
    %4568 = vmatpush1.msra.mxu0 0.0
    %4569 = vmatprep.subr.mxu0 0.0
    %4570 = vmatpush1.msra.mxu0 0.0
    %4571 = vmatprep.subr.mxu0 0.0
    %4572 = vmatpush1.msra.mxu0 0.0
    %4573 = vmatprep.subr.mxu0 0.0
    %4574 = vmatpush1.msra.mxu0 0.0
    %4575 = vmatprep.subr.mxu0 0.0
    %4576 = vmatpush1.msra.mxu0 0.0
    %4577 = vmatprep.subr.mxu0 0.0
    %4578 = vmatpush1.msra.mxu0 0.0
    %4579 = vmatprep.subr.mxu0 0.0
    %4580 = vmatpush1.msra.mxu0 0.0
    %4581 = vmatprep.subr.mxu0 0.0
    %4582 = vmatpush1.msra.mxu0 0.0
    %4583 = vmatprep.subr.mxu0 0.0
    %4584 = vmatpush1.msra.mxu0 0.0
    %4585 = vmatprep.subr.mxu0 0.0
    %4586 = vmatpush1.msra.mxu0 0.0
    %4587 = vmatprep.subr.mxu0 0.0
    %4588 = vmatpush1.msra.mxu0 0.0
    %4589 = vmatprep.mubr.f32.mxu0 0.0
    %4590 = vmatmul.mubr.f32.gmra.mrb[0].mxu0 %v1709
    %v4591 = vpop.f32.mrb[0].mxu0
    %v4592 = vadd.f32 %v4515, %v4591
    %v4593 = vpop.f32.mrb[0].mxu0
    %v4594 = vadd.f32 %v4517, %v4593
    %4595 = vmatprep.mubr.f32.mxu0 0.0
    %4596 = vmatmul.mubr.f32.gmra.mrb[0].mxu0 %v1712
    %v4597 = vpop.f32.mrb[0].mxu0
    %v4598 = vadd.f32 %v4521, %v4597
    %v4599 = vpop.f32.mrb[0].mxu0
    %v4600 = vadd.f32 %v4523, %v4599
    %4601 = vdwg.mxu0
    %4602 = vmatprep.subr.mxu0 %v1436
    %4603 = vmatpush1.msra.mxu0 %v1435
    %4604 = vmatprep.subr.mxu0 %v1438
    %4605 = vmatpush1.msra.mxu0 %v1437
    %4606 = vmatprep.subr.mxu0 %v1440
    %4607 = vmatpush1.msra.mxu0 %v1439
    %4608 = vmatprep.subr.mxu0 %v1442
    %4609 = vmatpush1.msra.mxu0 %v1441
    %4610 = vmatprep.subr.mxu0 %v1444
    %4611 = vmatpush1.msra.mxu0 %v1443
    %4612 = vmatprep.subr.mxu0 %v1446
    %4613 = vmatpush1.msra.mxu0 %v1445
    %4614 = vmatprep.subr.mxu0 %v1448
    %4615 = vmatpush1.msra.mxu0 %v1447
    %4616 = vmatprep.subr.mxu0 %v1450
    %4617 = vmatpush1.msra.mxu0 %v1449
    %4618 = vmatprep.subr.mxu0 %v1452
    %4619 = vmatpush1.msra.mxu0 %v1451
    %4620 = vmatprep.subr.mxu0 %v1454
    %4621 = vmatpush1.msra.mxu0 %v1453
    %4622 = vmatprep.subr.mxu0 %v1456
    %4623 = vmatpush1.msra.mxu0 %v1455
    %4624 = vmatprep.subr.mxu0 %v1458
    %4625 = vmatpush1.msra.mxu0 %v1457
    %4626 = vmatprep.subr.mxu0 %v1460
    %4627 = vmatpush1.msra.mxu0 %v1459
    %4628 = vmatprep.subr.mxu0 %v1462
    %4629 = vmatpush1.msra.mxu0 %v1461
    %4630 = vmatprep.subr.mxu0 %v1464
    %4631 = vmatpush1.msra.mxu0 %v1463
    %4632 = vmatprep.subr.mxu0 %v1466
    %4633 = vmatpush1.msra.mxu0 %v1465
    %4634 = vmatprep.subr.mxu0 0.0
    %4635 = vmatpush1.msra.mxu0 0.0
    %4636 = vmatprep.subr.mxu0 0.0
    %4637 = vmatpush1.msra.mxu0 0.0
    %4638 = vmatprep.subr.mxu0 0.0
    %4639 = vmatpush1.msra.mxu0 0.0
    %4640 = vmatprep.subr.mxu0 0.0
    %4641 = vmatpush1.msra.mxu0 0.0
    %4642 = vmatprep.subr.mxu0 0.0
    %4643 = vmatpush1.msra.mxu0 0.0
    %4644 = vmatprep.subr.mxu0 0.0
    %4645 = vmatpush1.msra.mxu0 0.0
    %4646 = vmatprep.subr.mxu0 0.0
    %4647 = vmatpush1.msra.mxu0 0.0
    %4648 = vmatprep.subr.mxu0 0.0
    %4649 = vmatpush1.msra.mxu0 0.0
    %4650 = vmatprep.subr.mxu0 0.0
    %4651 = vmatpush1.msra.mxu0 0.0
    %4652 = vmatprep.subr.mxu0 0.0
    %4653 = vmatpush1.msra.mxu0 0.0
    %4654 = vmatprep.subr.mxu0 0.0
    %4655 = vmatpush1.msra.mxu0 0.0
    %4656 = vmatprep.subr.mxu0 0.0
    %4657 = vmatpush1.msra.mxu0 0.0
    %4658 = vmatprep.subr.mxu0 0.0
    %4659 = vmatpush1.msra.mxu0 0.0
    %4660 = vmatprep.subr.mxu0 0.0
    %4661 = vmatpush1.msra.mxu0 0.0
    %4662 = vmatprep.subr.mxu0 0.0
    %4663 = vmatpush1.msra.mxu0 0.0
    %4664 = vmatprep.subr.mxu0 0.0
    %4665 = vmatpush1.msra.mxu0 0.0
    %4666 = vmatprep.mubr.f32.mxu0 0.0
    %4667 = vmatmul.mubr.f32.gmra.mrb[0].mxu0 %v4435
    %v4668 = vpop.f32.mrb[0].mxu0
    %v4669 = vadd.f32 0.0, %v4668
    %v4670 = vpop.f32.mrb[0].mxu0
    %v4671 = vadd.f32 0.0, %v4670
    %4672 = vmatprep.mubr.f32.mxu0 0.0
    %4673 = vmatmul.mubr.f32.gmra.mrb[0].mxu0 %v4436
    %v4674 = vpop.f32.mrb[0].mxu0
    %v4675 = vadd.f32 0.0, %v4674
    %v4676 = vpop.f32.mrb[0].mxu0
    %v4677 = vadd.f32 0.0, %v4676
    %4678 = vdwg.mxu0
    %v4679 = vmul.f32 %v4669, %v4592
    %v4680 = vmul.f32 %v4671, %v4594
    %v4681 = vmul.f32 %v4675, %v4598
    %v4682 = vmul.f32 %v4677, %v4600
    %vm4683 = vcmask 523264
    %v4685 = vsel %vm4683, %v4680, 0
    %v4688 = vsel %vm4683, %v4682, 0
    %4690 = vmatprep.subr.mxu0 0.0
    %4691 = vmatpush1.msra.mxu0 %v1467
    %4692 = vmatprep.subr.mxu0 0.0
    %4693 = vmatpush1.msra.mxu0 %v1468
    %4694 = vmatprep.subr.mxu0 0.0
    %4695 = vmatpush1.msra.mxu0 %v1469
    %4696 = vmatprep.subr.mxu0 0.0
    %4697 = vmatpush1.msra.mxu0 %v1470
    %4698 = vmatprep.subr.mxu0 0.0
    %4699 = vmatpush1.msra.mxu0 %v1471
    %4700 = vmatprep.subr.mxu0 0.0
    %4701 = vmatpush1.msra.mxu0 %v1472
    %4702 = vmatprep.subr.mxu0 0.0
    %4703 = vmatpush1.msra.mxu0 %v1473
    %4704 = vmatprep.subr.mxu0 0.0
    %4705 = vmatpush1.msra.mxu0 %v1474
    %4706 = vmatprep.subr.mxu0 0.0
    %4707 = vmatpush1.msra.mxu0 %v1475
    %4708 = vmatprep.subr.mxu0 0.0
    %4709 = vmatpush1.msra.mxu0 %v1476
    %4710 = vmatprep.subr.mxu0 0.0
    %4711 = vmatpush1.msra.mxu0 %v1477
    %4712 = vmatprep.subr.mxu0 0.0
    %4713 = vmatpush1.msra.mxu0 %v1478
    %4714 = vmatprep.subr.mxu0 0.0
    %4715 = vmatpush1.msra.mxu0 %v1479
    %4716 = vmatprep.subr.mxu0 0.0
    %4717 = vmatpush1.msra.mxu0 %v1480
    %4718 = vmatprep.subr.mxu0 0.0
    %4719 = vmatpush1.msra.mxu0 %v1481
    %4720 = vmatprep.subr.mxu0 0.0
    %4721 = vmatpush1.msra.mxu0 %v1482
    %4722 = vmatprep.subr.mxu0 0.0
    %4723 = vmatpush1.msra.mxu0 %v1483
    %4724 = vmatprep.subr.mxu0 0.0
    %4725 = vmatpush1.msra.mxu0 %v1484
    %4726 = vmatprep.subr.mxu0 0.0
    %4727 = vmatpush1.msra.mxu0 %v1485
    %4728 = vmatprep.subr.mxu0 0.0
    %4729 = vmatpush1.msra.mxu0 %v1486
    %4730 = vmatprep.subr.mxu0 0.0
    %4731 = vmatpush1.msra.mxu0 %v1487
    %4732 = vmatprep.subr.mxu0 0.0
    %4733 = vmatpush1.msra.mxu0 %v1488
    %4734 = vmatprep.subr.mxu0 0.0
    %4735 = vmatpush1.msra.mxu0 %v1489
    %4736 = vmatprep.subr.mxu0 0.0
    %4737 = vmatpush1.msra.mxu0 %v1490
    %4738 = vmatprep.subr.mxu0 0.0
    %4739 = vmatpush1.msra.mxu0 0.0
    %4740 = vmatprep.subr.mxu0 0.0
    %4741 = vmatpush1.msra.mxu0 0.0
    %4742 = vmatprep.subr.mxu0 0.0
    %4743 = vmatpush1.msra.mxu0 0.0
    %4744 = vmatprep.subr.mxu0 0.0
    %4745 = vmatpush1.msra.mxu0 0.0
    %4746 = vmatprep.subr.mxu0 0.0
    %4747 = vmatpush1.msra.mxu0 0.0
    %4748 = vmatprep.subr.mxu0 0.0
    %4749 = vmatpush1.msra.mxu0 0.0
    %4750 = vmatprep.subr.mxu0 0.0
    %4751 = vmatpush1.msra.mxu0 0.0
    %4752 = vmatprep.subr.mxu0 0.0
    %4753 = vmatpush1.msra.mxu0 0.0
    %4754 = vmatprep.mubr.f32.mxu0 %v4685
    %4755 = vmatmul.mubr.f32.gmra.mrb[0].mxu0 %v4679
    %v4756 = vpop.f32.mrb[0].mxu0
    %v4757 = vadd.f32 0.0, %v4756
    %v4758 = vpop.f32.mrb[0].mxu0
    %4759 = vmatprep.mubr.f32.mxu0 %v4688
    %4760 = vmatmul.mubr.f32.gmra.mrb[0].mxu0 %v4681
    %v4761 = vpop.f32.mrb[0].mxu0
    %v4762 = vadd.f32 0.0, %v4761
    %v4763 = vpop.f32.mrb[0].mxu0
    %4764 = vdwg.mxu0
    %v4765 = vmul.f32 %v4757, %v2168
    %v4766 = vmul.f32 %v4762, %v2174
    %v4767 = vadd.f32 %v4765, %v2166
    %v4768 = vadd.f32 %v4766, %v2172
    %4769 = vst [vmem:[#allocation28] sm:$0xff] %v4767
    %4770 = vst [vmem:[#allocation28 + $0x8] sm:$0xff] %v4768
    // Predicated region
    $region138: #{tpu_custom_call.1} parent=1 // pred_check
      _
    $region139: #{tpu_custom_call.1} parent=1 // pred_check_branch
      %4772 = sbr.rel (0) target = $region141
    $region140: #{tpu_custom_call.1} parent=1 // pred_region
      %s4774 = ssub.s32 256, 256
      %4775 = vsyncadd [#allocation4], %s4774
      %s4776 = sshll.u32 [#allocation28], 4
      %s4777 = int_to_ptr.vmem [resolvable:$true] %s4776
      %4782 = dma.vmem_to_hbm [thread:$0]  %s4777, 256, %s18, [#allocation4], 128, 128, 8
    $region141: #{tpu_custom_call.1} parent=1 // pred_fallthru
      _
    // Predicated region
    $region142: #{tpu_custom_call.1} parent=1 // pred_check
      _
    $region143: #{tpu_custom_call.1} parent=1 // pred_check_branch
      %4784 = sbr.rel (0) target = $region145
    $region144: #{tpu_custom_call.1} parent=1 // pred_region
      %4785 = dma.done [#allocation4], 256
    $region145: #{tpu_custom_call.1} parent=1 // pred_fallthru
      _
    %4786 = vsyncpa [#allocation3], 1
    %4787 = vsyncpa [#allocation6], 1
    %4788 = vsyncpa [#allocation9], 1
    %4789 = vsyncpa [#allocation12], 1
    %4790 = vsyncpa [#allocation15], 1
    %4791 = vsyncpa [#allocation18], 1
    %4792 = vsyncpa [#allocation21], 1
    %4793 = vsyncpa [#allocation24], 1
    %4794 = vsyncpa [#allocation27], 1
    %4795 = vsyncpa [#allocation4], 1

// kernel: tpu_custom_call.1
$region0: #{tpu_custom_call.1}
  #allocation0 [shape = 'u32[]', space=smem, size = 0x4, offset = 0x4, fixed_abs, tag = 'smem constant byte address 0x4 - core index']
  #allocation1 [shape = 'u32[144,128]{1,0:T(1,128)}', space=vmem, size = 0x12000, scoped, tag = 'internal scratch']
  %s0 = inlined_call_operand.vmem [shape: f32[16,8], index: 0, kind: input, shape index: {}]
  %s1 = inlined_call_operand.hbm [shape: f32[16,24], index: 1, kind: input, shape index: {}]
  %s2 = inlined_call_operand.hbm [shape: f32[8,288], index: 2, kind: input, shape index: {}]
  %s3 = inlined_call_operand.hbm [shape: f32[1,288], index: 3, kind: input, shape index: {}]
  %s4 = inlined_call_operand.hbm [shape: f32[288,768], index: 4, kind: input, shape index: {}]
  %s5 = inlined_call_operand.hbm [shape: f32[1,768], index: 5, kind: input, shape index: {}]
  %s6 = inlined_call_operand.hbm [shape: f32[288,1024], index: 6, kind: input, shape index: {}]
  %s7 = inlined_call_operand.hbm [shape: f32[1,1024], index: 7, kind: input, shape index: {}]
  %s8 = inlined_call_operand.hbm [shape: f32[288,192], index: 8, kind: input, shape index: {}]
  %s9 = inlined_call_operand.hbm [shape: f32[1,192], index: 9, kind: input, shape index: {}]
  %s10 = inlined_call_operand.hbm [shape: f32[288,768], index: 10, kind: input, shape index: {}]
  %s11 = inlined_call_operand.hbm [shape: f32[1,768], index: 11, kind: input, shape index: {}]
  %s12 = inlined_call_operand.hbm [shape: f32[24,768], index: 12, kind: input, shape index: {}]
  %s13 = inlined_call_operand.hbm [shape: f32[768,128], index: 13, kind: input, shape index: {}]
  %s14 = inlined_call_operand.hbm [shape: f32[128,1024], index: 14, kind: input, shape index: {}]
  %s15 = inlined_call_operand.hbm [shape: f32[1024,128], index: 15, kind: input, shape index: {}]
  %s16 = inlined_call_operand.vmem [shape: f32[128,192], index: 16, kind: input, shape index: {}]
  %s17 = inlined_call_operand.hbm [shape: f32[192,128], index: 17, kind: input, shape index: {}]
  %s18 = inlined_call_operand.hbm [shape: f32[16,128], index: 18, kind: output, shape index: {}]
  %s19 = sld [smem:[#allocation0]]
  $region146: #{tpu_custom_call.1} parent=0
    _
  %s21 = ssub.s32 1, %s19
  %s22 = scalar_select 0, %s21, %s19
  $region1: #{tpu_custom_call.1} parent=0
    #allocation2 [shape = 'u8[8192]{0}', space=vmem, size = 0x2000, scoped, tag = 'input window, operand 1, single buffered']
    #allocation3 [shape = 's32[1]{0}', space=sflag, size = 0x4, scoped, tag = 'scoped memory for tpu_custom_call.1']
    #allocation4 [shape = 's32[1]{0}', space=sflag, size = 0x4, scoped, tag = 'scoped memory for tpu_custom_call.1']
    #allocation5 [shape = 'u8[12288]{0}', space=vmem, size = 0x3000, scoped, tag = 'input window, operand 2, single buffered']
    #allocation6 [shape = 's32[1]{0}', space=sflag, size = 0x4, scoped, tag = 'scoped memory for tpu_custom_call.1']
    #allocation7 [shape = 'u8[1536]{0}', space=vmem, size = 0x800, scoped, tag = 'input window, operand 3, single buffered']
    #allocation8 [shape = 'u8[884736]{0}', space=vmem, size = 0xd8000, scoped, tag = 'input window, operand 4, single buffered']
    #allocation9 [shape = 's32[1]{0}', space=sflag, size = 0x4, scoped, tag = 'scoped memory for tpu_custom_call.1']
    #allocation10 [shape = 'u8[3072]{0}', space=vmem, size = 0xc00, scoped, tag = 'input window, operand 5, single buffered']
    #allocation11 [shape = 'u8[1179648]{0}', space=vmem, size = 0x120000, scoped, tag = 'input window, operand 6, single buffered']
    #allocation12 [shape = 's32[1]{0}', space=sflag, size = 0x4, scoped, tag = 'scoped memory for tpu_custom_call.1']
    #allocation13 [shape = 'u8[4096]{0}', space=vmem, size = 0x1000, scoped, tag = 'input window, operand 7, single buffered']
    #allocation14 [shape = 'u8[294912]{0}', space=vmem, size = 0x48000, scoped, tag = 'input window, operand 8, single buffered']
    #allocation15 [shape = 's32[1]{0}', space=sflag, size = 0x4, scoped, tag = 'scoped memory for tpu_custom_call.1']
    #allocation16 [shape = 'u8[1024]{0}', space=vmem, size = 0x400, scoped, tag = 'input window, operand 9, single buffered']
    #allocation17 [shape = 'u8[884736]{0}', space=vmem, size = 0xd8000, scoped, tag = 'input window, operand 10, single buffered']
    #allocation18 [shape = 's32[1]{0}', space=sflag, size = 0x4, scoped, tag = 'scoped memory for tpu_custom_call.1']
    #allocation19 [shape = 'u8[3072]{0}', space=vmem, size = 0xc00, scoped, tag = 'input window, operand 11, single buffered']
    #allocation20 [shape = 'u8[73728]{0}', space=vmem, size = 0x12000, scoped, tag = 'input window, operand 12, single buffered']
    #allocation21 [shape = 's32[1]{0}', space=sflag, size = 0x4, scoped, tag = 'scoped memory for tpu_custom_call.1']
    #allocation22 [shape = 'u8[393216]{0}', space=vmem, size = 0x60000, scoped, tag = 'input window, operand 13, single buffered']
    #allocation23 [shape = 'u8[524288]{0}', space=vmem, size = 0x80000, scoped, tag = 'input window, operand 14, single buffered']
    #allocation24 [shape = 's32[1]{0}', space=sflag, size = 0x4, scoped, tag = 'scoped memory for tpu_custom_call.1']
    #allocation25 [shape = 'u8[524288]{0}', space=vmem, size = 0x80000, scoped, tag = 'input window, operand 15, single buffered']
    #allocation26 [shape = 'u8[98304]{0}', space=vmem, size = 0x18000, scoped, tag = 'input window, operand 17, single buffered']
    #allocation27 [shape = 's32[1]{0}', space=sflag, size = 0x4, scoped, tag = 'scoped memory for tpu_custom_call.1']
    #allocation28 [shape = 'u8[8192]{0}', space=vmem, size = 0x2000, scoped, tag = 'output window, operand 0, single buffered']
    %23 = vsyncpa [#allocation3], 0
    %24 = vsyncpa [#allocation6], 0
    %25 = vsyncpa [#allocation9], 0
    %26 = vsyncpa [#allocation12], 0
    %27 = vsyncpa [#allocation15], 0
    %28 = vsyncpa [#allocation18], 0
    %29 = vsyncpa [#allocation21], 0
    %30 = vsyncpa [#allocation24], 0
    %31 = vsyncpa [#allocation27], 0
    %32 = vsyncpa [#allocation4], 0
    // Predicated region
    $region2: #{tpu_custom_call.1} parent=1 // pred_check
      _
    $region3: #{tpu_custom_call.1} parent=1 // pred_check_branch
      %34 = sbr.rel (0) target = $region5
    $region4: #{tpu_custom_call.1} parent=1 // pred_region
      _
    $region5: #{tpu_custom_call.1} parent=1 // pred_fallthru
      _
    // Predicated region
    $region6: #{tpu_custom_call.1} parent=1 // pred_check
      _
    $region7: #{tpu_custom_call.1} parent=1 // pred_check_branch
      %36 = sbr.rel (0) target = $region9
    $region8: #{tpu_custom_call.1} parent=1 // pred_region
      %s38 = ssub.s32 256, 256
      %39 = vsyncadd [#allocation3], %s38
      %s40 = sshll.u32 [#allocation2], 4
      %s41 = int_to_ptr.vmem [resolvable:$true] %s40
      %46 = dma.hbm_to_vmem [thread:$0]  %s1, 256, %s41, [#allocation3], 128, 128, 8
    $region9: #{tpu_custom_call.1} parent=1 // pred_fallthru
      _
    // Predicated region
    $region10: #{tpu_custom_call.1} parent=1 // pred_check
      _
    $region11: #{tpu_custom_call.1} parent=1 // pred_check_branch
      %48 = sbr.rel (0) target = $region13
    $region12: #{tpu_custom_call.1} parent=1 // pred_region
      %s50 = ssub.s32 384, 384
      %51 = vsyncadd [#allocation6], %s50
      %s53 = sshll.u32 [#allocation5], 4
      %s54 = int_to_ptr.vmem [resolvable:$true] %s53
      %56 = dma.hbm_to_vmem [thread:$0]  %s2, 384, %s54, [#allocation6]
    $region13: #{tpu_custom_call.1} parent=1 // pred_fallthru
      _
    // Predicated region
    $region14: #{tpu_custom_call.1} parent=1 // pred_check
      _
    $region15: #{tpu_custom_call.1} parent=1 // pred_check_branch
      %58 = sbr.rel (0) target = $region17
    $region16: #{tpu_custom_call.1} parent=1 // pred_region
      %s60 = ssub.s32 48, 48
      %61 = vsyncadd [#allocation6], %s60
      %s63 = sshll.u32 [#allocation7], 4
      %s64 = int_to_ptr.vmem [resolvable:$true] %s63
      %66 = dma.hbm_to_vmem [thread:$0]  %s3, 48, %s64, [#allocation6]
    $region17: #{tpu_custom_call.1} parent=1 // pred_fallthru
      _
    // Predicated region
    $region18: #{tpu_custom_call.1} parent=1 // pred_check
      _
    $region19: #{tpu_custom_call.1} parent=1 // pred_check_branch
      %68 = sbr.rel (0) target = $region21
    $region20: #{tpu_custom_call.1} parent=1 // pred_region
      %s70 = ssub.s32 27648, 27648
      %71 = vsyncadd [#allocation9], %s70
      %s72 = sshll.u32 [#allocation8], 4
      %s73 = int_to_ptr.vmem [resolvable:$true] %s72
      %78 = dma.hbm_to_vmem [thread:$0]  %s4, 27648, %s73, [#allocation9], 768, 768, 48
    $region21: #{tpu_custom_call.1} parent=1 // pred_fallthru
      _
    // Predicated region
    $region22: #{tpu_custom_call.1} parent=1 // pred_check
      _
    $region23: #{tpu_custom_call.1} parent=1 // pred_check_branch
      %80 = sbr.rel (0) target = $region25
    $region24: #{tpu_custom_call.1} parent=1 // pred_region
      %s82 = ssub.s32 96, 96
      %83 = vsyncadd [#allocation9], %s82
      %s85 = sshll.u32 [#allocation10], 4
      %s86 = int_to_ptr.vmem [resolvable:$true] %s85
      %88 = dma.hbm_to_vmem [thread:$0]  %s5, 96, %s86, [#allocation9]
    $region25: #{tpu_custom_call.1} parent=1 // pred_fallthru
      _
    // Predicated region
    $region26: #{tpu_custom_call.1} parent=1 // pred_check
      _
    $region27: #{tpu_custom_call.1} parent=1 // pred_check_branch
      %90 = sbr.rel (0) target = $region29
    $region28: #{tpu_custom_call.1} parent=1 // pred_region
      %s92 = ssub.s32 36864, 36864
      %93 = vsyncadd [#allocation12], %s92
      %s94 = sshll.u32 [#allocation11], 4
      %s95 = int_to_ptr.vmem [resolvable:$true] %s94
      %100 = dma.hbm_to_vmem [thread:$0]  %s6, 36864, %s95, [#allocation12], 1024, 1024, 64
    $region29: #{tpu_custom_call.1} parent=1 // pred_fallthru
      _
    // Predicated region
    $region30: #{tpu_custom_call.1} parent=1 // pred_check
      _
    $region31: #{tpu_custom_call.1} parent=1 // pred_check_branch
      %102 = sbr.rel (0) target = $region33
    $region32: #{tpu_custom_call.1} parent=1 // pred_region
      %s104 = ssub.s32 128, 128
      %105 = vsyncadd [#allocation12], %s104
      %s107 = sshll.u32 [#allocation13], 4
      %s108 = int_to_ptr.vmem [resolvable:$true] %s107
      %110 = dma.hbm_to_vmem [thread:$0]  %s7, 128, %s108, [#allocation12]
    $region33: #{tpu_custom_call.1} parent=1 // pred_fallthru
      _
    // Predicated region
    $region34: #{tpu_custom_call.1} parent=1 // pred_check
      _
    $region35: #{tpu_custom_call.1} parent=1 // pred_check_branch
      %112 = sbr.rel (0) target = $region37
    $region36: #{tpu_custom_call.1} parent=1 // pred_region
      %s114 = ssub.s32 9216, 9216
      %115 = vsyncadd [#allocation15], %s114
      %s116 = sshll.u32 [#allocation14], 4
      %s117 = int_to_ptr.vmem [resolvable:$true] %s116
      %122 = dma.hbm_to_vmem [thread:$0]  %s8, 9216, %s117, [#allocation15], 256, 256, 16
    $region37: #{tpu_custom_call.1} parent=1 // pred_fallthru
      _
    // Predicated region
    $region38: #{tpu_custom_call.1} parent=1 // pred_check
      _
    $region39: #{tpu_custom_call.1} parent=1 // pred_check_branch
      %124 = sbr.rel (0) target = $region41
    $region40: #{tpu_custom_call.1} parent=1 // pred_region
      %s126 = ssub.s32 32, 32
      %127 = vsyncadd [#allocation15], %s126
      %s129 = sshll.u32 [#allocation16], 4
      %s130 = int_to_ptr.vmem [resolvable:$true] %s129
      %132 = dma.hbm_to_vmem [thread:$0]  %s9, 32, %s130, [#allocation15]
    $region41: #{tpu_custom_call.1} parent=1 // pred_fallthru
      _
    // Predicated region
    $region42: #{tpu_custom_call.1} parent=1 // pred_check
      _
    $region43: #{tpu_custom_call.1} parent=1 // pred_check_branch
      %134 = sbr.rel (0) target = $region45
    $region44: #{tpu_custom_call.1} parent=1 // pred_region
      %s136 = ssub.s32 27648, 27648
      %137 = vsyncadd [#allocation18], %s136
      %s138 = sshll.u32 [#allocation17], 4
      %s139 = int_to_ptr.vmem [resolvable:$true] %s138
      %144 = dma.hbm_to_vmem [thread:$0]  %s10, 27648, %s139, [#allocation18], 768, 768, 48
    $region45: #{tpu_custom_call.1} parent=1 // pred_fallthru
      _
    // Predicated region
    $region46: #{tpu_custom_call.1} parent=1 // pred_check
      _
    $region47: #{tpu_custom_call.1} parent=1 // pred_check_branch
      %146 = sbr.rel (0) target = $region49
    $region48: #{tpu_custom_call.1} parent=1 // pred_region
      %s148 = ssub.s32 96, 96
      %149 = vsyncadd [#allocation18], %s148
      %s151 = sshll.u32 [#allocation19], 4
      %s152 = int_to_ptr.vmem [resolvable:$true] %s151
      %154 = dma.hbm_to_vmem [thread:$0]  %s11, 96, %s152, [#allocation18]
    $region49: #{tpu_custom_call.1} parent=1 // pred_fallthru
      _
    // Predicated region
    $region50: #{tpu_custom_call.1} parent=1 // pred_check
      _
    $region51: #{tpu_custom_call.1} parent=1 // pred_check_branch
      %156 = sbr.rel (0) target = $region53
    $region52: #{tpu_custom_call.1} parent=1 // pred_region
      %s158 = ssub.s32 2304, 2304
      %159 = vsyncadd [#allocation21], %s158
      %s160 = sshll.u32 [#allocation20], 4
      %s161 = int_to_ptr.vmem [resolvable:$true] %s160
      %166 = dma.hbm_to_vmem [thread:$0]  %s12, 2304, %s161, [#allocation21], 768, 768, 48
    $region53: #{tpu_custom_call.1} parent=1 // pred_fallthru
      _
    // Predicated region
    $region54: #{tpu_custom_call.1} parent=1 // pred_check
      _
    $region55: #{tpu_custom_call.1} parent=1 // pred_check_branch
      %168 = sbr.rel (0) target = $region57
    $region56: #{tpu_custom_call.1} parent=1 // pred_region
      %s170 = ssub.s32 12288, 12288
      %171 = vsyncadd [#allocation21], %s170
      %s172 = sshll.u32 [#allocation22], 4
      %s173 = int_to_ptr.vmem [resolvable:$true] %s172
      %178 = dma.hbm_to_vmem [thread:$0]  %s13, 12288, %s173, [#allocation21], 128, 128, 8
    $region57: #{tpu_custom_call.1} parent=1 // pred_fallthru
      _
    // Predicated region
    $region58: #{tpu_custom_call.1} parent=1 // pred_check
      _
    $region59: #{tpu_custom_call.1} parent=1 // pred_check_branch
      %180 = sbr.rel (0) target = $region61
    $region60: #{tpu_custom_call.1} parent=1 // pred_region
      %s182 = ssub.s32 16384, 16384
      %183 = vsyncadd [#allocation24], %s182
      %s184 = sshll.u32 [#allocation23], 4
      %s185 = int_to_ptr.vmem [resolvable:$true] %s184
      %190 = dma.hbm_to_vmem [thread:$0]  %s14, 16384, %s185, [#allocation24], 1024, 1024, 64
    $region61: #{tpu_custom_call.1} parent=1 // pred_fallthru
      _
    // Predicated region
    $region62: #{tpu_custom_call.1} parent=1 // pred_check
      _
    $region63: #{tpu_custom_call.1} parent=1 // pred_check_branch
      %192 = sbr.rel (0) target = $region65
    $region64: #{tpu_custom_call.1} parent=1 // pred_region
      %s194 = ssub.s32 16384, 16384
      %195 = vsyncadd [#allocation24], %s194
      %s196 = sshll.u32 [#allocation25], 4
      %s197 = int_to_ptr.vmem [resolvable:$true] %s196
      %202 = dma.hbm_to_vmem [thread:$0]  %s15, 16384, %s197, [#allocation24], 128, 128, 8
    $region65: #{tpu_custom_call.1} parent=1 // pred_fallthru
      _
    // Predicated region
    $region66: #{tpu_custom_call.1} parent=1 // pred_check
      _
    $region67: #{tpu_custom_call.1} parent=1 // pred_check_branch
      %204 = sbr.rel (0) target = $region69
    $region68: #{tpu_custom_call.1} parent=1 // pred_region
      _
    $region69: #{tpu_custom_call.1} parent=1 // pred_fallthru
      _
    // Predicated region
    $region70: #{tpu_custom_call.1} parent=1 // pred_check
      _
    $region71: #{tpu_custom_call.1} parent=1 // pred_check_branch
      %206 = sbr.rel (0) target = $region73
    $region72: #{tpu_custom_call.1} parent=1 // pred_region
      %s208 = ssub.s32 3072, 3072
      %209 = vsyncadd [#allocation27], %s208
      %s210 = sshll.u32 [#allocation26], 4
      %s211 = int_to_ptr.vmem [resolvable:$true] %s210
      %216 = dma.hbm_to_vmem [thread:$0]  %s17, 3072, %s211, [#allocation27], 128, 128, 8
    $region73: #{tpu_custom_call.1} parent=1 // pred_fallthru
      _
    // Predicated region
    $region74: #{tpu_custom_call.1} parent=1 // pred_check
      _
    $region75: #{tpu_custom_call.1} parent=1 // pred_check_branch
      %218 = sbr.rel (0) target = $region77
    $region76: #{tpu_custom_call.1} parent=1 // pred_region
      %219 = dma.done [#allocation3], 256
    $region77: #{tpu_custom_call.1} parent=1 // pred_fallthru
      _
    // Predicated region
    $region78: #{tpu_custom_call.1} parent=1 // pred_check
      _
    $region79: #{tpu_custom_call.1} parent=1 // pred_check_branch
      %221 = sbr.rel (0) target = $region81
    $region80: #{tpu_custom_call.1} parent=1 // pred_region
      %222 = dma.done [#allocation6], 384
    $region81: #{tpu_custom_call.1} parent=1 // pred_fallthru
      _
    // Predicated region
    $region82: #{tpu_custom_call.1} parent=1 // pred_check
      _
    $region83: #{tpu_custom_call.1} parent=1 // pred_check_branch
      %224 = sbr.rel (0) target = $region85
    $region84: #{tpu_custom_call.1} parent=1 // pred_region
      %225 = dma.done [#allocation6], 48
    $region85: #{tpu_custom_call.1} parent=1 // pred_fallthru
      _
    // Predicated region
    $region86: #{tpu_custom_call.1} parent=1 // pred_check
      _
    $region87: #{tpu_custom_call.1} parent=1 // pred_check_branch
      %227 = sbr.rel (0) target = $region89
    $region88: #{tpu_custom_call.1} parent=1 // pred_region
      %228 = dma.done [#allocation9], 27648
    $region89: #{tpu_custom_call.1} parent=1 // pred_fallthru
      _
    // Predicated region
    $region90: #{tpu_custom_call.1} parent=1 // pred_check
      _
    $region91: #{tpu_custom_call.1} parent=1 // pred_check_branch
      %230 = sbr.rel (0) target = $region93
    $region92: #{tpu_custom_call.1} parent=1 // pred_region
      %231 = dma.done [#allocation9], 96
    $region93: #{tpu_custom_call.1} parent=1 // pred_fallthru
      _
    // Predicated region
    $region94: #{tpu_custom_call.1} parent=1 // pred_check
      _
    $region95: #{tpu_custom_call.1} parent=1 // pred_check_branch
      %233 = sbr.rel (0) target = $region97
    $region96: #{tpu_custom_call.1} parent=1 // pred_region
      %234 = dma.done [#allocation12], 36864
    $region97: #{tpu_custom_call.1} parent=1 // pred_fallthru
      _
    // Predicated region
    $region98: #{tpu_custom_call.1} parent=1 // pred_check
      _
    $region99: #{tpu_custom_call.1} parent=1 // pred_check_branch
      %236 = sbr.rel (0) target = $region101
    $region100: #{tpu_custom_call.1} parent=1 // pred_region
      %237 = dma.done [#allocation12], 128
    $region101: #{tpu_custom_call.1} parent=1 // pred_fallthru
      _
    // Predicated region
    $region102: #{tpu_custom_call.1} parent=1 // pred_check
      _
    $region103: #{tpu_custom_call.1} parent=1 // pred_check_branch
      %239 = sbr.rel (0) target = $region105
    $region104: #{tpu_custom_call.1} parent=1 // pred_region
      %240 = dma.done [#allocation15], 9216
    $region105: #{tpu_custom_call.1} parent=1 // pred_fallthru
      _
    // Predicated region
    $region106: #{tpu_custom_call.1} parent=1 // pred_check
      _
    $region107: #{tpu_custom_call.1} parent=1 // pred_check_branch
      %242 = sbr.rel (0) target = $region109
    $region108: #{tpu_custom_call.1} parent=1 // pred_region
      %243 = dma.done [#allocation15], 32
    $region109: #{tpu_custom_call.1} parent=1 // pred_fallthru
      _
    // Predicated region
    $region110: #{tpu_custom_call.1} parent=1 // pred_check
      _
    $region111: #{tpu_custom_call.1} parent=1 // pred_check_branch
      %245 = sbr.rel (0) target = $region113
    $region112: #{tpu_custom_call.1} parent=1 // pred_region
      %246 = dma.done [#allocation18], 27648
    $region113: #{tpu_custom_call.1} parent=1 // pred_fallthru
      _
    // Predicated region
    $region114: #{tpu_custom_call.1} parent=1 // pred_check
      _
    $region115: #{tpu_custom_call.1} parent=1 // pred_check_branch
      %248 = sbr.rel (0) target = $region117
    $region116: #{tpu_custom_call.1} parent=1 // pred_region
      %249 = dma.done [#allocation18], 96
    $region117: #{tpu_custom_call.1} parent=1 // pred_fallthru
      _
    // Predicated region
    $region118: #{tpu_custom_call.1} parent=1 // pred_check
      _
    $region119: #{tpu_custom_call.1} parent=1 // pred_check_branch
      %251 = sbr.rel (0) target = $region121
    $region120: #{tpu_custom_call.1} parent=1 // pred_region
      %252 = dma.done [#allocation21], 2304
    $region121: #{tpu_custom_call.1} parent=1 // pred_fallthru
      _
    // Predicated region
    $region122: #{tpu_custom_call.1} parent=1 // pred_check
      _
    $region123: #{tpu_custom_call.1} parent=1 // pred_check_branch
      %254 = sbr.rel (0) target = $region125
    $region124: #{tpu_custom_call.1} parent=1 // pred_region
      %255 = dma.done [#allocation21], 12288
    $region125: #{tpu_custom_call.1} parent=1 // pred_fallthru
      _
    // Predicated region
    $region126: #{tpu_custom_call.1} parent=1 // pred_check
      _
    $region127: #{tpu_custom_call.1} parent=1 // pred_check_branch
      %257 = sbr.rel (0) target = $region129
    $region128: #{tpu_custom_call.1} parent=1 // pred_region
      %258 = dma.done [#allocation24], 16384
    $region129: #{tpu_custom_call.1} parent=1 // pred_fallthru
      _
    // Predicated region
    $region130: #{tpu_custom_call.1} parent=1 // pred_check
      _
    $region131: #{tpu_custom_call.1} parent=1 // pred_check_branch
      %260 = sbr.rel (0) target = $region133
    $region132: #{tpu_custom_call.1} parent=1 // pred_region
      %261 = dma.done [#allocation24], 16384
    $region133: #{tpu_custom_call.1} parent=1 // pred_fallthru
      _
    // Predicated region
    $region134: #{tpu_custom_call.1} parent=1 // pred_check
      _
    $region135: #{tpu_custom_call.1} parent=1 // pred_check_branch
      %263 = sbr.rel (0) target = $region137
    $region136: #{tpu_custom_call.1} parent=1 // pred_region
      %264 = dma.done [#allocation27], 3072
    $region137: #{tpu_custom_call.1} parent=1 // pred_fallthru
      _
    %v265 = vld [vmem:[#allocation5] sm:$0xff]
    %v266 = vld [vmem:[#allocation5 + $0x8] sm:$0xff]
    %v267 = vld [vmem:[#allocation5 + $0x10] sm:$0xff]
    %v268 = vld [vmem:[#allocation7] sm:$0x7]
    %v269 = vld [vmem:[#allocation8] sm:$0xff]
    %v270 = vld [vmem:[#allocation8 + $0x8] sm:$0xff]
    %v271 = vld [vmem:[#allocation8 + $0x10] sm:$0xff]
    %v272 = vld [vmem:[#allocation8 + $0x18] sm:$0xff]
    %v273 = vld [vmem:[#allocation8 + $0x20] sm:$0xff]
    %v274 = vld [vmem:[#allocation8 + $0x28] sm:$0xff]
    %v275 = vld [vmem:[#allocation8 + $0x30] sm:$0xff]
    %v276 = vld [vmem:[#allocation8 + $0x38] sm:$0xff]
    %v277 = vld [vmem:[#allocation8 + $0x40] sm:$0xff]
    %v278 = vld [vmem:[#allocation8 + $0x48] sm:$0xff]
    %v279 = vld [vmem:[#allocation8 + $0x50] sm:$0xff]
    %v280 = vld [vmem:[#allocation8 + $0x58] sm:$0xff]
    %v281 = vld [vmem:[#allocation8 + $0x60] sm:$0xff]
    %v282 = vld [vmem:[#allocation8 + $0x68] sm:$0xff]
    %v283 = vld [vmem:[#allocation8 + $0x70] sm:$0xff]
    %v284 = vld [vmem:[#allocation8 + $0x78] sm:$0xff]
    %v285 = vld [vmem:[#allocation8 + $0x80] sm:$0xff]
    %v286 = vld [vmem:[#allocation8 + $0x88] sm:$0xff]
    %v287 = vld [vmem:[#allocation8 + $0x90] sm:$0xff]
    %v288 = vld [vmem:[#allocation8 + $0x98] sm:$0xff]
    %v289 = vld [vmem:[#allocation8 + $0xa0] sm:$0xff]
    %v290 = vld [vmem:[#allocation8 + $0xa8] sm:$0xff]
    %v291 = vld [vmem:[#allocation8 + $0xb0] sm:$0xff]
    %v292 = vld [vmem:[#allocation8 + $0xb8] sm:$0xff]
    %v293 = vld [vmem:[#allocation8 + $0xc0] sm:$0xff]
    %v294 = vld [vmem:[#allocation8 + $0xc8] sm:$0xff]
    %v295 = vld [vmem:[#allocation8 + $0xd0] sm:$0xff]
    %v296 = vld [vmem:[#allocation8 + $0xd8] sm:$0xff]
    %v297 = vld [vmem:[#allocation8 + $0xe0] sm:$0xff]
    %v298 = vld [vmem:[#allocation8 + $0xe8] sm:$0xff]
    %v299 = vld [vmem:[#allocation8 + $0xf0] sm:$0xff]
    %v300 = vld [vmem:[#allocation8 + $0xf8] sm:$0xff]
    %v301 = vld [vmem:[#allocation8 + $0x100] sm:$0xff]
    %v302 = vld [vmem:[#allocation8 + $0x108] sm:$0xff]
    %v303 = vld [vmem:[#allocation8 + $0x110] sm:$0xff]
    %v304 = vld [vmem:[#allocation8 + $0x118] sm:$0xff]
    %v305 = vld [vmem:[#allocation8 + $0x120] sm:$0xff]
    %v306 = vld [vmem:[#allocation8 + $0x128] sm:$0xff]
    %v307 = vld [vmem:[#allocation8 + $0x130] sm:$0xff]
    %v308 = vld [vmem:[#allocation8 + $0x138] sm:$0xff]
    %v309 = vld [vmem:[#allocation8 + $0x140] sm:$0xff]
    %v310 = vld [vmem:[#allocation8 + $0x148] sm:$0xff]
    %v311 = vld [vmem:[#allocation8 + $0x150] sm:$0xff]
    %v312 = vld [vmem:[#allocation8 + $0x158] sm:$0xff]
    %v313 = vld [vmem:[#allocation8 + $0x160] sm:$0xff]
    %v314 = vld [vmem:[#allocation8 + $0x168] sm:$0xff]
    %v315 = vld [vmem:[#allocation8 + $0x170] sm:$0xff]
    %v316 = vld [vmem:[#allocation8 + $0x178] sm:$0xff]
    %v317 = vld [vmem:[#allocation8 + $0x180] sm:$0xff]
    %v318 = vld [vmem:[#allocation8 + $0x188] sm:$0xff]
    %v319 = vld [vmem:[#allocation8 + $0x190] sm:$0xff]
    %v320 = vld [vmem:[#allocation8 + $0x198] sm:$0xff]
    %v321 = vld [vmem:[#allocation8 + $0x1a0] sm:$0xff]
    %v322 = vld [vmem:[#allocation8 + $0x1a8] sm:$0xff]
    %v323 = vld [vmem:[#allocation8 + $0x1b0] sm:$0xff]
    %v324 = vld [vmem:[#allocation8 + $0x1b8] sm:$0xff]
    %v325 = vld [vmem:[#allocation8 + $0x1c0] sm:$0xff]
    %v326 = vld [vmem:[#allocation8 + $0x1c8] sm:$0xff]
    %v327 = vld [vmem:[#allocation8 + $0x1d0] sm:$0xff]
    %v328 = vld [vmem:[#allocation8 + $0x1d8] sm:$0xff]
    %v329 = vld [vmem:[#allocation8 + $0x1e0] sm:$0xff]
    %v330 = vld [vmem:[#allocation8 + $0x1e8] sm:$0xff]
    %v331 = vld [vmem:[#allocation8 + $0x1f0] sm:$0xff]
    %v332 = vld [vmem:[#allocation8 + $0x1f8] sm:$0xff]
    %v333 = vld [vmem:[#allocation8 + $0x200] sm:$0xff]
    %v334 = vld [vmem:[#allocation8 + $0x208] sm:$0xff]
    %v335 = vld [vmem:[#allocation8 + $0x210] sm:$0xff]
    %v336 = vld [vmem:[#allocation8 + $0x218] sm:$0xff]
    %v337 = vld [vmem:[#allocation8 + $0x220] sm:$0xff]
    %v338 = vld [vmem:[#allocation8 + $0x228] sm:$0xff]
    %v339 = vld [vmem:[#allocation8 + $0x230] sm:$0xff]
    %v340 = vld [vmem:[#allocation8 + $0x238] sm:$0xff]
    %v341 = vld [vmem:[#allocation8 + $0x240] sm:$0xff]
    %v342 = vld [vmem:[#allocation8 + $0x248] sm:$0xff]
    %v343 = vld [vmem:[#allocation8 + $0x250] sm:$0xff]
    %v344 = vld [vmem:[#allocation8 + $0x258] sm:$0xff]
    %v345 = vld [vmem:[#allocation8 + $0x260] sm:$0xff]
    %v346 = vld [vmem:[#allocation8 + $0x268] sm:$0xff]
    %v347 = vld [vmem:[#allocation8 + $0x270] sm:$0xff]
    %v348 = vld [vmem:[#allocation8 + $0x278] sm:$0xff]
    %v349 = vld [vmem:[#allocation8 + $0x280] sm:$0xff]
    %v350 = vld [vmem:[#allocation8 + $0x288] sm:$0xff]
    %v351 = vld [vmem:[#allocation8 + $0x290] sm:$0xff]
    %v352 = vld [vmem:[#allocation8 + $0x298] sm:$0xff]
    %v353 = vld [vmem:[#allocation8 + $0x2a0] sm:$0xff]
    %v354 = vld [vmem:[#allocation8 + $0x2a8] sm:$0xff]
    %v355 = vld [vmem:[#allocation8 + $0x2b0] sm:$0xff]
    %v356 = vld [vmem:[#allocation8 + $0x2b8] sm:$0xff]
    %v357 = vld [vmem:[#allocation8 + $0x2c0] sm:$0xff]
    %v358 = vld [vmem:[#allocation8 + $0x2c8] sm:$0xff]
    %v359 = vld [vmem:[#allocation8 + $0x2d0] sm:$0xff]
    %v360 = vld [vmem:[#allocation8 + $0x2d8] sm:$0xff]
    %v361 = vld [vmem:[#allocation8 + $0x2e0] sm:$0xff]
    %v362 = vld [vmem:[#allocation8 + $0x2e8] sm:$0xff]
    %v363 = vld [vmem:[#allocation8 + $0x2f0] sm:$0xff]
    %v364 = vld [vmem:[#allocation8 + $0x2f8] sm:$0xff]
    %v365 = vld [vmem:[#allocation8 + $0x300] sm:$0xff]
    %v366 = vld [vmem:[#allocation8 + $0x308] sm:$0xff]
    %v367 = vld [vmem:[#allocation8 + $0x310] sm:$0xff]
    %v368 = vld [vmem:[#allocation8 + $0x318] sm:$0xff]
    %v369 = vld [vmem:[#allocation8 + $0x320] sm:$0xff]
    %v370 = vld [vmem:[#allocation8 + $0x328] sm:$0xff]
    %v371 = vld [vmem:[#allocation8 + $0x330] sm:$0xff]
    %v372 = vld [vmem:[#allocation8 + $0x338] sm:$0xff]
    %v373 = vld [vmem:[#allocation8 + $0x340] sm:$0xff]
    %v374 = vld [vmem:[#allocation8 + $0x348] sm:$0xff]
    %v375 = vld [vmem:[#allocation8 + $0x350] sm:$0xff]
    %v376 = vld [vmem:[#allocation8 + $0x358] sm:$0xff]
    %v377 = vld [vmem:[#allocation8 + $0x360] sm:$0xff]
    %v378 = vld [vmem:[#allocation8 + $0x368] sm:$0xff]
    %v379 = vld [vmem:[#allocation8 + $0x370] sm:$0xff]
    %v380 = vld [vmem:[#allocation8 + $0x378] sm:$0xff]
    %v381 = vld [vmem:[#allocation8 + $0x380] sm:$0xff]
    %v382 = vld [vmem:[#allocation8 + $0x388] sm:$0xff]
    %v383 = vld [vmem:[#allocation8 + $0x390] sm:$0xff]
    %v384 = vld [vmem:[#allocation8 + $0x398] sm:$0xff]
    %v385 = vld [vmem:[#allocation8 + $0x3a0] sm:$0xff]
    %v386 = vld [vmem:[#allocation8 + $0x3a8] sm:$0xff]
    %v387 = vld [vmem:[#allocation8 + $0x3b0] sm:$0xff]
    %v388 = vld [vmem:[#allocation8 + $0x3b8] sm:$0xff]
    %v389 = vld [vmem:[#allocation8 + $0x3c0] sm:$0xff]
    %v390 = vld [vmem:[#allocation8 + $0x3c8] sm:$0xff]
    %v391 = vld [vmem:[#allocation8 + $0x3d0] sm:$0xff]
    %v392 = vld [vmem:[#allocation8 + $0x3d8] sm:$0xff]
    %v393 = vld [vmem:[#allocation8 + $0x3e0] sm:$0xff]
    %v394 = vld [vmem:[#allocation8 + $0x3e8] sm:$0xff]
    %v395 = vld [vmem:[#allocation8 + $0x3f0] sm:$0xff]
    %v396 = vld [vmem:[#allocation8 + $0x3f8] sm:$0xff]
    %v397 = vld [vmem:[#allocation8 + $0x400] sm:$0xff]
    %v398 = vld [vmem:[#allocation8 + $0x408] sm:$0xff]
    %v399 = vld [vmem:[#allocation8 + $0x410] sm:$0xff]
    %v400 = vld [vmem:[#allocation8 + $0x418] sm:$0xff]
    %v401 = vld [vmem:[#allocation8 + $0x420] sm:$0xff]
    %v402 = vld [vmem:[#allocation8 + $0x428] sm:$0xff]
    %v403 = vld [vmem:[#allocation8 + $0x430] sm:$0xff]
    %v404 = vld [vmem:[#allocation8 + $0x438] sm:$0xff]
    %v405 = vld [vmem:[#allocation8 + $0x440] sm:$0xff]
    %v406 = vld [vmem:[#allocation8 + $0x448] sm:$0xff]
    %v407 = vld [vmem:[#allocation8 + $0x450] sm:$0xff]
    %v408 = vld [vmem:[#allocation8 + $0x458] sm:$0xff]
    %v409 = vld [vmem:[#allocation8 + $0x460] sm:$0xff]
    %v410 = vld [vmem:[#allocation8 + $0x468] sm:$0xff]
    %v411 = vld [vmem:[#allocation8 + $0x470] sm:$0xff]
    %v412 = vld [vmem:[#allocation8 + $0x478] sm:$0xff]
    %v413 = vld [vmem:[#allocation8 + $0x480] sm:$0xff]
    %v414 = vld [vmem:[#allocation8 + $0x488] sm:$0xff]
    %v415 = vld [vmem:[#allocation8 + $0x490] sm:$0xff]
    %v416 = vld [vmem:[#allocation8 + $0x498] sm:$0xff]
    %v417 = vld [vmem:[#allocation8 + $0x4a0] sm:$0xff]
    %v418 = vld [vmem:[#allocation8 + $0x4a8] sm:$0xff]
    %v419 = vld [vmem:[#allocation8 + $0x4b0] sm:$0xff]
    %v420 = vld [vmem:[#allocation8 + $0x4b8] sm:$0xff]
    %v421 = vld [vmem:[#allocation8 + $0x4c0] sm:$0xff]
    %v422 = vld [vmem:[#allocation8 + $0x4c8] sm:$0xff]
    %v423 = vld [vmem:[#allocation8 + $0x4d0] sm:$0xff]
    %v424 = vld [vmem:[#allocation8 + $0x4d8] sm:$0xff]
    %v425 = vld [vmem:[#allocation8 + $0x4e0] sm:$0xff]
    %v426 = vld [vmem:[#allocation8 + $0x4e8] sm:$0xff]
    %v427 = vld [vmem:[#allocation8 + $0x4f0] sm:$0xff]
    %v428 = vld [vmem:[#allocation8 + $0x4f8] sm:$0xff]
    %v429 = vld [vmem:[#allocation8 + $0x500] sm:$0xff]
    %v430 = vld [vmem:[#allocation8 + $0x508] sm:$0xff]
    %v431 = vld [vmem:[#allocation8 + $0x510] sm:$0xff]
    %v432 = vld [vmem:[#allocation8 + $0x518] sm:$0xff]
    %v433 = vld [vmem:[#allocation8 + $0x520] sm:$0xff]
    %v434 = vld [vmem:[#allocation8 + $0x528] sm:$0xff]
    %v435 = vld [vmem:[#allocation8 + $0x530] sm:$0xff]
    %v436 = vld [vmem:[#allocation8 + $0x538] sm:$0xff]
    %v437 = vld [vmem:[#allocation8 + $0x540] sm:$0xff]
    %v438 = vld [vmem:[#allocation8 + $0x548] sm:$0xff]
    %v439 = vld [vmem:[#allocation8 + $0x550] sm:$0xff]
    %v440 = vld [vmem:[#allocation8 + $0x558] sm:$0xff]
    %v441 = vld [vmem:[#allocation8 + $0x560] sm:$0xff]
    %v442 = vld [vmem:[#allocation8 + $0x568] sm:$0xff]
    %v443 = vld [vmem:[#allocation8 + $0x570] sm:$0xff]
    %v444 = vld [vmem:[#allocation8 + $0x578] sm:$0xff]
    %v445 = vld [vmem:[#allocation8 + $0x580] sm:$0xff]
    %v446 = vld [vmem:[#allocation8 + $0x588] sm:$0xff]
    %v447 = vld [vmem:[#allocation8 + $0x590] sm:$0xff]
    %v448 = vld [vmem:[#allocation8 + $0x598] sm:$0xff]
    %v449 = vld [vmem:[#allocation8 + $0x5a0] sm:$0xff]
    %v450 = vld [vmem:[#allocation8 + $0x5a8] sm:$0xff]
    %v451 = vld [vmem:[#allocation8 + $0x5b0] sm:$0xff]
    %v452 = vld [vmem:[#allocation8 + $0x5b8] sm:$0xff]
    %v453 = vld [vmem:[#allocation8 + $0x5c0] sm:$0xff]
    %v454 = vld [vmem:[#allocation8 + $0x5c8] sm:$0xff]
    %v455 = vld [vmem:[#allocation8 + $0x5d0] sm:$0xff]
    %v456 = vld [vmem:[#allocation8 + $0x5d8] sm:$0xff]
    %v457 = vld [vmem:[#allocation8 + $0x5e0] sm:$0xff]
    %v458 = vld [vmem:[#allocation8 + $0x5e8] sm:$0xff]
    %v459 = vld [vmem:[#allocation8 + $0x5f0] sm:$0xff]
    %v460 = vld [vmem:[#allocation8 + $0x5f8] sm:$0xff]
    %v461 = vld [vmem:[#allocation8 + $0x600] sm:$0xff]
    %v462 = vld [vmem:[#allocation8 + $0x608] sm:$0xff]
    %v463 = vld [vmem:[#allocation8 + $0x610] sm:$0xff]
    %v464 = vld [vmem:[#allocation8 + $0x618] sm:$0xff]
    %v465 = vld [vmem:[#allocation8 + $0x620] sm:$0xff]
    %v466 = vld [vmem:[#allocation8 + $0x628] sm:$0xff]
    %v467 = vld [vmem:[#allocation8 + $0x630] sm:$0xff]
    %v468 = vld [vmem:[#allocation8 + $0x638] sm:$0xff]
    %v469 = vld [vmem:[#allocation8 + $0x640] sm:$0xff]
    %v470 = vld [vmem:[#allocation8 + $0x648] sm:$0xff]
    %v471 = vld [vmem:[#allocation8 + $0x650] sm:$0xff]
    %v472 = vld [vmem:[#allocation8 + $0x658] sm:$0xff]
    %v473 = vld [vmem:[#allocation8 + $0x660] sm:$0xff]
    %v474 = vld [vmem:[#allocation8 + $0x668] sm:$0xff]
    %v475 = vld [vmem:[#allocation8 + $0x670] sm:$0xff]
    %v476 = vld [vmem:[#allocation8 + $0x678] sm:$0xff]
    %v477 = vld [vmem:[#allocation8 + $0x680] sm:$0xff]
    %v478 = vld [vmem:[#allocation8 + $0x688] sm:$0xff]
    %v479 = vld [vmem:[#allocation8 + $0x690] sm:$0xff]
    %v480 = vld [vmem:[#allocation8 + $0x698] sm:$0xff]
    %v481 = vld [vmem:[#allocation8 + $0x6a0] sm:$0xff]
    %v482 = vld [vmem:[#allocation8 + $0x6a8] sm:$0xff]
    %v483 = vld [vmem:[#allocation8 + $0x6b0] sm:$0xff]
    %v484 = vld [vmem:[#allocation8 + $0x6b8] sm:$0xff]
    %v485 = vld [vmem:[#allocation10] sm:$0x3f]
    %v486 = vld [vmem:[#allocation11] sm:$0xff]
    %v487 = vld [vmem:[#allocation11 + $0x8] sm:$0xff]
    %v488 = vld [vmem:[#allocation11 + $0x10] sm:$0xff]
    %v489 = vld [vmem:[#allocation11 + $0x18] sm:$0xff]
    %v490 = vld [vmem:[#allocation11 + $0x20] sm:$0xff]
    %v491 = vld [vmem:[#allocation11 + $0x28] sm:$0xff]
    %v492 = vld [vmem:[#allocation11 + $0x30] sm:$0xff]
    %v493 = vld [vmem:[#allocation11 + $0x38] sm:$0xff]
    %v494 = vld [vmem:[#allocation11 + $0x40] sm:$0xff]
    %v495 = vld [vmem:[#allocation11 + $0x48] sm:$0xff]
    %v496 = vld [vmem:[#allocation11 + $0x50] sm:$0xff]
    %v497 = vld [vmem:[#allocation11 + $0x58] sm:$0xff]
    %v498 = vld [vmem:[#allocation11 + $0x60] sm:$0xff]
    %v499 = vld [vmem:[#allocation11 + $0x68] sm:$0xff]
    %v500 = vld [vmem:[#allocation11 + $0x70] sm:$0xff]
    %v501 = vld [vmem:[#allocation11 + $0x78] sm:$0xff]
    %v502 = vld [vmem:[#allocation11 + $0x80] sm:$0xff]
    %v503 = vld [vmem:[#allocation11 + $0x88] sm:$0xff]
    %v504 = vld [vmem:[#allocation11 + $0x90] sm:$0xff]
    %v505 = vld [vmem:[#allocation11 + $0x98] sm:$0xff]
    %v506 = vld [vmem:[#allocation11 + $0xa0] sm:$0xff]
    %v507 = vld [vmem:[#allocation11 + $0xa8] sm:$0xff]
    %v508 = vld [vmem:[#allocation11 + $0xb0] sm:$0xff]
    %v509 = vld [vmem:[#allocation11 + $0xb8] sm:$0xff]
    %v510 = vld [vmem:[#allocation11 + $0xc0] sm:$0xff]
    %v511 = vld [vmem:[#allocation11 + $0xc8] sm:$0xff]
    %v512 = vld [vmem:[#allocation11 + $0xd0] sm:$0xff]
    %v513 = vld [vmem:[#allocation11 + $0xd8] sm:$0xff]
    %v514 = vld [vmem:[#allocation11 + $0xe0] sm:$0xff]
    %v515 = vld [vmem:[#allocation11 + $0xe8] sm:$0xff]
    %v516 = vld [vmem:[#allocation11 + $0xf0] sm:$0xff]
    %v517 = vld [vmem:[#allocation11 + $0xf8] sm:$0xff]
    %v518 = vld [vmem:[#allocation11 + $0x100] sm:$0xff]
    %v519 = vld [vmem:[#allocation11 + $0x108] sm:$0xff]
    %v520 = vld [vmem:[#allocation11 + $0x110] sm:$0xff]
    %v521 = vld [vmem:[#allocation11 + $0x118] sm:$0xff]
    %v522 = vld [vmem:[#allocation11 + $0x120] sm:$0xff]
    %v523 = vld [vmem:[#allocation11 + $0x128] sm:$0xff]
    %v524 = vld [vmem:[#allocation11 + $0x130] sm:$0xff]
    %v525 = vld [vmem:[#allocation11 + $0x138] sm:$0xff]
    %v526 = vld [vmem:[#allocation11 + $0x140] sm:$0xff]
    %v527 = vld [vmem:[#allocation11 + $0x148] sm:$0xff]
    %v528 = vld [vmem:[#allocation11 + $0x150] sm:$0xff]
    %v529 = vld [vmem:[#allocation11 + $0x158] sm:$0xff]
    %v530 = vld [vmem:[#allocation11 + $0x160] sm:$0xff]
    %v531 = vld [vmem:[#allocation11 + $0x168] sm:$0xff]
    %v532 = vld [vmem:[#allocation11 + $0x170] sm:$0xff]
    %v533 = vld [vmem:[#allocation11 + $0x178] sm:$0xff]
    %v534 = vld [vmem:[#allocation11 + $0x180] sm:$0xff]
    %v535 = vld [vmem:[#allocation11 + $0x188] sm:$0xff]
    %v536 = vld [vmem:[#allocation11 + $0x190] sm:$0xff]
    %v537 = vld [vmem:[#allocation11 + $0x198] sm:$0xff]
    %v538 = vld [vmem:[#allocation11 + $0x1a0] sm:$0xff]
    %v539 = vld [vmem:[#allocation11 + $0x1a8] sm:$0xff]
    %v540 = vld [vmem:[#allocation11 + $0x1b0] sm:$0xff]
    %v541 = vld [vmem:[#allocation11 + $0x1b8] sm:$0xff]
    %v542 = vld [vmem:[#allocation11 + $0x1c0] sm:$0xff]
    %v543 = vld [vmem:[#allocation11 + $0x1c8] sm:$0xff]
    %v544 = vld [vmem:[#allocation11 + $0x1d0] sm:$0xff]
    %v545 = vld [vmem:[#allocation11 + $0x1d8] sm:$0xff]
    %v546 = vld [vmem:[#allocation11 + $0x1e0] sm:$0xff]
    %v547 = vld [vmem:[#allocation11 + $0x1e8] sm:$0xff]
    %v548 = vld [vmem:[#allocation11 + $0x1f0] sm:$0xff]
    %v549 = vld [vmem:[#allocation11 + $0x1f8] sm:$0xff]
    %v550 = vld [vmem:[#allocation11 + $0x200] sm:$0xff]
    %v551 = vld [vmem:[#allocation11 + $0x208] sm:$0xff]
    %v552 = vld [vmem:[#allocation11 + $0x210] sm:$0xff]
    %v553 = vld [vmem:[#allocation11 + $0x218] sm:$0xff]
    %v554 = vld [vmem:[#allocation11 + $0x220] sm:$0xff]
    %v555 = vld [vmem:[#allocation11 + $0x228] sm:$0xff]
    %v556 = vld [vmem:[#allocation11 + $0x230] sm:$0xff]
    %v557 = vld [vmem:[#allocation11 + $0x238] sm:$0xff]
    %v558 = vld [vmem:[#allocation11 + $0x240] sm:$0xff]
    %v559 = vld [vmem:[#allocation11 + $0x248] sm:$0xff]
    %v560 = vld [vmem:[#allocation11 + $0x250] sm:$0xff]
    %v561 = vld [vmem:[#allocation11 + $0x258] sm:$0xff]
    %v562 = vld [vmem:[#allocation11 + $0x260] sm:$0xff]
    %v563 = vld [vmem:[#allocation11 + $0x268] sm:$0xff]
    %v564 = vld [vmem:[#allocation11 + $0x270] sm:$0xff]
    %v565 = vld [vmem:[#allocation11 + $0x278] sm:$0xff]
    %v566 = vld [vmem:[#allocation11 + $0x280] sm:$0xff]
    %v567 = vld [vmem:[#allocation11 + $0x288] sm:$0xff]
    %v568 = vld [vmem:[#allocation11 + $0x290] sm:$0xff]
    %v569 = vld [vmem:[#allocation11 + $0x298] sm:$0xff]
    %v570 = vld [vmem:[#allocation11 + $0x2a0] sm:$0xff]
    %v571 = vld [vmem:[#allocation11 + $0x2a8] sm:$0xff]
    %v572 = vld [vmem:[#allocation11 + $0x2b0] sm:$0xff]
    %v573 = vld [vmem:[#allocation11 + $0x2b8] sm:$0xff]
    %v574 = vld [vmem:[#allocation11 + $0x2c0] sm:$0xff]
    %v575 = vld [vmem:[#allocation11 + $0x2c8] sm:$0xff]
    %v576 = vld [vmem:[#allocation11 + $0x2d0] sm:$0xff]
    %v577 = vld [vmem:[#allocation11 + $0x2d8] sm:$0xff]
    %v578 = vld [vmem:[#allocation11 + $0x2e0] sm:$0xff]
    %v579 = vld [vmem:[#allocation11 + $0x2e8] sm:$0xff]
    %v580 = vld [vmem:[#allocation11 + $0x2f0] sm:$0xff]
    %v581 = vld [vmem:[#allocation11 + $0x2f8] sm:$0xff]
    %v582 = vld [vmem:[#allocation11 + $0x300] sm:$0xff]
    %v583 = vld [vmem:[#allocation11 + $0x308] sm:$0xff]
    %v584 = vld [vmem:[#allocation11 + $0x310] sm:$0xff]
    %v585 = vld [vmem:[#allocation11 + $0x318] sm:$0xff]
    %v586 = vld [vmem:[#allocation11 + $0x320] sm:$0xff]
    %v587 = vld [vmem:[#allocation11 + $0x328] sm:$0xff]
    %v588 = vld [vmem:[#allocation11 + $0x330] sm:$0xff]
    %v589 = vld [vmem:[#allocation11 + $0x338] sm:$0xff]
    %v590 = vld [vmem:[#allocation11 + $0x340] sm:$0xff]
    %v591 = vld [vmem:[#allocation11 + $0x348] sm:$0xff]
    %v592 = vld [vmem:[#allocation11 + $0x350] sm:$0xff]
    %v593 = vld [vmem:[#allocation11 + $0x358] sm:$0xff]
    %v594 = vld [vmem:[#allocation11 + $0x360] sm:$0xff]
    %v595 = vld [vmem:[#allocation11 + $0x368] sm:$0xff]
    %v596 = vld [vmem:[#allocation11 + $0x370] sm:$0xff]
    %v597 = vld [vmem:[#allocation11 + $0x378] sm:$0xff]
    %v598 = vld [vmem:[#allocation11 + $0x380] sm:$0xff]
    %v599 = vld [vmem:[#allocation11 + $0x388] sm:$0xff]
    %v600 = vld [vmem:[#allocation11 + $0x390] sm:$0xff]
    %v601 = vld [vmem:[#allocation11 + $0x398] sm:$0xff]
    %v602 = vld [vmem:[#allocation11 + $0x3a0] sm:$0xff]
    %v603 = vld [vmem:[#allocation11 + $0x3a8] sm:$0xff]
    %v604 = vld [vmem:[#allocation11 + $0x3b0] sm:$0xff]
    %v605 = vld [vmem:[#allocation11 + $0x3b8] sm:$0xff]
    %v606 = vld [vmem:[#allocation11 + $0x3c0] sm:$0xff]
    %v607 = vld [vmem:[#allocation11 + $0x3c8] sm:$0xff]
    %v608 = vld [vmem:[#allocation11 + $0x3d0] sm:$0xff]
    %v609 = vld [vmem:[#allocation11 + $0x3d8] sm:$0xff]
    %v610 = vld [vmem:[#allocation11 + $0x3e0] sm:$0xff]
    %v611 = vld [vmem:[#allocation11 + $0x3e8] sm:$0xff]
    %v612 = vld [vmem:[#allocation11 + $0x3f0] sm:$0xff]
    %v613 = vld [vmem:[#allocation11 + $0x3f8] sm:$0xff]
    %v614 = vld [vmem:[#allocation11 + $0x400] sm:$0xff]
    %v615 = vld [vmem:[#allocation11 + $0x408] sm:$0xff]
    %v616 = vld [vmem:[#allocation11 + $0x410] sm:$0xff]
    %v617 = vld [vmem:[#allocation11 + $0x418] sm:$0xff]
    %v618 = vld [vmem:[#allocation11 + $0x420] sm:$0xff]
    %v619 = vld [vmem:[#allocation11 + $0x428] sm:$0xff]
    %v620 = vld [vmem:[#allocation11 + $0x430] sm:$0xff]
    %v621 = vld [vmem:[#allocation11 + $0x438] sm:$0xff]
    %v622 = vld [vmem:[#allocation11 + $0x440] sm:$0xff]
    %v623 = vld [vmem:[#allocation11 + $0x448] sm:$0xff]
    %v624 = vld [vmem:[#allocation11 + $0x450] sm:$0xff]
    %v625 = vld [vmem:[#allocation11 + $0x458] sm:$0xff]
    %v626 = vld [vmem:[#allocation11 + $0x460] sm:$0xff]
    %v627 = vld [vmem:[#allocation11 + $0x468] sm:$0xff]
    %v628 = vld [vmem:[#allocation11 + $0x470] sm:$0xff]
    %v629 = vld [vmem:[#allocation11 + $0x478] sm:$0xff]
    %v630 = vld [vmem:[#allocation11 + $0x480] sm:$0xff]
    %v631 = vld [vmem:[#allocation11 + $0x488] sm:$0xff]
    %v632 = vld [vmem:[#allocation11 + $0x490] sm:$0xff]
    %v633 = vld [vmem:[#allocation11 + $0x498] sm:$0xff]
    %v634 = vld [vmem:[#allocation11 + $0x4a0] sm:$0xff]
    %v635 = vld [vmem:[#allocation11 + $0x4a8] sm:$0xff]
    %v636 = vld [vmem:[#allocation11 + $0x4b0] sm:$0xff]
    %v637 = vld [vmem:[#allocation11 + $0x4b8] sm:$0xff]
    %v638 = vld [vmem:[#allocation11 + $0x4c0] sm:$0xff]
    %v639 = vld [vmem:[#allocation11 + $0x4c8] sm:$0xff]
    %v640 = vld [vmem:[#allocation11 + $0x4d0] sm:$0xff]
    %v641 = vld [vmem:[#allocation11 + $0x4d8] sm:$0xff]
    %v642 = vld [vmem:[#allocation11 + $0x4e0] sm:$0xff]
    %v643 = vld [vmem:[#allocation11 + $0x4e8] sm:$0xff]
    %v644 = vld [vmem:[#allocation11 + $0x4f0] sm:$0xff]
    %v645 = vld [vmem:[#allocation11 + $0x4f8] sm:$0xff]
    %v646 = vld [vmem:[#allocation11 + $0x500] sm:$0xff]
    %v647 = vld [vmem:[#allocation11 + $0x508] sm:$0xff]
    %v648 = vld [vmem:[#allocation11 + $0x510] sm:$0xff]
    %v649 = vld [vmem:[#allocation11 + $0x518] sm:$0xff]
    %v650 = vld [vmem:[#allocation11 + $0x520] sm:$0xff]
    %v651 = vld [vmem:[#allocation11 + $0x528] sm:$0xff]
    %v652 = vld [vmem:[#allocation11 + $0x530] sm:$0xff]
    %v653 = vld [vmem:[#allocation11 + $0x538] sm:$0xff]
    %v654 = vld [vmem:[#allocation11 + $0x540] sm:$0xff]
    %v655 = vld [vmem:[#allocation11 + $0x548] sm:$0xff]
    %v656 = vld [vmem:[#allocation11 + $0x550] sm:$0xff]
    %v657 = vld [vmem:[#allocation11 + $0x558] sm:$0xff]
    %v658 = vld [vmem:[#allocation11 + $0x560] sm:$0xff]
    %v659 = vld [vmem:[#allocation11 + $0x568] sm:$0xff]
    %v660 = vld [vmem:[#allocation11 + $0x570] sm:$0xff]
    %v661 = vld [vmem:[#allocation11 + $0x578] sm:$0xff]
    %v662 = vld [vmem:[#allocation11 + $0x580] sm:$0xff]
    %v663 = vld [vmem:[#allocation11 + $0x588] sm:$0xff]
    %v664 = vld [vmem:[#allocation11 + $0x590] sm:$0xff]
    %v665 = vld [vmem:[#allocation11 + $0x598] sm:$0xff]
    %v666 = vld [vmem:[#allocation11 + $0x5a0] sm:$0xff]
    %v667 = vld [vmem:[#allocation11 + $0x5a8] sm:$0xff]
    %v668 = vld [vmem:[#allocation11 + $0x5b0] sm:$0xff]
    %v669 = vld [vmem:[#allocation11 + $0x5b8] sm:$0xff]
    %v670 = vld [vmem:[#allocation11 + $0x5c0] sm:$0xff]
    %v671 = vld [vmem:[#allocation11 + $0x5c8] sm:$0xff]
    %v672 = vld [vmem:[#allocation11 + $0x5d0] sm:$0xff]
    %v673 = vld [vmem:[#allocation11 + $0x5d8] sm:$0xff]
    %v674 = vld [vmem:[#allocation11 + $0x5e0] sm:$0xff]
    %v675 = vld [vmem:[#allocation11 + $0x5e8] sm:$0xff]
    %v676 = vld [vmem:[#allocation11 + $0x5f0] sm:$0xff]
    %v677 = vld [vmem:[#allocation11 + $0x5f8] sm:$0xff]
    %v678 = vld [vmem:[#allocation11 + $0x600] sm:$0xff]
    %v679 = vld [vmem:[#allocation11 + $0x608] sm:$0xff]
    %v680 = vld [vmem:[#allocation11 + $0x610] sm:$0xff]
    %v681 = vld [vmem:[#allocation11 + $0x618] sm:$0xff]
    %v682 = vld [vmem:[#allocation11 + $0x620] sm:$0xff]
    %v683 = vld [vmem:[#allocation11 + $0x628] sm:$0xff]
    %v684 = vld [vmem:[#allocation11 + $0x630] sm:$0xff]
    %v685 = vld [vmem:[#allocation11 + $0x638] sm:$0xff]
    %v686 = vld [vmem:[#allocation11 + $0x640] sm:$0xff]
    %v687 = vld [vmem:[#allocation11 + $0x648] sm:$0xff]
    %v688 = vld [vmem:[#allocation11 + $0x650] sm:$0xff]
    %v689 = vld [vmem:[#allocation11 + $0x658] sm:$0xff]
    %v690 = vld [vmem:[#allocation11 + $0x660] sm:$0xff]
    %v691 = vld [vmem:[#allocation11 + $0x668] sm:$0xff]
    %v692 = vld [vmem:[#allocation11 + $0x670] sm:$0xff]
    %v693 = vld [vmem:[#allocation11 + $0x678] sm:$0xff]
    %v694 = vld [vmem:[#allocation11 + $0x680] sm:$0xff]
    %v695 = vld [vmem:[#allocation11 + $0x688] sm:$0xff]
    %v696 = vld [vmem:[#allocation11 + $0x690] sm:$0xff]
    %v697 = vld [vmem:[#allocation11 + $0x698] sm:$0xff]
    %v698 = vld [vmem:[#allocation11 + $0x6a0] sm:$0xff]
    %v699 = vld [vmem:[#allocation11 + $0x6a8] sm:$0xff]
    %v700 = vld [vmem:[#allocation11 + $0x6b0] sm:$0xff]
    %v701 = vld [vmem:[#allocation11 + $0x6b8] sm:$0xff]
    %v702 = vld [vmem:[#allocation11 + $0x6c0] sm:$0xff]
    %v703 = vld [vmem:[#allocation11 + $0x6c8] sm:$0xff]
    %v704 = vld [vmem:[#allocation11 + $0x6d0] sm:$0xff]
    %v705 = vld [vmem:[#allocation11 + $0x6d8] sm:$0xff]
    %v706 = vld [vmem:[#allocation11 + $0x6e0] sm:$0xff]
    %v707 = vld [vmem:[#allocation11 + $0x6e8] sm:$0xff]
    %v708 = vld [vmem:[#allocation11 + $0x6f0] sm:$0xff]
    %v709 = vld [vmem:[#allocation11 + $0x6f8] sm:$0xff]
    %v710 = vld [vmem:[#allocation11 + $0x700] sm:$0xff]
    %v711 = vld [vmem:[#allocation11 + $0x708] sm:$0xff]
    %v712 = vld [vmem:[#allocation11 + $0x710] sm:$0xff]
    %v713 = vld [vmem:[#allocation11 + $0x718] sm:$0xff]
    %v714 = vld [vmem:[#allocation11 + $0x720] sm:$0xff]
    %v715 = vld [vmem:[#allocation11 + $0x728] sm:$0xff]
    %v716 = vld [vmem:[#allocation11 + $0x730] sm:$0xff]
    %v717 = vld [vmem:[#allocation11 + $0x738] sm:$0xff]
    %v718 = vld [vmem:[#allocation11 + $0x740] sm:$0xff]
    %v719 = vld [vmem:[#allocation11 + $0x748] sm:$0xff]
    %v720 = vld [vmem:[#allocation11 + $0x750] sm:$0xff]
    %v721 = vld [vmem:[#allocation11 + $0x758] sm:$0xff]
    %v722 = vld [vmem:[#allocation11 + $0x760] sm:$0xff]
    %v723 = vld [vmem:[#allocation11 + $0x768] sm:$0xff]
    %v724 = vld [vmem:[#allocation11 + $0x770] sm:$0xff]
    %v725 = vld [vmem:[#allocation11 + $0x778] sm:$0xff]
    %v726 = vld [vmem:[#allocation11 + $0x780] sm:$0xff]
    %v727 = vld [vmem:[#allocation11 + $0x788] sm:$0xff]
    %v728 = vld [vmem:[#allocation11 + $0x790] sm:$0xff]
    %v729 = vld [vmem:[#allocation11 + $0x798] sm:$0xff]
    %v730 = vld [vmem:[#allocation11 + $0x7a0] sm:$0xff]
    %v731 = vld [vmem:[#allocation11 + $0x7a8] sm:$0xff]
    %v732 = vld [vmem:[#allocation11 + $0x7b0] sm:$0xff]
    %v733 = vld [vmem:[#allocation11 + $0x7b8] sm:$0xff]
    %v734 = vld [vmem:[#allocation11 + $0x7c0] sm:$0xff]
    %v735 = vld [vmem:[#allocation11 + $0x7c8] sm:$0xff]
    %v736 = vld [vmem:[#allocation11 + $0x7d0] sm:$0xff]
    %v737 = vld [vmem:[#allocation11 + $0x7d8] sm:$0xff]
    %v738 = vld [vmem:[#allocation11 + $0x7e0] sm:$0xff]
    %v739 = vld [vmem:[#allocation11 + $0x7e8] sm:$0xff]
    %v740 = vld [vmem:[#allocation11 + $0x7f0] sm:$0xff]
    %v741 = vld [vmem:[#allocation11 + $0x7f8] sm:$0xff]
    %v742 = vld [vmem:[#allocation11 + $0x800] sm:$0xff]
    %v743 = vld [vmem:[#allocation11 + $0x808] sm:$0xff]
    %v744 = vld [vmem:[#allocation11 + $0x810] sm:$0xff]
    %v745 = vld [vmem:[#allocation11 + $0x818] sm:$0xff]
    %v746 = vld [vmem:[#allocation11 + $0x820] sm:$0xff]
    %v747 = vld [vmem:[#allocation11 + $0x828] sm:$0xff]
    %v748 = vld [vmem:[#allocation11 + $0x830] sm:$0xff]
    %v749 = vld [vmem:[#allocation11 + $0x838] sm:$0xff]
    %v750 = vld [vmem:[#allocation11 + $0x840] sm:$0xff]
    %v751 = vld [vmem:[#allocation11 + $0x848] sm:$0xff]
    %v752 = vld [vmem:[#allocation11 + $0x850] sm:$0xff]
    %v753 = vld [vmem:[#allocation11 + $0x858] sm:$0xff]
    %v754 = vld [vmem:[#allocation11 + $0x860] sm:$0xff]
    %v755 = vld [vmem:[#allocation11 + $0x868] sm:$0xff]
    %v756 = vld [vmem:[#allocation11 + $0x870] sm:$0xff]
    %v757 = vld [vmem:[#allocation11 + $0x878] sm:$0xff]
    %v758 = vld [vmem:[#allocation11 + $0x880] sm:$0xff]
    %v759 = vld [vmem:[#allocation11 + $0x888] sm:$0xff]
    %v760 = vld [vmem:[#allocation11 + $0x890] sm:$0xff]
    %v761 = vld [vmem:[#allocation11 + $0x898] sm:$0xff]
    %v762 = vld [vmem:[#allocation11 + $0x8a0] sm:$0xff]
    %v763 = vld [vmem:[#allocation11 + $0x8a8] sm:$0xff]
    %v764 = vld [vmem:[#allocation11 + $0x8b0] sm:$0xff]
    %v765 = vld [vmem:[#allocation11 + $0x8b8] sm:$0xff]
    %v766 = vld [vmem:[#allocation11 + $0x8c0] sm:$0xff]
    %v767 = vld [vmem:[#allocation11 + $0x8c8] sm:$0xff]
    %v768 = vld [vmem:[#allocation11 + $0x8d0] sm:$0xff]
    %v769 = vld [vmem:[#allocation11 + $0x8d8] sm:$0xff]
    %v770 = vld [vmem:[#allocation11 + $0x8e0] sm:$0xff]
    %v771 = vld [vmem:[#allocation11 + $0x8e8] sm:$0xff]
    %v772 = vld [vmem:[#allocation11 + $0x8f0] sm:$0xff]
    %v773 = vld [vmem:[#allocation11 + $0x8f8] sm:$0xff]
    %v774 = vld [vmem:[#allocation13] sm:$0xff]
    %v775 = vld [vmem:[#allocation14] sm:$0xff]
    %v776 = vld [vmem:[#allocation14 + $0x8] sm:$0xff]
    %v777 = vld [vmem:[#allocation14 + $0x10] sm:$0xff]
    %v778 = vld [vmem:[#allocation14 + $0x18] sm:$0xff]
    %v779 = vld [vmem:[#allocation14 + $0x20] sm:$0xff]
    %v780 = vld [vmem:[#allocation14 + $0x28] sm:$0xff]
    %v781 = vld [vmem:[#allocation14 + $0x30] sm:$0xff]
    %v782 = vld [vmem:[#allocation14 + $0x38] sm:$0xff]
    %v783 = vld [vmem:[#allocation14 + $0x40] sm:$0xff]
    %v784 = vld [vmem:[#allocation14 + $0x48] sm:$0xff]
    %v785 = vld [vmem:[#allocation14 + $0x50] sm:$0xff]
    %v786 = vld [vmem:[#allocation14 + $0x58] sm:$0xff]
    %v787 = vld [vmem:[#allocation14 + $0x60] sm:$0xff]
    %v788 = vld [vmem:[#allocation14 + $0x68] sm:$0xff]
    %v789 = vld [vmem:[#allocation14 + $0x70] sm:$0xff]
    %v790 = vld [vmem:[#allocation14 + $0x78] sm:$0xff]
    %v791 = vld [vmem:[#allocation14 + $0x80] sm:$0xff]
    %v792 = vld [vmem:[#allocation14 + $0x88] sm:$0xff]
    %v793 = vld [vmem:[#allocation14 + $0x90] sm:$0xff]
    %v794 = vld [vmem:[#allocation14 + $0x98] sm:$0xff]
    %v795 = vld [vmem:[#allocation14 + $0xa0] sm:$0xff]
    %v796 = vld [vmem:[#allocation14 + $0xa8] sm:$0xff]
    %v797 = vld [vmem:[#allocation14 + $0xb0] sm:$0xff]
    %v798 = vld [vmem:[#allocation14 + $0xb8] sm:$0xff]
    %v799 = vld [vmem:[#allocation14 + $0xc0] sm:$0xff]
    %v800 = vld [vmem:[#allocation14 + $0xc8] sm:$0xff]
    %v801 = vld [vmem:[#allocation14 + $0xd0] sm:$0xff]
    %v802 = vld [vmem:[#allocation14 + $0xd8] sm:$0xff]
    %v803 = vld [vmem:[#allocation14 + $0xe0] sm:$0xff]
    %v804 = vld [vmem:[#allocation14 + $0xe8] sm:$0xff]
    %v805 = vld [vmem:[#allocation14 + $0xf0] sm:$0xff]
    %v806 = vld [vmem:[#allocation14 + $0xf8] sm:$0xff]
    %v807 = vld [vmem:[#allocation14 + $0x100] sm:$0xff]
    %v808 = vld [vmem:[#allocation14 + $0x108] sm:$0xff]
    %v809 = vld [vmem:[#allocation14 + $0x110] sm:$0xff]
    %v810 = vld [vmem:[#allocation14 + $0x118] sm:$0xff]
    %v811 = vld [vmem:[#allocation14 + $0x120] sm:$0xff]
    %v812 = vld [vmem:[#allocation14 + $0x128] sm:$0xff]
    %v813 = vld [vmem:[#allocation14 + $0x130] sm:$0xff]
    %v814 = vld [vmem:[#allocation14 + $0x138] sm:$0xff]
    %v815 = vld [vmem:[#allocation14 + $0x140] sm:$0xff]
    %v816 = vld [vmem:[#allocation14 + $0x148] sm:$0xff]
    %v817 = vld [vmem:[#allocation14 + $0x150] sm:$0xff]
    %v818 = vld [vmem:[#allocation14 + $0x158] sm:$0xff]
    %v819 = vld [vmem:[#allocation14 + $0x160] sm:$0xff]
    %v820 = vld [vmem:[#allocation14 + $0x168] sm:$0xff]
    %v821 = vld [vmem:[#allocation14 + $0x170] sm:$0xff]
    %v822 = vld [vmem:[#allocation14 + $0x178] sm:$0xff]
    %v823 = vld [vmem:[#allocation14 + $0x180] sm:$0xff]
    %v824 = vld [vmem:[#allocation14 + $0x188] sm:$0xff]
    %v825 = vld [vmem:[#allocation14 + $0x190] sm:$0xff]
    %v826 = vld [vmem:[#allocation14 + $0x198] sm:$0xff]
    %v827 = vld [vmem:[#allocation14 + $0x1a0] sm:$0xff]
    %v828 = vld [vmem:[#allocation14 + $0x1a8] sm:$0xff]
    %v829 = vld [vmem:[#allocation14 + $0x1b0] sm:$0xff]
    %v830 = vld [vmem:[#allocation14 + $0x1b8] sm:$0xff]
    %v831 = vld [vmem:[#allocation14 + $0x1c0] sm:$0xff]
    %v832 = vld [vmem:[#allocation14 + $0x1c8] sm:$0xff]
    %v833 = vld [vmem:[#allocation14 + $0x1d0] sm:$0xff]
    %v834 = vld [vmem:[#allocation14 + $0x1d8] sm:$0xff]
    %v835 = vld [vmem:[#allocation14 + $0x1e0] sm:$0xff]
    %v836 = vld [vmem:[#allocation14 + $0x1e8] sm:$0xff]
    %v837 = vld [vmem:[#allocation14 + $0x1f0] sm:$0xff]
    %v838 = vld [vmem:[#allocation14 + $0x1f8] sm:$0xff]
    %v839 = vld [vmem:[#allocation14 + $0x200] sm:$0xff]
    %v840 = vld [vmem:[#allocation14 + $0x208] sm:$0xff]
    %v841 = vld [vmem:[#allocation14 + $0x210] sm:$0xff]
    %v842 = vld [vmem:[#allocation14 + $0x218] sm:$0xff]
    %v843 = vld [vmem:[#allocation14 + $0x220] sm:$0xff]
    %v844 = vld [vmem:[#allocation14 + $0x228] sm:$0xff]
    %v845 = vld [vmem:[#allocation14 + $0x230] sm:$0xff]
    %v846 = vld [vmem:[#allocation14 + $0x238] sm:$0xff]
    %v847 = vld [vmem:[#allocation16] sm:$0x3]
    %v848 = vld [vmem:[#allocation17] sm:$0xff]
    %v849 = vld [vmem:[#allocation17 + $0x8] sm:$0xff]
    %v850 = vld [vmem:[#allocation17 + $0x10] sm:$0xff]
    %v851 = vld [vmem:[#allocation17 + $0x18] sm:$0xff]
    %v852 = vld [vmem:[#allocation17 + $0x20] sm:$0xff]
    %v853 = vld [vmem:[#allocation17 + $0x28] sm:$0xff]
    %v854 = vld [vmem:[#allocation17 + $0x30] sm:$0xff]
    %v855 = vld [vmem:[#allocation17 + $0x38] sm:$0xff]
    %v856 = vld [vmem:[#allocation17 + $0x40] sm:$0xff]
    %v857 = vld [vmem:[#allocation17 + $0x48] sm:$0xff]
    %v858 = vld [vmem:[#allocation17 + $0x50] sm:$0xff]
    %v859 = vld [vmem:[#allocation17 + $0x58] sm:$0xff]
    %v860 = vld [vmem:[#allocation17 + $0x60] sm:$0xff]
    %v861 = vld [vmem:[#allocation17 + $0x68] sm:$0xff]
    %v862 = vld [vmem:[#allocation17 + $0x70] sm:$0xff]
    %v863 = vld [vmem:[#allocation17 + $0x78] sm:$0xff]
    %v864 = vld [vmem:[#allocation17 + $0x80] sm:$0xff]
    %v865 = vld [vmem:[#allocation17 + $0x88] sm:$0xff]
    %v866 = vld [vmem:[#allocation17 + $0x90] sm:$0xff]
    %v867 = vld [vmem:[#allocation17 + $0x98] sm:$0xff]
    %v868 = vld [vmem:[#allocation17 + $0xa0] sm:$0xff]
    %v869 = vld [vmem:[#allocation17 + $0xa8] sm:$0xff]
    %v870 = vld [vmem:[#allocation17 + $0xb0] sm:$0xff]
    %v871 = vld [vmem:[#allocation17 + $0xb8] sm:$0xff]
    %v872 = vld [vmem:[#allocation17 + $0xc0] sm:$0xff]
    %v873 = vld [vmem:[#allocation17 + $0xc8] sm:$0xff]
    %v874 = vld [vmem:[#allocation17 + $0xd0] sm:$0xff]
    %v875 = vld [vmem:[#allocation17 + $0xd8] sm:$0xff]
    %v876 = vld [vmem:[#allocation17 + $0xe0] sm:$0xff]
    %v877 = vld [vmem:[#allocation17 + $0xe8] sm:$0xff]
    %v878 = vld [vmem:[#allocation17 + $0xf0] sm:$0xff]
    %v879 = vld [vmem:[#allocation17 + $0xf8] sm:$0xff]
    %v880 = vld [vmem:[#allocation17 + $0x100] sm:$0xff]
    %v881 = vld [vmem:[#allocation17 + $0x108] sm:$0xff]
    %v882 = vld [vmem:[#allocation17 + $0x110] sm:$0xff]
    %v883 = vld [vmem:[#allocation17 + $0x118] sm:$0xff]
    %v884 = vld [vmem:[#allocation17 + $0x120] sm:$0xff]
    %v885 = vld [vmem:[#allocation17 + $0x128] sm:$0xff]
    %v886 = vld [vmem:[#allocation17 + $0x130] sm:$0xff]
    %v887 = vld [vmem:[#allocation17 + $0x138] sm:$0xff]
    %v888 = vld [vmem:[#allocation17 + $0x140] sm:$0xff]
    %v889 = vld [vmem:[#allocation17 + $0x148] sm:$0xff]
    %v890 = vld [vmem:[#allocation17 + $0x150] sm:$0xff]
    %v891 = vld [vmem:[#allocation17 + $0x158] sm:$0xff]
    %v892 = vld [vmem:[#allocation17 + $0x160] sm:$0xff]
    %v893 = vld [vmem:[#allocation17 + $0x168] sm:$0xff]
    %v894 = vld [vmem:[#allocation17 + $0x170] sm:$0xff]
    %v895 = vld [vmem:[#allocation17 + $0x178] sm:$0xff]
    %v896 = vld [vmem:[#allocation17 + $0x180] sm:$0xff]
    %v897 = vld [vmem:[#allocation17 + $0x188] sm:$0xff]
    %v898 = vld [vmem:[#allocation17 + $0x190] sm:$0xff]
    %v899 = vld [vmem:[#allocation17 + $0x198] sm:$0xff]
    %v900 = vld [vmem:[#allocation17 + $0x1a0] sm:$0xff]
    %v901 = vld [vmem:[#allocation17 + $0x1a8] sm:$0xff]
    %v902 = vld [vmem:[#allocation17 + $0x1b0] sm:$0xff]
    %v903 = vld [vmem:[#allocation17 + $0x1b8] sm:$0xff]
    %v904 = vld [vmem:[#allocation17 + $0x1c0] sm:$0xff]
    %v905 = vld [vmem:[#allocation17 + $0x1c8] sm:$0xff]
    %v906 = vld [vmem:[#allocation17 + $0x1d0] sm:$0xff]
    %v907 = vld [vmem:[#allocation17 + $0x1d8] sm:$0xff]
    %v908 = vld [vmem:[#allocation17 + $0x1e0] sm:$0xff]
    %v909 = vld [vmem:[#allocation17 + $0x1e8] sm:$0xff]
    %v910 = vld [vmem:[#allocation17 + $0x1f0] sm:$0xff]
    %v911 = vld [vmem:[#allocation17 + $0x1f8] sm:$0xff]
    %v912 = vld [vmem:[#allocation17 + $0x200] sm:$0xff]
    %v913 = vld [vmem:[#allocation17 + $0x208] sm:$0xff]
    %v914 = vld [vmem:[#allocation17 + $0x210] sm:$0xff]
    %v915 = vld [vmem:[#allocation17 + $0x218] sm:$0xff]
    %v916 = vld [vmem:[#allocation17 + $0x220] sm:$0xff]
    %v917 = vld [vmem:[#allocation17 + $0x228] sm:$0xff]
    %v918 = vld [vmem:[#allocation17 + $0x230] sm:$0xff]
    %v919 = vld [vmem:[#allocation17 + $0x238] sm:$0xff]
    %v920 = vld [vmem:[#allocation17 + $0x240] sm:$0xff]
    %v921 = vld [vmem:[#allocation17 + $0x248] sm:$0xff]
    %v922 = vld [vmem:[#allocation17 + $0x250] sm:$0xff]
    %v923 = vld [vmem:[#allocation17 + $0x258] sm:$0xff]
    %v924 = vld [vmem:[#allocation17 + $0x260] sm:$0xff]
    %v925 = vld [vmem:[#allocation17 + $0x268] sm:$0xff]
    %v926 = vld [vmem:[#allocation17 + $0x270] sm:$0xff]
    %v927 = vld [vmem:[#allocation17 + $0x278] sm:$0xff]
    %v928 = vld [vmem:[#allocation17 + $0x280] sm:$0xff]
    %v929 = vld [vmem:[#allocation17 + $0x288] sm:$0xff]
    %v930 = vld [vmem:[#allocation17 + $0x290] sm:$0xff]
    %v931 = vld [vmem:[#allocation17 + $0x298] sm:$0xff]
    %v932 = vld [vmem:[#allocation17 + $0x2a0] sm:$0xff]
    %v933 = vld [vmem:[#allocation17 + $0x2a8] sm:$0xff]
    %v934 = vld [vmem:[#allocation17 + $0x2b0] sm:$0xff]
    %v935 = vld [vmem:[#allocation17 + $0x2b8] sm:$0xff]
    %v936 = vld [vmem:[#allocation17 + $0x2c0] sm:$0xff]
    %v937 = vld [vmem:[#allocation17 + $0x2c8] sm:$0xff]
    %v938 = vld [vmem:[#allocation17 + $0x2d0] sm:$0xff]
    %v939 = vld [vmem:[#allocation17 + $0x2d8] sm:$0xff]
    %v940 = vld [vmem:[#allocation17 + $0x2e0] sm:$0xff]
    %v941 = vld [vmem:[#allocation17 + $0x2e8] sm:$0xff]
    %v942 = vld [vmem:[#allocation17 + $0x2f0] sm:$0xff]
    %v943 = vld [vmem:[#allocation17 + $0x2f8] sm:$0xff]
    %v944 = vld [vmem:[#allocation17 + $0x300] sm:$0xff]
    %v945 = vld [vmem:[#allocation17 + $0x308] sm:$0xff]
    %v946 = vld [vmem:[#allocation17 + $0x310] sm:$0xff]
    %v947 = vld [vmem:[#allocation17 + $0x318] sm:$0xff]
    %v948 = vld [vmem:[#allocation17 + $0x320] sm:$0xff]
    %v949 = vld [vmem:[#allocation17 + $0x328] sm:$0xff]
    %v950 = vld [vmem:[#allocation17 + $0x330] sm:$0xff]
    %v951 = vld [vmem:[#allocation17 + $0x338] sm:$0xff]
    %v952 = vld [vmem:[#allocation17 + $0x340] sm:$0xff]
    %v953 = vld [vmem:[#allocation17 + $0x348] sm:$0xff]
    %v954 = vld [vmem:[#allocation17 + $0x350] sm:$0xff]
    %v955 = vld [vmem:[#allocation17 + $0x358] sm:$0xff]
    %v956 = vld [vmem:[#allocation17 + $0x360] sm:$0xff]
    %v957 = vld [vmem:[#allocation17 + $0x368] sm:$0xff]
    %v958 = vld [vmem:[#allocation17 + $0x370] sm:$0xff]
    %v959 = vld [vmem:[#allocation17 + $0x378] sm:$0xff]
    %v960 = vld [vmem:[#allocation17 + $0x380] sm:$0xff]
    %v961 = vld [vmem:[#allocation17 + $0x388] sm:$0xff]
    %v962 = vld [vmem:[#allocation17 + $0x390] sm:$0xff]
    %v963 = vld [vmem:[#allocation17 + $0x398] sm:$0xff]
    %v964 = vld [vmem:[#allocation17 + $0x3a0] sm:$0xff]
    %v965 = vld [vmem:[#allocation17 + $0x3a8] sm:$0xff]
    %v966 = vld [vmem:[#allocation17 + $0x3b0] sm:$0xff]
    %v967 = vld [vmem:[#allocation17 + $0x3b8] sm:$0xff]
    %v968 = vld [vmem:[#allocation17 + $0x3c0] sm:$0xff]
    %v969 = vld [vmem:[#allocation17 + $0x3c8] sm:$0xff]
    %v970 = vld [vmem:[#allocation17 + $0x3d0] sm:$0xff]
    %v971 = vld [vmem:[#allocation17 + $0x3d8] sm:$0xff]
    %v972 = vld [vmem:[#allocation17 + $0x3e0] sm:$0xff]
    %v973 = vld [vmem:[#allocation17 + $0x3e8] sm:$0xff]
    %v974 = vld [vmem:[#allocation17 + $0x3f0] sm:$0xff]
    %v975 = vld [vmem:[#allocation17 + $0x3f8] sm:$0xff]
    %v976 = vld [vmem:[#allocation17 + $0x400] sm:$0xff]
    %v977 = vld [vmem:[#allocation17 + $0x408] sm:$0xff]
    %v978 = vld [vmem:[#allocation17 + $0x410] sm:$0xff]
    %v979 = vld [vmem:[#allocation17 + $0x418] sm:$0xff]
    %v980 = vld [vmem:[#allocation17 + $0x420] sm:$0xff]
    %v981 = vld [vmem:[#allocation17 + $0x428] sm:$0xff]
    %v982 = vld [vmem:[#allocation17 + $0x430] sm:$0xff]
    %v983 = vld [vmem:[#allocation17 + $0x438] sm:$0xff]
    %v984 = vld [vmem:[#allocation17 + $0x440] sm:$0xff]
    %v985 = vld [vmem:[#allocation17 + $0x448] sm:$0xff]
    %v986 = vld [vmem:[#allocation17 + $0x450] sm:$0xff]
    %v987 = vld [vmem:[#allocation17 + $0x458] sm:$0xff]
    %v988 = vld [vmem:[#allocation17 + $0x460] sm:$0xff]
    %v989 = vld [vmem:[#allocation17 + $0x468] sm:$0xff]
    %v990 = vld [vmem:[#allocation17 + $0x470] sm:$0xff]
    %v991 = vld [vmem:[#allocation17 + $0x478] sm:$0xff]
    %v992 = vld [vmem:[#allocation17 + $0x480] sm:$0xff]
    %v993 = vld [vmem:[#allocation17 + $0x488] sm:$0xff]
    %v994 = vld [vmem:[#allocation17 + $0x490] sm:$0xff]
    %v995 = vld [vmem:[#allocation17 + $0x498] sm:$0xff]
    %v996 = vld [vmem:[#allocation17 + $0x4a0] sm:$0xff]
    %v997 = vld [vmem:[#allocation17 + $0x4a8] sm:$0xff]
    %v998 = vld [vmem:[#allocation17 + $0x4b0] sm:$0xff]
    %v999 = vld [vmem:[#allocation17 + $0x4b8] sm:$0xff]
    %v1000 = vld [vmem:[#allocation17 + $0x4c0] sm:$0xff]
    %v1001 = vld [vmem:[#allocation17 + $0x4c8] sm:$0xff]
    %v1002 = vld [vmem:[#allocation17 + $0x4d0] sm:$0xff]
    %v1003 = vld [vmem:[#allocation17 + $0x4d8] sm:$0xff]
    %v1004 = vld [vmem:[#allocation17 + $0x4e0] sm:$0xff]
    %v1005 = vld [vmem:[#allocation17 + $0x4e8] sm:$0xff]
    %v1006 = vld [vmem:[#allocation17 + $0x4f0] sm:$0xff]
    %v1007 = vld [vmem:[#allocation17 + $0x4f8] sm:$0xff]
    %v1008 = vld [vmem:[#allocation17 + $0x500] sm:$0xff]
    %v1009 = vld [vmem:[#allocation17 + $0x508] sm:$0xff]
    %v1010 = vld [vmem:[#allocation17 + $0x510] sm:$0xff]
    %v1011 = vld [vmem:[#allocation17 + $0x518] sm:$0xff]
    %v1012 = vld [vmem:[#allocation17 + $0x520] sm:$0xff]
    %v1013 = vld [vmem:[#allocation17 + $0x528] sm:$0xff]
    %v1014 = vld [vmem:[#allocation17 + $0x530] sm:$0xff]
    %v1015 = vld [vmem:[#allocation17 + $0x538] sm:$0xff]
    %v1016 = vld [vmem:[#allocation17 + $0x540] sm:$0xff]
    %v1017 = vld [vmem:[#allocation17 + $0x548] sm:$0xff]
    %v1018 = vld [vmem:[#allocation17 + $0x550] sm:$0xff]
    %v1019 = vld [vmem:[#allocation17 + $0x558] sm:$0xff]
    %v1020 = vld [vmem:[#allocation17 + $0x560] sm:$0xff]
    %v1021 = vld [vmem:[#allocation17 + $0x568] sm:$0xff]
    %v1022 = vld [vmem:[#allocation17 + $0x570] sm:$0xff]
    %v1023 = vld [vmem:[#allocation17 + $0x578] sm:$0xff]
    %v1024 = vld [vmem:[#allocation17 + $0x580] sm:$0xff]
    %v1025 = vld [vmem:[#allocation17 + $0x588] sm:$0xff]
    %v1026 = vld [vmem:[#allocation17 + $0x590] sm:$0xff]
    %v1027 = vld [vmem:[#allocation17 + $0x598] sm:$0xff]
    %v1028 = vld [vmem:[#allocation17 + $0x5a0] sm:$0xff]
    %v1029 = vld [vmem:[#allocation17 + $0x5a8] sm:$0xff]
    %v1030 = vld [vmem:[#allocation17 + $0x5b0] sm:$0xff]
    %v1031 = vld [vmem:[#allocation17 + $0x5b8] sm:$0xff]
    %v1032 = vld [vmem:[#allocation17 + $0x5c0] sm:$0xff]
    %v1033 = vld [vmem:[#allocation17 + $0x5c8] sm:$0xff]
    %v1034 = vld [vmem:[#allocation17 + $0x5d0] sm:$0xff]
    %v1035 = vld [vmem:[#allocation17 + $0x5d8] sm:$0xff]
    %v1036 = vld [vmem:[#allocation17 + $0x5e0] sm:$0xff]
    %v1037 = vld [vmem:[#allocation17 + $0x5e8] sm:$0xff]
    %v1038 = vld [vmem:[#allocation17 + $0x5f0] sm:$0xff]
    %v1039 = vld [vmem:[#allocation17 + $0x5f8] sm:$0xff]
    %v1040 = vld [vmem:[#allocation17 + $0x600] sm:$0xff]
    %v1041 = vld [vmem:[#allocation17 + $0x608] sm:$0xff]
    %v1042 = vld [vmem:[#allocation17 + $0x610] sm:$0xff]
    %v1043 = vld [vmem:[#allocation17 + $0x618] sm:$0xff]
    %v1044 = vld [vmem:[#allocation17 + $0x620] sm:$0xff]
    %v1045 = vld [vmem:[#allocation17 + $0x628] sm:$0xff]
    %v1046 = vld [vmem:[#allocation17 + $0x630] sm:$0xff]
    %v1047 = vld [vmem:[#allocation17 + $0x638] sm:$0xff]
    %v1048 = vld [vmem:[#allocation17 + $0x640] sm:$0xff]
    %v1049 = vld [vmem:[#allocation17 + $0x648] sm:$0xff]
    %v1050 = vld [vmem:[#allocation17 + $0x650] sm:$0xff]
    %v1051 = vld [vmem:[#allocation17 + $0x658] sm:$0xff]
    %v1052 = vld [vmem:[#allocation17 + $0x660] sm:$0xff]
    %v1053 = vld [vmem:[#allocation17 + $0x668] sm:$0xff]
    %v1054 = vld [vmem:[#allocation17 + $0x670] sm:$0xff]
    %v1055 = vld [vmem:[#allocation17 + $0x678] sm:$0xff]
    %v1056 = vld [vmem:[#allocation17 + $0x680] sm:$0xff]
    %v1057 = vld [vmem:[#allocation17 + $0x688] sm:$0xff]
    %v1058 = vld [vmem:[#allocation17 + $0x690] sm:$0xff]
    %v1059 = vld [vmem:[#allocation17 + $0x698] sm:$0xff]
    %v1060 = vld [vmem:[#allocation17 + $0x6a0] sm:$0xff]
    %v1061 = vld [vmem:[#allocation17 + $0x6a8] sm:$0xff]
    %v1062 = vld [vmem:[#allocation17 + $0x6b0] sm:$0xff]
    %v1063 = vld [vmem:[#allocation17 + $0x6b8] sm:$0xff]
    %v1064 = vld [vmem:[#allocation19] sm:$0x3f]
    %v1065 = vld [vmem:[#allocation20] sm:$0xff]
    %v1066 = vld [vmem:[#allocation20 + $0x8] sm:$0xff]
    %v1067 = vld [vmem:[#allocation20 + $0x10] sm:$0xff]
    %v1068 = vld [vmem:[#allocation20 + $0x18] sm:$0xff]
    %v1069 = vld [vmem:[#allocation20 + $0x20] sm:$0xff]
    %v1070 = vld [vmem:[#allocation20 + $0x28] sm:$0xff]
    %v1071 = vld [vmem:[#allocation20 + $0x30] sm:$0xff]
    %v1072 = vld [vmem:[#allocation20 + $0x38] sm:$0xff]
    %v1073 = vld [vmem:[#allocation20 + $0x40] sm:$0xff]
    %v1074 = vld [vmem:[#allocation20 + $0x48] sm:$0xff]
    %v1075 = vld [vmem:[#allocation20 + $0x50] sm:$0xff]
    %v1076 = vld [vmem:[#allocation20 + $0x58] sm:$0xff]
    %v1077 = vld [vmem:[#allocation20 + $0x60] sm:$0xff]
    %v1078 = vld [vmem:[#allocation20 + $0x68] sm:$0xff]
    %v1079 = vld [vmem:[#allocation20 + $0x70] sm:$0xff]
    %v1080 = vld [vmem:[#allocation20 + $0x78] sm:$0xff]
    %v1081 = vld [vmem:[#allocation20 + $0x80] sm:$0xff]
    %v1082 = vld [vmem:[#allocation20 + $0x88] sm:$0xff]
    %v1083 = vld [vmem:[#allocation22] sm:$0xff]
    %v1084 = vld [vmem:[#allocation22 + $0x8] sm:$0xff]
    %v1085 = vld [vmem:[#allocation22 + $0x10] sm:$0xff]
    %v1086 = vld [vmem:[#allocation22 + $0x18] sm:$0xff]
    %v1087 = vld [vmem:[#allocation22 + $0x20] sm:$0xff]
    %v1088 = vld [vmem:[#allocation22 + $0x28] sm:$0xff]
    %v1089 = vld [vmem:[#allocation22 + $0x30] sm:$0xff]
    %v1090 = vld [vmem:[#allocation22 + $0x38] sm:$0xff]
    %v1091 = vld [vmem:[#allocation22 + $0x40] sm:$0xff]
    %v1092 = vld [vmem:[#allocation22 + $0x48] sm:$0xff]
    %v1093 = vld [vmem:[#allocation22 + $0x50] sm:$0xff]
    %v1094 = vld [vmem:[#allocation22 + $0x58] sm:$0xff]
    %v1095 = vld [vmem:[#allocation22 + $0x60] sm:$0xff]
    %v1096 = vld [vmem:[#allocation22 + $0x68] sm:$0xff]
    %v1097 = vld [vmem:[#allocation22 + $0x70] sm:$0xff]
    %v1098 = vld [vmem:[#allocation22 + $0x78] sm:$0xff]
    %v1099 = vld [vmem:[#allocation22 + $0x80] sm:$0xff]
    %v1100 = vld [vmem:[#allocation22 + $0x88] sm:$0xff]
    %v1101 = vld [vmem:[#allocation22 + $0x90] sm:$0xff]
    %v1102 = vld [vmem:[#allocation22 + $0x98] sm:$0xff]
    %v1103 = vld [vmem:[#allocation22 + $0xa0] sm:$0xff]
    %v1104 = vld [vmem:[#allocation22 + $0xa8] sm:$0xff]
    %v1105 = vld [vmem:[#allocation22 + $0xb0] sm:$0xff]
    %v1106 = vld [vmem:[#allocation22 + $0xb8] sm:$0xff]
    %v1107 = vld [vmem:[#allocation22 + $0xc0] sm:$0xff]
    %v1108 = vld [vmem:[#allocation22 + $0xc8] sm:$0xff]
    %v1109 = vld [vmem:[#allocation22 + $0xd0] sm:$0xff]
    %v1110 = vld [vmem:[#allocation22 + $0xd8] sm:$0xff]
    %v1111 = vld [vmem:[#allocation22 + $0xe0] sm:$0xff]
    %v1112 = vld [vmem:[#allocation22 + $0xe8] sm:$0xff]
    %v1113 = vld [vmem:[#allocation22 + $0xf0] sm:$0xff]
    %v1114 = vld [vmem:[#allocation22 + $0xf8] sm:$0xff]
    %v1115 = vld [vmem:[#allocation22 + $0x100] sm:$0xff]
    %v1116 = vld [vmem:[#allocation22 + $0x108] sm:$0xff]
    %v1117 = vld [vmem:[#allocation22 + $0x110] sm:$0xff]
    %v1118 = vld [vmem:[#allocation22 + $0x118] sm:$0xff]
    %v1119 = vld [vmem:[#allocation22 + $0x120] sm:$0xff]
    %v1120 = vld [vmem:[#allocation22 + $0x128] sm:$0xff]
    %v1121 = vld [vmem:[#allocation22 + $0x130] sm:$0xff]
    %v1122 = vld [vmem:[#allocation22 + $0x138] sm:$0xff]
    %v1123 = vld [vmem:[#allocation22 + $0x140] sm:$0xff]
    %v1124 = vld [vmem:[#allocation22 + $0x148] sm:$0xff]
    %v1125 = vld [vmem:[#allocation22 + $0x150] sm:$0xff]
    %v1126 = vld [vmem:[#allocation22 + $0x158] sm:$0xff]
    %v1127 = vld [vmem:[#allocation22 + $0x160] sm:$0xff]
    %v1128 = vld [vmem:[#allocation22 + $0x168] sm:$0xff]
    %v1129 = vld [vmem:[#allocation22 + $0x170] sm:$0xff]
    %v1130 = vld [vmem:[#allocation22 + $0x178] sm:$0xff]
    %v1131 = vld [vmem:[#allocation22 + $0x180] sm:$0xff]
    %v1132 = vld [vmem:[#allocation22 + $0x188] sm:$0xff]
    %v1133 = vld [vmem:[#allocation22 + $0x190] sm:$0xff]
    %v1134 = vld [vmem:[#allocation22 + $0x198] sm:$0xff]
    %v1135 = vld [vmem:[#allocation22 + $0x1a0] sm:$0xff]
    %v1136 = vld [vmem:[#allocation22 + $0x1a8] sm:$0xff]
    %v1137 = vld [vmem:[#allocation22 + $0x1b0] sm:$0xff]
    %v1138 = vld [vmem:[#allocation22 + $0x1b8] sm:$0xff]
    %v1139 = vld [vmem:[#allocation22 + $0x1c0] sm:$0xff]
    %v1140 = vld [vmem:[#allocation22 + $0x1c8] sm:$0xff]
    %v1141 = vld [vmem:[#allocation22 + $0x1d0] sm:$0xff]
    %v1142 = vld [vmem:[#allocation22 + $0x1d8] sm:$0xff]
    %v1143 = vld [vmem:[#allocation22 + $0x1e0] sm:$0xff]
    %v1144 = vld [vmem:[#allocation22 + $0x1e8] sm:$0xff]
    %v1145 = vld [vmem:[#allocation22 + $0x1f0] sm:$0xff]
    %v1146 = vld [vmem:[#allocation22 + $0x1f8] sm:$0xff]
    %v1147 = vld [vmem:[#allocation22 + $0x200] sm:$0xff]
    %v1148 = vld [vmem:[#allocation22 + $0x208] sm:$0xff]
    %v1149 = vld [vmem:[#allocation22 + $0x210] sm:$0xff]
    %v1150 = vld [vmem:[#allocation22 + $0x218] sm:$0xff]
    %v1151 = vld [vmem:[#allocation22 + $0x220] sm:$0xff]
    %v1152 = vld [vmem:[#allocation22 + $0x228] sm:$0xff]
    %v1153 = vld [vmem:[#allocation22 + $0x230] sm:$0xff]
    %v1154 = vld [vmem:[#allocation22 + $0x238] sm:$0xff]
    %v1155 = vld [vmem:[#allocation22 + $0x240] sm:$0xff]
    %v1156 = vld [vmem:[#allocation22 + $0x248] sm:$0xff]
    %v1157 = vld [vmem:[#allocation22 + $0x250] sm:$0xff]
    %v1158 = vld [vmem:[#allocation22 + $0x258] sm:$0xff]
    %v1159 = vld [vmem:[#allocation22 + $0x260] sm:$0xff]
    %v1160 = vld [vmem:[#allocation22 + $0x268] sm:$0xff]
    %v1161 = vld [vmem:[#allocation22 + $0x270] sm:$0xff]
    %v1162 = vld [vmem:[#allocation22 + $0x278] sm:$0xff]
    %v1163 = vld [vmem:[#allocation22 + $0x280] sm:$0xff]
    %v1164 = vld [vmem:[#allocation22 + $0x288] sm:$0xff]
    %v1165 = vld [vmem:[#allocation22 + $0x290] sm:$0xff]
    %v1166 = vld [vmem:[#allocation22 + $0x298] sm:$0xff]
    %v1167 = vld [vmem:[#allocation22 + $0x2a0] sm:$0xff]
    %v1168 = vld [vmem:[#allocation22 + $0x2a8] sm:$0xff]
    %v1169 = vld [vmem:[#allocation22 + $0x2b0] sm:$0xff]
    %v1170 = vld [vmem:[#allocation22 + $0x2b8] sm:$0xff]
    %v1171 = vld [vmem:[#allocation22 + $0x2c0] sm:$0xff]
    %v1172 = vld [vmem:[#allocation22 + $0x2c8] sm:$0xff]
    %v1173 = vld [vmem:[#allocation22 + $0x2d0] sm:$0xff]
    %v1174 = vld [vmem:[#allocation22 + $0x2d8] sm:$0xff]
    %v1175 = vld [vmem:[#allocation22 + $0x2e0] sm:$0xff]
    %v1176 = vld [vmem:[#allocation22 + $0x2e8] sm:$0xff]
    %v1177 = vld [vmem:[#allocation22 + $0x2f0] sm:$0xff]
    %v1178 = vld [vmem:[#allocation22 + $0x2f8] sm:$0xff]
    %v1179 = vld [vmem:[#allocation23] sm:$0xff]
    %v1180 = vld [vmem:[#allocation23 + $0x8] sm:$0xff]
    %v1181 = vld [vmem:[#allocation23 + $0x10] sm:$0xff]
    %v1182 = vld [vmem:[#allocation23 + $0x18] sm:$0xff]
    %v1183 = vld [vmem:[#allocation23 + $0x20] sm:$0xff]
    %v1184 = vld [vmem:[#allocation23 + $0x28] sm:$0xff]
    %v1185 = vld [vmem:[#allocation23 + $0x30] sm:$0xff]
    %v1186 = vld [vmem:[#allocation23 + $0x38] sm:$0xff]
    %v1187 = vld [vmem:[#allocation23 + $0x40] sm:$0xff]
    %v1188 = vld [vmem:[#allocation23 + $0x48] sm:$0xff]
    %v1189 = vld [vmem:[#allocation23 + $0x50] sm:$0xff]
    %v1190 = vld [vmem:[#allocation23 + $0x58] sm:$0xff]
    %v1191 = vld [vmem:[#allocation23 + $0x60] sm:$0xff]
    %v1192 = vld [vmem:[#allocation23 + $0x68] sm:$0xff]
    %v1193 = vld [vmem:[#allocation23 + $0x70] sm:$0xff]
    %v1194 = vld [vmem:[#allocation23 + $0x78] sm:$0xff]
    %v1195 = vld [vmem:[#allocation23 + $0x80] sm:$0xff]
    %v1196 = vld [vmem:[#allocation23 + $0x88] sm:$0xff]
    %v1197 = vld [vmem:[#allocation23 + $0x90] sm:$0xff]
    %v1198 = vld [vmem:[#allocation23 + $0x98] sm:$0xff]
    %v1199 = vld [vmem:[#allocation23 + $0xa0] sm:$0xff]
    %v1200 = vld [vmem:[#allocation23 + $0xa8] sm:$0xff]
    %v1201 = vld [vmem:[#allocation23 + $0xb0] sm:$0xff]
    %v1202 = vld [vmem:[#allocation23 + $0xb8] sm:$0xff]
    %v1203 = vld [vmem:[#allocation23 + $0xc0] sm:$0xff]
    %v1204 = vld [vmem:[#allocation23 + $0xc8] sm:$0xff]
    %v1205 = vld [vmem:[#allocation23 + $0xd0] sm:$0xff]
    %v1206 = vld [vmem:[#allocation23 + $0xd8] sm:$0xff]
    %v1207 = vld [vmem:[#allocation23 + $0xe0] sm:$0xff]
    %v1208 = vld [vmem:[#allocation23 + $0xe8] sm:$0xff]
    %v1209 = vld [vmem:[#allocation23 + $0xf0] sm:$0xff]
    %v1210 = vld [vmem:[#allocation23 + $0xf8] sm:$0xff]
    %v1211 = vld [vmem:[#allocation23 + $0x100] sm:$0xff]
    %v1212 = vld [vmem:[#allocation23 + $0x108] sm:$0xff]
    %v1213 = vld [vmem:[#allocation23 + $0x110] sm:$0xff]
    %v1214 = vld [vmem:[#allocation23 + $0x118] sm:$0xff]
    %v1215 = vld [vmem:[#allocation23 + $0x120] sm:$0xff]
    %v1216 = vld [vmem:[#allocation23 + $0x128] sm:$0xff]
    %v1217 = vld [vmem:[#allocation23 + $0x130] sm:$0xff]
    %v1218 = vld [vmem:[#allocation23 + $0x138] sm:$0xff]
    %v1219 = vld [vmem:[#allocation23 + $0x140] sm:$0xff]
    %v1220 = vld [vmem:[#allocation23 + $0x148] sm:$0xff]
    %v1221 = vld [vmem:[#allocation23 + $0x150] sm:$0xff]
    %v1222 = vld [vmem:[#allocation23 + $0x158] sm:$0xff]
    %v1223 = vld [vmem:[#allocation23 + $0x160] sm:$0xff]
    %v1224 = vld [vmem:[#allocation23 + $0x168] sm:$0xff]
    %v1225 = vld [vmem:[#allocation23 + $0x170] sm:$0xff]
    %v1226 = vld [vmem:[#allocation23 + $0x178] sm:$0xff]
    %v1227 = vld [vmem:[#allocation23 + $0x180] sm:$0xff]
    %v1228 = vld [vmem:[#allocation23 + $0x188] sm:$0xff]
    %v1229 = vld [vmem:[#allocation23 + $0x190] sm:$0xff]
    %v1230 = vld [vmem:[#allocation23 + $0x198] sm:$0xff]
    %v1231 = vld [vmem:[#allocation23 + $0x1a0] sm:$0xff]
    %v1232 = vld [vmem:[#allocation23 + $0x1a8] sm:$0xff]
    %v1233 = vld [vmem:[#allocation23 + $0x1b0] sm:$0xff]
    %v1234 = vld [vmem:[#allocation23 + $0x1b8] sm:$0xff]
    %v1235 = vld [vmem:[#allocation23 + $0x1c0] sm:$0xff]
    %v1236 = vld [vmem:[#allocation23 + $0x1c8] sm:$0xff]
    %v1237 = vld [vmem:[#allocation23 + $0x1d0] sm:$0xff]
    %v1238 = vld [vmem:[#allocation23 + $0x1d8] sm:$0xff]
    %v1239 = vld [vmem:[#allocation23 + $0x1e0] sm:$0xff]
    %v1240 = vld [vmem:[#allocation23 + $0x1e8] sm:$0xff]
    %v1241 = vld [vmem:[#allocation23 + $0x1f0] sm:$0xff]
    %v1242 = vld [vmem:[#allocation23 + $0x1f8] sm:$0xff]
    %v1243 = vld [vmem:[#allocation23 + $0x200] sm:$0xff]
    %v1244 = vld [vmem:[#allocation23 + $0x208] sm:$0xff]
    %v1245 = vld [vmem:[#allocation23 + $0x210] sm:$0xff]
    %v1246 = vld [vmem:[#allocation23 + $0x218] sm:$0xff]
    %v1247 = vld [vmem:[#allocation23 + $0x220] sm:$0xff]
    %v1248 = vld [vmem:[#allocation23 + $0x228] sm:$0xff]
    %v1249 = vld [vmem:[#allocation23 + $0x230] sm:$0xff]
    %v1250 = vld [vmem:[#allocation23 + $0x238] sm:$0xff]
    %v1251 = vld [vmem:[#allocation23 + $0x240] sm:$0xff]
    %v1252 = vld [vmem:[#allocation23 + $0x248] sm:$0xff]
    %v1253 = vld [vmem:[#allocation23 + $0x250] sm:$0xff]
    %v1254 = vld [vmem:[#allocation23 + $0x258] sm:$0xff]
    %v1255 = vld [vmem:[#allocation23 + $0x260] sm:$0xff]
    %v1256 = vld [vmem:[#allocation23 + $0x268] sm:$0xff]
    %v1257 = vld [vmem:[#allocation23 + $0x270] sm:$0xff]
    %v1258 = vld [vmem:[#allocation23 + $0x278] sm:$0xff]
    %v1259 = vld [vmem:[#allocation23 + $0x280] sm:$0xff]
    %v1260 = vld [vmem:[#allocation23 + $0x288] sm:$0xff]
    %v1261 = vld [vmem:[#allocation23 + $0x290] sm:$0xff]
    %v1262 = vld [vmem:[#allocation23 + $0x298] sm:$0xff]
    %v1263 = vld [vmem:[#allocation23 + $0x2a0] sm:$0xff]
    %v1264 = vld [vmem:[#allocation23 + $0x2a8] sm:$0xff]
    %v1265 = vld [vmem:[#allocation23 + $0x2b0] sm:$0xff]
    %v1266 = vld [vmem:[#allocation23 + $0x2b8] sm:$0xff]
    %v1267 = vld [vmem:[#allocation23 + $0x2c0] sm:$0xff]
    %v1268 = vld [vmem:[#allocation23 + $0x2c8] sm:$0xff]
    %v1269 = vld [vmem:[#allocation23 + $0x2d0] sm:$0xff]
    %v1270 = vld [vmem:[#allocation23 + $0x2d8] sm:$0xff]
    %v1271 = vld [vmem:[#allocation23 + $0x2e0] sm:$0xff]
    %v1272 = vld [vmem:[#allocation23 + $0x2e8] sm:$0xff]
    %v1273 = vld [vmem:[#allocation23 + $0x2f0] sm:$0xff]
    %v1274 = vld [vmem:[#allocation23 + $0x2f8] sm:$0xff]
    %v1275 = vld [vmem:[#allocation23 + $0x300] sm:$0xff]
    %v1276 = vld [vmem:[#allocation23 + $0x308] sm:$0xff]
    %v1277 = vld [vmem:[#allocation23 + $0x310] sm:$0xff]
    %v1278 = vld [vmem:[#allocation23 + $0x318] sm:$0xff]
    %v1279 = vld [vmem:[#allocation23 + $0x320] sm:$0xff]
    %v1280 = vld [vmem:[#allocation23 + $0x328] sm:$0xff]
    %v1281 = vld [vmem:[#allocation23 + $0x330] sm:$0xff]
    %v1282 = vld [vmem:[#allocation23 + $0x338] sm:$0xff]
    %v1283 = vld [vmem:[#allocation23 + $0x340] sm:$0xff]
    %v1284 = vld [vmem:[#allocation23 + $0x348] sm:$0xff]
    %v1285 = vld [vmem:[#allocation23 + $0x350] sm:$0xff]
    %v1286 = vld [vmem:[#allocation23 + $0x358] sm:$0xff]
    %v1287 = vld [vmem:[#allocation23 + $0x360] sm:$0xff]
    %v1288 = vld [vmem:[#allocation23 + $0x368] sm:$0xff]
    %v1289 = vld [vmem:[#allocation23 + $0x370] sm:$0xff]
    %v1290 = vld [vmem:[#allocation23 + $0x378] sm:$0xff]
    %v1291 = vld [vmem:[#allocation23 + $0x380] sm:$0xff]
    %v1292 = vld [vmem:[#allocation23 + $0x388] sm:$0xff]
    %v1293 = vld [vmem:[#allocation23 + $0x390] sm:$0xff]
    %v1294 = vld [vmem:[#allocation23 + $0x398] sm:$0xff]
    %v1295 = vld [vmem:[#allocation23 + $0x3a0] sm:$0xff]
    %v1296 = vld [vmem:[#allocation23 + $0x3a8] sm:$0xff]
    %v1297 = vld [vmem:[#allocation23 + $0x3b0] sm:$0xff]
    %v1298 = vld [vmem:[#allocation23 + $0x3b8] sm:$0xff]
    %v1299 = vld [vmem:[#allocation23 + $0x3c0] sm:$0xff]
    %v1300 = vld [vmem:[#allocation23 + $0x3c8] sm:$0xff]
    %v1301 = vld [vmem:[#allocation23 + $0x3d0] sm:$0xff]
    %v1302 = vld [vmem:[#allocation23 + $0x3d8] sm:$0xff]
    %v1303 = vld [vmem:[#allocation23 + $0x3e0] sm:$0xff]
    %v1304 = vld [vmem:[#allocation23 + $0x3e8] sm:$0xff]
    %v1305 = vld [vmem:[#allocation23 + $0x3f0] sm:$0xff]
    %v1306 = vld [vmem:[#allocation23 + $0x3f8] sm:$0xff]
    %v1307 = vld [vmem:[#allocation25] sm:$0xff]
    %v1308 = vld [vmem:[#allocation25 + $0x8] sm:$0xff]
    %v1309 = vld [vmem:[#allocation25 + $0x10] sm:$0xff]
    %v1310 = vld [vmem:[#allocation25 + $0x18] sm:$0xff]
    %v1311 = vld [vmem:[#allocation25 + $0x20] sm:$0xff]
    %v1312 = vld [vmem:[#allocation25 + $0x28] sm:$0xff]
    %v1313 = vld [vmem:[#allocation25 + $0x30] sm:$0xff]
    %v1314 = vld [vmem:[#allocation25 + $0x38] sm:$0xff]
    %v1315 = vld [vmem:[#allocation25 + $0x40] sm:$0xff]
    %v1316 = vld [vmem:[#allocation25 + $0x48] sm:$0xff]
    %v1317 = vld [vmem:[#allocation25 + $0x50] sm:$0xff]
    %v1318 = vld [vmem:[#allocation25 + $0x58] sm:$0xff]
    %v1319 = vld [vmem:[#allocation25 + $0x60] sm:$0xff]
    %v1320 = vld [vmem:[#allocation25 + $0x68] sm:$0xff]
    %v1321 = vld [vmem:[#allocation25 + $0x70] sm:$0xff]
    %v1322 = vld [vmem:[#allocation25 + $0x78] sm:$0xff]
    %v1323 = vld [vmem:[#allocation25 + $0x80] sm:$0xff]
    %v1324 = vld [vmem:[#allocation25 + $0x88] sm:$0xff]
    %v1325 = vld [vmem:[#allocation25 + $0x90] sm:$0xff]
    %v1326 = vld [vmem:[#allocation25 + $0x98] sm:$0xff]
    %v1327 = vld [vmem:[#allocation25 + $0xa0] sm:$0xff]
    %v1328 = vld [vmem:[#allocation25 + $0xa8] sm:$0xff]
    %v1329 = vld [vmem:[#allocation25 + $0xb0] sm:$0xff]
    %v1330 = vld [vmem:[#allocation25 + $0xb8] sm:$0xff]
    %v1331 = vld [vmem:[#allocation25 + $0xc0] sm:$0xff]
    %v1332 = vld [vmem:[#allocation25 + $0xc8] sm:$0xff]
    %v1333 = vld [vmem:[#allocation25 + $0xd0] sm:$0xff]
    %v1334 = vld [vmem:[#allocation25 + $0xd8] sm:$0xff]
    %v1335 = vld [vmem:[#allocation25 + $0xe0] sm:$0xff]
    %v1336 = vld [vmem:[#allocation25 + $0xe8] sm:$0xff]
    %v1337 = vld [vmem:[#allocation25 + $0xf0] sm:$0xff]
    %v1338 = vld [vmem:[#allocation25 + $0xf8] sm:$0xff]
    %v1339 = vld [vmem:[#allocation25 + $0x100] sm:$0xff]
    %v1340 = vld [vmem:[#allocation25 + $0x108] sm:$0xff]
    %v1341 = vld [vmem:[#allocation25 + $0x110] sm:$0xff]
    %v1342 = vld [vmem:[#allocation25 + $0x118] sm:$0xff]
    %v1343 = vld [vmem:[#allocation25 + $0x120] sm:$0xff]
    %v1344 = vld [vmem:[#allocation25 + $0x128] sm:$0xff]
    %v1345 = vld [vmem:[#allocation25 + $0x130] sm:$0xff]
    %v1346 = vld [vmem:[#allocation25 + $0x138] sm:$0xff]
    %v1347 = vld [vmem:[#allocation25 + $0x140] sm:$0xff]
    %v1348 = vld [vmem:[#allocation25 + $0x148] sm:$0xff]
    %v1349 = vld [vmem:[#allocation25 + $0x150] sm:$0xff]
    %v1350 = vld [vmem:[#allocation25 + $0x158] sm:$0xff]
    %v1351 = vld [vmem:[#allocation25 + $0x160] sm:$0xff]
    %v1352 = vld [vmem:[#allocation25 + $0x168] sm:$0xff]
    %v1353 = vld [vmem:[#allocation25 + $0x170] sm:$0xff]
    %v1354 = vld [vmem:[#allocation25 + $0x178] sm:$0xff]
    %v1355 = vld [vmem:[#allocation25 + $0x180] sm:$0xff]
    %v1356 = vld [vmem:[#allocation25 + $0x188] sm:$0xff]
    %v1357 = vld [vmem:[#allocation25 + $0x190] sm:$0xff]
    %v1358 = vld [vmem:[#allocation25 + $0x198] sm:$0xff]
    %v1359 = vld [vmem:[#allocation25 + $0x1a0] sm:$0xff]
    %v1360 = vld [vmem:[#allocation25 + $0x1a8] sm:$0xff]
    %v1361 = vld [vmem:[#allocation25 + $0x1b0] sm:$0xff]
    %v1362 = vld [vmem:[#allocation25 + $0x1b8] sm:$0xff]
    %v1363 = vld [vmem:[#allocation25 + $0x1c0] sm:$0xff]
    %v1364 = vld [vmem:[#allocation25 + $0x1c8] sm:$0xff]
    %v1365 = vld [vmem:[#allocation25 + $0x1d0] sm:$0xff]
    %v1366 = vld [vmem:[#allocation25 + $0x1d8] sm:$0xff]
    %v1367 = vld [vmem:[#allocation25 + $0x1e0] sm:$0xff]
    %v1368 = vld [vmem:[#allocation25 + $0x1e8] sm:$0xff]
    %v1369 = vld [vmem:[#allocation25 + $0x1f0] sm:$0xff]
    %v1370 = vld [vmem:[#allocation25 + $0x1f8] sm:$0xff]
    %v1371 = vld [vmem:[#allocation25 + $0x200] sm:$0xff]
    %v1372 = vld [vmem:[#allocation25 + $0x208] sm:$0xff]
    %v1373 = vld [vmem:[#allocation25 + $0x210] sm:$0xff]
    %v1374 = vld [vmem:[#allocation25 + $0x218] sm:$0xff]
    %v1375 = vld [vmem:[#allocation25 + $0x220] sm:$0xff]
    %v1376 = vld [vmem:[#allocation25 + $0x228] sm:$0xff]
    %v1377 = vld [vmem:[#allocation25 + $0x230] sm:$0xff]
    %v1378 = vld [vmem:[#allocation25 + $0x238] sm:$0xff]
    %v1379 = vld [vmem:[#allocation25 + $0x240] sm:$0xff]
    %v1380 = vld [vmem:[#allocation25 + $0x248] sm:$0xff]
    %v1381 = vld [vmem:[#allocation25 + $0x250] sm:$0xff]
    %v1382 = vld [vmem:[#allocation25 + $0x258] sm:$0xff]
    %v1383 = vld [vmem:[#allocation25 + $0x260] sm:$0xff]
    %v1384 = vld [vmem:[#allocation25 + $0x268] sm:$0xff]
    %v1385 = vld [vmem:[#allocation25 + $0x270] sm:$0xff]
    %v1386 = vld [vmem:[#allocation25 + $0x278] sm:$0xff]
    %v1387 = vld [vmem:[#allocation25 + $0x280] sm:$0xff]
    %v1388 = vld [vmem:[#allocation25 + $0x288] sm:$0xff]
    %v1389 = vld [vmem:[#allocation25 + $0x290] sm:$0xff]
    %v1390 = vld [vmem:[#allocation25 + $0x298] sm:$0xff]
    %v1391 = vld [vmem:[#allocation25 + $0x2a0] sm:$0xff]
    %v1392 = vld [vmem:[#allocation25 + $0x2a8] sm:$0xff]
    %v1393 = vld [vmem:[#allocation25 + $0x2b0] sm:$0xff]
    %v1394 = vld [vmem:[#allocation25 + $0x2b8] sm:$0xff]
    %v1395 = vld [vmem:[#allocation25 + $0x2c0] sm:$0xff]
    %v1396 = vld [vmem:[#allocation25 + $0x2c8] sm:$0xff]
    %v1397 = vld [vmem:[#allocation25 + $0x2d0] sm:$0xff]
    %v1398 = vld [vmem:[#allocation25 + $0x2d8] sm:$0xff]
    %v1399 = vld [vmem:[#allocation25 + $0x2e0] sm:$0xff]
    %v1400 = vld [vmem:[#allocation25 + $0x2e8] sm:$0xff]
    %v1401 = vld [vmem:[#allocation25 + $0x2f0] sm:$0xff]
    %v1402 = vld [vmem:[#allocation25 + $0x2f8] sm:$0xff]
    %v1403 = vld [vmem:[#allocation25 + $0x300] sm:$0xff]
    %v1404 = vld [vmem:[#allocation25 + $0x308] sm:$0xff]
    %v1405 = vld [vmem:[#allocation25 + $0x310] sm:$0xff]
    %v1406 = vld [vmem:[#allocation25 + $0x318] sm:$0xff]
    %v1407 = vld [vmem:[#allocation25 + $0x320] sm:$0xff]
    %v1408 = vld [vmem:[#allocation25 + $0x328] sm:$0xff]
    %v1409 = vld [vmem:[#allocation25 + $0x330] sm:$0xff]
    %v1410 = vld [vmem:[#allocation25 + $0x338] sm:$0xff]
    %v1411 = vld [vmem:[#allocation25 + $0x340] sm:$0xff]
    %v1412 = vld [vmem:[#allocation25 + $0x348] sm:$0xff]
    %v1413 = vld [vmem:[#allocation25 + $0x350] sm:$0xff]
    %v1414 = vld [vmem:[#allocation25 + $0x358] sm:$0xff]
    %v1415 = vld [vmem:[#allocation25 + $0x360] sm:$0xff]
    %v1416 = vld [vmem:[#allocation25 + $0x368] sm:$0xff]
    %v1417 = vld [vmem:[#allocation25 + $0x370] sm:$0xff]
    %v1418 = vld [vmem:[#allocation25 + $0x378] sm:$0xff]
    %v1419 = vld [vmem:[#allocation25 + $0x380] sm:$0xff]
    %v1420 = vld [vmem:[#allocation25 + $0x388] sm:$0xff]
    %v1421 = vld [vmem:[#allocation25 + $0x390] sm:$0xff]
    %v1422 = vld [vmem:[#allocation25 + $0x398] sm:$0xff]
    %v1423 = vld [vmem:[#allocation25 + $0x3a0] sm:$0xff]
    %v1424 = vld [vmem:[#allocation25 + $0x3a8] sm:$0xff]
    %v1425 = vld [vmem:[#allocation25 + $0x3b0] sm:$0xff]
    %v1426 = vld [vmem:[#allocation25 + $0x3b8] sm:$0xff]
    %v1427 = vld [vmem:[#allocation25 + $0x3c0] sm:$0xff]
    %v1428 = vld [vmem:[#allocation25 + $0x3c8] sm:$0xff]
    %v1429 = vld [vmem:[#allocation25 + $0x3d0] sm:$0xff]
    %v1430 = vld [vmem:[#allocation25 + $0x3d8] sm:$0xff]
    %v1431 = vld [vmem:[#allocation25 + $0x3e0] sm:$0xff]
    %v1432 = vld [vmem:[#allocation25 + $0x3e8] sm:$0xff]
    %v1433 = vld [vmem:[#allocation25 + $0x3f0] sm:$0xff]
    %v1434 = vld [vmem:[#allocation25 + $0x3f8] sm:$0xff]
    %v1435 = vld [vmem:[%s16] sm:$0xff]
    %v1436 = vld [vmem:[%s16 + $0x8] sm:$0xff]
    %v1437 = vld [vmem:[%s16 + $0x10] sm:$0xff]
    %v1438 = vld [vmem:[%s16 + $0x18] sm:$0xff]
    %v1439 = vld [vmem:[%s16 + $0x20] sm:$0xff]
    %v1440 = vld [vmem:[%s16 + $0x28] sm:$0xff]
    %v1441 = vld [vmem:[%s16 + $0x30] sm:$0xff]
    %v1442 = vld [vmem:[%s16 + $0x38] sm:$0xff]
    %v1443 = vld [vmem:[%s16 + $0x40] sm:$0xff]
    %v1444 = vld [vmem:[%s16 + $0x48] sm:$0xff]
    %v1445 = vld [vmem:[%s16 + $0x50] sm:$0xff]
    %v1446 = vld [vmem:[%s16 + $0x58] sm:$0xff]
    %v1447 = vld [vmem:[%s16 + $0x60] sm:$0xff]
    %v1448 = vld [vmem:[%s16 + $0x68] sm:$0xff]
    %v1449 = vld [vmem:[%s16 + $0x70] sm:$0xff]
    %v1450 = vld [vmem:[%s16 + $0x78] sm:$0xff]
    %v1451 = vld [vmem:[%s16 + $0x80] sm:$0xff]
    %v1452 = vld [vmem:[%s16 + $0x88] sm:$0xff]
    %v1453 = vld [vmem:[%s16 + $0x90] sm:$0xff]
    %v1454 = vld [vmem:[%s16 + $0x98] sm:$0xff]
    %v1455 = vld [vmem:[%s16 + $0xa0] sm:$0xff]
    %v1456 = vld [vmem:[%s16 + $0xa8] sm:$0xff]
    %v1457 = vld [vmem:[%s16 + $0xb0] sm:$0xff]
    %v1458 = vld [vmem:[%s16 + $0xb8] sm:$0xff]
    %v1459 = vld [vmem:[%s16 + $0xc0] sm:$0xff]
    %v1460 = vld [vmem:[%s16 + $0xc8] sm:$0xff]
    %v1461 = vld [vmem:[%s16 + $0xd0] sm:$0xff]
    %v1462 = vld [vmem:[%s16 + $0xd8] sm:$0xff]
    %v1463 = vld [vmem:[%s16 + $0xe0] sm:$0xff]
    %v1464 = vld [vmem:[%s16 + $0xe8] sm:$0xff]
    %v1465 = vld [vmem:[%s16 + $0xf0] sm:$0xff]
    %v1466 = vld [vmem:[%s16 + $0xf8] sm:$0xff]
    %v1467 = vld [vmem:[#allocation26] sm:$0xff]
    %v1468 = vld [vmem:[#allocation26 + $0x8] sm:$0xff]
    %v1469 = vld [vmem:[#allocation26 + $0x10] sm:$0xff]
    %v1470 = vld [vmem:[#allocation26 + $0x18] sm:$0xff]
    %v1471 = vld [vmem:[#allocation26 + $0x20] sm:$0xff]
    %v1472 = vld [vmem:[#allocation26 + $0x28] sm:$0xff]
    %v1473 = vld [vmem:[#allocation26 + $0x30] sm:$0xff]
    %v1474 = vld [vmem:[#allocation26 + $0x38] sm:$0xff]
    %v1475 = vld [vmem:[#allocation26 + $0x40] sm:$0xff]
    %v1476 = vld [vmem:[#allocation26 + $0x48] sm:$0xff]
    %v1477 = vld [vmem:[#allocation26 + $0x50] sm:$0xff]
    %v1478 = vld [vmem:[#allocation26 + $0x58] sm:$0xff]
    %v1479 = vld [vmem:[#allocation26 + $0x60] sm:$0xff]
    %v1480 = vld [vmem:[#allocation26 + $0x68] sm:$0xff]
    %v1481 = vld [vmem:[#allocation26 + $0x70] sm:$0xff]
    %v1482 = vld [vmem:[#allocation26 + $0x78] sm:$0xff]
    %v1483 = vld [vmem:[#allocation26 + $0x80] sm:$0xff]
    %v1484 = vld [vmem:[#allocation26 + $0x88] sm:$0xff]
    %v1485 = vld [vmem:[#allocation26 + $0x90] sm:$0xff]
    %v1486 = vld [vmem:[#allocation26 + $0x98] sm:$0xff]
    %v1487 = vld [vmem:[#allocation26 + $0xa0] sm:$0xff]
    %v1488 = vld [vmem:[#allocation26 + $0xa8] sm:$0xff]
    %v1489 = vld [vmem:[#allocation26 + $0xb0] sm:$0xff]
    %v1490 = vld [vmem:[#allocation26 + $0xb8] sm:$0xff]
    %v1491 = vld [vmem:[%s0] sm:$0xff]
    %v1492 = vld [vmem:[%s0 + $0x8] sm:$0xff]
    %v1493 = vld [vmem:[#allocation2] sm:$0xff]
    %v1494 = vld [vmem:[#allocation2 + $0x8] sm:$0xff]
    %v1496 = vlaneseq
    %v1497 = vshrl.u32 %v1496, 7
    %v1498 = vsub.s32 0, %v1497
    %v1499 = vrot.slane %v268, %v1498
    %v1500 = vlaneseq
    %v1501 = vshrl.u32 %v1500, 7
    %v1502 = vsub.s32 1, %v1501
    %v1503 = vrot.slane %v268, %v1502
    %v1504 = vlaneseq
    %v1505 = vshrl.u32 %v1504, 7
    %v1506 = vsub.s32 2, %v1505
    %v1507 = vrot.slane %v268, %v1506
    %vm1511 = vcmask 64512
    %v1513 = vsel %vm1511, %v1491, 0
    %v1516 = vsel %vm1511, %v1492, 0
    %1518 = vmatprep.subr.mxu0 %v266
    %1519 = vmatpush1.msra.mxu0 %v265
    %1520 = vmatprep.subr.mxu0 0.0
    %1521 = vmatpush1.msra.mxu0 0.0
    %1522 = vmatprep.subr.mxu0 0.0
    %1523 = vmatpush1.msra.mxu0 0.0
    %1524 = vmatprep.subr.mxu0 0.0
    %1525 = vmatpush1.msra.mxu0 0.0
    %1526 = vmatprep.subr.mxu0 0.0
    %1527 = vmatpush1.msra.mxu0 0.0
    %1528 = vmatprep.subr.mxu0 0.0
    %1529 = vmatpush1.msra.mxu0 0.0
    %1530 = vmatprep.subr.mxu0 0.0
    %1531 = vmatpush1.msra.mxu0 0.0
    %1532 = vmatprep.subr.mxu0 0.0
    %1533 = vmatpush1.msra.mxu0 0.0
    %1534 = vmatprep.subr.mxu0 0.0
    %1535 = vmatpush1.msra.mxu0 0.0
    %1536 = vmatprep.subr.mxu0 0.0
    %1537 = vmatpush1.msra.mxu0 0.0
    %1538 = vmatprep.subr.mxu0 0.0
    %1539 = vmatpush1.msra.mxu0 0.0
    %1540 = vmatprep.subr.mxu0 0.0
    %1541 = vmatpush1.msra.mxu0 0.0
    %1542 = vmatprep.subr.mxu0 0.0
    %1543 = vmatpush1.msra.mxu0 0.0
    %1544 = vmatprep.subr.mxu0 0.0
    %1545 = vmatpush1.msra.mxu0 0.0
    %1546 = vmatprep.subr.mxu0 0.0
    %1547 = vmatpush1.msra.mxu0 0.0
    %1548 = vmatprep.subr.mxu0 0.0
    %1549 = vmatpush1.msra.mxu0 0.0
    %1550 = vmatprep.subr.mxu0 0.0
    %1551 = vmatpush1.msra.mxu0 0.0
    %1552 = vmatprep.subr.mxu0 0.0
    %1553 = vmatpush1.msra.mxu0 0.0
    %1554 = vmatprep.subr.mxu0 0.0
    %1555 = vmatpush1.msra.mxu0 0.0
    %1556 = vmatprep.subr.mxu0 0.0
    %1557 = vmatpush1.msra.mxu0 0.0
    %1558 = vmatprep.subr.mxu0 0.0
    %1559 = vmatpush1.msra.mxu0 0.0
    %1560 = vmatprep.subr.mxu0 0.0
    %1561 = vmatpush1.msra.mxu0 0.0
    %1562 = vmatprep.subr.mxu0 0.0
    %1563 = vmatpush1.msra.mxu0 0.0
    %1564 = vmatprep.subr.mxu0 0.0
    %1565 = vmatpush1.msra.mxu0 0.0
    %1566 = vmatprep.subr.mxu0 0.0
    %1567 = vmatpush1.msra.mxu0 0.0
    %1568 = vmatprep.subr.mxu0 0.0
    %1569 = vmatpush1.msra.mxu0 0.0
    %1570 = vmatprep.subr.mxu0 0.0
    %1571 = vmatpush1.msra.mxu0 0.0
    %1572 = vmatprep.subr.mxu0 0.0
    %1573 = vmatpush1.msra.mxu0 0.0
    %1574 = vmatprep.subr.mxu0 0.0
    %1575 = vmatpush1.msra.mxu0 0.0
    %1576 = vmatprep.subr.mxu0 0.0
    %1577 = vmatpush1.msra.mxu0 0.0
    %1578 = vmatprep.subr.mxu0 0.0
    %1579 = vmatpush1.msra.mxu0 0.0
    %1580 = vmatprep.subr.mxu0 0.0
    %1581 = vmatpush1.msra.mxu0 0.0
    %1582 = vmatprep.mubr.f32.mxu0 0.0
    %1583 = vmatmul.mubr.f32.gmra.mrb[0].mxu0 %v1513
    %v1584 = vpop.f32.mrb[0].mxu0
    %v1585 = vadd.f32 %v1499, %v1584
    %v1586 = vpop.f32.mrb[0].mxu0
    %v1587 = vadd.f32 %v1503, %v1586
    %1588 = vmatprep.mubr.f32.mxu0 0.0
    %1589 = vmatmul.mubr.f32.gmra.mrb[0].mxu0 %v1516
    %v1590 = vpop.f32.mrb[0].mxu0
    %v1591 = vadd.f32 %v1499, %v1590
    %v1592 = vpop.f32.mrb[0].mxu0
    %v1593 = vadd.f32 %v1503, %v1592
    %1594 = vdwg.mxu0
    %1595 = vmatprep.subr.mxu0 0.0
    %1596 = vmatpush1.msra.mxu0 %v267
    %1597 = vmatprep.subr.mxu0 0.0
    %1598 = vmatpush1.msra.mxu0 0.0
    %1599 = vmatprep.subr.mxu0 0.0
    %1600 = vmatpush1.msra.mxu0 0.0
    %1601 = vmatprep.subr.mxu0 0.0
    %1602 = vmatpush1.msra.mxu0 0.0
    %1603 = vmatprep.subr.mxu0 0.0
    %1604 = vmatpush1.msra.mxu0 0.0
    %1605 = vmatprep.subr.mxu0 0.0
    %1606 = vmatpush1.msra.mxu0 0.0
    %1607 = vmatprep.subr.mxu0 0.0
    %1608 = vmatpush1.msra.mxu0 0.0
    %1609 = vmatprep.subr.mxu0 0.0
    %1610 = vmatpush1.msra.mxu0 0.0
    %1611 = vmatprep.subr.mxu0 0.0
    %1612 = vmatpush1.msra.mxu0 0.0
    %1613 = vmatprep.subr.mxu0 0.0
    %1614 = vmatpush1.msra.mxu0 0.0
    %1615 = vmatprep.subr.mxu0 0.0
    %1616 = vmatpush1.msra.mxu0 0.0
    %1617 = vmatprep.subr.mxu0 0.0
    %1618 = vmatpush1.msra.mxu0 0.0
    %1619 = vmatprep.subr.mxu0 0.0
    %1620 = vmatpush1.msra.mxu0 0.0
    %1621 = vmatprep.subr.mxu0 0.0
    %1622 = vmatpush1.msra.mxu0 0.0
    %1623 = vmatprep.subr.mxu0 0.0
    %1624 = vmatpush1.msra.mxu0 0.0
    %1625 = vmatprep.subr.mxu0 0.0
    %1626 = vmatpush1.msra.mxu0 0.0
    %1627 = vmatprep.subr.mxu0 0.0
    %1628 = vmatpush1.msra.mxu0 0.0
    %1629 = vmatprep.subr.mxu0 0.0
    %1630 = vmatpush1.msra.mxu0 0.0
    %1631 = vmatprep.subr.mxu0 0.0
    %1632 = vmatpush1.msra.mxu0 0.0
    %1633 = vmatprep.subr.mxu0 0.0
    %1634 = vmatpush1.msra.mxu0 0.0
    %1635 = vmatprep.subr.mxu0 0.0
    %1636 = vmatpush1.msra.mxu0 0.0
    %1637 = vmatprep.subr.mxu0 0.0
    %1638 = vmatpush1.msra.mxu0 0.0
    %1639 = vmatprep.subr.mxu0 0.0
    %1640 = vmatpush1.msra.mxu0 0.0
    %1641 = vmatprep.subr.mxu0 0.0
    %1642 = vmatpush1.msra.mxu0 0.0
    %1643 = vmatprep.subr.mxu0 0.0
    %1644 = vmatpush1.msra.mxu0 0.0
    %1645 = vmatprep.subr.mxu0 0.0
    %1646 = vmatpush1.msra.mxu0 0.0
    %1647 = vmatprep.subr.mxu0 0.0
    %1648 = vmatpush1.msra.mxu0 0.0
    %1649 = vmatprep.subr.mxu0 0.0
    %1650 = vmatpush1.msra.mxu0 0.0
    %1651 = vmatprep.subr.mxu0 0.0
    %1652 = vmatpush1.msra.mxu0 0.0
    %1653 = vmatprep.subr.mxu0 0.0
    %1654 = vmatpush1.msra.mxu0 0.0
    %1655 = vmatprep.subr.mxu0 0.0
    %1656 = vmatpush1.msra.mxu0 0.0
    %1657 = vmatprep.subr.mxu0 0.0
    %1658 = vmatpush1.msra.mxu0 0.0
    %1659 = vmatprep.mubr.f32.mxu0 0.0
    %1660 = vmatmul.mubr.f32.gmra.mrb[0].mxu0 %v1513
    %v1661 = vpop.f32.mrb[0].mxu0
    %v1662 = vadd.f32 %v1507, %v1661
    %v1663 = vpop.f32.mrb[0].mxu0
    %1664 = vmatprep.mubr.f32.mxu0 0.0
    %1665 = vmatmul.mubr.f32.gmra.mrb[0].mxu0 %v1516
    %v1666 = vpop.f32.mrb[0].mxu0
    %v1667 = vadd.f32 %v1507, %v1666
    %v1668 = vpop.f32.mrb[0].mxu0
    %1669 = vdwg.mxu0
    %v1670 = vmax.f32 %v1585, 0.0
    %v1671 = vmax.f32 %v1587, 0.0
    %v1672 = vmax.f32 %v1662, 0.0
    %v1673 = vmax.f32 %v1591, 0.0
    %v1674 = vmax.f32 %v1593, 0.0
    %v1675 = vmax.f32 %v1667, 0.0
    %v1677 = vlaneseq
    %v1678 = vshrl.u32 %v1677, 7
    %v1679 = vsub.s32 0, %v1678
    %v1680 = vrot.slane %v1064, %v1679
    %v1681 = vlaneseq
    %v1682 = vshrl.u32 %v1681, 7
    %v1683 = vsub.s32 1, %v1682
    %v1684 = vrot.slane %v1064, %v1683
    %v1685 = vlaneseq
    %v1686 = vshrl.u32 %v1685, 7
    %v1687 = vsub.s32 2, %v1686
    %v1688 = vrot.slane %v1064, %v1687
    %v1689 = vlaneseq
    %v1690 = vshrl.u32 %v1689, 7
    %v1691 = vsub.s32 3, %v1690
    %v1692 = vrot.slane %v1064, %v1691
    %v1693 = vlaneseq
    %v1694 = vshrl.u32 %v1693, 7
    %v1695 = vsub.s32 4, %v1694
    %v1696 = vrot.slane %v1064, %v1695
    %v1697 = vlaneseq
    %v1698 = vshrl.u32 %v1697, 7
    %v1699 = vsub.s32 5, %v1698
    %v1700 = vrot.slane %v1064, %v1699
    %vm1707 = vcmask 261120
    %v1709 = vsel %vm1707, %v1672, 0
    %v1712 = vsel %vm1707, %v1675, 0
    %1714 = vmatprep.subr.mxu0 %v849
    %1715 = vmatpush1.msra.mxu0 %v848
    %1716 = vmatprep.subr.mxu0 %v855
    %1717 = vmatpush1.msra.mxu0 %v854
    %1718 = vmatprep.subr.mxu0 %v861
    %1719 = vmatpush1.msra.mxu0 %v860
    %1720 = vmatprep.subr.mxu0 %v867
    %1721 = vmatpush1.msra.mxu0 %v866
    %1722 = vmatprep.subr.mxu0 %v873
    %1723 = vmatpush1.msra.mxu0 %v872
    %1724 = vmatprep.subr.mxu0 %v879
    %1725 = vmatpush1.msra.mxu0 %v878
    %1726 = vmatprep.subr.mxu0 %v885
    %1727 = vmatpush1.msra.mxu0 %v884
    %1728 = vmatprep.subr.mxu0 %v891
    %1729 = vmatpush1.msra.mxu0 %v890
    %1730 = vmatprep.subr.mxu0 %v897
    %1731 = vmatpush1.msra.mxu0 %v896
    %1732 = vmatprep.subr.mxu0 %v903
    %1733 = vmatpush1.msra.mxu0 %v902
    %1734 = vmatprep.subr.mxu0 %v909
    %1735 = vmatpush1.msra.mxu0 %v908
    %1736 = vmatprep.subr.mxu0 %v915
    %1737 = vmatpush1.msra.mxu0 %v914
    %1738 = vmatprep.subr.mxu0 %v921
    %1739 = vmatpush1.msra.mxu0 %v920
    %1740 = vmatprep.subr.mxu0 %v927
    %1741 = vmatpush1.msra.mxu0 %v926
    %1742 = vmatprep.subr.mxu0 %v933
    %1743 = vmatpush1.msra.mxu0 %v932
    %1744 = vmatprep.subr.mxu0 %v939
    %1745 = vmatpush1.msra.mxu0 %v938
    %1746 = vmatprep.subr.mxu0 %v945
    %1747 = vmatpush1.msra.mxu0 %v944
    %1748 = vmatprep.subr.mxu0 %v951
    %1749 = vmatpush1.msra.mxu0 %v950
    %1750 = vmatprep.subr.mxu0 %v957
    %1751 = vmatpush1.msra.mxu0 %v956
    %1752 = vmatprep.subr.mxu0 %v963
    %1753 = vmatpush1.msra.mxu0 %v962
    %1754 = vmatprep.subr.mxu0 %v969
    %1755 = vmatpush1.msra.mxu0 %v968
    %1756 = vmatprep.subr.mxu0 %v975
    %1757 = vmatpush1.msra.mxu0 %v974
    %1758 = vmatprep.subr.mxu0 %v981
    %1759 = vmatpush1.msra.mxu0 %v980
    %1760 = vmatprep.subr.mxu0 %v987
    %1761 = vmatpush1.msra.mxu0 %v986
    %1762 = vmatprep.subr.mxu0 %v993
    %1763 = vmatpush1.msra.mxu0 %v992
    %1764 = vmatprep.subr.mxu0 %v999
    %1765 = vmatpush1.msra.mxu0 %v998
    %1766 = vmatprep.subr.mxu0 %v1005
    %1767 = vmatpush1.msra.mxu0 %v1004
    %1768 = vmatprep.subr.mxu0 %v1011
    %1769 = vmatpush1.msra.mxu0 %v1010
    %1770 = vmatprep.subr.mxu0 %v1017
    %1771 = vmatpush1.msra.mxu0 %v1016
    %1772 = vmatprep.subr.mxu0 %v1023
    %1773 = vmatpush1.msra.mxu0 %v1022
    %1774 = vmatprep.subr.mxu0 %v1029
    %1775 = vmatpush1.msra.mxu0 %v1028
    %1776 = vmatprep.subr.mxu0 %v1035
    %1777 = vmatpush1.msra.mxu0 %v1034
    %1778 = vmatprep.mubr.f32.mxu0 %v1671
    %1779 = vmatmul.mubr.f32.gmra.mrb[0].mxu0 %v1670
    %v1780 = vpop.f32.mrb[0].mxu0
    %v1781 = vadd.f32 %v1680, %v1780
    %v1782 = vpop.f32.mrb[0].mxu0
    %v1783 = vadd.f32 %v1684, %v1782
    %1784 = vmatprep.mubr.f32.mxu0 %v1674
    %1785 = vmatmul.mubr.f32.gmra.mrb[0].mxu0 %v1673
    %v1786 = vpop.f32.mrb[0].mxu0
    %v1787 = vadd.f32 %v1680, %v1786
    %v1788 = vpop.f32.mrb[0].mxu0
    %v1789 = vadd.f32 %v1684, %v1788
    %1790 = vdwg.mxu0
    %1791 = vmatprep.subr.mxu0 %v1041
    %1792 = vmatpush1.msra.mxu0 %v1040
    %1793 = vmatprep.subr.mxu0 %v1047
    %1794 = vmatpush1.msra.mxu0 %v1046
    %1795 = vmatprep.subr.mxu0 %v1053
    %1796 = vmatpush1.msra.mxu0 %v1052
    %1797 = vmatprep.subr.mxu0 %v1059
    %1798 = vmatpush1.msra.mxu0 %v1058
    %1799 = vmatprep.subr.mxu0 0.0
    %1800 = vmatpush1.msra.mxu0 0.0
    %1801 = vmatprep.subr.mxu0 0.0
    %1802 = vmatpush1.msra.mxu0 0.0
    %1803 = vmatprep.subr.mxu0 0.0
    %1804 = vmatpush1.msra.mxu0 0.0
    %1805 = vmatprep.subr.mxu0 0.0
    %1806 = vmatpush1.msra.mxu0 0.0
    %1807 = vmatprep.subr.mxu0 0.0
    %1808 = vmatpush1.msra.mxu0 0.0
    %1809 = vmatprep.subr.mxu0 0.0
    %1810 = vmatpush1.msra.mxu0 0.0
    %1811 = vmatprep.subr.mxu0 0.0
    %1812 = vmatpush1.msra.mxu0 0.0
    %1813 = vmatprep.subr.mxu0 0.0
    %1814 = vmatpush1.msra.mxu0 0.0
    %1815 = vmatprep.subr.mxu0 0.0
    %1816 = vmatpush1.msra.mxu0 0.0
    %1817 = vmatprep.subr.mxu0 0.0
    %1818 = vmatpush1.msra.mxu0 0.0
    %1819 = vmatprep.subr.mxu0 0.0
    %1820 = vmatpush1.msra.mxu0 0.0
    %1821 = vmatprep.subr.mxu0 0.0
    %1822 = vmatpush1.msra.mxu0 0.0
    %1823 = vmatprep.subr.mxu0 0.0
    %1824 = vmatpush1.msra.mxu0 0.0
    %1825 = vmatprep.subr.mxu0 0.0
    %1826 = vmatpush1.msra.mxu0 0.0
    %1827 = vmatprep.subr.mxu0 0.0
    %1828 = vmatpush1.msra.mxu0 0.0
    %1829 = vmatprep.subr.mxu0 0.0
    %1830 = vmatpush1.msra.mxu0 0.0
    %1831 = vmatprep.subr.mxu0 0.0
    %1832 = vmatpush1.msra.mxu0 0.0
    %1833 = vmatprep.subr.mxu0 0.0
    %1834 = vmatpush1.msra.mxu0 0.0
    %1835 = vmatprep.subr.mxu0 0.0
    %1836 = vmatpush1.msra.mxu0 0.0
    %1837 = vmatprep.subr.mxu0 0.0
    %1838 = vmatpush1.msra.mxu0 0.0
    %1839 = vmatprep.subr.mxu0 0.0
    %1840 = vmatpush1.msra.mxu0 0.0
    %1841 = vmatprep.subr.mxu0 0.0
    %1842 = vmatpush1.msra.mxu0 0.0
    %1843 = vmatprep.subr.mxu0 0.0
    %1844 = vmatpush1.msra.mxu0 0.0
    %1845 = vmatprep.subr.mxu0 0.0
    %1846 = vmatpush1.msra.mxu0 0.0
    %1847 = vmatprep.subr.mxu0 0.0
    %1848 = vmatpush1.msra.mxu0 0.0
    %1849 = vmatprep.subr.mxu0 0.0
    %1850 = vmatpush1.msra.mxu0 0.0
    %1851 = vmatprep.subr.mxu0 0.0
    %1852 = vmatpush1.msra.mxu0 0.0
    %1853 = vmatprep.subr.mxu0 0.0
    %1854 = vmatpush1.msra.mxu0 0.0
    %1855 = vmatprep.mubr.f32.mxu0 0.0
    %1856 = vmatmul.mubr.f32.gmra.mrb[0].mxu0 %v1709
    %v1857 = vpop.f32.mrb[0].mxu0
    %v1858 = vadd.f32 %v1781, %v1857
    %v1859 = vpop.f32.mrb[0].mxu0
    %v1860 = vadd.f32 %v1783, %v1859
    %1861 = vmatprep.mubr.f32.mxu0 0.0
    %1862 = vmatmul.mubr.f32.gmra.mrb[0].mxu0 %v1712
    %v1863 = vpop.f32.mrb[0].mxu0
    %v1864 = vadd.f32 %v1787, %v1863
    %v1865 = vpop.f32.mrb[0].mxu0
    %v1866 = vadd.f32 %v1789, %v1865
    %1867 = vdwg.mxu0
    %1868 = vmatprep.subr.mxu0 %v851
    %1869 = vmatpush1.msra.mxu0 %v850
    %1870 = vmatprep.subr.mxu0 %v857
    %1871 = vmatpush1.msra.mxu0 %v856
    %1872 = vmatprep.subr.mxu0 %v863
    %1873 = vmatpush1.msra.mxu0 %v862
    %1874 = vmatprep.subr.mxu0 %v869
    %1875 = vmatpush1.msra.mxu0 %v868
    %1876 = vmatprep.subr.mxu0 %v875
    %1877 = vmatpush1.msra.mxu0 %v874
    %1878 = vmatprep.subr.mxu0 %v881
    %1879 = vmatpush1.msra.mxu0 %v880
    %1880 = vmatprep.subr.mxu0 %v887
    %1881 = vmatpush1.msra.mxu0 %v886
    %1882 = vmatprep.subr.mxu0 %v893
    %1883 = vmatpush1.msra.mxu0 %v892
    %1884 = vmatprep.subr.mxu0 %v899
    %1885 = vmatpush1.msra.mxu0 %v898
    %1886 = vmatprep.subr.mxu0 %v905
    %1887 = vmatpush1.msra.mxu0 %v904
    %1888 = vmatprep.subr.mxu0 %v911
    %1889 = vmatpush1.msra.mxu0 %v910
    %1890 = vmatprep.subr.mxu0 %v917
    %1891 = vmatpush1.msra.mxu0 %v916
    %1892 = vmatprep.subr.mxu0 %v923
    %1893 = vmatpush1.msra.mxu0 %v922
    %1894 = vmatprep.subr.mxu0 %v929
    %1895 = vmatpush1.msra.mxu0 %v928
    %1896 = vmatprep.subr.mxu0 %v935
    %1897 = vmatpush1.msra.mxu0 %v934
    %1898 = vmatprep.subr.mxu0 %v941
    %1899 = vmatpush1.msra.mxu0 %v940
    %1900 = vmatprep.subr.mxu0 %v947
    %1901 = vmatpush1.msra.mxu0 %v946
    %1902 = vmatprep.subr.mxu0 %v953
    %1903 = vmatpush1.msra.mxu0 %v952
    %1904 = vmatprep.subr.mxu0 %v959
    %1905 = vmatpush1.msra.mxu0 %v958
    %1906 = vmatprep.subr.mxu0 %v965
    %1907 = vmatpush1.msra.mxu0 %v964
    %1908 = vmatprep.subr.mxu0 %v971
    %1909 = vmatpush1.msra.mxu0 %v970
    %1910 = vmatprep.subr.mxu0 %v977
    %1911 = vmatpush1.msra.mxu0 %v976
    %1912 = vmatprep.subr.mxu0 %v983
    %1913 = vmatpush1.msra.mxu0 %v982
    %1914 = vmatprep.subr.mxu0 %v989
    %1915 = vmatpush1.msra.mxu0 %v988
    %1916 = vmatprep.subr.mxu0 %v995
    %1917 = vmatpush1.msra.mxu0 %v994
    %1918 = vmatprep.subr.mxu0 %v1001
    %1919 = vmatpush1.msra.mxu0 %v1000
    %1920 = vmatprep.subr.mxu0 %v1007
    %1921 = vmatpush1.msra.mxu0 %v1006
    %1922 = vmatprep.subr.mxu0 %v1013
    %1923 = vmatpush1.msra.mxu0 %v1012
    %1924 = vmatprep.subr.mxu0 %v1019
    %1925 = vmatpush1.msra.mxu0 %v1018
    %1926 = vmatprep.subr.mxu0 %v1025
    %1927 = vmatpush1.msra.mxu0 %v1024
    %1928 = vmatprep.subr.mxu0 %v1031
    %1929 = vmatpush1.msra.mxu0 %v1030
    %1930 = vmatprep.subr.mxu0 %v1037
    %1931 = vmatpush1.msra.mxu0 %v1036
    %1932 = vmatprep.mubr.f32.mxu0 %v1671
    %1933 = vmatmul.mubr.f32.gmra.mrb[0].mxu0 %v1670
    %v1934 = vpop.f32.mrb[0].mxu0
    %v1935 = vadd.f32 %v1688, %v1934
    %v1936 = vpop.f32.mrb[0].mxu0
    %v1937 = vadd.f32 %v1692, %v1936
    %1938 = vmatprep.mubr.f32.mxu0 %v1674
    %1939 = vmatmul.mubr.f32.gmra.mrb[0].mxu0 %v1673
    %v1940 = vpop.f32.mrb[0].mxu0
    %v1941 = vadd.f32 %v1688, %v1940
    %v1942 = vpop.f32.mrb[0].mxu0
    %v1943 = vadd.f32 %v1692, %v1942
    %1944 = vdwg.mxu0
    %1945 = vmatprep.subr.mxu0 %v1043
    %1946 = vmatpush1.msra.mxu0 %v1042
    %1947 = vmatprep.subr.mxu0 %v1049
    %1948 = vmatpush1.msra.mxu0 %v1048
    %1949 = vmatprep.subr.mxu0 %v1055
    %1950 = vmatpush1.msra.mxu0 %v1054
    %1951 = vmatprep.subr.mxu0 %v1061
    %1952 = vmatpush1.msra.mxu0 %v1060
    %1953 = vmatprep.subr.mxu0 0.0
    %1954 = vmatpush1.msra.mxu0 0.0
    %1955 = vmatprep.subr.mxu0 0.0
    %1956 = vmatpush1.msra.mxu0 0.0
    %1957 = vmatprep.subr.mxu0 0.0
    %1958 = vmatpush1.msra.mxu0 0.0
    %1959 = vmatprep.subr.mxu0 0.0
    %1960 = vmatpush1.msra.mxu0 0.0
    %1961 = vmatprep.subr.mxu0 0.0
    %1962 = vmatpush1.msra.mxu0 0.0
    %1963 = vmatprep.subr.mxu0 0.0
    %1964 = vmatpush1.msra.mxu0 0.0
    %1965 = vmatprep.subr.mxu0 0.0
    %1966 = vmatpush1.msra.mxu0 0.0
    %1967 = vmatprep.subr.mxu0 0.0
    %1968 = vmatpush1.msra.mxu0 0.0
    %1969 = vmatprep.subr.mxu0 0.0
    %1970 = vmatpush1.msra.mxu0 0.0
    %1971 = vmatprep.subr.mxu0 0.0
    %1972 = vmatpush1.msra.mxu0 0.0
    %1973 = vmatprep.subr.mxu0 0.0
    %1974 = vmatpush1.msra.mxu0 0.0
    %1975 = vmatprep.subr.mxu0 0.0
    %1976 = vmatpush1.msra.mxu0 0.0
    %1977 = vmatprep.subr.mxu0 0.0
    %1978 = vmatpush1.msra.mxu0 0.0
    %1979 = vmatprep.subr.mxu0 0.0
    %1980 = vmatpush1.msra.mxu0 0.0
    %1981 = vmatprep.subr.mxu0 0.0
    %1982 = vmatpush1.msra.mxu0 0.0
    %1983 = vmatprep.subr.mxu0 0.0
    %1984 = vmatpush1.msra.mxu0 0.0
    %1985 = vmatprep.subr.mxu0 0.0
    %1986 = vmatpush1.msra.mxu0 0.0
    %1987 = vmatprep.subr.mxu0 0.0
    %1988 = vmatpush1.msra.mxu0 0.0
    %1989 = vmatprep.subr.mxu0 0.0
    %1990 = vmatpush1.msra.mxu0 0.0
    %1991 = vmatprep.subr.mxu0 0.0
    %1992 = vmatpush1.msra.mxu0 0.0
    %1993 = vmatprep.subr.mxu0 0.0
    %1994 = vmatpush1.msra.mxu0 0.0
    %1995 = vmatprep.subr.mxu0 0.0
    %1996 = vmatpush1.msra.mxu0 0.0
    %1997 = vmatprep.subr.mxu0 0.0
    %1998 = vmatpush1.msra.mxu0 0.0
    %1999 = vmatprep.subr.mxu0 0.0
    %2000 = vmatpush1.msra.mxu0 0.0
    %2001 = vmatprep.subr.mxu0 0.0
    %2002 = vmatpush1.msra.mxu0 0.0
    %2003 = vmatprep.subr.mxu0 0.0
    %2004 = vmatpush1.msra.mxu0 0.0
    %2005 = vmatprep.subr.mxu0 0.0
    %2006 = vmatpush1.msra.mxu0 0.0
    %2007 = vmatprep.subr.mxu0 0.0
    %2008 = vmatpush1.msra.mxu0 0.0
    %2009 = vmatprep.mubr.f32.mxu0 0.0
    %2010 = vmatmul.mubr.f32.gmra.mrb[0].mxu0 %v1709
    %v2011 = vpop.f32.mrb[0].mxu0
    %v2012 = vadd.f32 %v1935, %v2011
    %v2013 = vpop.f32.mrb[0].mxu0
    %v2014 = vadd.f32 %v1937, %v2013
    %2015 = vmatprep.mubr.f32.mxu0 0.0
    %2016 = vmatmul.mubr.f32.gmra.mrb[0].mxu0 %v1712
    %v2017 = vpop.f32.mrb[0].mxu0
    %v2018 = vadd.f32 %v1941, %v2017
    %v2019 = vpop.f32.mrb[0].mxu0
    %v2020 = vadd.f32 %v1943, %v2019
    %2021 = vdwg.mxu0
    %2022 = vmatprep.subr.mxu0 %v853
    %2023 = vmatpush1.msra.mxu0 %v852
    %2024 = vmatprep.subr.mxu0 %v859
    %2025 = vmatpush1.msra.mxu0 %v858
    %2026 = vmatprep.subr.mxu0 %v865
    %2027 = vmatpush1.msra.mxu0 %v864
    %2028 = vmatprep.subr.mxu0 %v871
    %2029 = vmatpush1.msra.mxu0 %v870
    %2030 = vmatprep.subr.mxu0 %v877
    %2031 = vmatpush1.msra.mxu0 %v876
    %2032 = vmatprep.subr.mxu0 %v883
    %2033 = vmatpush1.msra.mxu0 %v882
    %2034 = vmatprep.subr.mxu0 %v889
    %2035 = vmatpush1.msra.mxu0 %v888
    %2036 = vmatprep.subr.mxu0 %v895
    %2037 = vmatpush1.msra.mxu0 %v894
    %2038 = vmatprep.subr.mxu0 %v901
    %2039 = vmatpush1.msra.mxu0 %v900
    %2040 = vmatprep.subr.mxu0 %v907
    %2041 = vmatpush1.msra.mxu0 %v906
    %2042 = vmatprep.subr.mxu0 %v913
    %2043 = vmatpush1.msra.mxu0 %v912
    %2044 = vmatprep.subr.mxu0 %v919
    %2045 = vmatpush1.msra.mxu0 %v918
    %2046 = vmatprep.subr.mxu0 %v925
    %2047 = vmatpush1.msra.mxu0 %v924
    %2048 = vmatprep.subr.mxu0 %v931
    %2049 = vmatpush1.msra.mxu0 %v930
    %2050 = vmatprep.subr.mxu0 %v937
    %2051 = vmatpush1.msra.mxu0 %v936
    %2052 = vmatprep.subr.mxu0 %v943
    %2053 = vmatpush1.msra.mxu0 %v942
    %2054 = vmatprep.subr.mxu0 %v949
    %2055 = vmatpush1.msra.mxu0 %v948
    %2056 = vmatprep.subr.mxu0 %v955
    %2057 = vmatpush1.msra.mxu0 %v954
    %2058 = vmatprep.subr.mxu0 %v961
    %2059 = vmatpush1.msra.mxu0 %v960
    %2060 = vmatprep.subr.mxu0 %v967
    %2061 = vmatpush1.msra.mxu0 %v966
    %2062 = vmatprep.subr.mxu0 %v973
    %2063 = vmatpush1.msra.mxu0 %v972
    %2064 = vmatprep.subr.mxu0 %v979
    %2065 = vmatpush1.msra.mxu0 %v978
    %2066 = vmatprep.subr.mxu0 %v985
    %2067 = vmatpush1.msra.mxu0 %v984
    %2068 = vmatprep.subr.mxu0 %v991
    %2069 = vmatpush1.msra.mxu0 %v990
    %2070 = vmatprep.subr.mxu0 %v997
    %2071 = vmatpush1.msra.mxu0 %v996
    %2072 = vmatprep.subr.mxu0 %v1003
    %2073 = vmatpush1.msra.mxu0 %v1002
    %2074 = vmatprep.subr.mxu0 %v1009
    %2075 = vmatpush1.msra.mxu0 %v1008
    %2076 = vmatprep.subr.mxu0 %v1015
    %2077 = vmatpush1.msra.mxu0 %v1014
    %2078 = vmatprep.subr.mxu0 %v1021
    %2079 = vmatpush1.msra.mxu0 %v1020
    %2080 = vmatprep.subr.mxu0 %v1027
    %2081 = vmatpush1.msra.mxu0 %v1026
    %2082 = vmatprep.subr.mxu0 %v1033
    %2083 = vmatpush1.msra.mxu0 %v1032
    %2084 = vmatprep.subr.mxu0 %v1039
    %2085 = vmatpush1.msra.mxu0 %v1038
    %2086 = vmatprep.mubr.f32.mxu0 %v1671
    %2087 = vmatmul.mubr.f32.gmra.mrb[0].mxu0 %v1670
    %v2088 = vpop.f32.mrb[0].mxu0
    %v2089 = vadd.f32 %v1696, %v2088
    %v2090 = vpop.f32.mrb[0].mxu0
    %v2091 = vadd.f32 %v1700, %v2090
    %2092 = vmatprep.mubr.f32.mxu0 %v1674
    %2093 = vmatmul.mubr.f32.gmra.mrb[0].mxu0 %v1673
    %v2094 = vpop.f32.mrb[0].mxu0
    %v2095 = vadd.f32 %v1696, %v2094
    %v2096 = vpop.f32.mrb[0].mxu0
    %v2097 = vadd.f32 %v1700, %v2096
    %2098 = vdwg.mxu0
    %2099 = vmatprep.subr.mxu0 %v1045
    %2100 = vmatpush1.msra.mxu0 %v1044
    %2101 = vmatprep.subr.mxu0 %v1051
    %2102 = vmatpush1.msra.mxu0 %v1050
    %2103 = vmatprep.subr.mxu0 %v1057
    %2104 = vmatpush1.msra.mxu0 %v1056
    %2105 = vmatprep.subr.mxu0 %v1063
    %2106 = vmatpush1.msra.mxu0 %v1062
    %2107 = vmatprep.subr.mxu0 0.0
    %2108 = vmatpush1.msra.mxu0 0.0
    %2109 = vmatprep.subr.mxu0 0.0
    %2110 = vmatpush1.msra.mxu0 0.0
    %2111 = vmatprep.subr.mxu0 0.0
    %2112 = vmatpush1.msra.mxu0 0.0
    %2113 = vmatprep.subr.mxu0 0.0
    %2114 = vmatpush1.msra.mxu0 0.0
    %2115 = vmatprep.subr.mxu0 0.0
    %2116 = vmatpush1.msra.mxu0 0.0
    %2117 = vmatprep.subr.mxu0 0.0
    %2118 = vmatpush1.msra.mxu0 0.0
    %2119 = vmatprep.subr.mxu0 0.0
    %2120 = vmatpush1.msra.mxu0 0.0
    %2121 = vmatprep.subr.mxu0 0.0
    %2122 = vmatpush1.msra.mxu0 0.0
    %2123 = vmatprep.subr.mxu0 0.0
    %2124 = vmatpush1.msra.mxu0 0.0
    %2125 = vmatprep.subr.mxu0 0.0
    %2126 = vmatpush1.msra.mxu0 0.0
    %2127 = vmatprep.subr.mxu0 0.0
    %2128 = vmatpush1.msra.mxu0 0.0
    %2129 = vmatprep.subr.mxu0 0.0
    %2130 = vmatpush1.msra.mxu0 0.0
    %2131 = vmatprep.subr.mxu0 0.0
    %2132 = vmatpush1.msra.mxu0 0.0
    %2133 = vmatprep.subr.mxu0 0.0
    %2134 = vmatpush1.msra.mxu0 0.0
    %2135 = vmatprep.subr.mxu0 0.0
    %2136 = vmatpush1.msra.mxu0 0.0
    %2137 = vmatprep.subr.mxu0 0.0
    %2138 = vmatpush1.msra.mxu0 0.0
    %2139 = vmatprep.subr.mxu0 0.0
    %2140 = vmatpush1.msra.mxu0 0.0
    %2141 = vmatprep.subr.mxu0 0.0
    %2142 = vmatpush1.msra.mxu0 0.0
    %2143 = vmatprep.subr.mxu0 0.0
    %2144 = vmatpush1.msra.mxu0 0.0
    %2145 = vmatprep.subr.mxu0 0.0
    %2146 = vmatpush1.msra.mxu0 0.0
    %2147 = vmatprep.subr.mxu0 0.0
    %2148 = vmatpush1.msra.mxu0 0.0
    %2149 = vmatprep.subr.mxu0 0.0
    %2150 = vmatpush1.msra.mxu0 0.0
    %2151 = vmatprep.subr.mxu0 0.0
    %2152 = vmatpush1.msra.mxu0 0.0
    %2153 = vmatprep.subr.mxu0 0.0
    %2154 = vmatpush1.msra.mxu0 0.0
    %2155 = vmatprep.subr.mxu0 0.0
    %2156 = vmatpush1.msra.mxu0 0.0
    %2157 = vmatprep.subr.mxu0 0.0
    %2158 = vmatpush1.msra.mxu0 0.0
    %2159 = vmatprep.subr.mxu0 0.0
    %2160 = vmatpush1.msra.mxu0 0.0
    %2161 = vmatprep.subr.mxu0 0.0
    %2162 = vmatpush1.msra.mxu0 0.0
    %2163 = vmatprep.mubr.f32.mxu0 0.0
    %2164 = vmatmul.mubr.f32.gmra.mrb[0].mxu0 %v1709
    %v2165 = vpop.f32.mrb[0].mxu0
    %v2166 = vadd.f32 %v2089, %v2165
    %v2167 = vpop.f32.mrb[0].mxu0
    %v2168 = vadd.f32 %v2091, %v2167
    %2169 = vmatprep.mubr.f32.mxu0 0.0
    %2170 = vmatmul.mubr.f32.gmra.mrb[0].mxu0 %v1712
    %v2171 = vpop.f32.mrb[0].mxu0
    %v2172 = vadd.f32 %v2095, %v2171
    %v2173 = vpop.f32.mrb[0].mxu0
    %v2174 = vadd.f32 %v2097, %v2173
    %2175 = vdwg.mxu0
    %v2177 = vlaneseq
    %v2178 = vshrl.u32 %v2177, 7
    %v2179 = vsub.s32 0, %v2178
    %v2180 = vrot.slane %v485, %v2179
    %v2181 = vlaneseq
    %v2182 = vshrl.u32 %v2181, 7
    %v2183 = vsub.s32 1, %v2182
    %v2184 = vrot.slane %v485, %v2183
    %v2185 = vlaneseq
    %v2186 = vshrl.u32 %v2185, 7
    %v2187 = vsub.s32 2, %v2186
    %v2188 = vrot.slane %v485, %v2187
    %v2189 = vlaneseq
    %v2190 = vshrl.u32 %v2189, 7
    %v2191 = vsub.s32 3, %v2190
    %v2192 = vrot.slane %v485, %v2191
    %v2193 = vlaneseq
    %v2194 = vshrl.u32 %v2193, 7
    %v2195 = vsub.s32 4, %v2194
    %v2196 = vrot.slane %v485, %v2195
    %v2197 = vlaneseq
    %v2198 = vshrl.u32 %v2197, 7
    %v2199 = vsub.s32 5, %v2198
    %v2200 = vrot.slane %v485, %v2199
    %2207 = vmatprep.subr.mxu0 %v270
    %2208 = vmatpush1.msra.mxu0 %v269
    %2209 = vmatprep.subr.mxu0 %v276
    %2210 = vmatpush1.msra.mxu0 %v275
    %2211 = vmatprep.subr.mxu0 %v282
    %2212 = vmatpush1.msra.mxu0 %v281
    %2213 = vmatprep.subr.mxu0 %v288
    %2214 = vmatpush1.msra.mxu0 %v287
    %2215 = vmatprep.subr.mxu0 %v294
    %2216 = vmatpush1.msra.mxu0 %v293
    %2217 = vmatprep.subr.mxu0 %v300
    %2218 = vmatpush1.msra.mxu0 %v299
    %2219 = vmatprep.subr.mxu0 %v306
    %2220 = vmatpush1.msra.mxu0 %v305
    %2221 = vmatprep.subr.mxu0 %v312
    %2222 = vmatpush1.msra.mxu0 %v311
    %2223 = vmatprep.subr.mxu0 %v318
    %2224 = vmatpush1.msra.mxu0 %v317
    %2225 = vmatprep.subr.mxu0 %v324
    %2226 = vmatpush1.msra.mxu0 %v323
    %2227 = vmatprep.subr.mxu0 %v330
    %2228 = vmatpush1.msra.mxu0 %v329
    %2229 = vmatprep.subr.mxu0 %v336
    %2230 = vmatpush1.msra.mxu0 %v335
    %2231 = vmatprep.subr.mxu0 %v342
    %2232 = vmatpush1.msra.mxu0 %v341
    %2233 = vmatprep.subr.mxu0 %v348
    %2234 = vmatpush1.msra.mxu0 %v347
    %2235 = vmatprep.subr.mxu0 %v354
    %2236 = vmatpush1.msra.mxu0 %v353
    %2237 = vmatprep.subr.mxu0 %v360
    %2238 = vmatpush1.msra.mxu0 %v359
    %2239 = vmatprep.subr.mxu0 %v366
    %2240 = vmatpush1.msra.mxu0 %v365
    %2241 = vmatprep.subr.mxu0 %v372
    %2242 = vmatpush1.msra.mxu0 %v371
    %2243 = vmatprep.subr.mxu0 %v378
    %2244 = vmatpush1.msra.mxu0 %v377
    %2245 = vmatprep.subr.mxu0 %v384
    %2246 = vmatpush1.msra.mxu0 %v383
    %2247 = vmatprep.subr.mxu0 %v390
    %2248 = vmatpush1.msra.mxu0 %v389
    %2249 = vmatprep.subr.mxu0 %v396
    %2250 = vmatpush1.msra.mxu0 %v395
    %2251 = vmatprep.subr.mxu0 %v402
    %2252 = vmatpush1.msra.mxu0 %v401
    %2253 = vmatprep.subr.mxu0 %v408
    %2254 = vmatpush1.msra.mxu0 %v407
    %2255 = vmatprep.subr.mxu0 %v414
    %2256 = vmatpush1.msra.mxu0 %v413
    %2257 = vmatprep.subr.mxu0 %v420
    %2258 = vmatpush1.msra.mxu0 %v419
    %2259 = vmatprep.subr.mxu0 %v426
    %2260 = vmatpush1.msra.mxu0 %v425
    %2261 = vmatprep.subr.mxu0 %v432
    %2262 = vmatpush1.msra.mxu0 %v431
    %2263 = vmatprep.subr.mxu0 %v438
    %2264 = vmatpush1.msra.mxu0 %v437
    %2265 = vmatprep.subr.mxu0 %v444
    %2266 = vmatpush1.msra.mxu0 %v443
    %2267 = vmatprep.subr.mxu0 %v450
    %2268 = vmatpush1.msra.mxu0 %v449
    %2269 = vmatprep.subr.mxu0 %v456
    %2270 = vmatpush1.msra.mxu0 %v455
    %2271 = vmatprep.mubr.f32.mxu0 %v1671
    %2272 = vmatmul.mubr.f32.gmra.mrb[0].mxu0 %v1670
    %v2273 = vpop.f32.mrb[0].mxu0
    %v2274 = vadd.f32 %v2180, %v2273
    %v2275 = vpop.f32.mrb[0].mxu0
    %v2276 = vadd.f32 %v2184, %v2275
    %2277 = vmatprep.mubr.f32.mxu0 %v1674
    %2278 = vmatmul.mubr.f32.gmra.mrb[0].mxu0 %v1673
    %v2279 = vpop.f32.mrb[0].mxu0
    %v2280 = vadd.f32 %v2180, %v2279
    %v2281 = vpop.f32.mrb[0].mxu0
    %v2282 = vadd.f32 %v2184, %v2281
    %2283 = vdwg.mxu0
    %2284 = vmatprep.subr.mxu0 %v462
    %2285 = vmatpush1.msra.mxu0 %v461
    %2286 = vmatprep.subr.mxu0 %v468
    %2287 = vmatpush1.msra.mxu0 %v467
    %2288 = vmatprep.subr.mxu0 %v474
    %2289 = vmatpush1.msra.mxu0 %v473
    %2290 = vmatprep.subr.mxu0 %v480
    %2291 = vmatpush1.msra.mxu0 %v479
    %2292 = vmatprep.subr.mxu0 0.0
    %2293 = vmatpush1.msra.mxu0 0.0
    %2294 = vmatprep.subr.mxu0 0.0
    %2295 = vmatpush1.msra.mxu0 0.0
    %2296 = vmatprep.subr.mxu0 0.0
    %2297 = vmatpush1.msra.mxu0 0.0
    %2298 = vmatprep.subr.mxu0 0.0
    %2299 = vmatpush1.msra.mxu0 0.0
    %2300 = vmatprep.subr.mxu0 0.0
    %2301 = vmatpush1.msra.mxu0 0.0
    %2302 = vmatprep.subr.mxu0 0.0
    %2303 = vmatpush1.msra.mxu0 0.0
    %2304 = vmatprep.subr.mxu0 0.0
    %2305 = vmatpush1.msra.mxu0 0.0
    %2306 = vmatprep.subr.mxu0 0.0
    %2307 = vmatpush1.msra.mxu0 0.0
    %2308 = vmatprep.subr.mxu0 0.0
    %2309 = vmatpush1.msra.mxu0 0.0
    %2310 = vmatprep.subr.mxu0 0.0
    %2311 = vmatpush1.msra.mxu0 0.0
    %2312 = vmatprep.subr.mxu0 0.0
    %2313 = vmatpush1.msra.mxu0 0.0
    %2314 = vmatprep.subr.mxu0 0.0
    %2315 = vmatpush1.msra.mxu0 0.0
    %2316 = vmatprep.subr.mxu0 0.0
    %2317 = vmatpush1.msra.mxu0 0.0
    %2318 = vmatprep.subr.mxu0 0.0
    %2319 = vmatpush1.msra.mxu0 0.0
    %2320 = vmatprep.subr.mxu0 0.0
    %2321 = vmatpush1.msra.mxu0 0.0
    %2322 = vmatprep.subr.mxu0 0.0
    %2323 = vmatpush1.msra.mxu0 0.0
    %2324 = vmatprep.subr.mxu0 0.0
    %2325 = vmatpush1.msra.mxu0 0.0
    %2326 = vmatprep.subr.mxu0 0.0
    %2327 = vmatpush1.msra.mxu0 0.0
    %2328 = vmatprep.subr.mxu0 0.0
    %2329 = vmatpush1.msra.mxu0 0.0
    %2330 = vmatprep.subr.mxu0 0.0
    %2331 = vmatpush1.msra.mxu0 0.0
    %2332 = vmatprep.subr.mxu0 0.0
    %2333 = vmatpush1.msra.mxu0 0.0
    %2334 = vmatprep.subr.mxu0 0.0
    %2335 = vmatpush1.msra.mxu0 0.0
    %2336 = vmatprep.subr.mxu0 0.0
    %2337 = vmatpush1.msra.mxu0 0.0
    %2338 = vmatprep.subr.mxu0 0.0
    %2339 = vmatpush1.msra.mxu0 0.0
    %2340 = vmatprep.subr.mxu0 0.0
    %2341 = vmatpush1.msra.mxu0 0.0
    %2342 = vmatprep.subr.mxu0 0.0
    %2343 = vmatpush1.msra.mxu0 0.0
    %2344 = vmatprep.subr.mxu0 0.0
    %2345 = vmatpush1.msra.mxu0 0.0
    %2346 = vmatprep.subr.mxu0 0.0
    %2347 = vmatpush1.msra.mxu0 0.0
    %2348 = vmatprep.mubr.f32.mxu0 0.0
    %2349 = vmatmul.mubr.f32.gmra.mrb[0].mxu0 %v1709
    %v2350 = vpop.f32.mrb[0].mxu0
    %v2351 = vadd.f32 %v2274, %v2350
    %v2352 = vpop.f32.mrb[0].mxu0
    %v2353 = vadd.f32 %v2276, %v2352
    %2354 = vmatprep.mubr.f32.mxu0 0.0
    %2355 = vmatmul.mubr.f32.gmra.mrb[0].mxu0 %v1712
    %v2356 = vpop.f32.mrb[0].mxu0
    %v2357 = vadd.f32 %v2280, %v2356
    %v2358 = vpop.f32.mrb[0].mxu0
    %v2359 = vadd.f32 %v2282, %v2358
    %2360 = vdwg.mxu0
    %2361 = vmatprep.subr.mxu0 %v272
    %2362 = vmatpush1.msra.mxu0 %v271
    %2363 = vmatprep.subr.mxu0 %v278
    %2364 = vmatpush1.msra.mxu0 %v277
    %2365 = vmatprep.subr.mxu0 %v284
    %2366 = vmatpush1.msra.mxu0 %v283
    %2367 = vmatprep.subr.mxu0 %v290
    %2368 = vmatpush1.msra.mxu0 %v289
    %2369 = vmatprep.subr.mxu0 %v296
    %2370 = vmatpush1.msra.mxu0 %v295
    %2371 = vmatprep.subr.mxu0 %v302
    %2372 = vmatpush1.msra.mxu0 %v301
    %2373 = vmatprep.subr.mxu0 %v308
    %2374 = vmatpush1.msra.mxu0 %v307
    %2375 = vmatprep.subr.mxu0 %v314
    %2376 = vmatpush1.msra.mxu0 %v313
    %2377 = vmatprep.subr.mxu0 %v320
    %2378 = vmatpush1.msra.mxu0 %v319
    %2379 = vmatprep.subr.mxu0 %v326
    %2380 = vmatpush1.msra.mxu0 %v325
    %2381 = vmatprep.subr.mxu0 %v332
    %2382 = vmatpush1.msra.mxu0 %v331
    %2383 = vmatprep.subr.mxu0 %v338
    %2384 = vmatpush1.msra.mxu0 %v337
    %2385 = vmatprep.subr.mxu0 %v344
    %2386 = vmatpush1.msra.mxu0 %v343
    %2387 = vmatprep.subr.mxu0 %v350
    %2388 = vmatpush1.msra.mxu0 %v349
    %2389 = vmatprep.subr.mxu0 %v356
    %2390 = vmatpush1.msra.mxu0 %v355
    %2391 = vmatprep.subr.mxu0 %v362
    %2392 = vmatpush1.msra.mxu0 %v361
    %2393 = vmatprep.subr.mxu0 %v368
    %2394 = vmatpush1.msra.mxu0 %v367
    %2395 = vmatprep.subr.mxu0 %v374
    %2396 = vmatpush1.msra.mxu0 %v373
    %2397 = vmatprep.subr.mxu0 %v380
    %2398 = vmatpush1.msra.mxu0 %v379
    %2399 = vmatprep.subr.mxu0 %v386
    %2400 = vmatpush1.msra.mxu0 %v385
    %2401 = vmatprep.subr.mxu0 %v392
    %2402 = vmatpush1.msra.mxu0 %v391
    %2403 = vmatprep.subr.mxu0 %v398
    %2404 = vmatpush1.msra.mxu0 %v397
    %2405 = vmatprep.subr.mxu0 %v404
    %2406 = vmatpush1.msra.mxu0 %v403
    %2407 = vmatprep.subr.mxu0 %v410
    %2408 = vmatpush1.msra.mxu0 %v409
    %2409 = vmatprep.subr.mxu0 %v416
    %2410 = vmatpush1.msra.mxu0 %v415
    %2411 = vmatprep.subr.mxu0 %v422
    %2412 = vmatpush1.msra.mxu0 %v421
    %2413 = vmatprep.subr.mxu0 %v428
    %2414 = vmatpush1.msra.mxu0 %v427
    %2415 = vmatprep.subr.mxu0 %v434
    %2416 = vmatpush1.msra.mxu0 %v433
    %2417 = vmatprep.subr.mxu0 %v440
    %2418 = vmatpush1.msra.mxu0 %v439
    %2419 = vmatprep.subr.mxu0 %v446
    %2420 = vmatpush1.msra.mxu0 %v445
    %2421 = vmatprep.subr.mxu0 %v452
    %2422 = vmatpush1.msra.mxu0 %v451
    %2423 = vmatprep.subr.mxu0 %v458
    %2424 = vmatpush1.msra.mxu0 %v457
    %2425 = vmatprep.mubr.f32.mxu0 %v1671
    %2426 = vmatmul.mubr.f32.gmra.mrb[0].mxu0 %v1670
    %v2427 = vpop.f32.mrb[0].mxu0
    %v2428 = vadd.f32 %v2188, %v2427
    %v2429 = vpop.f32.mrb[0].mxu0
    %v2430 = vadd.f32 %v2192, %v2429
    %2431 = vmatprep.mubr.f32.mxu0 %v1674
    %2432 = vmatmul.mubr.f32.gmra.mrb[0].mxu0 %v1673
    %v2433 = vpop.f32.mrb[0].mxu0
    %v2434 = vadd.f32 %v2188, %v2433
    %v2435 = vpop.f32.mrb[0].mxu0
    %v2436 = vadd.f32 %v2192, %v2435
    %2437 = vdwg.mxu0
    %2438 = vmatprep.subr.mxu0 %v464
    %2439 = vmatpush1.msra.mxu0 %v463
    %2440 = vmatprep.subr.mxu0 %v470
    %2441 = vmatpush1.msra.mxu0 %v469
    %2442 = vmatprep.subr.mxu0 %v476
    %2443 = vmatpush1.msra.mxu0 %v475
    %2444 = vmatprep.subr.mxu0 %v482
    %2445 = vmatpush1.msra.mxu0 %v481
    %2446 = vmatprep.subr.mxu0 0.0
    %2447 = vmatpush1.msra.mxu0 0.0
    %2448 = vmatprep.subr.mxu0 0.0
    %2449 = vmatpush1.msra.mxu0 0.0
    %2450 = vmatprep.subr.mxu0 0.0
    %2451 = vmatpush1.msra.mxu0 0.0
    %2452 = vmatprep.subr.mxu0 0.0
    %2453 = vmatpush1.msra.mxu0 0.0
    %2454 = vmatprep.subr.mxu0 0.0
    %2455 = vmatpush1.msra.mxu0 0.0
    %2456 = vmatprep.subr.mxu0 0.0
    %2457 = vmatpush1.msra.mxu0 0.0
    %2458 = vmatprep.subr.mxu0 0.0
    %2459 = vmatpush1.msra.mxu0 0.0
    %2460 = vmatprep.subr.mxu0 0.0
    %2461 = vmatpush1.msra.mxu0 0.0
    %2462 = vmatprep.subr.mxu0 0.0
    %2463 = vmatpush1.msra.mxu0 0.0
    %2464 = vmatprep.subr.mxu0 0.0
    %2465 = vmatpush1.msra.mxu0 0.0
    %2466 = vmatprep.subr.mxu0 0.0
    %2467 = vmatpush1.msra.mxu0 0.0
    %2468 = vmatprep.subr.mxu0 0.0
    %2469 = vmatpush1.msra.mxu0 0.0
    %2470 = vmatprep.subr.mxu0 0.0
    %2471 = vmatpush1.msra.mxu0 0.0
    %2472 = vmatprep.subr.mxu0 0.0
    %2473 = vmatpush1.msra.mxu0 0.0
    %2474 = vmatprep.subr.mxu0 0.0
    %2475 = vmatpush1.msra.mxu0 0.0
    %2476 = vmatprep.subr.mxu0 0.0
    %2477 = vmatpush1.msra.mxu0 0.0
    %2478 = vmatprep.subr.mxu0 0.0
    %2479 = vmatpush1.msra.mxu0 0.0
    %2480 = vmatprep.subr.mxu0 0.0
    %2481 = vmatpush1.msra.mxu0 0.0
    %2482 = vmatprep.subr.mxu0 0.0
    %2483 = vmatpush1.msra.mxu0 0.0
    %2484 = vmatprep.subr.mxu0 0.0
    %2485 = vmatpush1.msra.mxu0 0.0
    %2486 = vmatprep.subr.mxu0 0.0
    %2487 = vmatpush1.msra.mxu0 0.0
    %2488 = vmatprep.subr.mxu0 0.0
    %2489 = vmatpush1.msra.mxu0 0.0
    %2490 = vmatprep.subr.mxu0 0.0
    %2491 = vmatpush1.msra.mxu0 0.0
    %2492 = vmatprep.subr.mxu0 0.0
    %2493 = vmatpush1.msra.mxu0 0.0
    %2494 = vmatprep.subr.mxu0 0.0
    %2495 = vmatpush1.msra.mxu0 0.0
    %2496 = vmatprep.subr.mxu0 0.0
    %2497 = vmatpush1.msra.mxu0 0.0
    %2498 = vmatprep.subr.mxu0 0.0
    %2499 = vmatpush1.msra.mxu0 0.0
    %2500 = vmatprep.subr.mxu0 0.0
    %2501 = vmatpush1.msra.mxu0 0.0
    %2502 = vmatprep.mubr.f32.mxu0 0.0
    %2503 = vmatmul.mubr.f32.gmra.mrb[0].mxu0 %v1709
    %v2504 = vpop.f32.mrb[0].mxu0
    %v2505 = vadd.f32 %v2428, %v2504
    %v2506 = vpop.f32.mrb[0].mxu0
    %v2507 = vadd.f32 %v2430, %v2506
    %2508 = vmatprep.mubr.f32.mxu0 0.0
    %2509 = vmatmul.mubr.f32.gmra.mrb[0].mxu0 %v1712
    %v2510 = vpop.f32.mrb[0].mxu0
    %v2511 = vadd.f32 %v2434, %v2510
    %v2512 = vpop.f32.mrb[0].mxu0
    %v2513 = vadd.f32 %v2436, %v2512
    %2514 = vdwg.mxu0
    %2515 = vmatprep.subr.mxu0 %v274
    %2516 = vmatpush1.msra.mxu0 %v273
    %2517 = vmatprep.subr.mxu0 %v280
    %2518 = vmatpush1.msra.mxu0 %v279
    %2519 = vmatprep.subr.mxu0 %v286
    %2520 = vmatpush1.msra.mxu0 %v285
    %2521 = vmatprep.subr.mxu0 %v292
    %2522 = vmatpush1.msra.mxu0 %v291
    %2523 = vmatprep.subr.mxu0 %v298
    %2524 = vmatpush1.msra.mxu0 %v297
    %2525 = vmatprep.subr.mxu0 %v304
    %2526 = vmatpush1.msra.mxu0 %v303
    %2527 = vmatprep.subr.mxu0 %v310
    %2528 = vmatpush1.msra.mxu0 %v309
    %2529 = vmatprep.subr.mxu0 %v316
    %2530 = vmatpush1.msra.mxu0 %v315
    %2531 = vmatprep.subr.mxu0 %v322
    %2532 = vmatpush1.msra.mxu0 %v321
    %2533 = vmatprep.subr.mxu0 %v328
    %2534 = vmatpush1.msra.mxu0 %v327
    %2535 = vmatprep.subr.mxu0 %v334
    %2536 = vmatpush1.msra.mxu0 %v333
    %2537 = vmatprep.subr.mxu0 %v340
    %2538 = vmatpush1.msra.mxu0 %v339
    %2539 = vmatprep.subr.mxu0 %v346
    %2540 = vmatpush1.msra.mxu0 %v345
    %2541 = vmatprep.subr.mxu0 %v352
    %2542 = vmatpush1.msra.mxu0 %v351
    %2543 = vmatprep.subr.mxu0 %v358
    %2544 = vmatpush1.msra.mxu0 %v357
    %2545 = vmatprep.subr.mxu0 %v364
    %2546 = vmatpush1.msra.mxu0 %v363
    %2547 = vmatprep.subr.mxu0 %v370
    %2548 = vmatpush1.msra.mxu0 %v369
    %2549 = vmatprep.subr.mxu0 %v376
    %2550 = vmatpush1.msra.mxu0 %v375
    %2551 = vmatprep.subr.mxu0 %v382
    %2552 = vmatpush1.msra.mxu0 %v381
    %2553 = vmatprep.subr.mxu0 %v388
    %2554 = vmatpush1.msra.mxu0 %v387
    %2555 = vmatprep.subr.mxu0 %v394
    %2556 = vmatpush1.msra.mxu0 %v393
    %2557 = vmatprep.subr.mxu0 %v400
    %2558 = vmatpush1.msra.mxu0 %v399
    %2559 = vmatprep.subr.mxu0 %v406
    %2560 = vmatpush1.msra.mxu0 %v405
    %2561 = vmatprep.subr.mxu0 %v412
    %2562 = vmatpush1.msra.mxu0 %v411
    %2563 = vmatprep.subr.mxu0 %v418
    %2564 = vmatpush1.msra.mxu0 %v417
    %2565 = vmatprep.subr.mxu0 %v424
    %2566 = vmatpush1.msra.mxu0 %v423
    %2567 = vmatprep.subr.mxu0 %v430
    %2568 = vmatpush1.msra.mxu0 %v429
    %2569 = vmatprep.subr.mxu0 %v436
    %2570 = vmatpush1.msra.mxu0 %v435
    %2571 = vmatprep.subr.mxu0 %v442
    %2572 = vmatpush1.msra.mxu0 %v441
    %2573 = vmatprep.subr.mxu0 %v448
    %2574 = vmatpush1.msra.mxu0 %v447
    %2575 = vmatprep.subr.mxu0 %v454
    %2576 = vmatpush1.msra.mxu0 %v453
    %2577 = vmatprep.subr.mxu0 %v460
    %2578 = vmatpush1.msra.mxu0 %v459
    %2579 = vmatprep.mubr.f32.mxu0 %v1671
    %2580 = vmatmul.mubr.f32.gmra.mrb[0].mxu0 %v1670
    %v2581 = vpop.f32.mrb[0].mxu0
    %v2582 = vadd.f32 %v2196, %v2581
    %v2583 = vpop.f32.mrb[0].mxu0
    %v2584 = vadd.f32 %v2200, %v2583
    %2585 = vmatprep.mubr.f32.mxu0 %v1674
    %2586 = vmatmul.mubr.f32.gmra.mrb[0].mxu0 %v1673
    %v2587 = vpop.f32.mrb[0].mxu0
    %v2588 = vadd.f32 %v2196, %v2587
    %v2589 = vpop.f32.mrb[0].mxu0
    %v2590 = vadd.f32 %v2200, %v2589
    %2591 = vdwg.mxu0
    %2592 = vmatprep.subr.mxu0 %v466
    %2593 = vmatpush1.msra.mxu0 %v465
    %2594 = vmatprep.subr.mxu0 %v472
    %2595 = vmatpush1.msra.mxu0 %v471
    %2596 = vmatprep.subr.mxu0 %v478
    %2597 = vmatpush1.msra.mxu0 %v477
    %2598 = vmatprep.subr.mxu0 %v484
    %2599 = vmatpush1.msra.mxu0 %v483
    %2600 = vmatprep.subr.mxu0 0.0
    %2601 = vmatpush1.msra.mxu0 0.0
    %2602 = vmatprep.subr.mxu0 0.0
    %2603 = vmatpush1.msra.mxu0 0.0
    %2604 = vmatprep.subr.mxu0 0.0
    %2605 = vmatpush1.msra.mxu0 0.0
    %2606 = vmatprep.subr.mxu0 0.0
    %2607 = vmatpush1.msra.mxu0 0.0
    %2608 = vmatprep.subr.mxu0 0.0
    %2609 = vmatpush1.msra.mxu0 0.0
    %2610 = vmatprep.subr.mxu0 0.0
    %2611 = vmatpush1.msra.mxu0 0.0
    %2612 = vmatprep.subr.mxu0 0.0
    %2613 = vmatpush1.msra.mxu0 0.0
    %2614 = vmatprep.subr.mxu0 0.0
    %2615 = vmatpush1.msra.mxu0 0.0
    %2616 = vmatprep.subr.mxu0 0.0
    %2617 = vmatpush1.msra.mxu0 0.0
    %2618 = vmatprep.subr.mxu0 0.0
    %2619 = vmatpush1.msra.mxu0 0.0
    %2620 = vmatprep.subr.mxu0 0.0
    %2621 = vmatpush1.msra.mxu0 0.0
    %2622 = vmatprep.subr.mxu0 0.0
    %2623 = vmatpush1.msra.mxu0 0.0
    %2624 = vmatprep.subr.mxu0 0.0
    %2625 = vmatpush1.msra.mxu0 0.0
    %2626 = vmatprep.subr.mxu0 0.0
    %2627 = vmatpush1.msra.mxu0 0.0
    %2628 = vmatprep.subr.mxu0 0.0
    %2629 = vmatpush1.msra.mxu0 0.0
    %2630 = vmatprep.subr.mxu0 0.0
    %2631 = vmatpush1.msra.mxu0 0.0
    %2632 = vmatprep.subr.mxu0 0.0
    %2633 = vmatpush1.msra.mxu0 0.0
    %2634 = vmatprep.subr.mxu0 0.0
    %2635 = vmatpush1.msra.mxu0 0.0
    %2636 = vmatprep.subr.mxu0 0.0
    %2637 = vmatpush1.msra.mxu0 0.0
    %2638 = vmatprep.subr.mxu0 0.0
    %2639 = vmatpush1.msra.mxu0 0.0
    %2640 = vmatprep.subr.mxu0 0.0
    %2641 = vmatpush1.msra.mxu0 0.0
    %2642 = vmatprep.subr.mxu0 0.0
    %2643 = vmatpush1.msra.mxu0 0.0
    %2644 = vmatprep.subr.mxu0 0.0
    %2645 = vmatpush1.msra.mxu0 0.0
    %2646 = vmatprep.subr.mxu0 0.0
    %2647 = vmatpush1.msra.mxu0 0.0
    %2648 = vmatprep.subr.mxu0 0.0
    %2649 = vmatpush1.msra.mxu0 0.0
    %2650 = vmatprep.subr.mxu0 0.0
    %2651 = vmatpush1.msra.mxu0 0.0
    %2652 = vmatprep.subr.mxu0 0.0
    %2653 = vmatpush1.msra.mxu0 0.0
    %2654 = vmatprep.subr.mxu0 0.0
    %2655 = vmatpush1.msra.mxu0 0.0
    %2656 = vmatprep.mubr.f32.mxu0 0.0
    %2657 = vmatmul.mubr.f32.gmra.mrb[0].mxu0 %v1709
    %v2658 = vpop.f32.mrb[0].mxu0
    %v2659 = vadd.f32 %v2582, %v2658
    %v2660 = vpop.f32.mrb[0].mxu0
    %v2661 = vadd.f32 %v2584, %v2660
    %2662 = vmatprep.mubr.f32.mxu0 0.0
    %2663 = vmatmul.mubr.f32.gmra.mrb[0].mxu0 %v1712
    %v2664 = vpop.f32.mrb[0].mxu0
    %v2665 = vadd.f32 %v2588, %v2664
    %v2666 = vpop.f32.mrb[0].mxu0
    %v2667 = vadd.f32 %v2590, %v2666
    %2668 = vdwg.mxu0
    %vm2669 = vcmask 195584
    %v2671 = vsel %vm2669, %v1493, 0
    %v2674 = vsel %vm2669, %v1494, 0
    %2676 = vmatprep.subr.mxu0 %v1066
    %2677 = vmatpush1.msra.mxu0 %v1065
    %2678 = vmatprep.subr.mxu0 %v1072
    %2679 = vmatpush1.msra.mxu0 %v1071
    %2680 = vmatprep.subr.mxu0 %v1078
    %2681 = vmatpush1.msra.mxu0 %v1077
    %2682 = vmatprep.subr.mxu0 0.0
    %2683 = vmatpush1.msra.mxu0 0.0
    %2684 = vmatprep.subr.mxu0 0.0
    %2685 = vmatpush1.msra.mxu0 0.0
    %2686 = vmatprep.subr.mxu0 0.0
    %2687 = vmatpush1.msra.mxu0 0.0
    %2688 = vmatprep.subr.mxu0 0.0
    %2689 = vmatpush1.msra.mxu0 0.0
    %2690 = vmatprep.subr.mxu0 0.0
    %2691 = vmatpush1.msra.mxu0 0.0
    %2692 = vmatprep.subr.mxu0 0.0
    %2693 = vmatpush1.msra.mxu0 0.0
    %2694 = vmatprep.subr.mxu0 0.0
    %2695 = vmatpush1.msra.mxu0 0.0
    %2696 = vmatprep.subr.mxu0 0.0
    %2697 = vmatpush1.msra.mxu0 0.0
    %2698 = vmatprep.subr.mxu0 0.0
    %2699 = vmatpush1.msra.mxu0 0.0
    %2700 = vmatprep.subr.mxu0 0.0
    %2701 = vmatpush1.msra.mxu0 0.0
    %2702 = vmatprep.subr.mxu0 0.0
    %2703 = vmatpush1.msra.mxu0 0.0
    %2704 = vmatprep.subr.mxu0 0.0
    %2705 = vmatpush1.msra.mxu0 0.0
    %2706 = vmatprep.subr.mxu0 0.0
    %2707 = vmatpush1.msra.mxu0 0.0
    %2708 = vmatprep.subr.mxu0 0.0
    %2709 = vmatpush1.msra.mxu0 0.0
    %2710 = vmatprep.subr.mxu0 0.0
    %2711 = vmatpush1.msra.mxu0 0.0
    %2712 = vmatprep.subr.mxu0 0.0
    %2713 = vmatpush1.msra.mxu0 0.0
    %2714 = vmatprep.subr.mxu0 0.0
    %2715 = vmatpush1.msra.mxu0 0.0
    %2716 = vmatprep.subr.mxu0 0.0
    %2717 = vmatpush1.msra.mxu0 0.0
    %2718 = vmatprep.subr.mxu0 0.0
    %2719 = vmatpush1.msra.mxu0 0.0
    %2720 = vmatprep.subr.mxu0 0.0
    %2721 = vmatpush1.msra.mxu0 0.0
    %2722 = vmatprep.subr.mxu0 0.0
    %2723 = vmatpush1.msra.mxu0 0.0
    %2724 = vmatprep.subr.mxu0 0.0
    %2725 = vmatpush1.msra.mxu0 0.0
    %2726 = vmatprep.subr.mxu0 0.0
    %2727 = vmatpush1.msra.mxu0 0.0
    %2728 = vmatprep.subr.mxu0 0.0
    %2729 = vmatpush1.msra.mxu0 0.0
    %2730 = vmatprep.subr.mxu0 0.0
    %2731 = vmatpush1.msra.mxu0 0.0
    %2732 = vmatprep.subr.mxu0 0.0
    %2733 = vmatpush1.msra.mxu0 0.0
    %2734 = vmatprep.subr.mxu0 0.0
    %2735 = vmatpush1.msra.mxu0 0.0
    %2736 = vmatprep.subr.mxu0 0.0
    %2737 = vmatpush1.msra.mxu0 0.0
    %2738 = vmatprep.subr.mxu0 0.0
    %2739 = vmatpush1.msra.mxu0 0.0
    %2740 = vmatprep.mubr.f32.mxu0 0.0
    %2741 = vmatmul.mubr.f32.gmra.mrb[0].mxu0 %v2671
    %v2742 = vpop.f32.mrb[0].mxu0
    %v2743 = vadd.f32 0.0, %v2742
    %v2744 = vpop.f32.mrb[0].mxu0
    %v2745 = vadd.f32 0.0, %v2744
    %2746 = vmatprep.mubr.f32.mxu0 0.0
    %2747 = vmatmul.mubr.f32.gmra.mrb[0].mxu0 %v2674
    %v2748 = vpop.f32.mrb[0].mxu0
    %v2749 = vadd.f32 0.0, %v2748
    %v2750 = vpop.f32.mrb[0].mxu0
    %v2751 = vadd.f32 0.0, %v2750
    %2752 = vdwg.mxu0
    %2753 = vmatprep.subr.mxu0 %v1068
    %2754 = vmatpush1.msra.mxu0 %v1067
    %2755 = vmatprep.subr.mxu0 %v1074
    %2756 = vmatpush1.msra.mxu0 %v1073
    %2757 = vmatprep.subr.mxu0 %v1080
    %2758 = vmatpush1.msra.mxu0 %v1079
    %2759 = vmatprep.subr.mxu0 0.0
    %2760 = vmatpush1.msra.mxu0 0.0
    %2761 = vmatprep.subr.mxu0 0.0
    %2762 = vmatpush1.msra.mxu0 0.0
    %2763 = vmatprep.subr.mxu0 0.0
    %2764 = vmatpush1.msra.mxu0 0.0
    %2765 = vmatprep.subr.mxu0 0.0
    %2766 = vmatpush1.msra.mxu0 0.0
    %2767 = vmatprep.subr.mxu0 0.0
    %2768 = vmatpush1.msra.mxu0 0.0
    %2769 = vmatprep.subr.mxu0 0.0
    %2770 = vmatpush1.msra.mxu0 0.0
    %2771 = vmatprep.subr.mxu0 0.0
    %2772 = vmatpush1.msra.mxu0 0.0
    %2773 = vmatprep.subr.mxu0 0.0
    %2774 = vmatpush1.msra.mxu0 0.0
    %2775 = vmatprep.subr.mxu0 0.0
    %2776 = vmatpush1.msra.mxu0 0.0
    %2777 = vmatprep.subr.mxu0 0.0
    %2778 = vmatpush1.msra.mxu0 0.0
    %2779 = vmatprep.subr.mxu0 0.0
    %2780 = vmatpush1.msra.mxu0 0.0
    %2781 = vmatprep.subr.mxu0 0.0
    %2782 = vmatpush1.msra.mxu0 0.0
    %2783 = vmatprep.subr.mxu0 0.0
    %2784 = vmatpush1.msra.mxu0 0.0
    %2785 = vmatprep.subr.mxu0 0.0
    %2786 = vmatpush1.msra.mxu0 0.0
    %2787 = vmatprep.subr.mxu0 0.0
    %2788 = vmatpush1.msra.mxu0 0.0
    %2789 = vmatprep.subr.mxu0 0.0
    %2790 = vmatpush1.msra.mxu0 0.0
    %2791 = vmatprep.subr.mxu0 0.0
    %2792 = vmatpush1.msra.mxu0 0.0
    %2793 = vmatprep.subr.mxu0 0.0
    %2794 = vmatpush1.msra.mxu0 0.0
    %2795 = vmatprep.subr.mxu0 0.0
    %2796 = vmatpush1.msra.mxu0 0.0
    %2797 = vmatprep.subr.mxu0 0.0
    %2798 = vmatpush1.msra.mxu0 0.0
    %2799 = vmatprep.subr.mxu0 0.0
    %2800 = vmatpush1.msra.mxu0 0.0
    %2801 = vmatprep.subr.mxu0 0.0
    %2802 = vmatpush1.msra.mxu0 0.0
    %2803 = vmatprep.subr.mxu0 0.0
    %2804 = vmatpush1.msra.mxu0 0.0
    %2805 = vmatprep.subr.mxu0 0.0
    %2806 = vmatpush1.msra.mxu0 0.0
    %2807 = vmatprep.subr.mxu0 0.0
    %2808 = vmatpush1.msra.mxu0 0.0
    %2809 = vmatprep.subr.mxu0 0.0
    %2810 = vmatpush1.msra.mxu0 0.0
    %2811 = vmatprep.subr.mxu0 0.0
    %2812 = vmatpush1.msra.mxu0 0.0
    %2813 = vmatprep.subr.mxu0 0.0
    %2814 = vmatpush1.msra.mxu0 0.0
    %2815 = vmatprep.subr.mxu0 0.0
    %2816 = vmatpush1.msra.mxu0 0.0
    %2817 = vmatprep.mubr.f32.mxu0 0.0
    %2818 = vmatmul.mubr.f32.gmra.mrb[0].mxu0 %v2671
    %v2819 = vpop.f32.mrb[0].mxu0
    %v2820 = vadd.f32 0.0, %v2819
    %v2821 = vpop.f32.mrb[0].mxu0
    %v2822 = vadd.f32 0.0, %v2821
    %2823 = vmatprep.mubr.f32.mxu0 0.0
    %2824 = vmatmul.mubr.f32.gmra.mrb[0].mxu0 %v2674
    %v2825 = vpop.f32.mrb[0].mxu0
    %v2826 = vadd.f32 0.0, %v2825
    %v2827 = vpop.f32.mrb[0].mxu0
    %v2828 = vadd.f32 0.0, %v2827
    %2829 = vdwg.mxu0
    %2830 = vmatprep.subr.mxu0 %v1070
    %2831 = vmatpush1.msra.mxu0 %v1069
    %2832 = vmatprep.subr.mxu0 %v1076
    %2833 = vmatpush1.msra.mxu0 %v1075
    %2834 = vmatprep.subr.mxu0 %v1082
    %2835 = vmatpush1.msra.mxu0 %v1081
    %2836 = vmatprep.subr.mxu0 0.0
    %2837 = vmatpush1.msra.mxu0 0.0
    %2838 = vmatprep.subr.mxu0 0.0
    %2839 = vmatpush1.msra.mxu0 0.0
    %2840 = vmatprep.subr.mxu0 0.0
    %2841 = vmatpush1.msra.mxu0 0.0
    %2842 = vmatprep.subr.mxu0 0.0
    %2843 = vmatpush1.msra.mxu0 0.0
    %2844 = vmatprep.subr.mxu0 0.0
    %2845 = vmatpush1.msra.mxu0 0.0
    %2846 = vmatprep.subr.mxu0 0.0
    %2847 = vmatpush1.msra.mxu0 0.0
    %2848 = vmatprep.subr.mxu0 0.0
    %2849 = vmatpush1.msra.mxu0 0.0
    %2850 = vmatprep.subr.mxu0 0.0
    %2851 = vmatpush1.msra.mxu0 0.0
    %2852 = vmatprep.subr.mxu0 0.0
    %2853 = vmatpush1.msra.mxu0 0.0
    %2854 = vmatprep.subr.mxu0 0.0
    %2855 = vmatpush1.msra.mxu0 0.0
    %2856 = vmatprep.subr.mxu0 0.0
    %2857 = vmatpush1.msra.mxu0 0.0
    %2858 = vmatprep.subr.mxu0 0.0
    %2859 = vmatpush1.msra.mxu0 0.0
    %2860 = vmatprep.subr.mxu0 0.0
    %2861 = vmatpush1.msra.mxu0 0.0
    %2862 = vmatprep.subr.mxu0 0.0
    %2863 = vmatpush1.msra.mxu0 0.0
    %2864 = vmatprep.subr.mxu0 0.0
    %2865 = vmatpush1.msra.mxu0 0.0
    %2866 = vmatprep.subr.mxu0 0.0
    %2867 = vmatpush1.msra.mxu0 0.0
    %2868 = vmatprep.subr.mxu0 0.0
    %2869 = vmatpush1.msra.mxu0 0.0
    %2870 = vmatprep.subr.mxu0 0.0
    %2871 = vmatpush1.msra.mxu0 0.0
    %2872 = vmatprep.subr.mxu0 0.0
    %2873 = vmatpush1.msra.mxu0 0.0
    %2874 = vmatprep.subr.mxu0 0.0
    %2875 = vmatpush1.msra.mxu0 0.0
    %2876 = vmatprep.subr.mxu0 0.0
    %2877 = vmatpush1.msra.mxu0 0.0
    %2878 = vmatprep.subr.mxu0 0.0
    %2879 = vmatpush1.msra.mxu0 0.0
    %2880 = vmatprep.subr.mxu0 0.0
    %2881 = vmatpush1.msra.mxu0 0.0
    %2882 = vmatprep.subr.mxu0 0.0
    %2883 = vmatpush1.msra.mxu0 0.0
    %2884 = vmatprep.subr.mxu0 0.0
    %2885 = vmatpush1.msra.mxu0 0.0
    %2886 = vmatprep.subr.mxu0 0.0
    %2887 = vmatpush1.msra.mxu0 0.0
    %2888 = vmatprep.subr.mxu0 0.0
    %2889 = vmatpush1.msra.mxu0 0.0
    %2890 = vmatprep.subr.mxu0 0.0
    %2891 = vmatpush1.msra.mxu0 0.0
    %2892 = vmatprep.subr.mxu0 0.0
    %2893 = vmatpush1.msra.mxu0 0.0
    %2894 = vmatprep.mubr.f32.mxu0 0.0
    %2895 = vmatmul.mubr.f32.gmra.mrb[0].mxu0 %v2671
    %v2896 = vpop.f32.mrb[0].mxu0
    %v2897 = vadd.f32 0.0, %v2896
    %v2898 = vpop.f32.mrb[0].mxu0
    %v2899 = vadd.f32 0.0, %v2898
    %2900 = vmatprep.mubr.f32.mxu0 0.0
    %2901 = vmatmul.mubr.f32.gmra.mrb[0].mxu0 %v2674
    %v2902 = vpop.f32.mrb[0].mxu0
    %v2903 = vadd.f32 0.0, %v2902
    %v2904 = vpop.f32.mrb[0].mxu0
    %v2905 = vadd.f32 0.0, %v2904
    %2906 = vdwg.mxu0
    %v2907 = vmul.f32 %v2743, %v2351
    %v2908 = vmul.f32 %v2745, %v2353
    %v2909 = vmul.f32 %v2820, %v2505
    %v2910 = vmul.f32 %v2822, %v2507
    %v2911 = vmul.f32 %v2897, %v2659
    %v2912 = vmul.f32 %v2899, %v2661
    %v2913 = vmul.f32 %v2749, %v2357
    %v2914 = vmul.f32 %v2751, %v2359
    %v2915 = vmul.f32 %v2826, %v2511
    %v2916 = vmul.f32 %v2828, %v2513
    %v2917 = vmul.f32 %v2903, %v2665
    %v2918 = vmul.f32 %v2905, %v2667
    %2919 = vmatprep.subr.mxu0 0.0
    %2920 = vmatpush1.msra.mxu0 %v1083
    %2921 = vmatprep.subr.mxu0 0.0
    %2922 = vmatpush1.msra.mxu0 %v1084
    %2923 = vmatprep.subr.mxu0 0.0
    %2924 = vmatpush1.msra.mxu0 %v1085
    %2925 = vmatprep.subr.mxu0 0.0
    %2926 = vmatpush1.msra.mxu0 %v1086
    %2927 = vmatprep.subr.mxu0 0.0
    %2928 = vmatpush1.msra.mxu0 %v1087
    %2929 = vmatprep.subr.mxu0 0.0
    %2930 = vmatpush1.msra.mxu0 %v1088
    %2931 = vmatprep.subr.mxu0 0.0
    %2932 = vmatpush1.msra.mxu0 %v1089
    %2933 = vmatprep.subr.mxu0 0.0
    %2934 = vmatpush1.msra.mxu0 %v1090
    %2935 = vmatprep.subr.mxu0 0.0
    %2936 = vmatpush1.msra.mxu0 %v1091
    %2937 = vmatprep.subr.mxu0 0.0
    %2938 = vmatpush1.msra.mxu0 %v1092
    %2939 = vmatprep.subr.mxu0 0.0
    %2940 = vmatpush1.msra.mxu0 %v1093
    %2941 = vmatprep.subr.mxu0 0.0
    %2942 = vmatpush1.msra.mxu0 %v1094
    %2943 = vmatprep.subr.mxu0 0.0
    %2944 = vmatpush1.msra.mxu0 %v1095
    %2945 = vmatprep.subr.mxu0 0.0
    %2946 = vmatpush1.msra.mxu0 %v1096
    %2947 = vmatprep.subr.mxu0 0.0
    %2948 = vmatpush1.msra.mxu0 %v1097
    %2949 = vmatprep.subr.mxu0 0.0
    %2950 = vmatpush1.msra.mxu0 %v1098
    %2951 = vmatprep.subr.mxu0 0.0
    %2952 = vmatpush1.msra.mxu0 %v1099
    %2953 = vmatprep.subr.mxu0 0.0
    %2954 = vmatpush1.msra.mxu0 %v1100
    %2955 = vmatprep.subr.mxu0 0.0
    %2956 = vmatpush1.msra.mxu0 %v1101
    %2957 = vmatprep.subr.mxu0 0.0
    %2958 = vmatpush1.msra.mxu0 %v1102
    %2959 = vmatprep.subr.mxu0 0.0
    %2960 = vmatpush1.msra.mxu0 %v1103
    %2961 = vmatprep.subr.mxu0 0.0
    %2962 = vmatpush1.msra.mxu0 %v1104
    %2963 = vmatprep.subr.mxu0 0.0
    %2964 = vmatpush1.msra.mxu0 %v1105
    %2965 = vmatprep.subr.mxu0 0.0
    %2966 = vmatpush1.msra.mxu0 %v1106
    %2967 = vmatprep.subr.mxu0 0.0
    %2968 = vmatpush1.msra.mxu0 %v1107
    %2969 = vmatprep.subr.mxu0 0.0
    %2970 = vmatpush1.msra.mxu0 %v1108
    %2971 = vmatprep.subr.mxu0 0.0
    %2972 = vmatpush1.msra.mxu0 %v1109
    %2973 = vmatprep.subr.mxu0 0.0
    %2974 = vmatpush1.msra.mxu0 %v1110
    %2975 = vmatprep.subr.mxu0 0.0
    %2976 = vmatpush1.msra.mxu0 %v1111
    %2977 = vmatprep.subr.mxu0 0.0
    %2978 = vmatpush1.msra.mxu0 %v1112
    %2979 = vmatprep.subr.mxu0 0.0
    %2980 = vmatpush1.msra.mxu0 %v1113
    %2981 = vmatprep.subr.mxu0 0.0
    %2982 = vmatpush1.msra.mxu0 %v1114
    %2983 = vmatprep.mubr.f32.mxu0 %v2908
    %2984 = vmatmul.mubr.f32.gmra.mrb[0].mxu0 %v2907
    %v2985 = vpop.f32.mrb[0].mxu0
    %v2986 = vadd.f32 0.0, %v2985
    %v2987 = vpop.f32.mrb[0].mxu0
    %2988 = vmatprep.mubr.f32.mxu0 %v2914
    %2989 = vmatmul.mubr.f32.gmra.mrb[0].mxu0 %v2913
    %v2990 = vpop.f32.mrb[0].mxu0
    %v2991 = vadd.f32 0.0, %v2990
    %v2992 = vpop.f32.mrb[0].mxu0
    %2993 = vdwg.mxu0
    %2994 = vmatprep.subr.mxu0 0.0
    %2995 = vmatpush1.msra.mxu0 %v1115
    %2996 = vmatprep.subr.mxu0 0.0
    %2997 = vmatpush1.msra.mxu0 %v1116
    %2998 = vmatprep.subr.mxu0 0.0
    %2999 = vmatpush1.msra.mxu0 %v1117
    %3000 = vmatprep.subr.mxu0 0.0
    %3001 = vmatpush1.msra.mxu0 %v1118
    %3002 = vmatprep.subr.mxu0 0.0
    %3003 = vmatpush1.msra.mxu0 %v1119
    %3004 = vmatprep.subr.mxu0 0.0
    %3005 = vmatpush1.msra.mxu0 %v1120
    %3006 = vmatprep.subr.mxu0 0.0
    %3007 = vmatpush1.msra.mxu0 %v1121
    %3008 = vmatprep.subr.mxu0 0.0
    %3009 = vmatpush1.msra.mxu0 %v1122
    %3010 = vmatprep.subr.mxu0 0.0
    %3011 = vmatpush1.msra.mxu0 %v1123
    %3012 = vmatprep.subr.mxu0 0.0
    %3013 = vmatpush1.msra.mxu0 %v1124
    %3014 = vmatprep.subr.mxu0 0.0
    %3015 = vmatpush1.msra.mxu0 %v1125
    %3016 = vmatprep.subr.mxu0 0.0
    %3017 = vmatpush1.msra.mxu0 %v1126
    %3018 = vmatprep.subr.mxu0 0.0
    %3019 = vmatpush1.msra.mxu0 %v1127
    %3020 = vmatprep.subr.mxu0 0.0
    %3021 = vmatpush1.msra.mxu0 %v1128
    %3022 = vmatprep.subr.mxu0 0.0
    %3023 = vmatpush1.msra.mxu0 %v1129
    %3024 = vmatprep.subr.mxu0 0.0
    %3025 = vmatpush1.msra.mxu0 %v1130
    %3026 = vmatprep.subr.mxu0 0.0
    %3027 = vmatpush1.msra.mxu0 %v1131
    %3028 = vmatprep.subr.mxu0 0.0
    %3029 = vmatpush1.msra.mxu0 %v1132
    %3030 = vmatprep.subr.mxu0 0.0
    %3031 = vmatpush1.msra.mxu0 %v1133
    %3032 = vmatprep.subr.mxu0 0.0
    %3033 = vmatpush1.msra.mxu0 %v1134
    %3034 = vmatprep.subr.mxu0 0.0
    %3035 = vmatpush1.msra.mxu0 %v1135
    %3036 = vmatprep.subr.mxu0 0.0
    %3037 = vmatpush1.msra.mxu0 %v1136
    %3038 = vmatprep.subr.mxu0 0.0
    %3039 = vmatpush1.msra.mxu0 %v1137
    %3040 = vmatprep.subr.mxu0 0.0
    %3041 = vmatpush1.msra.mxu0 %v1138
    %3042 = vmatprep.subr.mxu0 0.0
    %3043 = vmatpush1.msra.mxu0 %v1139
    %3044 = vmatprep.subr.mxu0 0.0
    %3045 = vmatpush1.msra.mxu0 %v1140
    %3046 = vmatprep.subr.mxu0 0.0
    %3047 = vmatpush1.msra.mxu0 %v1141
    %3048 = vmatprep.subr.mxu0 0.0
    %3049 = vmatpush1.msra.mxu0 %v1142
    %3050 = vmatprep.subr.mxu0 0.0
    %3051 = vmatpush1.msra.mxu0 %v1143
    %3052 = vmatprep.subr.mxu0 0.0
    %3053 = vmatpush1.msra.mxu0 %v1144
    %3054 = vmatprep.subr.mxu0 0.0
    %3055 = vmatpush1.msra.mxu0 %v1145
    %3056 = vmatprep.subr.mxu0 0.0
    %3057 = vmatpush1.msra.mxu0 %v1146
    %3058 = vmatprep.mubr.f32.mxu0 %v2910
    %3059 = vmatmul.mubr.f32.gmra.mrb[0].mxu0 %v2909
    %v3060 = vpop.f32.mrb[0].mxu0
    %v3061 = vadd.f32 %v2986, %v3060
    %v3062 = vpop.f32.mrb[0].mxu0
    %3063 = vmatprep.mubr.f32.mxu0 %v2916
    %3064 = vmatmul.mubr.f32.gmra.mrb[0].mxu0 %v2915
    %v3065 = vpop.f32.mrb[0].mxu0
    %v3066 = vadd.f32 %v2991, %v3065
    %v3067 = vpop.f32.mrb[0].mxu0
    %3068 = vdwg.mxu0
    %3069 = vmatprep.subr.mxu0 0.0
    %3070 = vmatpush1.msra.mxu0 %v1147
    %3071 = vmatprep.subr.mxu0 0.0
    %3072 = vmatpush1.msra.mxu0 %v1148
    %3073 = vmatprep.subr.mxu0 0.0
    %3074 = vmatpush1.msra.mxu0 %v1149
    %3075 = vmatprep.subr.mxu0 0.0
    %3076 = vmatpush1.msra.mxu0 %v1150
    %3077 = vmatprep.subr.mxu0 0.0
    %3078 = vmatpush1.msra.mxu0 %v1151
    %3079 = vmatprep.subr.mxu0 0.0
    %3080 = vmatpush1.msra.mxu0 %v1152
    %3081 = vmatprep.subr.mxu0 0.0
    %3082 = vmatpush1.msra.mxu0 %v1153
    %3083 = vmatprep.subr.mxu0 0.0
    %3084 = vmatpush1.msra.mxu0 %v1154
    %3085 = vmatprep.subr.mxu0 0.0
    %3086 = vmatpush1.msra.mxu0 %v1155
    %3087 = vmatprep.subr.mxu0 0.0
    %3088 = vmatpush1.msra.mxu0 %v1156
    %3089 = vmatprep.subr.mxu0 0.0
    %3090 = vmatpush1.msra.mxu0 %v1157
    %3091 = vmatprep.subr.mxu0 0.0
    %3092 = vmatpush1.msra.mxu0 %v1158
    %3093 = vmatprep.subr.mxu0 0.0
    %3094 = vmatpush1.msra.mxu0 %v1159
    %3095 = vmatprep.subr.mxu0 0.0
    %3096 = vmatpush1.msra.mxu0 %v1160
    %3097 = vmatprep.subr.mxu0 0.0
    %3098 = vmatpush1.msra.mxu0 %v1161
    %3099 = vmatprep.subr.mxu0 0.0
    %3100 = vmatpush1.msra.mxu0 %v1162
    %3101 = vmatprep.subr.mxu0 0.0
    %3102 = vmatpush1.msra.mxu0 %v1163
    %3103 = vmatprep.subr.mxu0 0.0
    %3104 = vmatpush1.msra.mxu0 %v1164
    %3105 = vmatprep.subr.mxu0 0.0
    %3106 = vmatpush1.msra.mxu0 %v1165
    %3107 = vmatprep.subr.mxu0 0.0
    %3108 = vmatpush1.msra.mxu0 %v1166
    %3109 = vmatprep.subr.mxu0 0.0
    %3110 = vmatpush1.msra.mxu0 %v1167
    %3111 = vmatprep.subr.mxu0 0.0
    %3112 = vmatpush1.msra.mxu0 %v1168
    %3113 = vmatprep.subr.mxu0 0.0
    %3114 = vmatpush1.msra.mxu0 %v1169
    %3115 = vmatprep.subr.mxu0 0.0
    %3116 = vmatpush1.msra.mxu0 %v1170
    %3117 = vmatprep.subr.mxu0 0.0
    %3118 = vmatpush1.msra.mxu0 %v1171
    %3119 = vmatprep.subr.mxu0 0.0
    %3120 = vmatpush1.msra.mxu0 %v1172
    %3121 = vmatprep.subr.mxu0 0.0
    %3122 = vmatpush1.msra.mxu0 %v1173
    %3123 = vmatprep.subr.mxu0 0.0
    %3124 = vmatpush1.msra.mxu0 %v1174
    %3125 = vmatprep.subr.mxu0 0.0
    %3126 = vmatpush1.msra.mxu0 %v1175
    %3127 = vmatprep.subr.mxu0 0.0
    %3128 = vmatpush1.msra.mxu0 %v1176
    %3129 = vmatprep.subr.mxu0 0.0
    %3130 = vmatpush1.msra.mxu0 %v1177
    %3131 = vmatprep.subr.mxu0 0.0
    %3132 = vmatpush1.msra.mxu0 %v1178
    %3133 = vmatprep.mubr.f32.mxu0 %v2912
    %3134 = vmatmul.mubr.f32.gmra.mrb[0].mxu0 %v2911
    %v3135 = vpop.f32.mrb[0].mxu0
    %v3136 = vadd.f32 %v3061, %v3135
    %v3137 = vpop.f32.mrb[0].mxu0
    %3138 = vmatprep.mubr.f32.mxu0 %v2918
    %3139 = vmatmul.mubr.f32.gmra.mrb[0].mxu0 %v2917
    %v3140 = vpop.f32.mrb[0].mxu0
    %v3141 = vadd.f32 %v3066, %v3140
    %v3142 = vpop.f32.mrb[0].mxu0
    %3143 = vdwg.mxu0
    %v3144 = vmul.f32 %v3136, %v1860
    %v3145 = vmul.f32 %v3141, %v1866
    %v3146 = vadd.f32 %v3144, %v1858
    %v3147 = vadd.f32 %v3145, %v1864
    %v3148 = vmax.f32 %v3146, 0.0
    %v3149 = vmax.f32 %v3147, 0.0
    %v3151 = vlaneseq
    %v3152 = vshrl.u32 %v3151, 7
    %v3153 = vsub.s32 0, %v3152
    %v3154 = vrot.slane %v774, %v3153
    %v3155 = vlaneseq
    %v3156 = vshrl.u32 %v3155, 7
    %v3157 = vsub.s32 1, %v3156
    %v3158 = vrot.slane %v774, %v3157
    %v3159 = vlaneseq
    %v3160 = vshrl.u32 %v3159, 7
    %v3161 = vsub.s32 2, %v3160
    %v3162 = vrot.slane %v774, %v3161
    %v3163 = vlaneseq
    %v3164 = vshrl.u32 %v3163, 7
    %v3165 = vsub.s32 3, %v3164
    %v3166 = vrot.slane %v774, %v3165
    %v3167 = vlaneseq
    %v3168 = vshrl.u32 %v3167, 7
    %v3169 = vsub.s32 4, %v3168
    %v3170 = vrot.slane %v774, %v3169
    %v3171 = vlaneseq
    %v3172 = vshrl.u32 %v3171, 7
    %v3173 = vsub.s32 5, %v3172
    %v3174 = vrot.slane %v774, %v3173
    %v3175 = vlaneseq
    %v3176 = vshrl.u32 %v3175, 7
    %v3177 = vsub.s32 6, %v3176
    %v3178 = vrot.slane %v774, %v3177
    %v3179 = vlaneseq
    %v3180 = vshrl.u32 %v3179, 7
    %v3181 = vsub.s32 7, %v3180
    %v3182 = vrot.slane %v774, %v3181
    %3191 = vmatprep.subr.mxu0 %v487
    %3192 = vmatpush1.msra.mxu0 %v486
    %3193 = vmatprep.subr.mxu0 %v495
    %3194 = vmatpush1.msra.mxu0 %v494
    %3195 = vmatprep.subr.mxu0 %v503
    %3196 = vmatpush1.msra.mxu0 %v502
    %3197 = vmatprep.subr.mxu0 %v511
    %3198 = vmatpush1.msra.mxu0 %v510
    %3199 = vmatprep.subr.mxu0 %v519
    %3200 = vmatpush1.msra.mxu0 %v518
    %3201 = vmatprep.subr.mxu0 %v527
    %3202 = vmatpush1.msra.mxu0 %v526
    %3203 = vmatprep.subr.mxu0 %v535
    %3204 = vmatpush1.msra.mxu0 %v534
    %3205 = vmatprep.subr.mxu0 %v543
    %3206 = vmatpush1.msra.mxu0 %v542
    %3207 = vmatprep.subr.mxu0 %v551
    %3208 = vmatpush1.msra.mxu0 %v550
    %3209 = vmatprep.subr.mxu0 %v559
    %3210 = vmatpush1.msra.mxu0 %v558
    %3211 = vmatprep.subr.mxu0 %v567
    %3212 = vmatpush1.msra.mxu0 %v566
    %3213 = vmatprep.subr.mxu0 %v575
    %3214 = vmatpush1.msra.mxu0 %v574
    %3215 = vmatprep.subr.mxu0 %v583
    %3216 = vmatpush1.msra.mxu0 %v582
    %3217 = vmatprep.subr.mxu0 %v591
    %3218 = vmatpush1.msra.mxu0 %v590
    %3219 = vmatprep.subr.mxu0 %v599
    %3220 = vmatpush1.msra.mxu0 %v598
    %3221 = vmatprep.subr.mxu0 %v607
    %3222 = vmatpush1.msra.mxu0 %v606
    %3223 = vmatprep.subr.mxu0 %v615
    %3224 = vmatpush1.msra.mxu0 %v614
    %3225 = vmatprep.subr.mxu0 %v623
    %3226 = vmatpush1.msra.mxu0 %v622
    %3227 = vmatprep.subr.mxu0 %v631
    %3228 = vmatpush1.msra.mxu0 %v630
    %3229 = vmatprep.subr.mxu0 %v639
    %3230 = vmatpush1.msra.mxu0 %v638
    %3231 = vmatprep.subr.mxu0 %v647
    %3232 = vmatpush1.msra.mxu0 %v646
    %3233 = vmatprep.subr.mxu0 %v655
    %3234 = vmatpush1.msra.mxu0 %v654
    %3235 = vmatprep.subr.mxu0 %v663
    %3236 = vmatpush1.msra.mxu0 %v662
    %3237 = vmatprep.subr.mxu0 %v671
    %3238 = vmatpush1.msra.mxu0 %v670
    %3239 = vmatprep.subr.mxu0 %v679
    %3240 = vmatpush1.msra.mxu0 %v678
    %3241 = vmatprep.subr.mxu0 %v687
    %3242 = vmatpush1.msra.mxu0 %v686
    %3243 = vmatprep.subr.mxu0 %v695
    %3244 = vmatpush1.msra.mxu0 %v694
    %3245 = vmatprep.subr.mxu0 %v703
    %3246 = vmatpush1.msra.mxu0 %v702
    %3247 = vmatprep.subr.mxu0 %v711
    %3248 = vmatpush1.msra.mxu0 %v710
    %3249 = vmatprep.subr.mxu0 %v719
    %3250 = vmatpush1.msra.mxu0 %v718
    %3251 = vmatprep.subr.mxu0 %v727
    %3252 = vmatpush1.msra.mxu0 %v726
    %3253 = vmatprep.subr.mxu0 %v735
    %3254 = vmatpush1.msra.mxu0 %v734
    %3255 = vmatprep.mubr.f32.mxu0 %v1671
    %3256 = vmatmul.mubr.f32.gmra.mrb[0].mxu0 %v1670
    %v3257 = vpop.f32.mrb[0].mxu0
    %v3258 = vadd.f32 %v3154, %v3257
    %v3259 = vpop.f32.mrb[0].mxu0
    %v3260 = vadd.f32 %v3158, %v3259
    %3261 = vmatprep.mubr.f32.mxu0 %v1674
    %3262 = vmatmul.mubr.f32.gmra.mrb[0].mxu0 %v1673
    %v3263 = vpop.f32.mrb[0].mxu0
    %v3264 = vadd.f32 %v3154, %v3263
    %v3265 = vpop.f32.mrb[0].mxu0
    %v3266 = vadd.f32 %v3158, %v3265
    %3267 = vdwg.mxu0
    %3268 = vmatprep.subr.mxu0 %v743
    %3269 = vmatpush1.msra.mxu0 %v742
    %3270 = vmatprep.subr.mxu0 %v751
    %3271 = vmatpush1.msra.mxu0 %v750
    %3272 = vmatprep.subr.mxu0 %v759
    %3273 = vmatpush1.msra.mxu0 %v758
    %3274 = vmatprep.subr.mxu0 %v767
    %3275 = vmatpush1.msra.mxu0 %v766
    %3276 = vmatprep.subr.mxu0 0.0
    %3277 = vmatpush1.msra.mxu0 0.0
    %3278 = vmatprep.subr.mxu0 0.0
    %3279 = vmatpush1.msra.mxu0 0.0
    %3280 = vmatprep.subr.mxu0 0.0
    %3281 = vmatpush1.msra.mxu0 0.0
    %3282 = vmatprep.subr.mxu0 0.0
    %3283 = vmatpush1.msra.mxu0 0.0
    %3284 = vmatprep.subr.mxu0 0.0
    %3285 = vmatpush1.msra.mxu0 0.0
    %3286 = vmatprep.subr.mxu0 0.0
    %3287 = vmatpush1.msra.mxu0 0.0
    %3288 = vmatprep.subr.mxu0 0.0
    %3289 = vmatpush1.msra.mxu0 0.0
    %3290 = vmatprep.subr.mxu0 0.0
    %3291 = vmatpush1.msra.mxu0 0.0
    %3292 = vmatprep.subr.mxu0 0.0
    %3293 = vmatpush1.msra.mxu0 0.0
    %3294 = vmatprep.subr.mxu0 0.0
    %3295 = vmatpush1.msra.mxu0 0.0
    %3296 = vmatprep.subr.mxu0 0.0
    %3297 = vmatpush1.msra.mxu0 0.0
    %3298 = vmatprep.subr.mxu0 0.0
    %3299 = vmatpush1.msra.mxu0 0.0
    %3300 = vmatprep.subr.mxu0 0.0
    %3301 = vmatpush1.msra.mxu0 0.0
    %3302 = vmatprep.subr.mxu0 0.0
    %3303 = vmatpush1.msra.mxu0 0.0
    %3304 = vmatprep.subr.mxu0 0.0
    %3305 = vmatpush1.msra.mxu0 0.0
    %3306 = vmatprep.subr.mxu0 0.0
    %3307 = vmatpush1.msra.mxu0 0.0
    %3308 = vmatprep.subr.mxu0 0.0
    %3309 = vmatpush1.msra.mxu0 0.0
    %3310 = vmatprep.subr.mxu0 0.0
    %3311 = vmatpush1.msra.mxu0 0.0
    %3312 = vmatprep.subr.mxu0 0.0
    %3313 = vmatpush1.msra.mxu0 0.0
    %3314 = vmatprep.subr.mxu0 0.0
    %3315 = vmatpush1.msra.mxu0 0.0
    %3316 = vmatprep.subr.mxu0 0.0
    %3317 = vmatpush1.msra.mxu0 0.0
    %3318 = vmatprep.subr.mxu0 0.0
    %3319 = vmatpush1.msra.mxu0 0.0
    %3320 = vmatprep.subr.mxu0 0.0
    %3321 = vmatpush1.msra.mxu0 0.0
    %3322 = vmatprep.subr.mxu0 0.0
    %3323 = vmatpush1.msra.mxu0 0.0
    %3324 = vmatprep.subr.mxu0 0.0
    %3325 = vmatpush1.msra.mxu0 0.0
    %3326 = vmatprep.subr.mxu0 0.0
    %3327 = vmatpush1.msra.mxu0 0.0
    %3328 = vmatprep.subr.mxu0 0.0
    %3329 = vmatpush1.msra.mxu0 0.0
    %3330 = vmatprep.subr.mxu0 0.0
    %3331 = vmatpush1.msra.mxu0 0.0
    %3332 = vmatprep.mubr.f32.mxu0 0.0
    %3333 = vmatmul.mubr.f32.gmra.mrb[0].mxu0 %v1709
    %v3334 = vpop.f32.mrb[0].mxu0
    %v3335 = vadd.f32 %v3258, %v3334
    %v3336 = vpop.f32.mrb[0].mxu0
    %v3337 = vadd.f32 %v3260, %v3336
    %3338 = vmatprep.mubr.f32.mxu0 0.0
    %3339 = vmatmul.mubr.f32.gmra.mrb[0].mxu0 %v1712
    %v3340 = vpop.f32.mrb[0].mxu0
    %v3341 = vadd.f32 %v3264, %v3340
    %v3342 = vpop.f32.mrb[0].mxu0
    %v3343 = vadd.f32 %v3266, %v3342
    %3344 = vdwg.mxu0
    %3345 = vmatprep.subr.mxu0 %v489
    %3346 = vmatpush1.msra.mxu0 %v488
    %3347 = vmatprep.subr.mxu0 %v497
    %3348 = vmatpush1.msra.mxu0 %v496
    %3349 = vmatprep.subr.mxu0 %v505
    %3350 = vmatpush1.msra.mxu0 %v504
    %3351 = vmatprep.subr.mxu0 %v513
    %3352 = vmatpush1.msra.mxu0 %v512
    %3353 = vmatprep.subr.mxu0 %v521
    %3354 = vmatpush1.msra.mxu0 %v520
    %3355 = vmatprep.subr.mxu0 %v529
    %3356 = vmatpush1.msra.mxu0 %v528
    %3357 = vmatprep.subr.mxu0 %v537
    %3358 = vmatpush1.msra.mxu0 %v536
    %3359 = vmatprep.subr.mxu0 %v545
    %3360 = vmatpush1.msra.mxu0 %v544
    %3361 = vmatprep.subr.mxu0 %v553
    %3362 = vmatpush1.msra.mxu0 %v552
    %3363 = vmatprep.subr.mxu0 %v561
    %3364 = vmatpush1.msra.mxu0 %v560
    %3365 = vmatprep.subr.mxu0 %v569
    %3366 = vmatpush1.msra.mxu0 %v568
    %3367 = vmatprep.subr.mxu0 %v577
    %3368 = vmatpush1.msra.mxu0 %v576
    %3369 = vmatprep.subr.mxu0 %v585
    %3370 = vmatpush1.msra.mxu0 %v584
    %3371 = vmatprep.subr.mxu0 %v593
    %3372 = vmatpush1.msra.mxu0 %v592
    %3373 = vmatprep.subr.mxu0 %v601
    %3374 = vmatpush1.msra.mxu0 %v600
    %3375 = vmatprep.subr.mxu0 %v609
    %3376 = vmatpush1.msra.mxu0 %v608
    %3377 = vmatprep.subr.mxu0 %v617
    %3378 = vmatpush1.msra.mxu0 %v616
    %3379 = vmatprep.subr.mxu0 %v625
    %3380 = vmatpush1.msra.mxu0 %v624
    %3381 = vmatprep.subr.mxu0 %v633
    %3382 = vmatpush1.msra.mxu0 %v632
    %3383 = vmatprep.subr.mxu0 %v641
    %3384 = vmatpush1.msra.mxu0 %v640
    %3385 = vmatprep.subr.mxu0 %v649
    %3386 = vmatpush1.msra.mxu0 %v648
    %3387 = vmatprep.subr.mxu0 %v657
    %3388 = vmatpush1.msra.mxu0 %v656
    %3389 = vmatprep.subr.mxu0 %v665
    %3390 = vmatpush1.msra.mxu0 %v664
    %3391 = vmatprep.subr.mxu0 %v673
    %3392 = vmatpush1.msra.mxu0 %v672
    %3393 = vmatprep.subr.mxu0 %v681
    %3394 = vmatpush1.msra.mxu0 %v680
    %3395 = vmatprep.subr.mxu0 %v689
    %3396 = vmatpush1.msra.mxu0 %v688
    %3397 = vmatprep.subr.mxu0 %v697
    %3398 = vmatpush1.msra.mxu0 %v696
    %3399 = vmatprep.subr.mxu0 %v705
    %3400 = vmatpush1.msra.mxu0 %v704
    %3401 = vmatprep.subr.mxu0 %v713
    %3402 = vmatpush1.msra.mxu0 %v712
    %3403 = vmatprep.subr.mxu0 %v721
    %3404 = vmatpush1.msra.mxu0 %v720
    %3405 = vmatprep.subr.mxu0 %v729
    %3406 = vmatpush1.msra.mxu0 %v728
    %3407 = vmatprep.subr.mxu0 %v737
    %3408 = vmatpush1.msra.mxu0 %v736
    %3409 = vmatprep.mubr.f32.mxu0 %v1671
    %3410 = vmatmul.mubr.f32.gmra.mrb[0].mxu0 %v1670
    %v3411 = vpop.f32.mrb[0].mxu0
    %v3412 = vadd.f32 %v3162, %v3411
    %v3413 = vpop.f32.mrb[0].mxu0
    %v3414 = vadd.f32 %v3166, %v3413
    %3415 = vmatprep.mubr.f32.mxu0 %v1674
    %3416 = vmatmul.mubr.f32.gmra.mrb[0].mxu0 %v1673
    %v3417 = vpop.f32.mrb[0].mxu0
    %v3418 = vadd.f32 %v3162, %v3417
    %v3419 = vpop.f32.mrb[0].mxu0
    %v3420 = vadd.f32 %v3166, %v3419
    %3421 = vdwg.mxu0
    %3422 = vmatprep.subr.mxu0 %v745
    %3423 = vmatpush1.msra.mxu0 %v744
    %3424 = vmatprep.subr.mxu0 %v753
    %3425 = vmatpush1.msra.mxu0 %v752
    %3426 = vmatprep.subr.mxu0 %v761
    %3427 = vmatpush1.msra.mxu0 %v760
    %3428 = vmatprep.subr.mxu0 %v769
    %3429 = vmatpush1.msra.mxu0 %v768
    %3430 = vmatprep.subr.mxu0 0.0
    %3431 = vmatpush1.msra.mxu0 0.0
    %3432 = vmatprep.subr.mxu0 0.0
    %3433 = vmatpush1.msra.mxu0 0.0
    %3434 = vmatprep.subr.mxu0 0.0
    %3435 = vmatpush1.msra.mxu0 0.0
    %3436 = vmatprep.subr.mxu0 0.0
    %3437 = vmatpush1.msra.mxu0 0.0
    %3438 = vmatprep.subr.mxu0 0.0
    %3439 = vmatpush1.msra.mxu0 0.0
    %3440 = vmatprep.subr.mxu0 0.0
    %3441 = vmatpush1.msra.mxu0 0.0
    %3442 = vmatprep.subr.mxu0 0.0
    %3443 = vmatpush1.msra.mxu0 0.0
    %3444 = vmatprep.subr.mxu0 0.0
    %3445 = vmatpush1.msra.mxu0 0.0
    %3446 = vmatprep.subr.mxu0 0.0
    %3447 = vmatpush1.msra.mxu0 0.0
    %3448 = vmatprep.subr.mxu0 0.0
    %3449 = vmatpush1.msra.mxu0 0.0
    %3450 = vmatprep.subr.mxu0 0.0
    %3451 = vmatpush1.msra.mxu0 0.0
    %3452 = vmatprep.subr.mxu0 0.0
    %3453 = vmatpush1.msra.mxu0 0.0
    %3454 = vmatprep.subr.mxu0 0.0
    %3455 = vmatpush1.msra.mxu0 0.0
    %3456 = vmatprep.subr.mxu0 0.0
    %3457 = vmatpush1.msra.mxu0 0.0
    %3458 = vmatprep.subr.mxu0 0.0
    %3459 = vmatpush1.msra.mxu0 0.0
    %3460 = vmatprep.subr.mxu0 0.0
    %3461 = vmatpush1.msra.mxu0 0.0
    %3462 = vmatprep.subr.mxu0 0.0
    %3463 = vmatpush1.msra.mxu0 0.0
    %3464 = vmatprep.subr.mxu0 0.0
    %3465 = vmatpush1.msra.mxu0 0.0
    %3466 = vmatprep.subr.mxu0 0.0
    %3467 = vmatpush1.msra.mxu0 0.0
    %3468 = vmatprep.subr.mxu0 0.0
    %3469 = vmatpush1.msra.mxu0 0.0
    %3470 = vmatprep.subr.mxu0 0.0
    %3471 = vmatpush1.msra.mxu0 0.0
    %3472 = vmatprep.subr.mxu0 0.0
    %3473 = vmatpush1.msra.mxu0 0.0
    %3474 = vmatprep.subr.mxu0 0.0
    %3475 = vmatpush1.msra.mxu0 0.0
    %3476 = vmatprep.subr.mxu0 0.0
    %3477 = vmatpush1.msra.mxu0 0.0
    %3478 = vmatprep.subr.mxu0 0.0
    %3479 = vmatpush1.msra.mxu0 0.0
    %3480 = vmatprep.subr.mxu0 0.0
    %3481 = vmatpush1.msra.mxu0 0.0
    %3482 = vmatprep.subr.mxu0 0.0
    %3483 = vmatpush1.msra.mxu0 0.0
    %3484 = vmatprep.subr.mxu0 0.0
    %3485 = vmatpush1.msra.mxu0 0.0
    %3486 = vmatprep.mubr.f32.mxu0 0.0
    %3487 = vmatmul.mubr.f32.gmra.mrb[0].mxu0 %v1709
    %v3488 = vpop.f32.mrb[0].mxu0
    %v3489 = vadd.f32 %v3412, %v3488
    %v3490 = vpop.f32.mrb[0].mxu0
    %v3491 = vadd.f32 %v3414, %v3490
    %3492 = vmatprep.mubr.f32.mxu0 0.0
    %3493 = vmatmul.mubr.f32.gmra.mrb[0].mxu0 %v1712
    %v3494 = vpop.f32.mrb[0].mxu0
    %v3495 = vadd.f32 %v3418, %v3494
    %v3496 = vpop.f32.mrb[0].mxu0
    %v3497 = vadd.f32 %v3420, %v3496
    %3498 = vdwg.mxu0
    %3499 = vmatprep.subr.mxu0 %v491
    %3500 = vmatpush1.msra.mxu0 %v490
    %3501 = vmatprep.subr.mxu0 %v499
    %3502 = vmatpush1.msra.mxu0 %v498
    %3503 = vmatprep.subr.mxu0 %v507
    %3504 = vmatpush1.msra.mxu0 %v506
    %3505 = vmatprep.subr.mxu0 %v515
    %3506 = vmatpush1.msra.mxu0 %v514
    %3507 = vmatprep.subr.mxu0 %v523
    %3508 = vmatpush1.msra.mxu0 %v522
    %3509 = vmatprep.subr.mxu0 %v531
    %3510 = vmatpush1.msra.mxu0 %v530
    %3511 = vmatprep.subr.mxu0 %v539
    %3512 = vmatpush1.msra.mxu0 %v538
    %3513 = vmatprep.subr.mxu0 %v547
    %3514 = vmatpush1.msra.mxu0 %v546
    %3515 = vmatprep.subr.mxu0 %v555
    %3516 = vmatpush1.msra.mxu0 %v554
    %3517 = vmatprep.subr.mxu0 %v563
    %3518 = vmatpush1.msra.mxu0 %v562
    %3519 = vmatprep.subr.mxu0 %v571
    %3520 = vmatpush1.msra.mxu0 %v570
    %3521 = vmatprep.subr.mxu0 %v579
    %3522 = vmatpush1.msra.mxu0 %v578
    %3523 = vmatprep.subr.mxu0 %v587
    %3524 = vmatpush1.msra.mxu0 %v586
    %3525 = vmatprep.subr.mxu0 %v595
    %3526 = vmatpush1.msra.mxu0 %v594
    %3527 = vmatprep.subr.mxu0 %v603
    %3528 = vmatpush1.msra.mxu0 %v602
    %3529 = vmatprep.subr.mxu0 %v611
    %3530 = vmatpush1.msra.mxu0 %v610
    %3531 = vmatprep.subr.mxu0 %v619
    %3532 = vmatpush1.msra.mxu0 %v618
    %3533 = vmatprep.subr.mxu0 %v627
    %3534 = vmatpush1.msra.mxu0 %v626
    %3535 = vmatprep.subr.mxu0 %v635
    %3536 = vmatpush1.msra.mxu0 %v634
    %3537 = vmatprep.subr.mxu0 %v643
    %3538 = vmatpush1.msra.mxu0 %v642
    %3539 = vmatprep.subr.mxu0 %v651
    %3540 = vmatpush1.msra.mxu0 %v650
    %3541 = vmatprep.subr.mxu0 %v659
    %3542 = vmatpush1.msra.mxu0 %v658
    %3543 = vmatprep.subr.mxu0 %v667
    %3544 = vmatpush1.msra.mxu0 %v666
    %3545 = vmatprep.subr.mxu0 %v675
    %3546 = vmatpush1.msra.mxu0 %v674
    %3547 = vmatprep.subr.mxu0 %v683
    %3548 = vmatpush1.msra.mxu0 %v682
    %3549 = vmatprep.subr.mxu0 %v691
    %3550 = vmatpush1.msra.mxu0 %v690
    %3551 = vmatprep.subr.mxu0 %v699
    %3552 = vmatpush1.msra.mxu0 %v698
    %3553 = vmatprep.subr.mxu0 %v707
    %3554 = vmatpush1.msra.mxu0 %v706
    %3555 = vmatprep.subr.mxu0 %v715
    %3556 = vmatpush1.msra.mxu0 %v714
    %3557 = vmatprep.subr.mxu0 %v723
    %3558 = vmatpush1.msra.mxu0 %v722
    %3559 = vmatprep.subr.mxu0 %v731
    %3560 = vmatpush1.msra.mxu0 %v730
    %3561 = vmatprep.subr.mxu0 %v739
    %3562 = vmatpush1.msra.mxu0 %v738
    %3563 = vmatprep.mubr.f32.mxu0 %v1671
    %3564 = vmatmul.mubr.f32.gmra.mrb[0].mxu0 %v1670
    %v3565 = vpop.f32.mrb[0].mxu0
    %v3566 = vadd.f32 %v3170, %v3565
    %v3567 = vpop.f32.mrb[0].mxu0
    %v3568 = vadd.f32 %v3174, %v3567
    %3569 = vmatprep.mubr.f32.mxu0 %v1674
    %3570 = vmatmul.mubr.f32.gmra.mrb[0].mxu0 %v1673
    %v3571 = vpop.f32.mrb[0].mxu0
    %v3572 = vadd.f32 %v3170, %v3571
    %v3573 = vpop.f32.mrb[0].mxu0
    %v3574 = vadd.f32 %v3174, %v3573
    %3575 = vdwg.mxu0
    %3576 = vmatprep.subr.mxu0 %v747
    %3577 = vmatpush1.msra.mxu0 %v746
    %3578 = vmatprep.subr.mxu0 %v755
    %3579 = vmatpush1.msra.mxu0 %v754
    %3580 = vmatprep.subr.mxu0 %v763
    %3581 = vmatpush1.msra.mxu0 %v762
    %3582 = vmatprep.subr.mxu0 %v771
    %3583 = vmatpush1.msra.mxu0 %v770
    %3584 = vmatprep.subr.mxu0 0.0
    %3585 = vmatpush1.msra.mxu0 0.0
    %3586 = vmatprep.subr.mxu0 0.0
    %3587 = vmatpush1.msra.mxu0 0.0
    %3588 = vmatprep.subr.mxu0 0.0
    %3589 = vmatpush1.msra.mxu0 0.0
    %3590 = vmatprep.subr.mxu0 0.0
    %3591 = vmatpush1.msra.mxu0 0.0
    %3592 = vmatprep.subr.mxu0 0.0
    %3593 = vmatpush1.msra.mxu0 0.0
    %3594 = vmatprep.subr.mxu0 0.0
    %3595 = vmatpush1.msra.mxu0 0.0
    %3596 = vmatprep.subr.mxu0 0.0
    %3597 = vmatpush1.msra.mxu0 0.0
    %3598 = vmatprep.subr.mxu0 0.0
    %3599 = vmatpush1.msra.mxu0 0.0
    %3600 = vmatprep.subr.mxu0 0.0
    %3601 = vmatpush1.msra.mxu0 0.0
    %3602 = vmatprep.subr.mxu0 0.0
    %3603 = vmatpush1.msra.mxu0 0.0
    %3604 = vmatprep.subr.mxu0 0.0
    %3605 = vmatpush1.msra.mxu0 0.0
    %3606 = vmatprep.subr.mxu0 0.0
    %3607 = vmatpush1.msra.mxu0 0.0
    %3608 = vmatprep.subr.mxu0 0.0
    %3609 = vmatpush1.msra.mxu0 0.0
    %3610 = vmatprep.subr.mxu0 0.0
    %3611 = vmatpush1.msra.mxu0 0.0
    %3612 = vmatprep.subr.mxu0 0.0
    %3613 = vmatpush1.msra.mxu0 0.0
    %3614 = vmatprep.subr.mxu0 0.0
    %3615 = vmatpush1.msra.mxu0 0.0
    %3616 = vmatprep.subr.mxu0 0.0
    %3617 = vmatpush1.msra.mxu0 0.0
    %3618 = vmatprep.subr.mxu0 0.0
    %3619 = vmatpush1.msra.mxu0 0.0
    %3620 = vmatprep.subr.mxu0 0.0
    %3621 = vmatpush1.msra.mxu0 0.0
    %3622 = vmatprep.subr.mxu0 0.0
    %3623 = vmatpush1.msra.mxu0 0.0
    %3624 = vmatprep.subr.mxu0 0.0
    %3625 = vmatpush1.msra.mxu0 0.0
    %3626 = vmatprep.subr.mxu0 0.0
    %3627 = vmatpush1.msra.mxu0 0.0
    %3628 = vmatprep.subr.mxu0 0.0
    %3629 = vmatpush1.msra.mxu0 0.0
    %3630 = vmatprep.subr.mxu0 0.0
    %3631 = vmatpush1.msra.mxu0 0.0
    %3632 = vmatprep.subr.mxu0 0.0
    %3633 = vmatpush1.msra.mxu0 0.0
    %3634 = vmatprep.subr.mxu0 0.0
    %3635 = vmatpush1.msra.mxu0 0.0
    %3636 = vmatprep.subr.mxu0 0.0
    %3637 = vmatpush1.msra.mxu0 0.0
    %3638 = vmatprep.subr.mxu0 0.0
    %3639 = vmatpush1.msra.mxu0 0.0
    %3640 = vmatprep.mubr.f32.mxu0 0.0
    %3641 = vmatmul.mubr.f32.gmra.mrb[0].mxu0 %v1709
    %v3642 = vpop.f32.mrb[0].mxu0
    %v3643 = vadd.f32 %v3566, %v3642
    %v3644 = vpop.f32.mrb[0].mxu0
    %v3645 = vadd.f32 %v3568, %v3644
    %3646 = vmatprep.mubr.f32.mxu0 0.0
    %3647 = vmatmul.mubr.f32.gmra.mrb[0].mxu0 %v1712
    %v3648 = vpop.f32.mrb[0].mxu0
    %v3649 = vadd.f32 %v3572, %v3648
    %v3650 = vpop.f32.mrb[0].mxu0
    %v3651 = vadd.f32 %v3574, %v3650
    %3652 = vdwg.mxu0
    %3653 = vmatprep.subr.mxu0 %v493
    %3654 = vmatpush1.msra.mxu0 %v492
    %3655 = vmatprep.subr.mxu0 %v501
    %3656 = vmatpush1.msra.mxu0 %v500
    %3657 = vmatprep.subr.mxu0 %v509
    %3658 = vmatpush1.msra.mxu0 %v508
    %3659 = vmatprep.subr.mxu0 %v517
    %3660 = vmatpush1.msra.mxu0 %v516
    %3661 = vmatprep.subr.mxu0 %v525
    %3662 = vmatpush1.msra.mxu0 %v524
    %3663 = vmatprep.subr.mxu0 %v533
    %3664 = vmatpush1.msra.mxu0 %v532
    %3665 = vmatprep.subr.mxu0 %v541
    %3666 = vmatpush1.msra.mxu0 %v540
    %3667 = vmatprep.subr.mxu0 %v549
    %3668 = vmatpush1.msra.mxu0 %v548
    %3669 = vmatprep.subr.mxu0 %v557
    %3670 = vmatpush1.msra.mxu0 %v556
    %3671 = vmatprep.subr.mxu0 %v565
    %3672 = vmatpush1.msra.mxu0 %v564
    %3673 = vmatprep.subr.mxu0 %v573
    %3674 = vmatpush1.msra.mxu0 %v572
    %3675 = vmatprep.subr.mxu0 %v581
    %3676 = vmatpush1.msra.mxu0 %v580
    %3677 = vmatprep.subr.mxu0 %v589
    %3678 = vmatpush1.msra.mxu0 %v588
    %3679 = vmatprep.subr.mxu0 %v597
    %3680 = vmatpush1.msra.mxu0 %v596
    %3681 = vmatprep.subr.mxu0 %v605
    %3682 = vmatpush1.msra.mxu0 %v604
    %3683 = vmatprep.subr.mxu0 %v613
    %3684 = vmatpush1.msra.mxu0 %v612
    %3685 = vmatprep.subr.mxu0 %v621
    %3686 = vmatpush1.msra.mxu0 %v620
    %3687 = vmatprep.subr.mxu0 %v629
    %3688 = vmatpush1.msra.mxu0 %v628
    %3689 = vmatprep.subr.mxu0 %v637
    %3690 = vmatpush1.msra.mxu0 %v636
    %3691 = vmatprep.subr.mxu0 %v645
    %3692 = vmatpush1.msra.mxu0 %v644
    %3693 = vmatprep.subr.mxu0 %v653
    %3694 = vmatpush1.msra.mxu0 %v652
    %3695 = vmatprep.subr.mxu0 %v661
    %3696 = vmatpush1.msra.mxu0 %v660
    %3697 = vmatprep.subr.mxu0 %v669
    %3698 = vmatpush1.msra.mxu0 %v668
    %3699 = vmatprep.subr.mxu0 %v677
    %3700 = vmatpush1.msra.mxu0 %v676
    %3701 = vmatprep.subr.mxu0 %v685
    %3702 = vmatpush1.msra.mxu0 %v684
    %3703 = vmatprep.subr.mxu0 %v693
    %3704 = vmatpush1.msra.mxu0 %v692
    %3705 = vmatprep.subr.mxu0 %v701
    %3706 = vmatpush1.msra.mxu0 %v700
    %3707 = vmatprep.subr.mxu0 %v709
    %3708 = vmatpush1.msra.mxu0 %v708
    %3709 = vmatprep.subr.mxu0 %v717
    %3710 = vmatpush1.msra.mxu0 %v716
    %3711 = vmatprep.subr.mxu0 %v725
    %3712 = vmatpush1.msra.mxu0 %v724
    %3713 = vmatprep.subr.mxu0 %v733
    %3714 = vmatpush1.msra.mxu0 %v732
    %3715 = vmatprep.subr.mxu0 %v741
    %3716 = vmatpush1.msra.mxu0 %v740
    %3717 = vmatprep.mubr.f32.mxu0 %v1671
    %3718 = vmatmul.mubr.f32.gmra.mrb[0].mxu0 %v1670
    %v3719 = vpop.f32.mrb[0].mxu0
    %v3720 = vadd.f32 %v3178, %v3719
    %v3721 = vpop.f32.mrb[0].mxu0
    %v3722 = vadd.f32 %v3182, %v3721
    %3723 = vmatprep.mubr.f32.mxu0 %v1674
    %3724 = vmatmul.mubr.f32.gmra.mrb[0].mxu0 %v1673
    %v3725 = vpop.f32.mrb[0].mxu0
    %v3726 = vadd.f32 %v3178, %v3725
    %v3727 = vpop.f32.mrb[0].mxu0
    %v3728 = vadd.f32 %v3182, %v3727
    %3729 = vdwg.mxu0
    %3730 = vmatprep.subr.mxu0 %v749
    %3731 = vmatpush1.msra.mxu0 %v748
    %3732 = vmatprep.subr.mxu0 %v757
    %3733 = vmatpush1.msra.mxu0 %v756
    %3734 = vmatprep.subr.mxu0 %v765
    %3735 = vmatpush1.msra.mxu0 %v764
    %3736 = vmatprep.subr.mxu0 %v773
    %3737 = vmatpush1.msra.mxu0 %v772
    %3738 = vmatprep.subr.mxu0 0.0
    %3739 = vmatpush1.msra.mxu0 0.0
    %3740 = vmatprep.subr.mxu0 0.0
    %3741 = vmatpush1.msra.mxu0 0.0
    %3742 = vmatprep.subr.mxu0 0.0
    %3743 = vmatpush1.msra.mxu0 0.0
    %3744 = vmatprep.subr.mxu0 0.0
    %3745 = vmatpush1.msra.mxu0 0.0
    %3746 = vmatprep.subr.mxu0 0.0
    %3747 = vmatpush1.msra.mxu0 0.0
    %3748 = vmatprep.subr.mxu0 0.0
    %3749 = vmatpush1.msra.mxu0 0.0
    %3750 = vmatprep.subr.mxu0 0.0
    %3751 = vmatpush1.msra.mxu0 0.0
    %3752 = vmatprep.subr.mxu0 0.0
    %3753 = vmatpush1.msra.mxu0 0.0
    %3754 = vmatprep.subr.mxu0 0.0
    %3755 = vmatpush1.msra.mxu0 0.0
    %3756 = vmatprep.subr.mxu0 0.0
    %3757 = vmatpush1.msra.mxu0 0.0
    %3758 = vmatprep.subr.mxu0 0.0
    %3759 = vmatpush1.msra.mxu0 0.0
    %3760 = vmatprep.subr.mxu0 0.0
    %3761 = vmatpush1.msra.mxu0 0.0
    %3762 = vmatprep.subr.mxu0 0.0
    %3763 = vmatpush1.msra.mxu0 0.0
    %3764 = vmatprep.subr.mxu0 0.0
    %3765 = vmatpush1.msra.mxu0 0.0
    %3766 = vmatprep.subr.mxu0 0.0
    %3767 = vmatpush1.msra.mxu0 0.0
    %3768 = vmatprep.subr.mxu0 0.0
    %3769 = vmatpush1.msra.mxu0 0.0
    %3770 = vmatprep.subr.mxu0 0.0
    %3771 = vmatpush1.msra.mxu0 0.0
    %3772 = vmatprep.subr.mxu0 0.0
    %3773 = vmatpush1.msra.mxu0 0.0
    %3774 = vmatprep.subr.mxu0 0.0
    %3775 = vmatpush1.msra.mxu0 0.0
    %3776 = vmatprep.subr.mxu0 0.0
    %3777 = vmatpush1.msra.mxu0 0.0
    %3778 = vmatprep.subr.mxu0 0.0
    %3779 = vmatpush1.msra.mxu0 0.0
    %3780 = vmatprep.subr.mxu0 0.0
    %3781 = vmatpush1.msra.mxu0 0.0
    %3782 = vmatprep.subr.mxu0 0.0
    %3783 = vmatpush1.msra.mxu0 0.0
    %3784 = vmatprep.subr.mxu0 0.0
    %3785 = vmatpush1.msra.mxu0 0.0
    %3786 = vmatprep.subr.mxu0 0.0
    %3787 = vmatpush1.msra.mxu0 0.0
    %3788 = vmatprep.subr.mxu0 0.0
    %3789 = vmatpush1.msra.mxu0 0.0
    %3790 = vmatprep.subr.mxu0 0.0
    %3791 = vmatpush1.msra.mxu0 0.0
    %3792 = vmatprep.subr.mxu0 0.0
    %3793 = vmatpush1.msra.mxu0 0.0
    %3794 = vmatprep.mubr.f32.mxu0 0.0
    %3795 = vmatmul.mubr.f32.gmra.mrb[0].mxu0 %v1709
    %v3796 = vpop.f32.mrb[0].mxu0
    %v3797 = vadd.f32 %v3720, %v3796
    %v3798 = vpop.f32.mrb[0].mxu0
    %v3799 = vadd.f32 %v3722, %v3798
    %3800 = vmatprep.mubr.f32.mxu0 0.0
    %3801 = vmatmul.mubr.f32.gmra.mrb[0].mxu0 %v1712
    %v3802 = vpop.f32.mrb[0].mxu0
    %v3803 = vadd.f32 %v3726, %v3802
    %v3804 = vpop.f32.mrb[0].mxu0
    %v3805 = vadd.f32 %v3728, %v3804
    %3806 = vdwg.mxu0
    %3807 = vmatprep.subr.mxu0 %v1180
    %3808 = vmatpush1.msra.mxu0 %v1179
    %3809 = vmatprep.subr.mxu0 %v1188
    %3810 = vmatpush1.msra.mxu0 %v1187
    %3811 = vmatprep.subr.mxu0 %v1196
    %3812 = vmatpush1.msra.mxu0 %v1195
    %3813 = vmatprep.subr.mxu0 %v1204
    %3814 = vmatpush1.msra.mxu0 %v1203
    %3815 = vmatprep.subr.mxu0 %v1212
    %3816 = vmatpush1.msra.mxu0 %v1211
    %3817 = vmatprep.subr.mxu0 %v1220
    %3818 = vmatpush1.msra.mxu0 %v1219
    %3819 = vmatprep.subr.mxu0 %v1228
    %3820 = vmatpush1.msra.mxu0 %v1227
    %3821 = vmatprep.subr.mxu0 %v1236
    %3822 = vmatpush1.msra.mxu0 %v1235
    %3823 = vmatprep.subr.mxu0 %v1244
    %3824 = vmatpush1.msra.mxu0 %v1243
    %3825 = vmatprep.subr.mxu0 %v1252
    %3826 = vmatpush1.msra.mxu0 %v1251
    %3827 = vmatprep.subr.mxu0 %v1260
    %3828 = vmatpush1.msra.mxu0 %v1259
    %3829 = vmatprep.subr.mxu0 %v1268
    %3830 = vmatpush1.msra.mxu0 %v1267
    %3831 = vmatprep.subr.mxu0 %v1276
    %3832 = vmatpush1.msra.mxu0 %v1275
    %3833 = vmatprep.subr.mxu0 %v1284
    %3834 = vmatpush1.msra.mxu0 %v1283
    %3835 = vmatprep.subr.mxu0 %v1292
    %3836 = vmatpush1.msra.mxu0 %v1291
    %3837 = vmatprep.subr.mxu0 %v1300
    %3838 = vmatpush1.msra.mxu0 %v1299
    %3839 = vmatprep.subr.mxu0 0.0
    %3840 = vmatpush1.msra.mxu0 0.0
    %3841 = vmatprep.subr.mxu0 0.0
    %3842 = vmatpush1.msra.mxu0 0.0
    %3843 = vmatprep.subr.mxu0 0.0
    %3844 = vmatpush1.msra.mxu0 0.0
    %3845 = vmatprep.subr.mxu0 0.0
    %3846 = vmatpush1.msra.mxu0 0.0
    %3847 = vmatprep.subr.mxu0 0.0
    %3848 = vmatpush1.msra.mxu0 0.0
    %3849 = vmatprep.subr.mxu0 0.0
    %3850 = vmatpush1.msra.mxu0 0.0
    %3851 = vmatprep.subr.mxu0 0.0
    %3852 = vmatpush1.msra.mxu0 0.0
    %3853 = vmatprep.subr.mxu0 0.0
    %3854 = vmatpush1.msra.mxu0 0.0
    %3855 = vmatprep.subr.mxu0 0.0
    %3856 = vmatpush1.msra.mxu0 0.0
    %3857 = vmatprep.subr.mxu0 0.0
    %3858 = vmatpush1.msra.mxu0 0.0
    %3859 = vmatprep.subr.mxu0 0.0
    %3860 = vmatpush1.msra.mxu0 0.0
    %3861 = vmatprep.subr.mxu0 0.0
    %3862 = vmatpush1.msra.mxu0 0.0
    %3863 = vmatprep.subr.mxu0 0.0
    %3864 = vmatpush1.msra.mxu0 0.0
    %3865 = vmatprep.subr.mxu0 0.0
    %3866 = vmatpush1.msra.mxu0 0.0
    %3867 = vmatprep.subr.mxu0 0.0
    %3868 = vmatpush1.msra.mxu0 0.0
    %3869 = vmatprep.subr.mxu0 0.0
    %3870 = vmatpush1.msra.mxu0 0.0
    %3871 = vmatprep.mubr.f32.mxu0 0.0
    %3872 = vmatmul.mubr.f32.gmra.mrb[0].mxu0 %v3148
    %v3873 = vpop.f32.mrb[0].mxu0
    %v3874 = vadd.f32 0.0, %v3873
    %v3875 = vpop.f32.mrb[0].mxu0
    %v3876 = vadd.f32 0.0, %v3875
    %3877 = vmatprep.mubr.f32.mxu0 0.0
    %3878 = vmatmul.mubr.f32.gmra.mrb[0].mxu0 %v3149
    %v3879 = vpop.f32.mrb[0].mxu0
    %v3880 = vadd.f32 0.0, %v3879
    %v3881 = vpop.f32.mrb[0].mxu0
    %v3882 = vadd.f32 0.0, %v3881
    %3883 = vdwg.mxu0
    %3884 = vmatprep.subr.mxu0 %v1182
    %3885 = vmatpush1.msra.mxu0 %v1181
    %3886 = vmatprep.subr.mxu0 %v1190
    %3887 = vmatpush1.msra.mxu0 %v1189
    %3888 = vmatprep.subr.mxu0 %v1198
    %3889 = vmatpush1.msra.mxu0 %v1197
    %3890 = vmatprep.subr.mxu0 %v1206
    %3891 = vmatpush1.msra.mxu0 %v1205
    %3892 = vmatprep.subr.mxu0 %v1214
    %3893 = vmatpush1.msra.mxu0 %v1213
    %3894 = vmatprep.subr.mxu0 %v1222
    %3895 = vmatpush1.msra.mxu0 %v1221
    %3896 = vmatprep.subr.mxu0 %v1230
    %3897 = vmatpush1.msra.mxu0 %v1229
    %3898 = vmatprep.subr.mxu0 %v1238
    %3899 = vmatpush1.msra.mxu0 %v1237
    %3900 = vmatprep.subr.mxu0 %v1246
    %3901 = vmatpush1.msra.mxu0 %v1245
    %3902 = vmatprep.subr.mxu0 %v1254
    %3903 = vmatpush1.msra.mxu0 %v1253
    %3904 = vmatprep.subr.mxu0 %v1262
    %3905 = vmatpush1.msra.mxu0 %v1261
    %3906 = vmatprep.subr.mxu0 %v1270
    %3907 = vmatpush1.msra.mxu0 %v1269
    %3908 = vmatprep.subr.mxu0 %v1278
    %3909 = vmatpush1.msra.mxu0 %v1277
    %3910 = vmatprep.subr.mxu0 %v1286
    %3911 = vmatpush1.msra.mxu0 %v1285
    %3912 = vmatprep.subr.mxu0 %v1294
    %3913 = vmatpush1.msra.mxu0 %v1293
    %3914 = vmatprep.subr.mxu0 %v1302
    %3915 = vmatpush1.msra.mxu0 %v1301
    %3916 = vmatprep.subr.mxu0 0.0
    %3917 = vmatpush1.msra.mxu0 0.0
    %3918 = vmatprep.subr.mxu0 0.0
    %3919 = vmatpush1.msra.mxu0 0.0
    %3920 = vmatprep.subr.mxu0 0.0
    %3921 = vmatpush1.msra.mxu0 0.0
    %3922 = vmatprep.subr.mxu0 0.0
    %3923 = vmatpush1.msra.mxu0 0.0
    %3924 = vmatprep.subr.mxu0 0.0
    %3925 = vmatpush1.msra.mxu0 0.0
    %3926 = vmatprep.subr.mxu0 0.0
    %3927 = vmatpush1.msra.mxu0 0.0
    %3928 = vmatprep.subr.mxu0 0.0
    %3929 = vmatpush1.msra.mxu0 0.0
    %3930 = vmatprep.subr.mxu0 0.0
    %3931 = vmatpush1.msra.mxu0 0.0
    %3932 = vmatprep.subr.mxu0 0.0
    %3933 = vmatpush1.msra.mxu0 0.0
    %3934 = vmatprep.subr.mxu0 0.0
    %3935 = vmatpush1.msra.mxu0 0.0
    %3936 = vmatprep.subr.mxu0 0.0
    %3937 = vmatpush1.msra.mxu0 0.0
    %3938 = vmatprep.subr.mxu0 0.0
    %3939 = vmatpush1.msra.mxu0 0.0
    %3940 = vmatprep.subr.mxu0 0.0
    %3941 = vmatpush1.msra.mxu0 0.0
    %3942 = vmatprep.subr.mxu0 0.0
    %3943 = vmatpush1.msra.mxu0 0.0
    %3944 = vmatprep.subr.mxu0 0.0
    %3945 = vmatpush1.msra.mxu0 0.0
    %3946 = vmatprep.subr.mxu0 0.0
    %3947 = vmatpush1.msra.mxu0 0.0
    %3948 = vmatprep.mubr.f32.mxu0 0.0
    %3949 = vmatmul.mubr.f32.gmra.mrb[0].mxu0 %v3148
    %v3950 = vpop.f32.mrb[0].mxu0
    %v3951 = vadd.f32 0.0, %v3950
    %v3952 = vpop.f32.mrb[0].mxu0
    %v3953 = vadd.f32 0.0, %v3952
    %3954 = vmatprep.mubr.f32.mxu0 0.0
    %3955 = vmatmul.mubr.f32.gmra.mrb[0].mxu0 %v3149
    %v3956 = vpop.f32.mrb[0].mxu0
    %v3957 = vadd.f32 0.0, %v3956
    %v3958 = vpop.f32.mrb[0].mxu0
    %v3959 = vadd.f32 0.0, %v3958
    %3960 = vdwg.mxu0
    %3961 = vmatprep.subr.mxu0 %v1184
    %3962 = vmatpush1.msra.mxu0 %v1183
    %3963 = vmatprep.subr.mxu0 %v1192
    %3964 = vmatpush1.msra.mxu0 %v1191
    %3965 = vmatprep.subr.mxu0 %v1200
    %3966 = vmatpush1.msra.mxu0 %v1199
    %3967 = vmatprep.subr.mxu0 %v1208
    %3968 = vmatpush1.msra.mxu0 %v1207
    %3969 = vmatprep.subr.mxu0 %v1216
    %3970 = vmatpush1.msra.mxu0 %v1215
    %3971 = vmatprep.subr.mxu0 %v1224
    %3972 = vmatpush1.msra.mxu0 %v1223
    %3973 = vmatprep.subr.mxu0 %v1232
    %3974 = vmatpush1.msra.mxu0 %v1231
    %3975 = vmatprep.subr.mxu0 %v1240
    %3976 = vmatpush1.msra.mxu0 %v1239
    %3977 = vmatprep.subr.mxu0 %v1248
    %3978 = vmatpush1.msra.mxu0 %v1247
    %3979 = vmatprep.subr.mxu0 %v1256
    %3980 = vmatpush1.msra.mxu0 %v1255
    %3981 = vmatprep.subr.mxu0 %v1264
    %3982 = vmatpush1.msra.mxu0 %v1263
    %3983 = vmatprep.subr.mxu0 %v1272
    %3984 = vmatpush1.msra.mxu0 %v1271
    %3985 = vmatprep.subr.mxu0 %v1280
    %3986 = vmatpush1.msra.mxu0 %v1279
    %3987 = vmatprep.subr.mxu0 %v1288
    %3988 = vmatpush1.msra.mxu0 %v1287
    %3989 = vmatprep.subr.mxu0 %v1296
    %3990 = vmatpush1.msra.mxu0 %v1295
    %3991 = vmatprep.subr.mxu0 %v1304
    %3992 = vmatpush1.msra.mxu0 %v1303
    %3993 = vmatprep.subr.mxu0 0.0
    %3994 = vmatpush1.msra.mxu0 0.0
    %3995 = vmatprep.subr.mxu0 0.0
    %3996 = vmatpush1.msra.mxu0 0.0
    %3997 = vmatprep.subr.mxu0 0.0
    %3998 = vmatpush1.msra.mxu0 0.0
    %3999 = vmatprep.subr.mxu0 0.0
    %4000 = vmatpush1.msra.mxu0 0.0
    %4001 = vmatprep.subr.mxu0 0.0
    %4002 = vmatpush1.msra.mxu0 0.0
    %4003 = vmatprep.subr.mxu0 0.0
    %4004 = vmatpush1.msra.mxu0 0.0
    %4005 = vmatprep.subr.mxu0 0.0
    %4006 = vmatpush1.msra.mxu0 0.0
    %4007 = vmatprep.subr.mxu0 0.0
    %4008 = vmatpush1.msra.mxu0 0.0
    %4009 = vmatprep.subr.mxu0 0.0
    %4010 = vmatpush1.msra.mxu0 0.0
    %4011 = vmatprep.subr.mxu0 0.0
    %4012 = vmatpush1.msra.mxu0 0.0
    %4013 = vmatprep.subr.mxu0 0.0
    %4014 = vmatpush1.msra.mxu0 0.0
    %4015 = vmatprep.subr.mxu0 0.0
    %4016 = vmatpush1.msra.mxu0 0.0
    %4017 = vmatprep.subr.mxu0 0.0
    %4018 = vmatpush1.msra.mxu0 0.0
    %4019 = vmatprep.subr.mxu0 0.0
    %4020 = vmatpush1.msra.mxu0 0.0
    %4021 = vmatprep.subr.mxu0 0.0
    %4022 = vmatpush1.msra.mxu0 0.0
    %4023 = vmatprep.subr.mxu0 0.0
    %4024 = vmatpush1.msra.mxu0 0.0
    %4025 = vmatprep.mubr.f32.mxu0 0.0
    %4026 = vmatmul.mubr.f32.gmra.mrb[0].mxu0 %v3148
    %v4027 = vpop.f32.mrb[0].mxu0
    %v4028 = vadd.f32 0.0, %v4027
    %v4029 = vpop.f32.mrb[0].mxu0
    %v4030 = vadd.f32 0.0, %v4029
    %4031 = vmatprep.mubr.f32.mxu0 0.0
    %4032 = vmatmul.mubr.f32.gmra.mrb[0].mxu0 %v3149
    %v4033 = vpop.f32.mrb[0].mxu0
    %v4034 = vadd.f32 0.0, %v4033
    %v4035 = vpop.f32.mrb[0].mxu0
    %v4036 = vadd.f32 0.0, %v4035
    %4037 = vdwg.mxu0
    %4038 = vmatprep.subr.mxu0 %v1186
    %4039 = vmatpush1.msra.mxu0 %v1185
    %4040 = vmatprep.subr.mxu0 %v1194
    %4041 = vmatpush1.msra.mxu0 %v1193
    %4042 = vmatprep.subr.mxu0 %v1202
    %4043 = vmatpush1.msra.mxu0 %v1201
    %4044 = vmatprep.subr.mxu0 %v1210
    %4045 = vmatpush1.msra.mxu0 %v1209
    %4046 = vmatprep.subr.mxu0 %v1218
    %4047 = vmatpush1.msra.mxu0 %v1217
    %4048 = vmatprep.subr.mxu0 %v1226
    %4049 = vmatpush1.msra.mxu0 %v1225
    %4050 = vmatprep.subr.mxu0 %v1234
    %4051 = vmatpush1.msra.mxu0 %v1233
    %4052 = vmatprep.subr.mxu0 %v1242
    %4053 = vmatpush1.msra.mxu0 %v1241
    %4054 = vmatprep.subr.mxu0 %v1250
    %4055 = vmatpush1.msra.mxu0 %v1249
    %4056 = vmatprep.subr.mxu0 %v1258
    %4057 = vmatpush1.msra.mxu0 %v1257
    %4058 = vmatprep.subr.mxu0 %v1266
    %4059 = vmatpush1.msra.mxu0 %v1265
    %4060 = vmatprep.subr.mxu0 %v1274
    %4061 = vmatpush1.msra.mxu0 %v1273
    %4062 = vmatprep.subr.mxu0 %v1282
    %4063 = vmatpush1.msra.mxu0 %v1281
    %4064 = vmatprep.subr.mxu0 %v1290
    %4065 = vmatpush1.msra.mxu0 %v1289
    %4066 = vmatprep.subr.mxu0 %v1298
    %4067 = vmatpush1.msra.mxu0 %v1297
    %4068 = vmatprep.subr.mxu0 %v1306
    %4069 = vmatpush1.msra.mxu0 %v1305
    %4070 = vmatprep.subr.mxu0 0.0
    %4071 = vmatpush1.msra.mxu0 0.0
    %4072 = vmatprep.subr.mxu0 0.0
    %4073 = vmatpush1.msra.mxu0 0.0
    %4074 = vmatprep.subr.mxu0 0.0
    %4075 = vmatpush1.msra.mxu0 0.0
    %4076 = vmatprep.subr.mxu0 0.0
    %4077 = vmatpush1.msra.mxu0 0.0
    %4078 = vmatprep.subr.mxu0 0.0
    %4079 = vmatpush1.msra.mxu0 0.0
    %4080 = vmatprep.subr.mxu0 0.0
    %4081 = vmatpush1.msra.mxu0 0.0
    %4082 = vmatprep.subr.mxu0 0.0
    %4083 = vmatpush1.msra.mxu0 0.0
    %4084 = vmatprep.subr.mxu0 0.0
    %4085 = vmatpush1.msra.mxu0 0.0
    %4086 = vmatprep.subr.mxu0 0.0
    %4087 = vmatpush1.msra.mxu0 0.0
    %4088 = vmatprep.subr.mxu0 0.0
    %4089 = vmatpush1.msra.mxu0 0.0
    %4090 = vmatprep.subr.mxu0 0.0
    %4091 = vmatpush1.msra.mxu0 0.0
    %4092 = vmatprep.subr.mxu0 0.0
    %4093 = vmatpush1.msra.mxu0 0.0
    %4094 = vmatprep.subr.mxu0 0.0
    %4095 = vmatpush1.msra.mxu0 0.0
    %4096 = vmatprep.subr.mxu0 0.0
    %4097 = vmatpush1.msra.mxu0 0.0
    %4098 = vmatprep.subr.mxu0 0.0
    %4099 = vmatpush1.msra.mxu0 0.0
    %4100 = vmatprep.subr.mxu0 0.0
    %4101 = vmatpush1.msra.mxu0 0.0
    %4102 = vmatprep.mubr.f32.mxu0 0.0
    %4103 = vmatmul.mubr.f32.gmra.mrb[0].mxu0 %v3148
    %v4104 = vpop.f32.mrb[0].mxu0
    %v4105 = vadd.f32 0.0, %v4104
    %v4106 = vpop.f32.mrb[0].mxu0
    %v4107 = vadd.f32 0.0, %v4106
    %4108 = vmatprep.mubr.f32.mxu0 0.0
    %4109 = vmatmul.mubr.f32.gmra.mrb[0].mxu0 %v3149
    %v4110 = vpop.f32.mrb[0].mxu0
    %v4111 = vadd.f32 0.0, %v4110
    %v4112 = vpop.f32.mrb[0].mxu0
    %v4113 = vadd.f32 0.0, %v4112
    %4114 = vdwg.mxu0
    %v4115 = vmul.f32 %v3874, %v3335
    %v4116 = vmul.f32 %v3876, %v3337
    %v4117 = vmul.f32 %v3951, %v3489
    %v4118 = vmul.f32 %v3953, %v3491
    %v4119 = vmul.f32 %v4028, %v3643
    %v4120 = vmul.f32 %v4030, %v3645
    %v4121 = vmul.f32 %v4105, %v3797
    %v4122 = vmul.f32 %v4107, %v3799
    %v4123 = vmul.f32 %v3880, %v3341
    %v4124 = vmul.f32 %v3882, %v3343
    %v4125 = vmul.f32 %v3957, %v3495
    %v4126 = vmul.f32 %v3959, %v3497
    %v4127 = vmul.f32 %v4034, %v3649
    %v4128 = vmul.f32 %v4036, %v3651
    %v4129 = vmul.f32 %v4111, %v3803
    %v4130 = vmul.f32 %v4113, %v3805
    %4131 = vmatprep.subr.mxu0 0.0
    %4132 = vmatpush1.msra.mxu0 %v1307
    %4133 = vmatprep.subr.mxu0 0.0
    %4134 = vmatpush1.msra.mxu0 %v1308
    %4135 = vmatprep.subr.mxu0 0.0
    %4136 = vmatpush1.msra.mxu0 %v1309
    %4137 = vmatprep.subr.mxu0 0.0
    %4138 = vmatpush1.msra.mxu0 %v1310
    %4139 = vmatprep.subr.mxu0 0.0
    %4140 = vmatpush1.msra.mxu0 %v1311
    %4141 = vmatprep.subr.mxu0 0.0
    %4142 = vmatpush1.msra.mxu0 %v1312
    %4143 = vmatprep.subr.mxu0 0.0
    %4144 = vmatpush1.msra.mxu0 %v1313
    %4145 = vmatprep.subr.mxu0 0.0
    %4146 = vmatpush1.msra.mxu0 %v1314
    %4147 = vmatprep.subr.mxu0 0.0
    %4148 = vmatpush1.msra.mxu0 %v1315
    %4149 = vmatprep.subr.mxu0 0.0
    %4150 = vmatpush1.msra.mxu0 %v1316
    %4151 = vmatprep.subr.mxu0 0.0
    %4152 = vmatpush1.msra.mxu0 %v1317
    %4153 = vmatprep.subr.mxu0 0.0
    %4154 = vmatpush1.msra.mxu0 %v1318
    %4155 = vmatprep.subr.mxu0 0.0
    %4156 = vmatpush1.msra.mxu0 %v1319
    %4157 = vmatprep.subr.mxu0 0.0
    %4158 = vmatpush1.msra.mxu0 %v1320
    %4159 = vmatprep.subr.mxu0 0.0
    %4160 = vmatpush1.msra.mxu0 %v1321
    %4161 = vmatprep.subr.mxu0 0.0
    %4162 = vmatpush1.msra.mxu0 %v1322
    %4163 = vmatprep.subr.mxu0 0.0
    %4164 = vmatpush1.msra.mxu0 %v1323
    %4165 = vmatprep.subr.mxu0 0.0
    %4166 = vmatpush1.msra.mxu0 %v1324
    %4167 = vmatprep.subr.mxu0 0.0
    %4168 = vmatpush1.msra.mxu0 %v1325
    %4169 = vmatprep.subr.mxu0 0.0
    %4170 = vmatpush1.msra.mxu0 %v1326
    %4171 = vmatprep.subr.mxu0 0.0
    %4172 = vmatpush1.msra.mxu0 %v1327
    %4173 = vmatprep.subr.mxu0 0.0
    %4174 = vmatpush1.msra.mxu0 %v1328
    %4175 = vmatprep.subr.mxu0 0.0
    %4176 = vmatpush1.msra.mxu0 %v1329
    %4177 = vmatprep.subr.mxu0 0.0
    %4178 = vmatpush1.msra.mxu0 %v1330
    %4179 = vmatprep.subr.mxu0 0.0
    %4180 = vmatpush1.msra.mxu0 %v1331
    %4181 = vmatprep.subr.mxu0 0.0
    %4182 = vmatpush1.msra.mxu0 %v1332
    %4183 = vmatprep.subr.mxu0 0.0
    %4184 = vmatpush1.msra.mxu0 %v1333
    %4185 = vmatprep.subr.mxu0 0.0
    %4186 = vmatpush1.msra.mxu0 %v1334
    %4187 = vmatprep.subr.mxu0 0.0
    %4188 = vmatpush1.msra.mxu0 %v1335
    %4189 = vmatprep.subr.mxu0 0.0
    %4190 = vmatpush1.msra.mxu0 %v1336
    %4191 = vmatprep.subr.mxu0 0.0
    %4192 = vmatpush1.msra.mxu0 %v1337
    %4193 = vmatprep.subr.mxu0 0.0
    %4194 = vmatpush1.msra.mxu0 %v1338
    %4195 = vmatprep.mubr.f32.mxu0 %v4116
    %4196 = vmatmul.mubr.f32.gmra.mrb[0].mxu0 %v4115
    %v4197 = vpop.f32.mrb[0].mxu0
    %v4198 = vadd.f32 0.0, %v4197
    %v4199 = vpop.f32.mrb[0].mxu0
    %4200 = vmatprep.mubr.f32.mxu0 %v4124
    %4201 = vmatmul.mubr.f32.gmra.mrb[0].mxu0 %v4123
    %v4202 = vpop.f32.mrb[0].mxu0
    %v4203 = vadd.f32 0.0, %v4202
    %v4204 = vpop.f32.mrb[0].mxu0
    %4205 = vdwg.mxu0
    %4206 = vmatprep.subr.mxu0 0.0
    %4207 = vmatpush1.msra.mxu0 %v1339
    %4208 = vmatprep.subr.mxu0 0.0
    %4209 = vmatpush1.msra.mxu0 %v1340
    %4210 = vmatprep.subr.mxu0 0.0
    %4211 = vmatpush1.msra.mxu0 %v1341
    %4212 = vmatprep.subr.mxu0 0.0
    %4213 = vmatpush1.msra.mxu0 %v1342
    %4214 = vmatprep.subr.mxu0 0.0
    %4215 = vmatpush1.msra.mxu0 %v1343
    %4216 = vmatprep.subr.mxu0 0.0
    %4217 = vmatpush1.msra.mxu0 %v1344
    %4218 = vmatprep.subr.mxu0 0.0
    %4219 = vmatpush1.msra.mxu0 %v1345
    %4220 = vmatprep.subr.mxu0 0.0
    %4221 = vmatpush1.msra.mxu0 %v1346
    %4222 = vmatprep.subr.mxu0 0.0
    %4223 = vmatpush1.msra.mxu0 %v1347
    %4224 = vmatprep.subr.mxu0 0.0
    %4225 = vmatpush1.msra.mxu0 %v1348
    %4226 = vmatprep.subr.mxu0 0.0
    %4227 = vmatpush1.msra.mxu0 %v1349
    %4228 = vmatprep.subr.mxu0 0.0
    %4229 = vmatpush1.msra.mxu0 %v1350
    %4230 = vmatprep.subr.mxu0 0.0
    %4231 = vmatpush1.msra.mxu0 %v1351
    %4232 = vmatprep.subr.mxu0 0.0
    %4233 = vmatpush1.msra.mxu0 %v1352
    %4234 = vmatprep.subr.mxu0 0.0
    %4235 = vmatpush1.msra.mxu0 %v1353
    %4236 = vmatprep.subr.mxu0 0.0
    %4237 = vmatpush1.msra.mxu0 %v1354
    %4238 = vmatprep.subr.mxu0 0.0
    %4239 = vmatpush1.msra.mxu0 %v1355
    %4240 = vmatprep.subr.mxu0 0.0
    %4241 = vmatpush1.msra.mxu0 %v1356
    %4242 = vmatprep.subr.mxu0 0.0
    %4243 = vmatpush1.msra.mxu0 %v1357
    %4244 = vmatprep.subr.mxu0 0.0
    %4245 = vmatpush1.msra.mxu0 %v1358
    %4246 = vmatprep.subr.mxu0 0.0
    %4247 = vmatpush1.msra.mxu0 %v1359
    %4248 = vmatprep.subr.mxu0 0.0
    %4249 = vmatpush1.msra.mxu0 %v1360
    %4250 = vmatprep.subr.mxu0 0.0
    %4251 = vmatpush1.msra.mxu0 %v1361
    %4252 = vmatprep.subr.mxu0 0.0
    %4253 = vmatpush1.msra.mxu0 %v1362
    %4254 = vmatprep.subr.mxu0 0.0
    %4255 = vmatpush1.msra.mxu0 %v1363
    %4256 = vmatprep.subr.mxu0 0.0
    %4257 = vmatpush1.msra.mxu0 %v1364
    %4258 = vmatprep.subr.mxu0 0.0
    %4259 = vmatpush1.msra.mxu0 %v1365
    %4260 = vmatprep.subr.mxu0 0.0
    %4261 = vmatpush1.msra.mxu0 %v1366
    %4262 = vmatprep.subr.mxu0 0.0
    %4263 = vmatpush1.msra.mxu0 %v1367
    %4264 = vmatprep.subr.mxu0 0.0
    %4265 = vmatpush1.msra.mxu0 %v1368
    %4266 = vmatprep.subr.mxu0 0.0
    %4267 = vmatpush1.msra.mxu0 %v1369
    %4268 = vmatprep.subr.mxu0 0.0
    %4269 = vmatpush1.msra.mxu0 %v1370
    %4270 = vmatprep.mubr.f32.mxu0 %v4118
    %4271 = vmatmul.mubr.f32.gmra.mrb[0].mxu0 %v4117
    %v4272 = vpop.f32.mrb[0].mxu0
    %v4273 = vadd.f32 %v4198, %v4272
    %v4274 = vpop.f32.mrb[0].mxu0
    %4275 = vmatprep.mubr.f32.mxu0 %v4126
    %4276 = vmatmul.mubr.f32.gmra.mrb[0].mxu0 %v4125
    %v4277 = vpop.f32.mrb[0].mxu0
    %v4278 = vadd.f32 %v4203, %v4277
    %v4279 = vpop.f32.mrb[0].mxu0
    %4280 = vdwg.mxu0
    %4281 = vmatprep.subr.mxu0 0.0
    %4282 = vmatpush1.msra.mxu0 %v1371
    %4283 = vmatprep.subr.mxu0 0.0
    %4284 = vmatpush1.msra.mxu0 %v1372
    %4285 = vmatprep.subr.mxu0 0.0
    %4286 = vmatpush1.msra.mxu0 %v1373
    %4287 = vmatprep.subr.mxu0 0.0
    %4288 = vmatpush1.msra.mxu0 %v1374
    %4289 = vmatprep.subr.mxu0 0.0
    %4290 = vmatpush1.msra.mxu0 %v1375
    %4291 = vmatprep.subr.mxu0 0.0
    %4292 = vmatpush1.msra.mxu0 %v1376
    %4293 = vmatprep.subr.mxu0 0.0
    %4294 = vmatpush1.msra.mxu0 %v1377
    %4295 = vmatprep.subr.mxu0 0.0
    %4296 = vmatpush1.msra.mxu0 %v1378
    %4297 = vmatprep.subr.mxu0 0.0
    %4298 = vmatpush1.msra.mxu0 %v1379
    %4299 = vmatprep.subr.mxu0 0.0
    %4300 = vmatpush1.msra.mxu0 %v1380
    %4301 = vmatprep.subr.mxu0 0.0
    %4302 = vmatpush1.msra.mxu0 %v1381
    %4303 = vmatprep.subr.mxu0 0.0
    %4304 = vmatpush1.msra.mxu0 %v1382
    %4305 = vmatprep.subr.mxu0 0.0
    %4306 = vmatpush1.msra.mxu0 %v1383
    %4307 = vmatprep.subr.mxu0 0.0
    %4308 = vmatpush1.msra.mxu0 %v1384
    %4309 = vmatprep.subr.mxu0 0.0
    %4310 = vmatpush1.msra.mxu0 %v1385
    %4311 = vmatprep.subr.mxu0 0.0
    %4312 = vmatpush1.msra.mxu0 %v1386
    %4313 = vmatprep.subr.mxu0 0.0
    %4314 = vmatpush1.msra.mxu0 %v1387
    %4315 = vmatprep.subr.mxu0 0.0
    %4316 = vmatpush1.msra.mxu0 %v1388
    %4317 = vmatprep.subr.mxu0 0.0
    %4318 = vmatpush1.msra.mxu0 %v1389
    %4319 = vmatprep.subr.mxu0 0.0
    %4320 = vmatpush1.msra.mxu0 %v1390
    %4321 = vmatprep.subr.mxu0 0.0
    %4322 = vmatpush1.msra.mxu0 %v1391
    %4323 = vmatprep.subr.mxu0 0.0
    %4324 = vmatpush1.msra.mxu0 %v1392
    %4325 = vmatprep.subr.mxu0 0.0
    %4326 = vmatpush1.msra.mxu0 %v1393
    %4327 = vmatprep.subr.mxu0 0.0
    %4328 = vmatpush1.msra.mxu0 %v1394
    %4329 = vmatprep.subr.mxu0 0.0
    %4330 = vmatpush1.msra.mxu0 %v1395
    %4331 = vmatprep.subr.mxu0 0.0
    %4332 = vmatpush1.msra.mxu0 %v1396
    %4333 = vmatprep.subr.mxu0 0.0
    %4334 = vmatpush1.msra.mxu0 %v1397
    %4335 = vmatprep.subr.mxu0 0.0
    %4336 = vmatpush1.msra.mxu0 %v1398
    %4337 = vmatprep.subr.mxu0 0.0
    %4338 = vmatpush1.msra.mxu0 %v1399
    %4339 = vmatprep.subr.mxu0 0.0
    %4340 = vmatpush1.msra.mxu0 %v1400
    %4341 = vmatprep.subr.mxu0 0.0
    %4342 = vmatpush1.msra.mxu0 %v1401
    %4343 = vmatprep.subr.mxu0 0.0
    %4344 = vmatpush1.msra.mxu0 %v1402
    %4345 = vmatprep.mubr.f32.mxu0 %v4120
    %4346 = vmatmul.mubr.f32.gmra.mrb[0].mxu0 %v4119
    %v4347 = vpop.f32.mrb[0].mxu0
    %v4348 = vadd.f32 %v4273, %v4347
    %v4349 = vpop.f32.mrb[0].mxu0
    %4350 = vmatprep.mubr.f32.mxu0 %v4128
    %4351 = vmatmul.mubr.f32.gmra.mrb[0].mxu0 %v4127
    %v4352 = vpop.f32.mrb[0].mxu0
    %v4353 = vadd.f32 %v4278, %v4352
    %v4354 = vpop.f32.mrb[0].mxu0
    %4355 = vdwg.mxu0
    %4356 = vmatprep.subr.mxu0 0.0
    %4357 = vmatpush1.msra.mxu0 %v1403
    %4358 = vmatprep.subr.mxu0 0.0
    %4359 = vmatpush1.msra.mxu0 %v1404
    %4360 = vmatprep.subr.mxu0 0.0
    %4361 = vmatpush1.msra.mxu0 %v1405
    %4362 = vmatprep.subr.mxu0 0.0
    %4363 = vmatpush1.msra.mxu0 %v1406
    %4364 = vmatprep.subr.mxu0 0.0
    %4365 = vmatpush1.msra.mxu0 %v1407
    %4366 = vmatprep.subr.mxu0 0.0
    %4367 = vmatpush1.msra.mxu0 %v1408
    %4368 = vmatprep.subr.mxu0 0.0
    %4369 = vmatpush1.msra.mxu0 %v1409
    %4370 = vmatprep.subr.mxu0 0.0
    %4371 = vmatpush1.msra.mxu0 %v1410
    %4372 = vmatprep.subr.mxu0 0.0
    %4373 = vmatpush1.msra.mxu0 %v1411
    %4374 = vmatprep.subr.mxu0 0.0
    %4375 = vmatpush1.msra.mxu0 %v1412
    %4376 = vmatprep.subr.mxu0 0.0
    %4377 = vmatpush1.msra.mxu0 %v1413
    %4378 = vmatprep.subr.mxu0 0.0
    %4379 = vmatpush1.msra.mxu0 %v1414
    %4380 = vmatprep.subr.mxu0 0.0
    %4381 = vmatpush1.msra.mxu0 %v1415
    %4382 = vmatprep.subr.mxu0 0.0
    %4383 = vmatpush1.msra.mxu0 %v1416
    %4384 = vmatprep.subr.mxu0 0.0
    %4385 = vmatpush1.msra.mxu0 %v1417
    %4386 = vmatprep.subr.mxu0 0.0
    %4387 = vmatpush1.msra.mxu0 %v1418
    %4388 = vmatprep.subr.mxu0 0.0
    %4389 = vmatpush1.msra.mxu0 %v1419
    %4390 = vmatprep.subr.mxu0 0.0
    %4391 = vmatpush1.msra.mxu0 %v1420
    %4392 = vmatprep.subr.mxu0 0.0
    %4393 = vmatpush1.msra.mxu0 %v1421
    %4394 = vmatprep.subr.mxu0 0.0
    %4395 = vmatpush1.msra.mxu0 %v1422
    %4396 = vmatprep.subr.mxu0 0.0
    %4397 = vmatpush1.msra.mxu0 %v1423
    %4398 = vmatprep.subr.mxu0 0.0
    %4399 = vmatpush1.msra.mxu0 %v1424
    %4400 = vmatprep.subr.mxu0 0.0
    %4401 = vmatpush1.msra.mxu0 %v1425
    %4402 = vmatprep.subr.mxu0 0.0
    %4403 = vmatpush1.msra.mxu0 %v1426
    %4404 = vmatprep.subr.mxu0 0.0
    %4405 = vmatpush1.msra.mxu0 %v1427
    %4406 = vmatprep.subr.mxu0 0.0
    %4407 = vmatpush1.msra.mxu0 %v1428
    %4408 = vmatprep.subr.mxu0 0.0
    %4409 = vmatpush1.msra.mxu0 %v1429
    %4410 = vmatprep.subr.mxu0 0.0
    %4411 = vmatpush1.msra.mxu0 %v1430
    %4412 = vmatprep.subr.mxu0 0.0
    %4413 = vmatpush1.msra.mxu0 %v1431
    %4414 = vmatprep.subr.mxu0 0.0
    %4415 = vmatpush1.msra.mxu0 %v1432
    %4416 = vmatprep.subr.mxu0 0.0
    %4417 = vmatpush1.msra.mxu0 %v1433
    %4418 = vmatprep.subr.mxu0 0.0
    %4419 = vmatpush1.msra.mxu0 %v1434
    %4420 = vmatprep.mubr.f32.mxu0 %v4122
    %4421 = vmatmul.mubr.f32.gmra.mrb[0].mxu0 %v4121
    %v4422 = vpop.f32.mrb[0].mxu0
    %v4423 = vadd.f32 %v4348, %v4422
    %v4424 = vpop.f32.mrb[0].mxu0
    %4425 = vmatprep.mubr.f32.mxu0 %v4130
    %4426 = vmatmul.mubr.f32.gmra.mrb[0].mxu0 %v4129
    %v4427 = vpop.f32.mrb[0].mxu0
    %v4428 = vadd.f32 %v4353, %v4427
    %v4429 = vpop.f32.mrb[0].mxu0
    %4430 = vdwg.mxu0
    %v4431 = vmul.f32 %v4423, %v2014
    %v4432 = vmul.f32 %v4428, %v2020
    %v4433 = vadd.f32 %v4431, %v2012
    %v4434 = vadd.f32 %v4432, %v2018
    %v4435 = vmax.f32 %v4433, 0.0
    %v4436 = vmax.f32 %v4434, 0.0
    %v4438 = vlaneseq
    %v4439 = vshrl.u32 %v4438, 7
    %v4440 = vsub.s32 0, %v4439
    %v4441 = vrot.slane %v847, %v4440
    %v4442 = vlaneseq
    %v4443 = vshrl.u32 %v4442, 7
    %v4444 = vsub.s32 1, %v4443
    %v4445 = vrot.slane %v847, %v4444
    %4448 = vmatprep.subr.mxu0 %v776
    %4449 = vmatpush1.msra.mxu0 %v775
    %4450 = vmatprep.subr.mxu0 %v778
    %4451 = vmatpush1.msra.mxu0 %v777
    %4452 = vmatprep.subr.mxu0 %v780
    %4453 = vmatpush1.msra.mxu0 %v779
    %4454 = vmatprep.subr.mxu0 %v782
    %4455 = vmatpush1.msra.mxu0 %v781
    %4456 = vmatprep.subr.mxu0 %v784
    %4457 = vmatpush1.msra.mxu0 %v783
    %4458 = vmatprep.subr.mxu0 %v786
    %4459 = vmatpush1.msra.mxu0 %v785
    %4460 = vmatprep.subr.mxu0 %v788
    %4461 = vmatpush1.msra.mxu0 %v787
    %4462 = vmatprep.subr.mxu0 %v790
    %4463 = vmatpush1.msra.mxu0 %v789
    %4464 = vmatprep.subr.mxu0 %v792
    %4465 = vmatpush1.msra.mxu0 %v791
    %4466 = vmatprep.subr.mxu0 %v794
    %4467 = vmatpush1.msra.mxu0 %v793
    %4468 = vmatprep.subr.mxu0 %v796
    %4469 = vmatpush1.msra.mxu0 %v795
    %4470 = vmatprep.subr.mxu0 %v798
    %4471 = vmatpush1.msra.mxu0 %v797
    %4472 = vmatprep.subr.mxu0 %v800
    %4473 = vmatpush1.msra.mxu0 %v799
    %4474 = vmatprep.subr.mxu0 %v802
    %4475 = vmatpush1.msra.mxu0 %v801
    %4476 = vmatprep.subr.mxu0 %v804
    %4477 = vmatpush1.msra.mxu0 %v803
    %4478 = vmatprep.subr.mxu0 %v806
    %4479 = vmatpush1.msra.mxu0 %v805
    %4480 = vmatprep.subr.mxu0 %v808
    %4481 = vmatpush1.msra.mxu0 %v807
    %4482 = vmatprep.subr.mxu0 %v810
    %4483 = vmatpush1.msra.mxu0 %v809
    %4484 = vmatprep.subr.mxu0 %v812
    %4485 = vmatpush1.msra.mxu0 %v811
    %4486 = vmatprep.subr.mxu0 %v814
    %4487 = vmatpush1.msra.mxu0 %v813
    %4488 = vmatprep.subr.mxu0 %v816
    %4489 = vmatpush1.msra.mxu0 %v815
    %4490 = vmatprep.subr.mxu0 %v818
    %4491 = vmatpush1.msra.mxu0 %v817
    %4492 = vmatprep.subr.mxu0 %v820
    %4493 = vmatpush1.msra.mxu0 %v819
    %4494 = vmatprep.subr.mxu0 %v822
    %4495 = vmatpush1.msra.mxu0 %v821
    %4496 = vmatprep.subr.mxu0 %v824
    %4497 = vmatpush1.msra.mxu0 %v823
    %4498 = vmatprep.subr.mxu0 %v826
    %4499 = vmatpush1.msra.mxu0 %v825
    %4500 = vmatprep.subr.mxu0 %v828
    %4501 = vmatpush1.msra.mxu0 %v827
    %4502 = vmatprep.subr.mxu0 %v830
    %4503 = vmatpush1.msra.mxu0 %v829
    %4504 = vmatprep.subr.mxu0 %v832
    %4505 = vmatpush1.msra.mxu0 %v831
    %4506 = vmatprep.subr.mxu0 %v834
    %4507 = vmatpush1.msra.mxu0 %v833
    %4508 = vmatprep.subr.mxu0 %v836
    %4509 = vmatpush1.msra.mxu0 %v835
    %4510 = vmatprep.subr.mxu0 %v838
    %4511 = vmatpush1.msra.mxu0 %v837
    %4512 = vmatprep.mubr.f32.mxu0 %v1671
    %4513 = vmatmul.mubr.f32.gmra.mrb[0].mxu0 %v1670
    %v4514 = vpop.f32.mrb[0].mxu0
    %v4515 = vadd.f32 %v4441, %v4514
    %v4516 = vpop.f32.mrb[0].mxu0
    %v4517 = vadd.f32 %v4445, %v4516
    %4518 = vmatprep.mubr.f32.mxu0 %v1674
    %4519 = vmatmul.mubr.f32.gmra.mrb[0].mxu0 %v1673
    %v4520 = vpop.f32.mrb[0].mxu0
    %v4521 = vadd.f32 %v4441, %v4520
    %v4522 = vpop.f32.mrb[0].mxu0
    %v4523 = vadd.f32 %v4445, %v4522
    %4524 = vdwg.mxu0
    %4525 = vmatprep.subr.mxu0 %v840
    %4526 = vmatpush1.msra.mxu0 %v839
    %4527 = vmatprep.subr.mxu0 %v842
    %4528 = vmatpush1.msra.mxu0 %v841
    %4529 = vmatprep.subr.mxu0 %v844
    %4530 = vmatpush1.msra.mxu0 %v843
    %4531 = vmatprep.subr.mxu0 %v846
    %4532 = vmatpush1.msra.mxu0 %v845
    %4533 = vmatprep.subr.mxu0 0.0
    %4534 = vmatpush1.msra.mxu0 0.0
    %4535 = vmatprep.subr.mxu0 0.0
    %4536 = vmatpush1.msra.mxu0 0.0
    %4537 = vmatprep.subr.mxu0 0.0
    %4538 = vmatpush1.msra.mxu0 0.0
    %4539 = vmatprep.subr.mxu0 0.0
    %4540 = vmatpush1.msra.mxu0 0.0
    %4541 = vmatprep.subr.mxu0 0.0
    %4542 = vmatpush1.msra.mxu0 0.0
    %4543 = vmatprep.subr.mxu0 0.0
    %4544 = vmatpush1.msra.mxu0 0.0
    %4545 = vmatprep.subr.mxu0 0.0
    %4546 = vmatpush1.msra.mxu0 0.0
    %4547 = vmatprep.subr.mxu0 0.0
    %4548 = vmatpush1.msra.mxu0 0.0
    %4549 = vmatprep.subr.mxu0 0.0
    %4550 = vmatpush1.msra.mxu0 0.0
    %4551 = vmatprep.subr.mxu0 0.0
    %4552 = vmatpush1.msra.mxu0 0.0
    %4553 = vmatprep.subr.mxu0 0.0
    %4554 = vmatpush1.msra.mxu0 0.0
    %4555 = vmatprep.subr.mxu0 0.0
    %4556 = vmatpush1.msra.mxu0 0.0
    %4557 = vmatprep.subr.mxu0 0.0
    %4558 = vmatpush1.msra.mxu0 0.0
    %4559 = vmatprep.subr.mxu0 0.0
    %4560 = vmatpush1.msra.mxu0 0.0
    %4561 = vmatprep.subr.mxu0 0.0
    %4562 = vmatpush1.msra.mxu0 0.0
    %4563 = vmatprep.subr.mxu0 0.0
    %4564 = vmatpush1.msra.mxu0 0.0
    %4565 = vmatprep.subr.mxu0 0.0
    %4566 = vmatpush1.msra.mxu0 0.0
    %4567 = vmatprep.subr.mxu0 0.0
    %4568 = vmatpush1.msra.mxu0 0.0
    %4569 = vmatprep.subr.mxu0 0.0
    %4570 = vmatpush1.msra.mxu0 0.0
    %4571 = vmatprep.subr.mxu0 0.0
    %4572 = vmatpush1.msra.mxu0 0.0
    %4573 = vmatprep.subr.mxu0 0.0
    %4574 = vmatpush1.msra.mxu0 0.0
    %4575 = vmatprep.subr.mxu0 0.0
    %4576 = vmatpush1.msra.mxu0 0.0
    %4577 = vmatprep.subr.mxu0 0.0
    %4578 = vmatpush1.msra.mxu0 0.0
    %4579 = vmatprep.subr.mxu0 0.0
    %4580 = vmatpush1.msra.mxu0 0.0
    %4581 = vmatprep.subr.mxu0 0.0
    %4582 = vmatpush1.msra.mxu0 0.0
    %4583 = vmatprep.subr.mxu0 0.0
    %4584 = vmatpush1.msra.mxu0 0.0
    %4585 = vmatprep.subr.mxu0 0.0
    %4586 = vmatpush1.msra.mxu0 0.0
    %4587 = vmatprep.subr.mxu0 0.0
    %4588 = vmatpush1.msra.mxu0 0.0
    %4589 = vmatprep.mubr.f32.mxu0 0.0
    %4590 = vmatmul.mubr.f32.gmra.mrb[0].mxu0 %v1709
    %v4591 = vpop.f32.mrb[0].mxu0
    %v4592 = vadd.f32 %v4515, %v4591
    %v4593 = vpop.f32.mrb[0].mxu0
    %v4594 = vadd.f32 %v4517, %v4593
    %4595 = vmatprep.mubr.f32.mxu0 0.0
    %4596 = vmatmul.mubr.f32.gmra.mrb[0].mxu0 %v1712
    %v4597 = vpop.f32.mrb[0].mxu0
    %v4598 = vadd.f32 %v4521, %v4597
    %v4599 = vpop.f32.mrb[0].mxu0
    %v4600 = vadd.f32 %v4523, %v4599
    %4601 = vdwg.mxu0
    %4602 = vmatprep.subr.mxu0 %v1436
    %4603 = vmatpush1.msra.mxu0 %v1435
    %4604 = vmatprep.subr.mxu0 %v1438
    %4605 = vmatpush1.msra.mxu0 %v1437
    %4606 = vmatprep.subr.mxu0 %v1440
    %4607 = vmatpush1.msra.mxu0 %v1439
    %4608 = vmatprep.subr.mxu0 %v1442
    %4609 = vmatpush1.msra.mxu0 %v1441
    %4610 = vmatprep.subr.mxu0 %v1444
    %4611 = vmatpush1.msra.mxu0 %v1443
    %4612 = vmatprep.subr.mxu0 %v1446
    %4613 = vmatpush1.msra.mxu0 %v1445
    %4614 = vmatprep.subr.mxu0 %v1448
    %4615 = vmatpush1.msra.mxu0 %v1447
    %4616 = vmatprep.subr.mxu0 %v1450
    %4617 = vmatpush1.msra.mxu0 %v1449
    %4618 = vmatprep.subr.mxu0 %v1452
    %4619 = vmatpush1.msra.mxu0 %v1451
    %4620 = vmatprep.subr.mxu0 %v1454
    %4621 = vmatpush1.msra.mxu0 %v1453
    %4622 = vmatprep.subr.mxu0 %v1456
    %4623 = vmatpush1.msra.mxu0 %v1455
    %4624 = vmatprep.subr.mxu0 %v1458
    %4625 = vmatpush1.msra.mxu0 %v1457
    %4626 = vmatprep.subr.mxu0 %v1460
    %4627 = vmatpush1.msra.mxu0 %v1459
    %4628 = vmatprep.subr.mxu0 %v1462
    %4629 = vmatpush1.msra.mxu0 %v1461
    %4630 = vmatprep.subr.mxu0 %v1464
    %4631 = vmatpush1.msra.mxu0 %v1463
    %4632 = vmatprep.subr.mxu0 %v1466
    %4633 = vmatpush1.msra.mxu0 %v1465
    %4634 = vmatprep.subr.mxu0 0.0
    %4635 = vmatpush1.msra.mxu0 0.0
    %4636 = vmatprep.subr.mxu0 0.0
    %4637 = vmatpush1.msra.mxu0 0.0
    %4638 = vmatprep.subr.mxu0 0.0
    %4639 = vmatpush1.msra.mxu0 0.0
    %4640 = vmatprep.subr.mxu0 0.0
    %4641 = vmatpush1.msra.mxu0 0.0
    %4642 = vmatprep.subr.mxu0 0.0
    %4643 = vmatpush1.msra.mxu0 0.0
    %4644 = vmatprep.subr.mxu0 0.0
    %4645 = vmatpush1.msra.mxu0 0.0
    %4646 = vmatprep.subr.mxu0 0.0
    %4647 = vmatpush1.msra.mxu0 0.0
    %4648 = vmatprep.subr.mxu0 0.0
    %4649 = vmatpush1.msra.mxu0 0.0
    %4650 = vmatprep.subr.mxu0 0.0
    %4651 = vmatpush1.msra.mxu0 0.0
    %4652 = vmatprep.subr.mxu0 0.0
    %4653 = vmatpush1.msra.mxu0 0.0
    %4654 = vmatprep.subr.mxu0 0.0
    %4655 = vmatpush1.msra.mxu0 0.0
    %4656 = vmatprep.subr.mxu0 0.0
    %4657 = vmatpush1.msra.mxu0 0.0
    %4658 = vmatprep.subr.mxu0 0.0
    %4659 = vmatpush1.msra.mxu0 0.0
    %4660 = vmatprep.subr.mxu0 0.0
    %4661 = vmatpush1.msra.mxu0 0.0
    %4662 = vmatprep.subr.mxu0 0.0
    %4663 = vmatpush1.msra.mxu0 0.0
    %4664 = vmatprep.subr.mxu0 0.0
    %4665 = vmatpush1.msra.mxu0 0.0
    %4666 = vmatprep.mubr.f32.mxu0 0.0
    %4667 = vmatmul.mubr.f32.gmra.mrb[0].mxu0 %v4435
    %v4668 = vpop.f32.mrb[0].mxu0
    %v4669 = vadd.f32 0.0, %v4668
    %v4670 = vpop.f32.mrb[0].mxu0
    %v4671 = vadd.f32 0.0, %v4670
    %4672 = vmatprep.mubr.f32.mxu0 0.0
    %4673 = vmatmul.mubr.f32.gmra.mrb[0].mxu0 %v4436
    %v4674 = vpop.f32.mrb[0].mxu0
    %v4675 = vadd.f32 0.0, %v4674
    %v4676 = vpop.f32.mrb[0].mxu0
    %v4677 = vadd.f32 0.0, %v4676
    %4678 = vdwg.mxu0
    %v4679 = vmul.f32 %v4669, %v4592
    %v4680 = vmul.f32 %v4671, %v4594
    %v4681 = vmul.f32 %v4675, %v4598
    %v4682 = vmul.f32 %v4677, %v4600
    %vm4683 = vcmask 523264
    %v4685 = vsel %vm4683, %v4680, 0
    %v4688 = vsel %vm4683, %v4682, 0
    %4690 = vmatprep.subr.mxu0 0.0
    %4691 = vmatpush1.msra.mxu0 %v1467
    %4692 = vmatprep.subr.mxu0 0.0
    %4693 = vmatpush1.msra.mxu0 %v1468
    %4694 = vmatprep.subr.mxu0 0.0
    %4695 = vmatpush1.msra.mxu0 %v1469
    %4696 = vmatprep.subr.mxu0 0.0
    %4697 = vmatpush1.msra.mxu0 %v1470
    %4698 = vmatprep.subr.mxu0 0.0
    %4699 = vmatpush1.msra.mxu0 %v1471
    %4700 = vmatprep.subr.mxu0 0.0
    %4701 = vmatpush1.msra.mxu0 %v1472
    %4702 = vmatprep.subr.mxu0 0.0
    %4703 = vmatpush1.msra.mxu0 %v1473
    %4704 = vmatprep.subr.mxu0 0.0
    %4705 = vmatpush1.msra.mxu0 %v1474
    %4706 = vmatprep.subr.mxu0 0.0
    %4707 = vmatpush1.msra.mxu0 %v1475
    %4708 = vmatprep.subr.mxu0 0.0
    %4709 = vmatpush1.msra.mxu0 %v1476
    %4710 = vmatprep.subr.mxu0 0.0
    %4711 = vmatpush1.msra.mxu0 %v1477
    %4712 = vmatprep.subr.mxu0 0.0
    %4713 = vmatpush1.msra.mxu0 %v1478
    %4714 = vmatprep.subr.mxu0 0.0
    %4715 = vmatpush1.msra.mxu0 %v1479
    %4716 = vmatprep.subr.mxu0 0.0
    %4717 = vmatpush1.msra.mxu0 %v1480
    %4718 = vmatprep.subr.mxu0 0.0
    %4719 = vmatpush1.msra.mxu0 %v1481
    %4720 = vmatprep.subr.mxu0 0.0
    %4721 = vmatpush1.msra.mxu0 %v1482
    %4722 = vmatprep.subr.mxu0 0.0
    %4723 = vmatpush1.msra.mxu0 %v1483
    %4724 = vmatprep.subr.mxu0 0.0
    %4725 = vmatpush1.msra.mxu0 %v1484
    %4726 = vmatprep.subr.mxu0 0.0
    %4727 = vmatpush1.msra.mxu0 %v1485
    %4728 = vmatprep.subr.mxu0 0.0
    %4729 = vmatpush1.msra.mxu0 %v1486
    %4730 = vmatprep.subr.mxu0 0.0
    %4731 = vmatpush1.msra.mxu0 %v1487
    %4732 = vmatprep.subr.mxu0 0.0
    %4733 = vmatpush1.msra.mxu0 %v1488
    %4734 = vmatprep.subr.mxu0 0.0
    %4735 = vmatpush1.msra.mxu0 %v1489
    %4736 = vmatprep.subr.mxu0 0.0
    %4737 = vmatpush1.msra.mxu0 %v1490
    %4738 = vmatprep.subr.mxu0 0.0
    %4739 = vmatpush1.msra.mxu0 0.0
    %4740 = vmatprep.subr.mxu0 0.0
    %4741 = vmatpush1.msra.mxu0 0.0
    %4742 = vmatprep.subr.mxu0 0.0
    %4743 = vmatpush1.msra.mxu0 0.0
    %4744 = vmatprep.subr.mxu0 0.0
    %4745 = vmatpush1.msra.mxu0 0.0
    %4746 = vmatprep.subr.mxu0 0.0
    %4747 = vmatpush1.msra.mxu0 0.0
    %4748 = vmatprep.subr.mxu0 0.0
    %4749 = vmatpush1.msra.mxu0 0.0
    %4750 = vmatprep.subr.mxu0 0.0
    %4751 = vmatpush1.msra.mxu0 0.0
    %4752 = vmatprep.subr.mxu0 0.0
    %4753 = vmatpush1.msra.mxu0 0.0
    %4754 = vmatprep.mubr.f32.mxu0 %v4685
    %4755 = vmatmul.mubr.f32.gmra.mrb[0].mxu0 %v4679
    %v4756 = vpop.f32.mrb[0].mxu0
    %v4757 = vadd.f32 0.0, %v4756
    %v4758 = vpop.f32.mrb[0].mxu0
    %4759 = vmatprep.mubr.f32.mxu0 %v4688
    %4760 = vmatmul.mubr.f32.gmra.mrb[0].mxu0 %v4681
    %v4761 = vpop.f32.mrb[0].mxu0
    %v4762 = vadd.f32 0.0, %v4761
    %v4763 = vpop.f32.mrb[0].mxu0
    %4764 = vdwg.mxu0
    %v4765 = vmul.f32 %v4757, %v2168
    %v4766 = vmul.f32 %v4762, %v2174
    %v4767 = vadd.f32 %v4765, %v2166
    %v4768 = vadd.f32 %v4766, %v2172
    %4769 = vst [vmem:[#allocation28] sm:$0xff] %v4767
    %4770 = vst [vmem:[#allocation28 + $0x8] sm:$0xff] %v4768
    // Predicated region
    $region138: #{tpu_custom_call.1} parent=1 // pred_check
      _
    $region139: #{tpu_custom_call.1} parent=1 // pred_check_branch
      %4772 = sbr.rel (0) target = $region141
    $region140: #{tpu_custom_call.1} parent=1 // pred_region
      %s4774 = ssub.s32 256, 256
      %4775 = vsyncadd [#allocation4], %s4774
      %s4776 = sshll.u32 [#allocation28], 4
      %s4777 = int_to_ptr.vmem [resolvable:$true] %s4776
      %4782 = dma.vmem_to_hbm [thread:$0]  %s4777, 256, %s18, [#allocation4], 128, 128, 8
    $region141: #{tpu_custom_call.1} parent=1 // pred_fallthru
      _
    // Predicated region
    $region142: #{tpu_custom_call.1} parent=1 // pred_check
      _
    $region143: #{tpu_custom_call.1} parent=1 // pred_check_branch
      %4784 = sbr.rel (0) target = $region145
    $region144: #{tpu_custom_call.1} parent=1 // pred_region
      %4785 = dma.done [#allocation4], 256
    $region145: #{tpu_custom_call.1} parent=1 // pred_fallthru
      _
    %4786 = vsyncpa [#allocation3], 1
    %4787 = vsyncpa [#allocation6], 1
    %4788 = vsyncpa [#allocation9], 1
    %4789 = vsyncpa [#allocation12], 1
    %4790 = vsyncpa [#allocation15], 1
    %4791 = vsyncpa [#allocation18], 1
    %4792 = vsyncpa [#allocation21], 1
    %4793 = vsyncpa [#allocation24], 1
    %4794 = vsyncpa [#allocation27], 1
    %4795 = vsyncpa [#allocation4], 1

</llo_original>
